<compile_context>
chip_gen: v5e
topology: v5e:2x2
jax: 0.10.0
libtpu: 0.0.40
codegen_flags: <defaults>
</compile_context>

<pallas_src>
import functools

import jax
import jax.numpy as jnp
from jax import lax
from jax.experimental import pallas as pl
from jax.experimental.pallas import tpu as pltpu

IN_FEATURES = 1280   # tf_efficientnetv2_s classifier.in_features
HIDDEN = 256
OUT = 1
_POOL_CHUNK = 16     # spatial rows folded per f32-accumulation step


def _head_kernel(x_ref, w1_ref, b1_ref, w2_ref, b2_ref, o_ref, *, precision):
    # x_ref: [TB, HW, C] channels-last feature-map tile (C on lanes; 1280 % 128 == 0).
    tb, hw, c = x_ref.shape
    chunk = min(_POOL_CHUNK, hw)
    n_full = hw // chunk
    rem = hw - n_full * chunk
    inv_hw = jnp.float32(1.0 / hw)

    # Global average pool (timm SelectAdaptivePool2d 'avg') with the f32 upcast
    # folded into the reduction: stream `chunk` spatial rows at a time and
    # accumulate into a small [TB, C] f32 value (never a full-tile f32 copy).
    def body(i, acc):
        s = pl.multiple_of(i * chunk, chunk)
        blk = x_ref[:, pl.ds(s, chunk), :].astype(jnp.float32)   # [TB, chunk, C]
        return acc + jnp.sum(blk, axis=1)                        # VPU sublane adds

    acc = jnp.zeros((tb, c), jnp.float32)
    acc = lax.fori_loop(0, n_full, body, acc)
    if rem:
        blk = x_ref[:, pl.ds(n_full * chunk, rem), :].astype(jnp.float32)
        acc = acc + jnp.sum(blk, axis=1)
    pooled = acc * inv_hw                                        # [TB, C] f32

    # Linear(1280, 256) + ReLU on the MXU.
    # Production path: bf16 x bf16 -> f32 (native single-pass MXU).
    # Strict f32 path: f32 weights + precision=HIGHEST.
    h = jnp.dot(pooled.astype(w1_ref.dtype), w1_ref[...],
                preferred_element_type=jnp.float32, precision=precision)
    h = jnp.maximum(h + b1_ref[...], 0.0)                        # [TB, 256] f32

    # Dropout(0.5): identity at inference (inverted dropout, no eval scaling).
    # Linear(256, 1): degenerate N=1 matmul -> VPU multiply + lane reduce.
    logit = jnp.sum(h * w2_ref[...], axis=-1, keepdims=True) + b2_ref[...]   # [TB, 1]
    o_ref[...] = logit.astype(o_ref.dtype)


def gender_classifier_head(x_feat, w1, b1, w2, b2, *,
                           data_format="NHWC",
                           tb=None,
                           activation_dtype=jnp.bfloat16,
                           vmem_limit_bytes=48 << 20):
    """Pooled classifier head of GenderClassifier.

    x_feat: backbone final feature map. Preferred layout is NHWC [B, H, W, C]
        (what TPU convolutions produce natively); "NCHW" is accepted but costs
        an extra transpose pass over HBM.
    activation_dtype: dtype the feature map is streamed in. bf16 halves the HBM
        traffic of this bandwidth-bound kernel; all accumulation stays f32.
        Pass jnp.float32 for a strict numerical-check path (f32 MXU, HIGHEST).
    tb: batch tile. None = auto-size to the VMEM budget, keeping >=2 grid steps
        when the batch allows so v7x can shard the batch over its two TCs.
    vmem_limit_bytes: 48 MiB default leaves headroom on v7x (64 MiB physical
        VMEM); v5e/v6e (128 MiB) can raise this to ~100 MiB together with tb=128.
    """
    if data_format == "NCHW":
        # Prefer requesting NHWC straight from the backbone: this transpose is
        # an extra HBM pass kept only as a convenience fallback.
        x_feat = jnp.transpose(x_feat, (0, 2, 3, 1))
    elif data_format != "NHWC":
        raise ValueError(f"unknown data_format {data_format!r}")

    B, H, W, C = x_feat.shape
    assert C == IN_FEATURES, (C, IN_FEATURES)
    HW = H * W

    act_dtype = jnp.dtype(activation_dtype)
    act_bytes = act_dtype.itemsize

    # Free reshape (no transpose): [B, H, W, C] -> [B, HW, C]; lanes fully dense.
    x = x_feat.reshape(B, HW, C)
    if x.dtype != act_dtype:
        # allow_input_fusion below lets XLA fuse this convert into the
        # pallas_call input DMA rather than running it as a standalone HBM pass.
        x = x.astype(act_dtype)

    strict_f32 = act_dtype == jnp.dtype(jnp.float32)
    w_dtype = jnp.float32 if strict_f32 else jnp.bfloat16
    precision = jax.lax.Precision.HIGHEST if strict_f32 else None
    w1 = w1.astype(w_dtype)

    # ---- batch tile ----
    x_row_bytes = HW * C * act_bytes
    if tb is None:
        budget = int(vmem_limit_bytes * 0.6)                  # x is double-buffered
        tb = max(8, min(128, ((budget // (2 * x_row_bytes)) // 8) * 8))
        if B >= 16 and tb >= B:
            # Keep >=2 grid steps so v7x's two TensorCores both get work.
            tb = ((pl.cdiv(B, 2) + 7) // 8) * 8
    tb = min(tb, B)
    if tb < B and tb % 8 != 0:
        tb = max(8, (tb // 8) * 8)
    grid = (pl.cdiv(B, tb),)

    cost = pl.CostEstimate(
        flops=B * HW * C + 2 * B * C * HIDDEN + 2 * B * HIDDEN,
        transcendentals=0,
        bytes_accessed=(B * HW * C * act_bytes
                        + w1.size * jnp.dtype(w1.dtype).itemsize
                        + (b1.size + w2.size + b2.size) * 4
                        + B * OUT * 4),
    )

    return pl.pallas_call(
        functools.partial(_head_kernel, precision=precision),
        out_shape=jax.ShapeDtypeStruct((B, OUT), jnp.float32),
        grid_spec=pltpu.PrefetchScalarGridSpec(
            num_scalar_prefetch=0,
            grid=grid,
            in_specs=[
                # Feature map: batch-tiled, double-buffered by the pipeline.
                pl.BlockSpec((tb, HW, C), lambda i: (i, 0, 0)),
                # Weights/biases: small untiled VMEM residents (single copy,
                # no per-step DMA bookkeeping).
                pl.BlockSpec(memory_space=pltpu.MemorySpace.VMEM),
                pl.BlockSpec(memory_space=pltpu.MemorySpace.VMEM),
                pl.BlockSpec(memory_space=pltpu.MemorySpace.VMEM),
                pl.BlockSpec(memory_space=pltpu.MemorySpace.VMEM),
            ],
            out_specs=pl.BlockSpec((tb, OUT), lambda i: (i, 0)),
        ),
        compiler_params=pltpu.CompilerParams(
            dimension_semantics=("parallel",),     # megacore batch sharding on v7x
            vmem_limit_bytes=vmem_limit_bytes,
            allow_input_fusion=[True, False, False, False, False],
        ),
        cost_estimate=cost,
    )(x, w1, b1.reshape(1, HIDDEN), w2.reshape(1, HIDDEN), b2.reshape(1, OUT))


def init_params(key):
    k1, k2, k3, k4 = jax.random.split(key, 4)
    # Deterministic synthetic parameters (shapes from the module's __init__)
    w1 = jax.random.normal(k1, (IN_FEATURES, HIDDEN), jnp.float32) * 0.02
    b1 = jax.random.normal(k2, (HIDDEN,), jnp.float32) * 0.01
    w2 = jax.random.normal(k3, (HIDDEN, OUT), jnp.float32) * 0.02
    b2 = jax.random.normal(k4, (OUT,), jnp.float32) * 0.01
    return w1, b1, w2, b2


if __name__ == "__main__":
    key = jax.random.PRNGKey(0)
    k_feat, k_params = jax.random.split(key)

    # Small synthetic backbone feature map: B=2, spatial 8x8, C=1280, NHWC
    # (the layout a TPU conv backbone emits).
    B, H, W = 2, 8, 8
    x_feat = jax.random.normal(k_feat, (B, H, W, IN_FEATURES), jnp.float32)
    w1, b1, w2, b2 = init_params(k_params)

    # Pure-JAX reference of the same head (pool + MLP), f32 with HIGHEST precision.
    pooled_ref = jnp.mean(x_feat, axis=(1, 2))
    h_ref = jnp.maximum(
        jnp.dot(pooled_ref, w1, precision=jax.lax.Precision.HIGHEST) + b1, 0.0)
    ref = jnp.dot(h_ref, w2, precision=jax.lax.Precision.HIGHEST) + b2

    # Strict f32 validation path (f32 activations/weights, HIGHEST precision MXU).
    out_f32 = jax.block_until_ready(
        gender_classifier_head(x_feat, w1, b1, w2, b2,
                               activation_dtype=jnp.float32))
    assert out_f32.shape == (B, OUT)
    assert jnp.allclose(out_f32, ref, atol=1e-4, rtol=1e-4)

    # Production path: bf16 activation streaming + bf16xbf16->f32 MXU.
    out_bf16 = jax.block_until_ready(
        gender_classifier_head(x_feat, w1, b1, w2, b2))
    assert out_bf16.shape == (B, OUT)
    assert jnp.allclose(out_bf16, ref, atol=5e-3, rtol=5e-3)

    # NCHW convenience fallback (wrapper transposes to NHWC).
    out_nchw = jax.block_until_ready(
        gender_classifier_head(jnp.transpose(x_feat, (0, 3, 1, 2)),
                               w1, b1, w2, b2, data_format="NCHW"))
    assert jnp.allclose(out_nchw, ref, atol=5e-3, rtol=5e-3)

    print("KERNEL_OK")
</pallas_src>

<mosaic_0001>
module attributes {stable_mosaic.version = 11 : i64} {
  func.func @_head_kernel(%arg0: i32, %arg1: memref<2x64x1280xf32, #tpu.memory_space<vmem>>, %arg2: memref<1280x256xf32, #tpu.memory_space<vmem>>, %arg3: memref<1x256xf32, #tpu.memory_space<vmem>>, %arg4: memref<1x256xf32, #tpu.memory_space<vmem>>, %arg5: memref<1x1xf32, #tpu.memory_space<vmem>>, %arg6: memref<2x1xf32, #tpu.memory_space<vmem>>) attributes {dimension_semantics = [#tpu.dimension_semantics<parallel>], iteration_bounds = array<i64: 1>, scalar_prefetch = 0 : i64, scratch_operands = 0 : i64, tpu.core_type = #tpu.core_type<tc>, window_params = [{transform_indices = @transform_0, window_bounds = array<i64: 2, 64, 1280>}, {pipeline_mode = #tpu.pipeline_mode<synchronous>, transform_indices = @transform_1, window_bounds = array<i64: 1280, 256>}, {pipeline_mode = #tpu.pipeline_mode<synchronous>, transform_indices = @transform_2, window_bounds = array<i64: 1, 256>}, {pipeline_mode = #tpu.pipeline_mode<synchronous>, transform_indices = @transform_3, window_bounds = array<i64: 1, 256>}, {pipeline_mode = #tpu.pipeline_mode<synchronous>, transform_indices = @transform_4, window_bounds = array<i64: 1, 1>}, {transform_indices = @transform_5, window_bounds = array<i64: 2, 1>}]} {
    %cst = arith.constant 0.000000e+00 : f32
    %0 = vector.broadcast %cst : f32 to vector<2x1280xf32>
    %c0_i32 = arith.constant 0 : i32
    %c4_i32 = arith.constant 4 : i32
    %1 = arith.addi %c0_i32, %c4_i32 : i32
    %c1_i32 = arith.constant 1 : i32
    %2 = scf.for %arg7 = %c0_i32 to %1 step %c1_i32 iter_args(%arg8 = %0) -> (vector<2x1280xf32>)  : i32 {
      %c16_i32 = arith.constant 16 : i32
      %21 = arith.muli %arg7, %c16_i32 : i32
      %22 = tpu.assume_multiple %21, 16 : i32
      %c0_14 = arith.constant 0 : index
      %23 = arith.index_cast %22 : i32 to index
      %c0_15 = arith.constant 0 : index
      %24 = vector.load %arg1[%c0_14, %23, %c0_15] : memref<2x64x1280xf32, #tpu.memory_space<vmem>>, vector<2x16x1280xf32>
      %cst_16 = arith.constant dense<0.000000e+00> : vector<2x1280xf32>
      %25 = vector.multi_reduction <add>, %24, %cst_16 [1] : vector<2x16x1280xf32> to vector<2x1280xf32>
      %26 = arith.addf %arg8, %25 : vector<2x1280xf32>
      scf.yield %26 : vector<2x1280xf32>
    }
    %c4_i32_0 = arith.constant 4 : i32
    %cst_1 = arith.constant 1.562500e-02 : f32
    %3 = vector.broadcast %cst_1 : f32 to vector<2x1280xf32>
    %4 = arith.mulf %2, %3 : vector<2x1280xf32>
    %c0 = arith.constant 0 : index
    %c0_2 = arith.constant 0 : index
    %5 = vector.load %arg2[%c0, %c0_2] : memref<1280x256xf32, #tpu.memory_space<vmem>>, vector<1280x256xf32>
    %cst_3 = arith.constant dense<0.000000e+00> : vector<2x256xf32>
    %6 = tpu.matmul %4, %5, %cst_3 {dimension_numbers = #tpu.dot_dimension_numbers<[1], [0], [0], [1], [0, 0, 1, 1], [], []>, precision = #tpu.contract_precision<fp32>} : vector<2x1280xf32>, vector<1280x256xf32>, vector<2x256xf32> -> vector<2x256xf32>
    %c0_4 = arith.constant 0 : index
    %c0_5 = arith.constant 0 : index
    %7 = vector.load %arg3[%c0_4, %c0_5] : memref<1x256xf32, #tpu.memory_space<vmem>>, vector<1x256xf32>
    %8 = vector.broadcast %7 : vector<1x256xf32> to vector<2x256xf32>
    %9 = arith.addf %6, %8 : vector<2x256xf32>
    %cst_6 = arith.constant 0.000000e+00 : f32
    %10 = vector.broadcast %cst_6 : f32 to vector<2x256xf32>
    %11 = arith.maximumf %9, %10 : vector<2x256xf32>
    %c0_7 = arith.constant 0 : index
    %c0_8 = arith.constant 0 : index
    %12 = vector.load %arg4[%c0_7, %c0_8] : memref<1x256xf32, #tpu.memory_space<vmem>>, vector<1x256xf32>
    %13 = vector.broadcast %12 : vector<1x256xf32> to vector<2x256xf32>
    %14 = arith.mulf %11, %13 : vector<2x256xf32>
    %cst_9 = arith.constant dense<0.000000e+00> : vector<2xf32>
    %15 = vector.multi_reduction <add>, %14, %cst_9 [1] : vector<2x256xf32> to vector<2xf32>
    %16 = vector.shape_cast %15 : vector<2xf32> to vector<2x1xf32>
    %c0_10 = arith.constant 0 : index
    %c0_11 = arith.constant 0 : index
    %17 = vector.load %arg5[%c0_10, %c0_11] : memref<1x1xf32, #tpu.memory_space<vmem>>, vector<1x1xf32>
    %18 = vector.broadcast %17 : vector<1x1xf32> to vector<2x1xf32>
    %19 = arith.addf %16, %18 : vector<2x1xf32>
    %c0_12 = arith.constant 0 : index
    %c0_13 = arith.constant 0 : index
    %20 = vector.load %arg6[%c0_12, %c0_13] : memref<2x1xf32, #tpu.memory_space<vmem>>, vector<2x1xf32>
    tpu.vector_store %arg6[%c0_12, %c0_13], %19 {strides = array<i32>} : memref<2x1xf32, #tpu.memory_space<vmem>>, vector<2x1xf32>,
    return
  }
  func.func @transform_0(%arg0: i32) -> (i32, i32, i32) {
    %c0_i32 = arith.constant 0 : i32
    %c0_i32_0 = arith.constant 0 : i32
    %c0_i32_1 = arith.constant 0 : i32
    return %arg0, %c0_i32, %c0_i32_0 : i32, i32, i32
  }
  func.func @transform_1(%arg0: i32) -> (i32, i32) {
    %c0_i32 = arith.constant 0 : i32
    %c0_i32_0 = arith.constant 0 : i32
    %c0_i32_1 = arith.constant 0 : i32
    return %c0_i32, %c0_i32_0 : i32, i32
  }
  func.func @transform_2(%arg0: i32) -> (i32, i32) {
    %c0_i32 = arith.constant 0 : i32
    %c0_i32_0 = arith.constant 0 : i32
    %c0_i32_1 = arith.constant 0 : i32
    return %c0_i32, %c0_i32_0 : i32, i32
  }
  func.func @transform_3(%arg0: i32) -> (i32, i32) {
    %c0_i32 = arith.constant 0 : i32
    %c0_i32_0 = arith.constant 0 : i32
    %c0_i32_1 = arith.constant 0 : i32
    return %c0_i32, %c0_i32_0 : i32, i32
  }
  func.func @transform_4(%arg0: i32) -> (i32, i32) {
    %c0_i32 = arith.constant 0 : i32
    %c0_i32_0 = arith.constant 0 : i32
    %c0_i32_1 = arith.constant 0 : i32
    return %c0_i32, %c0_i32_0 : i32, i32
  }
  func.func @transform_5(%arg0: i32) -> (i32, i32) {
    %c0_i32 = arith.constant 0 : i32
    %c0_i32_0 = arith.constant 0 : i32
    return %arg0, %c0_i32 : i32, i32
  }
}

</mosaic_0001>

<llo_original>
// kernel: tpu_custom_call.1
$region0: #{tpu_custom_call.1}
  #allocation0 [shape = 'u32[]', space=smem, size = 0x4, offset = 0x4, fixed_abs, tag = 'smem constant byte address 0x4 - core index']
  #allocation1 [shape = 'u32[72,128]{1,0:T(1,128)}', space=vmem, size = 0x9000, scoped, tag = 'internal scratch']
  #allocation2 [shape = 'f32[1,1]{1,0:T(1,128)S(1)}', space=vmem, size = 0x200, scoped, tag = 'scoped memory for tpu_custom_call.1']
  %s0 = inlined_call_operand.hbm [shape: f32[2,64,1280], index: 0, kind: input, shape index: {}]
  %s1 = inlined_call_operand.hbm [shape: f32[1280,256], index: 1, kind: input, shape index: {}]
  %s2 = inlined_call_operand.hbm [shape: f32[1,256], index: 2, kind: input, shape index: {}]
  %s3 = inlined_call_operand.hbm [shape: f32[1,256], index: 3, kind: input, shape index: {}]
  %s4 = inlined_call_operand.<no memory space> [shape: f32[1,1], index: 4, kind: input, shape index: {}]
  %s5 = inlined_call_operand.vmem [shape: f32[2,1], index: 5, kind: output, shape index: {}]
  %s6 = sld [smem:[#allocation0]]
  $region53: #{tpu_custom_call.1} parent=0
    _
  %s8 = ssub.s32 1, %s6
  %s9 = scalar_select 0, %s8, %s6
  %v10 = vstv %s4
  %11 = vst [vmem:[#allocation2] sm:$0x1] %v10
  $region1: #{tpu_custom_call.1} parent=0
    #allocation3 [shape = 'u8[655360]{0}', space=vmem, size = 0xa0000, scoped, tag = 'input window, operand 0, single buffered']
    #allocation4 [shape = 's32[1]{0}', space=sflag, size = 0x4, scoped, tag = 'scoped memory for tpu_custom_call.1']
    #allocation5 [shape = 'u8[1310720]{0}', space=vmem, size = 0x140000, scoped, tag = 'input window, operand 1, single buffered']
    #allocation6 [shape = 's32[1]{0}', space=sflag, size = 0x4, scoped, tag = 'scoped memory for tpu_custom_call.1']
    #allocation7 [shape = 'u8[1024]{0}', space=vmem, size = 0x400, scoped, tag = 'input window, operand 2, single buffered']
    #allocation8 [shape = 'u8[1024]{0}', space=vmem, size = 0x400, scoped, tag = 'input window, operand 3, single buffered']
    #allocation9 [shape = 's32[1]{0}', space=sflag, size = 0x4, scoped, tag = 'scoped memory for tpu_custom_call.1']
    %12 = vsyncpa [#allocation4], 0
    %13 = vsyncpa [#allocation6], 0
    %14 = vsyncpa [#allocation9], 0
    // Predicated region
    $region2: #{tpu_custom_call.1} parent=1 // pred_check
      _
    $region3: #{tpu_custom_call.1} parent=1 // pred_check_branch
      %16 = sbr.rel (0) target = $region5
    $region4: #{tpu_custom_call.1} parent=1 // pred_region
      %18 = vsyncadd [#allocation4], 0
      %s19 = sshll.u32 %s0, 4
      %s20 = int_to_ptr.hbm [resolvable:$true] %s19
      %s21 = sshll.u32 [#allocation3], 4
      %s22 = int_to_ptr.vmem [resolvable:$true] %s21
      %27 = dma.hbm_to_vmem [thread:$0]  %s20, 20480, %s22, [#allocation4], 1280, 1280, 80
    $region5: #{tpu_custom_call.1} parent=1 // pred_fallthru
      _
    // Predicated region
    $region6: #{tpu_custom_call.1} parent=1 // pred_check
      _
    $region7: #{tpu_custom_call.1} parent=1 // pred_check_branch
      %29 = sbr.rel (0) target = $region9
    $region8: #{tpu_custom_call.1} parent=1 // pred_region
      %31 = vsyncadd [#allocation6], 0
      %s32 = sshll.u32 %s1, 4
      %s33 = int_to_ptr.hbm [resolvable:$true] %s32
      %s34 = sshll.u32 [#allocation5], 4
      %s35 = int_to_ptr.vmem [resolvable:$true] %s34
      %40 = dma.hbm_to_vmem [thread:$0]  %s33, 40960, %s35, [#allocation6], 256, 256, 16
    $region9: #{tpu_custom_call.1} parent=1 // pred_fallthru
      _
    // Predicated region
    $region10: #{tpu_custom_call.1} parent=1 // pred_check
      _
    $region11: #{tpu_custom_call.1} parent=1 // pred_check_branch
      %42 = sbr.rel (0) target = $region13
    $region12: #{tpu_custom_call.1} parent=1 // pred_region
      %44 = vsyncadd [#allocation6], 0
      %s46 = sshll.u32 %s2, 4
      %s47 = int_to_ptr.hbm [resolvable:$true] %s46
      %s48 = sshll.u32 [#allocation7], 4
      %s49 = int_to_ptr.vmem [resolvable:$true] %s48
      %51 = dma.hbm_to_vmem [thread:$0]  %s47, 32, %s49, [#allocation6]
    $region13: #{tpu_custom_call.1} parent=1 // pred_fallthru
      _
    // Predicated region
    $region14: #{tpu_custom_call.1} parent=1 // pred_check
      _
    $region15: #{tpu_custom_call.1} parent=1 // pred_check_branch
      %53 = sbr.rel (0) target = $region17
    $region16: #{tpu_custom_call.1} parent=1 // pred_region
      %55 = vsyncadd [#allocation9], 0
      %s57 = sshll.u32 %s3, 4
      %s58 = int_to_ptr.hbm [resolvable:$true] %s57
      %s59 = sshll.u32 [#allocation8], 4
      %s60 = int_to_ptr.vmem [resolvable:$true] %s59
      %62 = dma.hbm_to_vmem [thread:$0]  %s58, 32, %s60, [#allocation9]
    $region17: #{tpu_custom_call.1} parent=1 // pred_fallthru
      _
    // Predicated region
    $region18: #{tpu_custom_call.1} parent=1 // pred_check
      _
    $region19: #{tpu_custom_call.1} parent=1 // pred_check_branch
      %64 = sbr.rel (0) target = $region21
    $region20: #{tpu_custom_call.1} parent=1 // pred_region
      _
    $region21: #{tpu_custom_call.1} parent=1 // pred_fallthru
      _
    // Predicated region
    $region22: #{tpu_custom_call.1} parent=1 // pred_check
      _
    $region23: #{tpu_custom_call.1} parent=1 // pred_check_branch
      %66 = sbr.rel (0) target = $region25
    $region24: #{tpu_custom_call.1} parent=1 // pred_region
      %68 = dma.done [#allocation4], 20480
    $region25: #{tpu_custom_call.1} parent=1 // pred_fallthru
      _
    // Predicated region
    $region26: #{tpu_custom_call.1} parent=1 // pred_check
      _
    $region27: #{tpu_custom_call.1} parent=1 // pred_check_branch
      %70 = sbr.rel (0) target = $region29
    $region28: #{tpu_custom_call.1} parent=1 // pred_region
      %72 = dma.done [#allocation6], 40960
    $region29: #{tpu_custom_call.1} parent=1 // pred_fallthru
      _
    // Predicated region
    $region30: #{tpu_custom_call.1} parent=1 // pred_check
      _
    $region31: #{tpu_custom_call.1} parent=1 // pred_check_branch
      %74 = sbr.rel (0) target = $region33
    $region32: #{tpu_custom_call.1} parent=1 // pred_region
      %76 = dma.done [#allocation6], 32
    $region33: #{tpu_custom_call.1} parent=1 // pred_fallthru
      _
    // Predicated region
    $region34: #{tpu_custom_call.1} parent=1 // pred_check
      _
    $region35: #{tpu_custom_call.1} parent=1 // pred_check_branch
      %78 = sbr.rel (0) target = $region37
    $region36: #{tpu_custom_call.1} parent=1 // pred_region
      %80 = dma.done [#allocation9], 32
    $region37: #{tpu_custom_call.1} parent=1 // pred_fallthru
      _
    loop: start=0, step=1, limit=4
    $region38: #{tpu_custom_call.1} parent=1 // loop_pre_header
      _
    $region39: #{tpu_custom_call.1} parent=1 // loop_header
      %s82 = sphi 0, %s86
      %p83 = scmp.ge.s32.totalorder %s82, 4
      %v87 = vphi 0.0, %v293
      %v88 = vphi 0.0, %v294
      %v89 = vphi 0.0, %v295
      %v90 = vphi 0.0, %v296
      %v91 = vphi 0.0, %v297
      %v92 = vphi 0.0, %v298
      %v93 = vphi 0.0, %v299
      %v94 = vphi 0.0, %v300
      %v95 = vphi 0.0, %v301
      %v96 = vphi 0.0, %v302
      %v97 = vphi 0.0, %v303
      %v98 = vphi 0.0, %v304
      %v99 = vphi 0.0, %v305
      %v100 = vphi 0.0, %v306
      %v101 = vphi 0.0, %v307
      %v102 = vphi 0.0, %v308
      %v103 = vphi 0.0, %v309
      %v104 = vphi 0.0, %v310
      %v105 = vphi 0.0, %v311
      %v106 = vphi 0.0, %v312
    $region40: #{tpu_custom_call.1} parent=1 // loop_header_branch
      %85 = sbr.rel (%p83) target = $region44
    $region41: #{tpu_custom_call.1} parent=1 // loop_body
      %s107 = smul.u32 %s82, 16
      %s108 = sshra.s32 %s107, 3
      %s109 = sand.u32 %s107, 7
      %s110 = smul.u32 %s108, 10
      %s111 = smul.addr %s110, 8
      %s112 = scalar_lea.vmem [#allocation3], %s111
      %v113 = vld [vmem:[%s112] sm:$0xff]
      %v114 = vld [vmem:[%s112 + $0x8] sm:$0xff]
      %v115 = vld [vmem:[%s112 + $0x10] sm:$0xff]
      %v116 = vld [vmem:[%s112 + $0x18] sm:$0xff]
      %v117 = vld [vmem:[%s112 + $0x20] sm:$0xff]
      %v118 = vld [vmem:[%s112 + $0x28] sm:$0xff]
      %v119 = vld [vmem:[%s112 + $0x30] sm:$0xff]
      %v120 = vld [vmem:[%s112 + $0x38] sm:$0xff]
      %v121 = vld [vmem:[%s112 + $0x40] sm:$0xff]
      %v122 = vld [vmem:[%s112 + $0x48] sm:$0xff]
      %v123 = vld [vmem:[%s112 + $0x50] sm:$0xff]
      %v124 = vld [vmem:[%s112 + $0x58] sm:$0xff]
      %v125 = vld [vmem:[%s112 + $0x60] sm:$0xff]
      %v126 = vld [vmem:[%s112 + $0x68] sm:$0xff]
      %v127 = vld [vmem:[%s112 + $0x70] sm:$0xff]
      %v128 = vld [vmem:[%s112 + $0x78] sm:$0xff]
      %v129 = vld [vmem:[%s112 + $0x80] sm:$0xff]
      %v130 = vld [vmem:[%s112 + $0x88] sm:$0xff]
      %v131 = vld [vmem:[%s112 + $0x90] sm:$0xff]
      %v132 = vld [vmem:[%s112 + $0x98] sm:$0xff]
      %v133 = vld [vmem:[%s112 + $0x280] sm:$0xff]
      %v134 = vld [vmem:[%s112 + $0x288] sm:$0xff]
      %v135 = vld [vmem:[%s112 + $0x290] sm:$0xff]
      %v136 = vld [vmem:[%s112 + $0x298] sm:$0xff]
      %v137 = vld [vmem:[%s112 + $0x2a0] sm:$0xff]
      %v138 = vld [vmem:[%s112 + $0x2a8] sm:$0xff]
      %v139 = vld [vmem:[%s112 + $0x2b0] sm:$0xff]
      %v140 = vld [vmem:[%s112 + $0x2b8] sm:$0xff]
      %v141 = vld [vmem:[%s112 + $0x2c0] sm:$0xff]
      %v142 = vld [vmem:[%s112 + $0x2c8] sm:$0xff]
      %v143 = vld [vmem:[%s112 + $0x2d0] sm:$0xff]
      %v144 = vld [vmem:[%s112 + $0x2d8] sm:$0xff]
      %v145 = vld [vmem:[%s112 + $0x2e0] sm:$0xff]
      %v146 = vld [vmem:[%s112 + $0x2e8] sm:$0xff]
      %v147 = vld [vmem:[%s112 + $0x2f0] sm:$0xff]
      %v148 = vld [vmem:[%s112 + $0x2f8] sm:$0xff]
      %v149 = vld [vmem:[%s112 + $0x300] sm:$0xff]
      %v150 = vld [vmem:[%s112 + $0x308] sm:$0xff]
      %v151 = vld [vmem:[%s112 + $0x310] sm:$0xff]
      %v152 = vld [vmem:[%s112 + $0x318] sm:$0xff]
      %v153 = vadd.f32 %v113, %v123
      %v154 = vrot.slane %v153, 4
      %v155 = vadd.f32 %v153, %v154
      %v156 = vrot.slane %v155, 2
      %v157 = vadd.f32 %v155, %v156
      %v158 = vrot.slane %v157, 1
      %v159 = vadd.f32 %v157, %v158
      %v160 = vadd.f32 %v114, %v124
      %v161 = vrot.slane %v160, 4
      %v162 = vadd.f32 %v160, %v161
      %v163 = vrot.slane %v162, 2
      %v164 = vadd.f32 %v162, %v163
      %v165 = vrot.slane %v164, 1
      %v166 = vadd.f32 %v164, %v165
      %v167 = vadd.f32 %v115, %v125
      %v168 = vrot.slane %v167, 4
      %v169 = vadd.f32 %v167, %v168
      %v170 = vrot.slane %v169, 2
      %v171 = vadd.f32 %v169, %v170
      %v172 = vrot.slane %v171, 1
      %v173 = vadd.f32 %v171, %v172
      %v174 = vadd.f32 %v116, %v126
      %v175 = vrot.slane %v174, 4
      %v176 = vadd.f32 %v174, %v175
      %v177 = vrot.slane %v176, 2
      %v178 = vadd.f32 %v176, %v177
      %v179 = vrot.slane %v178, 1
      %v180 = vadd.f32 %v178, %v179
      %v181 = vadd.f32 %v117, %v127
      %v182 = vrot.slane %v181, 4
      %v183 = vadd.f32 %v181, %v182
      %v184 = vrot.slane %v183, 2
      %v185 = vadd.f32 %v183, %v184
      %v186 = vrot.slane %v185, 1
      %v187 = vadd.f32 %v185, %v186
      %v188 = vadd.f32 %v118, %v128
      %v189 = vrot.slane %v188, 4
      %v190 = vadd.f32 %v188, %v189
      %v191 = vrot.slane %v190, 2
      %v192 = vadd.f32 %v190, %v191
      %v193 = vrot.slane %v192, 1
      %v194 = vadd.f32 %v192, %v193
      %v195 = vadd.f32 %v119, %v129
      %v196 = vrot.slane %v195, 4
      %v197 = vadd.f32 %v195, %v196
      %v198 = vrot.slane %v197, 2
      %v199 = vadd.f32 %v197, %v198
      %v200 = vrot.slane %v199, 1
      %v201 = vadd.f32 %v199, %v200
      %v202 = vadd.f32 %v120, %v130
      %v203 = vrot.slane %v202, 4
      %v204 = vadd.f32 %v202, %v203
      %v205 = vrot.slane %v204, 2
      %v206 = vadd.f32 %v204, %v205
      %v207 = vrot.slane %v206, 1
      %v208 = vadd.f32 %v206, %v207
      %v209 = vadd.f32 %v121, %v131
      %v210 = vrot.slane %v209, 4
      %v211 = vadd.f32 %v209, %v210
      %v212 = vrot.slane %v211, 2
      %v213 = vadd.f32 %v211, %v212
      %v214 = vrot.slane %v213, 1
      %v215 = vadd.f32 %v213, %v214
      %v216 = vadd.f32 %v122, %v132
      %v217 = vrot.slane %v216, 4
      %v218 = vadd.f32 %v216, %v217
      %v219 = vrot.slane %v218, 2
      %v220 = vadd.f32 %v218, %v219
      %v221 = vrot.slane %v220, 1
      %v222 = vadd.f32 %v220, %v221
      %v223 = vadd.f32 %v133, %v143
      %v224 = vrot.slane %v223, 4
      %v225 = vadd.f32 %v223, %v224
      %v226 = vrot.slane %v225, 2
      %v227 = vadd.f32 %v225, %v226
      %v228 = vrot.slane %v227, 1
      %v229 = vadd.f32 %v227, %v228
      %v230 = vadd.f32 %v134, %v144
      %v231 = vrot.slane %v230, 4
      %v232 = vadd.f32 %v230, %v231
      %v233 = vrot.slane %v232, 2
      %v234 = vadd.f32 %v232, %v233
      %v235 = vrot.slane %v234, 1
      %v236 = vadd.f32 %v234, %v235
      %v237 = vadd.f32 %v135, %v145
      %v238 = vrot.slane %v237, 4
      %v239 = vadd.f32 %v237, %v238
      %v240 = vrot.slane %v239, 2
      %v241 = vadd.f32 %v239, %v240
      %v242 = vrot.slane %v241, 1
      %v243 = vadd.f32 %v241, %v242
      %v244 = vadd.f32 %v136, %v146
      %v245 = vrot.slane %v244, 4
      %v246 = vadd.f32 %v244, %v245
      %v247 = vrot.slane %v246, 2
      %v248 = vadd.f32 %v246, %v247
      %v249 = vrot.slane %v248, 1
      %v250 = vadd.f32 %v248, %v249
      %v251 = vadd.f32 %v137, %v147
      %v252 = vrot.slane %v251, 4
      %v253 = vadd.f32 %v251, %v252
      %v254 = vrot.slane %v253, 2
      %v255 = vadd.f32 %v253, %v254
      %v256 = vrot.slane %v255, 1
      %v257 = vadd.f32 %v255, %v256
      %v258 = vadd.f32 %v138, %v148
      %v259 = vrot.slane %v258, 4
      %v260 = vadd.f32 %v258, %v259
      %v261 = vrot.slane %v260, 2
      %v262 = vadd.f32 %v260, %v261
      %v263 = vrot.slane %v262, 1
      %v264 = vadd.f32 %v262, %v263
      %v265 = vadd.f32 %v139, %v149
      %v266 = vrot.slane %v265, 4
      %v267 = vadd.f32 %v265, %v266
      %v268 = vrot.slane %v267, 2
      %v269 = vadd.f32 %v267, %v268
      %v270 = vrot.slane %v269, 1
      %v271 = vadd.f32 %v269, %v270
      %v272 = vadd.f32 %v140, %v150
      %v273 = vrot.slane %v272, 4
      %v274 = vadd.f32 %v272, %v273
      %v275 = vrot.slane %v274, 2
      %v276 = vadd.f32 %v274, %v275
      %v277 = vrot.slane %v276, 1
      %v278 = vadd.f32 %v276, %v277
      %v279 = vadd.f32 %v141, %v151
      %v280 = vrot.slane %v279, 4
      %v281 = vadd.f32 %v279, %v280
      %v282 = vrot.slane %v281, 2
      %v283 = vadd.f32 %v281, %v282
      %v284 = vrot.slane %v283, 1
      %v285 = vadd.f32 %v283, %v284
      %v286 = vadd.f32 %v142, %v152
      %v287 = vrot.slane %v286, 4
      %v288 = vadd.f32 %v286, %v287
      %v289 = vrot.slane %v288, 2
      %v290 = vadd.f32 %v288, %v289
      %v291 = vrot.slane %v290, 1
      %v292 = vadd.f32 %v290, %v291
      %v293 = vadd.f32 %v87, %v159
      %v294 = vadd.f32 %v88, %v166
      %v295 = vadd.f32 %v89, %v173
      %v296 = vadd.f32 %v90, %v180
      %v297 = vadd.f32 %v91, %v187
      %v298 = vadd.f32 %v92, %v194
      %v299 = vadd.f32 %v93, %v201
      %v300 = vadd.f32 %v94, %v208
      %v301 = vadd.f32 %v95, %v215
      %v302 = vadd.f32 %v96, %v222
      %v303 = vadd.f32 %v97, %v229
      %v304 = vadd.f32 %v98, %v236
      %v305 = vadd.f32 %v99, %v243
      %v306 = vadd.f32 %v100, %v250
      %v307 = vadd.f32 %v101, %v257
      %v308 = vadd.f32 %v102, %v264
      %v309 = vadd.f32 %v103, %v271
      %v310 = vadd.f32 %v104, %v278
      %v311 = vadd.f32 %v105, %v285
      %v312 = vadd.f32 %v106, %v292
    $region42: #{tpu_custom_call.1} parent=1 // loop_footer
      %s86 = sadd.s32 1, %s82
    $region43: #{tpu_custom_call.1} parent=1 // loop_footer_branch
      %81 = sbr.rel target = $region39
    $region44: #{tpu_custom_call.1} parent=1 // loop_exit
      _
    %v313 = vmul.f32 %v87, 0.015625
    %v314 = vmul.f32 %v88, 0.015625
    %v315 = vmul.f32 %v89, 0.015625
    %v316 = vmul.f32 %v90, 0.015625
    %v317 = vmul.f32 %v91, 0.015625
    %v318 = vmul.f32 %v92, 0.015625
    %v319 = vmul.f32 %v93, 0.015625
    %v320 = vmul.f32 %v94, 0.015625
    %v321 = vmul.f32 %v95, 0.015625
    %v322 = vmul.f32 %v96, 0.015625
    %v323 = vmul.f32 %v97, 0.015625
    %v324 = vmul.f32 %v98, 0.015625
    %v325 = vmul.f32 %v99, 0.015625
    %v326 = vmul.f32 %v100, 0.015625
    %v327 = vmul.f32 %v101, 0.015625
    %v328 = vmul.f32 %v102, 0.015625
    %v329 = vmul.f32 %v103, 0.015625
    %v330 = vmul.f32 %v104, 0.015625
    %v331 = vmul.f32 %v105, 0.015625
    %v332 = vmul.f32 %v106, 0.015625
    %v333 = vld [vmem:[#allocation5] sm:$0xff]
    %v334 = vld [vmem:[#allocation5 + $0x8] sm:$0xff]
    %v335 = vld [vmem:[#allocation5 + $0x10] sm:$0xff]
    %v336 = vld [vmem:[#allocation5 + $0x18] sm:$0xff]
    %v337 = vld [vmem:[#allocation5 + $0x20] sm:$0xff]
    %v338 = vld [vmem:[#allocation5 + $0x28] sm:$0xff]
    %v339 = vld [vmem:[#allocation5 + $0x30] sm:$0xff]
    %v340 = vld [vmem:[#allocation5 + $0x38] sm:$0xff]
    %v341 = vld [vmem:[#allocation5 + $0x40] sm:$0xff]
    %v342 = vld [vmem:[#allocation5 + $0x48] sm:$0xff]
    %v343 = vld [vmem:[#allocation5 + $0x50] sm:$0xff]
    %v344 = vld [vmem:[#allocation5 + $0x58] sm:$0xff]
    %v345 = vld [vmem:[#allocation5 + $0x60] sm:$0xff]
    %v346 = vld [vmem:[#allocation5 + $0x68] sm:$0xff]
    %v347 = vld [vmem:[#allocation5 + $0x70] sm:$0xff]
    %v348 = vld [vmem:[#allocation5 + $0x78] sm:$0xff]
    %v349 = vld [vmem:[#allocation5 + $0x80] sm:$0xff]
    %v350 = vld [vmem:[#allocation5 + $0x88] sm:$0xff]
    %v351 = vld [vmem:[#allocation5 + $0x90] sm:$0xff]
    %v352 = vld [vmem:[#allocation5 + $0x98] sm:$0xff]
    %v353 = vld [vmem:[#allocation5 + $0xa0] sm:$0xff]
    %v354 = vld [vmem:[#allocation5 + $0xa8] sm:$0xff]
    %v355 = vld [vmem:[#allocation5 + $0xb0] sm:$0xff]
    %v356 = vld [vmem:[#allocation5 + $0xb8] sm:$0xff]
    %v357 = vld [vmem:[#allocation5 + $0xc0] sm:$0xff]
    %v358 = vld [vmem:[#allocation5 + $0xc8] sm:$0xff]
    %v359 = vld [vmem:[#allocation5 + $0xd0] sm:$0xff]
    %v360 = vld [vmem:[#allocation5 + $0xd8] sm:$0xff]
    %v361 = vld [vmem:[#allocation5 + $0xe0] sm:$0xff]
    %v362 = vld [vmem:[#allocation5 + $0xe8] sm:$0xff]
    %v363 = vld [vmem:[#allocation5 + $0xf0] sm:$0xff]
    %v364 = vld [vmem:[#allocation5 + $0xf8] sm:$0xff]
    %v365 = vld [vmem:[#allocation5 + $0x100] sm:$0xff]
    %v366 = vld [vmem:[#allocation5 + $0x108] sm:$0xff]
    %v367 = vld [vmem:[#allocation5 + $0x110] sm:$0xff]
    %v368 = vld [vmem:[#allocation5 + $0x118] sm:$0xff]
    %v369 = vld [vmem:[#allocation5 + $0x120] sm:$0xff]
    %v370 = vld [vmem:[#allocation5 + $0x128] sm:$0xff]
    %v371 = vld [vmem:[#allocation5 + $0x130] sm:$0xff]
    %v372 = vld [vmem:[#allocation5 + $0x138] sm:$0xff]
    %v373 = vld [vmem:[#allocation5 + $0x140] sm:$0xff]
    %v374 = vld [vmem:[#allocation5 + $0x148] sm:$0xff]
    %v375 = vld [vmem:[#allocation5 + $0x150] sm:$0xff]
    %v376 = vld [vmem:[#allocation5 + $0x158] sm:$0xff]
    %v377 = vld [vmem:[#allocation5 + $0x160] sm:$0xff]
    %v378 = vld [vmem:[#allocation5 + $0x168] sm:$0xff]
    %v379 = vld [vmem:[#allocation5 + $0x170] sm:$0xff]
    %v380 = vld [vmem:[#allocation5 + $0x178] sm:$0xff]
    %v381 = vld [vmem:[#allocation5 + $0x180] sm:$0xff]
    %v382 = vld [vmem:[#allocation5 + $0x188] sm:$0xff]
    %v383 = vld [vmem:[#allocation5 + $0x190] sm:$0xff]
    %v384 = vld [vmem:[#allocation5 + $0x198] sm:$0xff]
    %v385 = vld [vmem:[#allocation5 + $0x1a0] sm:$0xff]
    %v386 = vld [vmem:[#allocation5 + $0x1a8] sm:$0xff]
    %v387 = vld [vmem:[#allocation5 + $0x1b0] sm:$0xff]
    %v388 = vld [vmem:[#allocation5 + $0x1b8] sm:$0xff]
    %v389 = vld [vmem:[#allocation5 + $0x1c0] sm:$0xff]
    %v390 = vld [vmem:[#allocation5 + $0x1c8] sm:$0xff]
    %v391 = vld [vmem:[#allocation5 + $0x1d0] sm:$0xff]
    %v392 = vld [vmem:[#allocation5 + $0x1d8] sm:$0xff]
    %v393 = vld [vmem:[#allocation5 + $0x1e0] sm:$0xff]
    %v394 = vld [vmem:[#allocation5 + $0x1e8] sm:$0xff]
    %v395 = vld [vmem:[#allocation5 + $0x1f0] sm:$0xff]
    %v396 = vld [vmem:[#allocation5 + $0x1f8] sm:$0xff]
    %v397 = vld [vmem:[#allocation5 + $0x200] sm:$0xff]
    %v398 = vld [vmem:[#allocation5 + $0x208] sm:$0xff]
    %v399 = vld [vmem:[#allocation5 + $0x210] sm:$0xff]
    %v400 = vld [vmem:[#allocation5 + $0x218] sm:$0xff]
    %v401 = vld [vmem:[#allocation5 + $0x220] sm:$0xff]
    %v402 = vld [vmem:[#allocation5 + $0x228] sm:$0xff]
    %v403 = vld [vmem:[#allocation5 + $0x230] sm:$0xff]
    %v404 = vld [vmem:[#allocation5 + $0x238] sm:$0xff]
    %v405 = vld [vmem:[#allocation5 + $0x240] sm:$0xff]
    %v406 = vld [vmem:[#allocation5 + $0x248] sm:$0xff]
    %v407 = vld [vmem:[#allocation5 + $0x250] sm:$0xff]
    %v408 = vld [vmem:[#allocation5 + $0x258] sm:$0xff]
    %v409 = vld [vmem:[#allocation5 + $0x260] sm:$0xff]
    %v410 = vld [vmem:[#allocation5 + $0x268] sm:$0xff]
    %v411 = vld [vmem:[#allocation5 + $0x270] sm:$0xff]
    %v412 = vld [vmem:[#allocation5 + $0x278] sm:$0xff]
    %v413 = vld [vmem:[#allocation5 + $0x280] sm:$0xff]
    %v414 = vld [vmem:[#allocation5 + $0x288] sm:$0xff]
    %v415 = vld [vmem:[#allocation5 + $0x290] sm:$0xff]
    %v416 = vld [vmem:[#allocation5 + $0x298] sm:$0xff]
    %v417 = vld [vmem:[#allocation5 + $0x2a0] sm:$0xff]
    %v418 = vld [vmem:[#allocation5 + $0x2a8] sm:$0xff]
    %v419 = vld [vmem:[#allocation5 + $0x2b0] sm:$0xff]
    %v420 = vld [vmem:[#allocation5 + $0x2b8] sm:$0xff]
    %v421 = vld [vmem:[#allocation5 + $0x2c0] sm:$0xff]
    %v422 = vld [vmem:[#allocation5 + $0x2c8] sm:$0xff]
    %v423 = vld [vmem:[#allocation5 + $0x2d0] sm:$0xff]
    %v424 = vld [vmem:[#allocation5 + $0x2d8] sm:$0xff]
    %v425 = vld [vmem:[#allocation5 + $0x2e0] sm:$0xff]
    %v426 = vld [vmem:[#allocation5 + $0x2e8] sm:$0xff]
    %v427 = vld [vmem:[#allocation5 + $0x2f0] sm:$0xff]
    %v428 = vld [vmem:[#allocation5 + $0x2f8] sm:$0xff]
    %v429 = vld [vmem:[#allocation5 + $0x300] sm:$0xff]
    %v430 = vld [vmem:[#allocation5 + $0x308] sm:$0xff]
    %v431 = vld [vmem:[#allocation5 + $0x310] sm:$0xff]
    %v432 = vld [vmem:[#allocation5 + $0x318] sm:$0xff]
    %v433 = vld [vmem:[#allocation5 + $0x320] sm:$0xff]
    %v434 = vld [vmem:[#allocation5 + $0x328] sm:$0xff]
    %v435 = vld [vmem:[#allocation5 + $0x330] sm:$0xff]
    %v436 = vld [vmem:[#allocation5 + $0x338] sm:$0xff]
    %v437 = vld [vmem:[#allocation5 + $0x340] sm:$0xff]
    %v438 = vld [vmem:[#allocation5 + $0x348] sm:$0xff]
    %v439 = vld [vmem:[#allocation5 + $0x350] sm:$0xff]
    %v440 = vld [vmem:[#allocation5 + $0x358] sm:$0xff]
    %v441 = vld [vmem:[#allocation5 + $0x360] sm:$0xff]
    %v442 = vld [vmem:[#allocation5 + $0x368] sm:$0xff]
    %v443 = vld [vmem:[#allocation5 + $0x370] sm:$0xff]
    %v444 = vld [vmem:[#allocation5 + $0x378] sm:$0xff]
    %v445 = vld [vmem:[#allocation5 + $0x380] sm:$0xff]
    %v446 = vld [vmem:[#allocation5 + $0x388] sm:$0xff]
    %v447 = vld [vmem:[#allocation5 + $0x390] sm:$0xff]
    %v448 = vld [vmem:[#allocation5 + $0x398] sm:$0xff]
    %v449 = vld [vmem:[#allocation5 + $0x3a0] sm:$0xff]
    %v450 = vld [vmem:[#allocation5 + $0x3a8] sm:$0xff]
    %v451 = vld [vmem:[#allocation5 + $0x3b0] sm:$0xff]
    %v452 = vld [vmem:[#allocation5 + $0x3b8] sm:$0xff]
    %v453 = vld [vmem:[#allocation5 + $0x3c0] sm:$0xff]
    %v454 = vld [vmem:[#allocation5 + $0x3c8] sm:$0xff]
    %v455 = vld [vmem:[#allocation5 + $0x3d0] sm:$0xff]
    %v456 = vld [vmem:[#allocation5 + $0x3d8] sm:$0xff]
    %v457 = vld [vmem:[#allocation5 + $0x3e0] sm:$0xff]
    %v458 = vld [vmem:[#allocation5 + $0x3e8] sm:$0xff]
    %v459 = vld [vmem:[#allocation5 + $0x3f0] sm:$0xff]
    %v460 = vld [vmem:[#allocation5 + $0x3f8] sm:$0xff]
    %v461 = vld [vmem:[#allocation5 + $0x400] sm:$0xff]
    %v462 = vld [vmem:[#allocation5 + $0x408] sm:$0xff]
    %v463 = vld [vmem:[#allocation5 + $0x410] sm:$0xff]
    %v464 = vld [vmem:[#allocation5 + $0x418] sm:$0xff]
    %v465 = vld [vmem:[#allocation5 + $0x420] sm:$0xff]
    %v466 = vld [vmem:[#allocation5 + $0x428] sm:$0xff]
    %v467 = vld [vmem:[#allocation5 + $0x430] sm:$0xff]
    %v468 = vld [vmem:[#allocation5 + $0x438] sm:$0xff]
    %v469 = vld [vmem:[#allocation5 + $0x440] sm:$0xff]
    %v470 = vld [vmem:[#allocation5 + $0x448] sm:$0xff]
    %v471 = vld [vmem:[#allocation5 + $0x450] sm:$0xff]
    %v472 = vld [vmem:[#allocation5 + $0x458] sm:$0xff]
    %v473 = vld [vmem:[#allocation5 + $0x460] sm:$0xff]
    %v474 = vld [vmem:[#allocation5 + $0x468] sm:$0xff]
    %v475 = vld [vmem:[#allocation5 + $0x470] sm:$0xff]
    %v476 = vld [vmem:[#allocation5 + $0x478] sm:$0xff]
    %v477 = vld [vmem:[#allocation5 + $0x480] sm:$0xff]
    %v478 = vld [vmem:[#allocation5 + $0x488] sm:$0xff]
    %v479 = vld [vmem:[#allocation5 + $0x490] sm:$0xff]
    %v480 = vld [vmem:[#allocation5 + $0x498] sm:$0xff]
    %v481 = vld [vmem:[#allocation5 + $0x4a0] sm:$0xff]
    %v482 = vld [vmem:[#allocation5 + $0x4a8] sm:$0xff]
    %v483 = vld [vmem:[#allocation5 + $0x4b0] sm:$0xff]
    %v484 = vld [vmem:[#allocation5 + $0x4b8] sm:$0xff]
    %v485 = vld [vmem:[#allocation5 + $0x4c0] sm:$0xff]
    %v486 = vld [vmem:[#allocation5 + $0x4c8] sm:$0xff]
    %v487 = vld [vmem:[#allocation5 + $0x4d0] sm:$0xff]
    %v488 = vld [vmem:[#allocation5 + $0x4d8] sm:$0xff]
    %v489 = vld [vmem:[#allocation5 + $0x4e0] sm:$0xff]
    %v490 = vld [vmem:[#allocation5 + $0x4e8] sm:$0xff]
    %v491 = vld [vmem:[#allocation5 + $0x4f0] sm:$0xff]
    %v492 = vld [vmem:[#allocation5 + $0x4f8] sm:$0xff]
    %v493 = vld [vmem:[#allocation5 + $0x500] sm:$0xff]
    %v494 = vld [vmem:[#allocation5 + $0x508] sm:$0xff]
    %v495 = vld [vmem:[#allocation5 + $0x510] sm:$0xff]
    %v496 = vld [vmem:[#allocation5 + $0x518] sm:$0xff]
    %v497 = vld [vmem:[#allocation5 + $0x520] sm:$0xff]
    %v498 = vld [vmem:[#allocation5 + $0x528] sm:$0xff]
    %v499 = vld [vmem:[#allocation5 + $0x530] sm:$0xff]
    %v500 = vld [vmem:[#allocation5 + $0x538] sm:$0xff]
    %v501 = vld [vmem:[#allocation5 + $0x540] sm:$0xff]
    %v502 = vld [vmem:[#allocation5 + $0x548] sm:$0xff]
    %v503 = vld [vmem:[#allocation5 + $0x550] sm:$0xff]
    %v504 = vld [vmem:[#allocation5 + $0x558] sm:$0xff]
    %v505 = vld [vmem:[#allocation5 + $0x560] sm:$0xff]
    %v506 = vld [vmem:[#allocation5 + $0x568] sm:$0xff]
    %v507 = vld [vmem:[#allocation5 + $0x570] sm:$0xff]
    %v508 = vld [vmem:[#allocation5 + $0x578] sm:$0xff]
    %v509 = vld [vmem:[#allocation5 + $0x580] sm:$0xff]
    %v510 = vld [vmem:[#allocation5 + $0x588] sm:$0xff]
    %v511 = vld [vmem:[#allocation5 + $0x590] sm:$0xff]
    %v512 = vld [vmem:[#allocation5 + $0x598] sm:$0xff]
    %v513 = vld [vmem:[#allocation5 + $0x5a0] sm:$0xff]
    %v514 = vld [vmem:[#allocation5 + $0x5a8] sm:$0xff]
    %v515 = vld [vmem:[#allocation5 + $0x5b0] sm:$0xff]
    %v516 = vld [vmem:[#allocation5 + $0x5b8] sm:$0xff]
    %v517 = vld [vmem:[#allocation5 + $0x5c0] sm:$0xff]
    %v518 = vld [vmem:[#allocation5 + $0x5c8] sm:$0xff]
    %v519 = vld [vmem:[#allocation5 + $0x5d0] sm:$0xff]
    %v520 = vld [vmem:[#allocation5 + $0x5d8] sm:$0xff]
    %v521 = vld [vmem:[#allocation5 + $0x5e0] sm:$0xff]
    %v522 = vld [vmem:[#allocation5 + $0x5e8] sm:$0xff]
    %v523 = vld [vmem:[#allocation5 + $0x5f0] sm:$0xff]
    %v524 = vld [vmem:[#allocation5 + $0x5f8] sm:$0xff]
    %v525 = vld [vmem:[#allocation5 + $0x600] sm:$0xff]
    %v526 = vld [vmem:[#allocation5 + $0x608] sm:$0xff]
    %v527 = vld [vmem:[#allocation5 + $0x610] sm:$0xff]
    %v528 = vld [vmem:[#allocation5 + $0x618] sm:$0xff]
    %v529 = vld [vmem:[#allocation5 + $0x620] sm:$0xff]
    %v530 = vld [vmem:[#allocation5 + $0x628] sm:$0xff]
    %v531 = vld [vmem:[#allocation5 + $0x630] sm:$0xff]
    %v532 = vld [vmem:[#allocation5 + $0x638] sm:$0xff]
    %v533 = vld [vmem:[#allocation5 + $0x640] sm:$0xff]
    %v534 = vld [vmem:[#allocation5 + $0x648] sm:$0xff]
    %v535 = vld [vmem:[#allocation5 + $0x650] sm:$0xff]
    %v536 = vld [vmem:[#allocation5 + $0x658] sm:$0xff]
    %v537 = vld [vmem:[#allocation5 + $0x660] sm:$0xff]
    %v538 = vld [vmem:[#allocation5 + $0x668] sm:$0xff]
    %v539 = vld [vmem:[#allocation5 + $0x670] sm:$0xff]
    %v540 = vld [vmem:[#allocation5 + $0x678] sm:$0xff]
    %v541 = vld [vmem:[#allocation5 + $0x680] sm:$0xff]
    %v542 = vld [vmem:[#allocation5 + $0x688] sm:$0xff]
    %v543 = vld [vmem:[#allocation5 + $0x690] sm:$0xff]
    %v544 = vld [vmem:[#allocation5 + $0x698] sm:$0xff]
    %v545 = vld [vmem:[#allocation5 + $0x6a0] sm:$0xff]
    %v546 = vld [vmem:[#allocation5 + $0x6a8] sm:$0xff]
    %v547 = vld [vmem:[#allocation5 + $0x6b0] sm:$0xff]
    %v548 = vld [vmem:[#allocation5 + $0x6b8] sm:$0xff]
    %v549 = vld [vmem:[#allocation5 + $0x6c0] sm:$0xff]
    %v550 = vld [vmem:[#allocation5 + $0x6c8] sm:$0xff]
    %v551 = vld [vmem:[#allocation5 + $0x6d0] sm:$0xff]
    %v552 = vld [vmem:[#allocation5 + $0x6d8] sm:$0xff]
    %v553 = vld [vmem:[#allocation5 + $0x6e0] sm:$0xff]
    %v554 = vld [vmem:[#allocation5 + $0x6e8] sm:$0xff]
    %v555 = vld [vmem:[#allocation5 + $0x6f0] sm:$0xff]
    %v556 = vld [vmem:[#allocation5 + $0x6f8] sm:$0xff]
    %v557 = vld [vmem:[#allocation5 + $0x700] sm:$0xff]
    %v558 = vld [vmem:[#allocation5 + $0x708] sm:$0xff]
    %v559 = vld [vmem:[#allocation5 + $0x710] sm:$0xff]
    %v560 = vld [vmem:[#allocation5 + $0x718] sm:$0xff]
    %v561 = vld [vmem:[#allocation5 + $0x720] sm:$0xff]
    %v562 = vld [vmem:[#allocation5 + $0x728] sm:$0xff]
    %v563 = vld [vmem:[#allocation5 + $0x730] sm:$0xff]
    %v564 = vld [vmem:[#allocation5 + $0x738] sm:$0xff]
    %v565 = vld [vmem:[#allocation5 + $0x740] sm:$0xff]
    %v566 = vld [vmem:[#allocation5 + $0x748] sm:$0xff]
    %v567 = vld [vmem:[#allocation5 + $0x750] sm:$0xff]
    %v568 = vld [vmem:[#allocation5 + $0x758] sm:$0xff]
    %v569 = vld [vmem:[#allocation5 + $0x760] sm:$0xff]
    %v570 = vld [vmem:[#allocation5 + $0x768] sm:$0xff]
    %v571 = vld [vmem:[#allocation5 + $0x770] sm:$0xff]
    %v572 = vld [vmem:[#allocation5 + $0x778] sm:$0xff]
    %v573 = vld [vmem:[#allocation5 + $0x780] sm:$0xff]
    %v574 = vld [vmem:[#allocation5 + $0x788] sm:$0xff]
    %v575 = vld [vmem:[#allocation5 + $0x790] sm:$0xff]
    %v576 = vld [vmem:[#allocation5 + $0x798] sm:$0xff]
    %v577 = vld [vmem:[#allocation5 + $0x7a0] sm:$0xff]
    %v578 = vld [vmem:[#allocation5 + $0x7a8] sm:$0xff]
    %v579 = vld [vmem:[#allocation5 + $0x7b0] sm:$0xff]
    %v580 = vld [vmem:[#allocation5 + $0x7b8] sm:$0xff]
    %v581 = vld [vmem:[#allocation5 + $0x7c0] sm:$0xff]
    %v582 = vld [vmem:[#allocation5 + $0x7c8] sm:$0xff]
    %v583 = vld [vmem:[#allocation5 + $0x7d0] sm:$0xff]
    %v584 = vld [vmem:[#allocation5 + $0x7d8] sm:$0xff]
    %v585 = vld [vmem:[#allocation5 + $0x7e0] sm:$0xff]
    %v586 = vld [vmem:[#allocation5 + $0x7e8] sm:$0xff]
    %v587 = vld [vmem:[#allocation5 + $0x7f0] sm:$0xff]
    %v588 = vld [vmem:[#allocation5 + $0x7f8] sm:$0xff]
    %v589 = vld [vmem:[#allocation5 + $0x800] sm:$0xff]
    %v590 = vld [vmem:[#allocation5 + $0x808] sm:$0xff]
    %v591 = vld [vmem:[#allocation5 + $0x810] sm:$0xff]
    %v592 = vld [vmem:[#allocation5 + $0x818] sm:$0xff]
    %v593 = vld [vmem:[#allocation5 + $0x820] sm:$0xff]
    %v594 = vld [vmem:[#allocation5 + $0x828] sm:$0xff]
    %v595 = vld [vmem:[#allocation5 + $0x830] sm:$0xff]
    %v596 = vld [vmem:[#allocation5 + $0x838] sm:$0xff]
    %v597 = vld [vmem:[#allocation5 + $0x840] sm:$0xff]
    %v598 = vld [vmem:[#allocation5 + $0x848] sm:$0xff]
    %v599 = vld [vmem:[#allocation5 + $0x850] sm:$0xff]
    %v600 = vld [vmem:[#allocation5 + $0x858] sm:$0xff]
    %v601 = vld [vmem:[#allocation5 + $0x860] sm:$0xff]
    %v602 = vld [vmem:[#allocation5 + $0x868] sm:$0xff]
    %v603 = vld [vmem:[#allocation5 + $0x870] sm:$0xff]
    %v604 = vld [vmem:[#allocation5 + $0x878] sm:$0xff]
    %v605 = vld [vmem:[#allocation5 + $0x880] sm:$0xff]
    %v606 = vld [vmem:[#allocation5 + $0x888] sm:$0xff]
    %v607 = vld [vmem:[#allocation5 + $0x890] sm:$0xff]
    %v608 = vld [vmem:[#allocation5 + $0x898] sm:$0xff]
    %v609 = vld [vmem:[#allocation5 + $0x8a0] sm:$0xff]
    %v610 = vld [vmem:[#allocation5 + $0x8a8] sm:$0xff]
    %v611 = vld [vmem:[#allocation5 + $0x8b0] sm:$0xff]
    %v612 = vld [vmem:[#allocation5 + $0x8b8] sm:$0xff]
    %v613 = vld [vmem:[#allocation5 + $0x8c0] sm:$0xff]
    %v614 = vld [vmem:[#allocation5 + $0x8c8] sm:$0xff]
    %v615 = vld [vmem:[#allocation5 + $0x8d0] sm:$0xff]
    %v616 = vld [vmem:[#allocation5 + $0x8d8] sm:$0xff]
    %v617 = vld [vmem:[#allocation5 + $0x8e0] sm:$0xff]
    %v618 = vld [vmem:[#allocation5 + $0x8e8] sm:$0xff]
    %v619 = vld [vmem:[#allocation5 + $0x8f0] sm:$0xff]
    %v620 = vld [vmem:[#allocation5 + $0x8f8] sm:$0xff]
    %v621 = vld [vmem:[#allocation5 + $0x900] sm:$0xff]
    %v622 = vld [vmem:[#allocation5 + $0x908] sm:$0xff]
    %v623 = vld [vmem:[#allocation5 + $0x910] sm:$0xff]
    %v624 = vld [vmem:[#allocation5 + $0x918] sm:$0xff]
    %v625 = vld [vmem:[#allocation5 + $0x920] sm:$0xff]
    %v626 = vld [vmem:[#allocation5 + $0x928] sm:$0xff]
    %v627 = vld [vmem:[#allocation5 + $0x930] sm:$0xff]
    %v628 = vld [vmem:[#allocation5 + $0x938] sm:$0xff]
    %v629 = vld [vmem:[#allocation5 + $0x940] sm:$0xff]
    %v630 = vld [vmem:[#allocation5 + $0x948] sm:$0xff]
    %v631 = vld [vmem:[#allocation5 + $0x950] sm:$0xff]
    %v632 = vld [vmem:[#allocation5 + $0x958] sm:$0xff]
    %v633 = vld [vmem:[#allocation5 + $0x960] sm:$0xff]
    %v634 = vld [vmem:[#allocation5 + $0x968] sm:$0xff]
    %v635 = vld [vmem:[#allocation5 + $0x970] sm:$0xff]
    %v636 = vld [vmem:[#allocation5 + $0x978] sm:$0xff]
    %v637 = vld [vmem:[#allocation5 + $0x980] sm:$0xff]
    %v638 = vld [vmem:[#allocation5 + $0x988] sm:$0xff]
    %v639 = vld [vmem:[#allocation5 + $0x990] sm:$0xff]
    %v640 = vld [vmem:[#allocation5 + $0x998] sm:$0xff]
    %v641 = vld [vmem:[#allocation5 + $0x9a0] sm:$0xff]
    %v642 = vld [vmem:[#allocation5 + $0x9a8] sm:$0xff]
    %v643 = vld [vmem:[#allocation5 + $0x9b0] sm:$0xff]
    %v644 = vld [vmem:[#allocation5 + $0x9b8] sm:$0xff]
    %v645 = vld [vmem:[#allocation5 + $0x9c0] sm:$0xff]
    %v646 = vld [vmem:[#allocation5 + $0x9c8] sm:$0xff]
    %v647 = vld [vmem:[#allocation5 + $0x9d0] sm:$0xff]
    %v648 = vld [vmem:[#allocation5 + $0x9d8] sm:$0xff]
    %v649 = vld [vmem:[#allocation5 + $0x9e0] sm:$0xff]
    %v650 = vld [vmem:[#allocation5 + $0x9e8] sm:$0xff]
    %v651 = vld [vmem:[#allocation5 + $0x9f0] sm:$0xff]
    %v652 = vld [vmem:[#allocation5 + $0x9f8] sm:$0xff]
    %v653 = vld [vmem:[#allocation7] sm:$0x3]
    %v655 = vperm.slane %v653, 0
    %v656 = vperm.slane %v653, 1
    %vm679 = vcmask 1041409
    %v680 = vsel %vm679, %v323, %v313
    %v681 = vsel %vm679, %v324, %v314
    %v682 = vsel %vm679, %v325, %v315
    %v683 = vsel %vm679, %v326, %v316
    %v684 = vsel %vm679, %v327, %v317
    %v685 = vsel %vm679, %v328, %v318
    %v686 = vsel %vm679, %v329, %v319
    %v687 = vsel %vm679, %v330, %v320
    %v688 = vsel %vm679, %v331, %v321
    %v689 = vsel %vm679, %v332, %v322
    %v700 = vand.u32 %v363, 4294901760
    %701 = vmatpush.msra.mxu0 %v700
    %v702 = vand.u32 %v361, 4294901760
    %703 = vmatpush.msra.mxu0 %v702
    %v704 = vand.u32 %v359, 4294901760
    %705 = vmatpush.msra.mxu0 %v704
    %v706 = vand.u32 %v357, 4294901760
    %707 = vmatpush.msra.mxu0 %v706
    %v708 = vand.u32 %v355, 4294901760
    %709 = vmatpush.msra.mxu0 %v708
    %v710 = vand.u32 %v353, 4294901760
    %711 = vmatpush.msra.mxu0 %v710
    %v712 = vand.u32 %v351, 4294901760
    %713 = vmatpush.msra.mxu0 %v712
    %v714 = vand.u32 %v349, 4294901760
    %715 = vmatpush.msra.mxu0 %v714
    %v716 = vand.u32 %v347, 4294901760
    %717 = vmatpush.msra.mxu0 %v716
    %v718 = vand.u32 %v345, 4294901760
    %719 = vmatpush.msra.mxu0 %v718
    %v720 = vand.u32 %v343, 4294901760
    %721 = vmatpush.msra.mxu0 %v720
    %v722 = vand.u32 %v341, 4294901760
    %723 = vmatpush.msra.mxu0 %v722
    %v724 = vand.u32 %v339, 4294901760
    %725 = vmatpush.msra.mxu0 %v724
    %v726 = vand.u32 %v337, 4294901760
    %727 = vmatpush.msra.mxu0 %v726
    %v728 = vand.u32 %v335, 4294901760
    %729 = vmatpush.msra.mxu0 %v728
    %v730 = vand.u32 %v333, 4294901760
    %731 = vmatpush.msra.mxu0 %v730
    %v732 = vand.u32 %v680, 4294901760
    %v733 = vsub.f32 %v680, %v732
    %v734 = vand.u32 %v733, 4294901760
    %v735 = vsub.f32 %v733, %v734
    %v736 = vand.u32 %v735, 4294901760
    %737 = vmatmul.f32.gmra.mxu0 %v736
    %v738 = vpop.f32.mrf.mxu0
    %v739 = vadd.f32 %v655, %v738
    %740 = vdwg.mxu0
    %v741 = vand.u32 %v363, 4294901760
    %v742 = vsub.f32 %v363, %v741
    %v743 = vand.u32 %v742, 4294901760
    %v744 = vsub.f32 %v742, %v743
    %v745 = vand.u32 %v744, 4294901760
    %746 = vmatpush.msra.mxu0 %v745
    %v747 = vand.u32 %v361, 4294901760
    %v748 = vsub.f32 %v361, %v747
    %v749 = vand.u32 %v748, 4294901760
    %v750 = vsub.f32 %v748, %v749
    %v751 = vand.u32 %v750, 4294901760
    %752 = vmatpush.msra.mxu0 %v751
    %v753 = vand.u32 %v359, 4294901760
    %v754 = vsub.f32 %v359, %v753
    %v755 = vand.u32 %v754, 4294901760
    %v756 = vsub.f32 %v754, %v755
    %v757 = vand.u32 %v756, 4294901760
    %758 = vmatpush.msra.mxu0 %v757
    %v759 = vand.u32 %v357, 4294901760
    %v760 = vsub.f32 %v357, %v759
    %v761 = vand.u32 %v760, 4294901760
    %v762 = vsub.f32 %v760, %v761
    %v763 = vand.u32 %v762, 4294901760
    %764 = vmatpush.msra.mxu0 %v763
    %v765 = vand.u32 %v355, 4294901760
    %v766 = vsub.f32 %v355, %v765
    %v767 = vand.u32 %v766, 4294901760
    %v768 = vsub.f32 %v766, %v767
    %v769 = vand.u32 %v768, 4294901760
    %770 = vmatpush.msra.mxu0 %v769
    %v771 = vand.u32 %v353, 4294901760
    %v772 = vsub.f32 %v353, %v771
    %v773 = vand.u32 %v772, 4294901760
    %v774 = vsub.f32 %v772, %v773
    %v775 = vand.u32 %v774, 4294901760
    %776 = vmatpush.msra.mxu0 %v775
    %v777 = vand.u32 %v351, 4294901760
    %v778 = vsub.f32 %v351, %v777
    %v779 = vand.u32 %v778, 4294901760
    %v780 = vsub.f32 %v778, %v779
    %v781 = vand.u32 %v780, 4294901760
    %782 = vmatpush.msra.mxu0 %v781
    %v783 = vand.u32 %v349, 4294901760
    %v784 = vsub.f32 %v349, %v783
    %v785 = vand.u32 %v784, 4294901760
    %v786 = vsub.f32 %v784, %v785
    %v787 = vand.u32 %v786, 4294901760
    %788 = vmatpush.msra.mxu0 %v787
    %v789 = vand.u32 %v347, 4294901760
    %v790 = vsub.f32 %v347, %v789
    %v791 = vand.u32 %v790, 4294901760
    %v792 = vsub.f32 %v790, %v791
    %v793 = vand.u32 %v792, 4294901760
    %794 = vmatpush.msra.mxu0 %v793
    %v795 = vand.u32 %v345, 4294901760
    %v796 = vsub.f32 %v345, %v795
    %v797 = vand.u32 %v796, 4294901760
    %v798 = vsub.f32 %v796, %v797
    %v799 = vand.u32 %v798, 4294901760
    %800 = vmatpush.msra.mxu0 %v799
    %v801 = vand.u32 %v343, 4294901760
    %v802 = vsub.f32 %v343, %v801
    %v803 = vand.u32 %v802, 4294901760
    %v804 = vsub.f32 %v802, %v803
    %v805 = vand.u32 %v804, 4294901760
    %806 = vmatpush.msra.mxu0 %v805
    %v807 = vand.u32 %v341, 4294901760
    %v808 = vsub.f32 %v341, %v807
    %v809 = vand.u32 %v808, 4294901760
    %v810 = vsub.f32 %v808, %v809
    %v811 = vand.u32 %v810, 4294901760
    %812 = vmatpush.msra.mxu0 %v811
    %v813 = vand.u32 %v339, 4294901760
    %v814 = vsub.f32 %v339, %v813
    %v815 = vand.u32 %v814, 4294901760
    %v816 = vsub.f32 %v814, %v815
    %v817 = vand.u32 %v816, 4294901760
    %818 = vmatpush.msra.mxu0 %v817
    %v819 = vand.u32 %v337, 4294901760
    %v820 = vsub.f32 %v337, %v819
    %v821 = vand.u32 %v820, 4294901760
    %v822 = vsub.f32 %v820, %v821
    %v823 = vand.u32 %v822, 4294901760
    %824 = vmatpush.msra.mxu0 %v823
    %v825 = vand.u32 %v335, 4294901760
    %v826 = vsub.f32 %v335, %v825
    %v827 = vand.u32 %v826, 4294901760
    %v828 = vsub.f32 %v826, %v827
    %v829 = vand.u32 %v828, 4294901760
    %830 = vmatpush.msra.mxu0 %v829
    %v831 = vand.u32 %v333, 4294901760
    %v832 = vsub.f32 %v333, %v831
    %v833 = vand.u32 %v832, 4294901760
    %v834 = vsub.f32 %v832, %v833
    %v835 = vand.u32 %v834, 4294901760
    %836 = vmatpush.msra.mxu0 %v835
    %v837 = vand.u32 %v680, 4294901760
    %838 = vmatmul.f32.gmra.mxu0 %v837
    %v839 = vpop.f32.mrf.mxu0
    %v840 = vadd.f32 %v739, %v839
    %841 = vdwg.mxu0
    %v842 = vand.u32 %v363, 4294901760
    %v843 = vsub.f32 %v363, %v842
    %844 = vmatpush.msra.mxu0 %v843
    %v845 = vand.u32 %v361, 4294901760
    %v846 = vsub.f32 %v361, %v845
    %847 = vmatpush.msra.mxu0 %v846
    %v848 = vand.u32 %v359, 4294901760
    %v849 = vsub.f32 %v359, %v848
    %850 = vmatpush.msra.mxu0 %v849
    %v851 = vand.u32 %v357, 4294901760
    %v852 = vsub.f32 %v357, %v851
    %853 = vmatpush.msra.mxu0 %v852
    %v854 = vand.u32 %v355, 4294901760
    %v855 = vsub.f32 %v355, %v854
    %856 = vmatpush.msra.mxu0 %v855
    %v857 = vand.u32 %v353, 4294901760
    %v858 = vsub.f32 %v353, %v857
    %859 = vmatpush.msra.mxu0 %v858
    %v860 = vand.u32 %v351, 4294901760
    %v861 = vsub.f32 %v351, %v860
    %862 = vmatpush.msra.mxu0 %v861
    %v863 = vand.u32 %v349, 4294901760
    %v864 = vsub.f32 %v349, %v863
    %865 = vmatpush.msra.mxu0 %v864
    %v866 = vand.u32 %v347, 4294901760
    %v867 = vsub.f32 %v347, %v866
    %868 = vmatpush.msra.mxu0 %v867
    %v869 = vand.u32 %v345, 4294901760
    %v870 = vsub.f32 %v345, %v869
    %871 = vmatpush.msra.mxu0 %v870
    %v872 = vand.u32 %v343, 4294901760
    %v873 = vsub.f32 %v343, %v872
    %874 = vmatpush.msra.mxu0 %v873
    %v875 = vand.u32 %v341, 4294901760
    %v876 = vsub.f32 %v341, %v875
    %877 = vmatpush.msra.mxu0 %v876
    %v878 = vand.u32 %v339, 4294901760
    %v879 = vsub.f32 %v339, %v878
    %880 = vmatpush.msra.mxu0 %v879
    %v881 = vand.u32 %v337, 4294901760
    %v882 = vsub.f32 %v337, %v881
    %883 = vmatpush.msra.mxu0 %v882
    %v884 = vand.u32 %v335, 4294901760
    %v885 = vsub.f32 %v335, %v884
    %886 = vmatpush.msra.mxu0 %v885
    %v887 = vand.u32 %v333, 4294901760
    %v888 = vsub.f32 %v333, %v887
    %889 = vmatpush.msra.mxu0 %v888
    %v890 = vand.u32 %v680, 4294901760
    %v891 = vsub.f32 %v680, %v890
    %892 = vmatmul.f32.gmra.mxu0 %v891
    %v893 = vpop.f32.mrf.mxu0
    %v894 = vadd.f32 %v840, %v893
    %895 = vdwg.mxu0
    %v896 = vand.u32 %v363, 4294901760
    %897 = vmatpush.msra.mxu0 %v896
    %v898 = vand.u32 %v361, 4294901760
    %899 = vmatpush.msra.mxu0 %v898
    %v900 = vand.u32 %v359, 4294901760
    %901 = vmatpush.msra.mxu0 %v900
    %v902 = vand.u32 %v357, 4294901760
    %903 = vmatpush.msra.mxu0 %v902
    %v904 = vand.u32 %v355, 4294901760
    %905 = vmatpush.msra.mxu0 %v904
    %v906 = vand.u32 %v353, 4294901760
    %907 = vmatpush.msra.mxu0 %v906
    %v908 = vand.u32 %v351, 4294901760
    %909 = vmatpush.msra.mxu0 %v908
    %v910 = vand.u32 %v349, 4294901760
    %911 = vmatpush.msra.mxu0 %v910
    %v912 = vand.u32 %v347, 4294901760
    %913 = vmatpush.msra.mxu0 %v912
    %v914 = vand.u32 %v345, 4294901760
    %915 = vmatpush.msra.mxu0 %v914
    %v916 = vand.u32 %v343, 4294901760
    %917 = vmatpush.msra.mxu0 %v916
    %v918 = vand.u32 %v341, 4294901760
    %919 = vmatpush.msra.mxu0 %v918
    %v920 = vand.u32 %v339, 4294901760
    %921 = vmatpush.msra.mxu0 %v920
    %v922 = vand.u32 %v337, 4294901760
    %923 = vmatpush.msra.mxu0 %v922
    %v924 = vand.u32 %v335, 4294901760
    %925 = vmatpush.msra.mxu0 %v924
    %v926 = vand.u32 %v333, 4294901760
    %927 = vmatpush.msra.mxu0 %v926
    %v928 = vand.u32 %v680, 4294901760
    %v929 = vsub.f32 %v680, %v928
    %v930 = vand.u32 %v929, 4294901760
    %931 = vmatmul.f32.gmra.mxu0 %v930
    %v932 = vpop.f32.mrf.mxu0
    %v933 = vadd.f32 %v894, %v932
    %934 = vdwg.mxu0
    %v935 = vand.u32 %v363, 4294901760
    %v936 = vsub.f32 %v363, %v935
    %v937 = vand.u32 %v936, 4294901760
    %938 = vmatpush.msra.mxu0 %v937
    %v939 = vand.u32 %v361, 4294901760
    %v940 = vsub.f32 %v361, %v939
    %v941 = vand.u32 %v940, 4294901760
    %942 = vmatpush.msra.mxu0 %v941
    %v943 = vand.u32 %v359, 4294901760
    %v944 = vsub.f32 %v359, %v943
    %v945 = vand.u32 %v944, 4294901760
    %946 = vmatpush.msra.mxu0 %v945
    %v947 = vand.u32 %v357, 4294901760
    %v948 = vsub.f32 %v357, %v947
    %v949 = vand.u32 %v948, 4294901760
    %950 = vmatpush.msra.mxu0 %v949
    %v951 = vand.u32 %v355, 4294901760
    %v952 = vsub.f32 %v355, %v951
    %v953 = vand.u32 %v952, 4294901760
    %954 = vmatpush.msra.mxu0 %v953
    %v955 = vand.u32 %v353, 4294901760
    %v956 = vsub.f32 %v353, %v955
    %v957 = vand.u32 %v956, 4294901760
    %958 = vmatpush.msra.mxu0 %v957
    %v959 = vand.u32 %v351, 4294901760
    %v960 = vsub.f32 %v351, %v959
    %v961 = vand.u32 %v960, 4294901760
    %962 = vmatpush.msra.mxu0 %v961
    %v963 = vand.u32 %v349, 4294901760
    %v964 = vsub.f32 %v349, %v963
    %v965 = vand.u32 %v964, 4294901760
    %966 = vmatpush.msra.mxu0 %v965
    %v967 = vand.u32 %v347, 4294901760
    %v968 = vsub.f32 %v347, %v967
    %v969 = vand.u32 %v968, 4294901760
    %970 = vmatpush.msra.mxu0 %v969
    %v971 = vand.u32 %v345, 4294901760
    %v972 = vsub.f32 %v345, %v971
    %v973 = vand.u32 %v972, 4294901760
    %974 = vmatpush.msra.mxu0 %v973
    %v975 = vand.u32 %v343, 4294901760
    %v976 = vsub.f32 %v343, %v975
    %v977 = vand.u32 %v976, 4294901760
    %978 = vmatpush.msra.mxu0 %v977
    %v979 = vand.u32 %v341, 4294901760
    %v980 = vsub.f32 %v341, %v979
    %v981 = vand.u32 %v980, 4294901760
    %982 = vmatpush.msra.mxu0 %v981
    %v983 = vand.u32 %v339, 4294901760
    %v984 = vsub.f32 %v339, %v983
    %v985 = vand.u32 %v984, 4294901760
    %986 = vmatpush.msra.mxu0 %v985
    %v987 = vand.u32 %v337, 4294901760
    %v988 = vsub.f32 %v337, %v987
    %v989 = vand.u32 %v988, 4294901760
    %990 = vmatpush.msra.mxu0 %v989
    %v991 = vand.u32 %v335, 4294901760
    %v992 = vsub.f32 %v335, %v991
    %v993 = vand.u32 %v992, 4294901760
    %994 = vmatpush.msra.mxu0 %v993
    %v995 = vand.u32 %v333, 4294901760
    %v996 = vsub.f32 %v333, %v995
    %v997 = vand.u32 %v996, 4294901760
    %998 = vmatpush.msra.mxu0 %v997
    %v999 = vand.u32 %v680, 4294901760
    %1000 = vmatmul.f32.gmra.mxu0 %v999
    %v1001 = vpop.f32.mrf.mxu0
    %v1002 = vadd.f32 %v933, %v1001
    %1003 = vdwg.mxu0
    %v1004 = vand.u32 %v363, 4294901760
    %1005 = vmatpush.msra.mxu0 %v1004
    %v1006 = vand.u32 %v361, 4294901760
    %1007 = vmatpush.msra.mxu0 %v1006
    %v1008 = vand.u32 %v359, 4294901760
    %1009 = vmatpush.msra.mxu0 %v1008
    %v1010 = vand.u32 %v357, 4294901760
    %1011 = vmatpush.msra.mxu0 %v1010
    %v1012 = vand.u32 %v355, 4294901760
    %1013 = vmatpush.msra.mxu0 %v1012
    %v1014 = vand.u32 %v353, 4294901760
    %1015 = vmatpush.msra.mxu0 %v1014
    %v1016 = vand.u32 %v351, 4294901760
    %1017 = vmatpush.msra.mxu0 %v1016
    %v1018 = vand.u32 %v349, 4294901760
    %1019 = vmatpush.msra.mxu0 %v1018
    %v1020 = vand.u32 %v347, 4294901760
    %1021 = vmatpush.msra.mxu0 %v1020
    %v1022 = vand.u32 %v345, 4294901760
    %1023 = vmatpush.msra.mxu0 %v1022
    %v1024 = vand.u32 %v343, 4294901760
    %1025 = vmatpush.msra.mxu0 %v1024
    %v1026 = vand.u32 %v341, 4294901760
    %1027 = vmatpush.msra.mxu0 %v1026
    %v1028 = vand.u32 %v339, 4294901760
    %1029 = vmatpush.msra.mxu0 %v1028
    %v1030 = vand.u32 %v337, 4294901760
    %1031 = vmatpush.msra.mxu0 %v1030
    %v1032 = vand.u32 %v335, 4294901760
    %1033 = vmatpush.msra.mxu0 %v1032
    %v1034 = vand.u32 %v333, 4294901760
    %1035 = vmatpush.msra.mxu0 %v1034
    %v1036 = vand.u32 %v680, 4294901760
    %1037 = vmatmul.f32.gmra.mxu0 %v1036
    %v1038 = vpop.f32.mrf.mxu0
    %v1039 = vadd.f32 %v1002, %v1038
    %1040 = vdwg.mxu0
    %v1041 = vand.u32 %v395, 4294901760
    %1042 = vmatpush.msra.mxu0 %v1041
    %v1043 = vand.u32 %v393, 4294901760
    %1044 = vmatpush.msra.mxu0 %v1043
    %v1045 = vand.u32 %v391, 4294901760
    %1046 = vmatpush.msra.mxu0 %v1045
    %v1047 = vand.u32 %v389, 4294901760
    %1048 = vmatpush.msra.mxu0 %v1047
    %v1049 = vand.u32 %v387, 4294901760
    %1050 = vmatpush.msra.mxu0 %v1049
    %v1051 = vand.u32 %v385, 4294901760
    %1052 = vmatpush.msra.mxu0 %v1051
    %v1053 = vand.u32 %v383, 4294901760
    %1054 = vmatpush.msra.mxu0 %v1053
    %v1055 = vand.u32 %v381, 4294901760
    %1056 = vmatpush.msra.mxu0 %v1055
    %v1057 = vand.u32 %v379, 4294901760
    %1058 = vmatpush.msra.mxu0 %v1057
    %v1059 = vand.u32 %v377, 4294901760
    %1060 = vmatpush.msra.mxu0 %v1059
    %v1061 = vand.u32 %v375, 4294901760
    %1062 = vmatpush.msra.mxu0 %v1061
    %v1063 = vand.u32 %v373, 4294901760
    %1064 = vmatpush.msra.mxu0 %v1063
    %v1065 = vand.u32 %v371, 4294901760
    %1066 = vmatpush.msra.mxu0 %v1065
    %v1067 = vand.u32 %v369, 4294901760
    %1068 = vmatpush.msra.mxu0 %v1067
    %v1069 = vand.u32 %v367, 4294901760
    %1070 = vmatpush.msra.mxu0 %v1069
    %v1071 = vand.u32 %v365, 4294901760
    %1072 = vmatpush.msra.mxu0 %v1071
    %v1073 = vand.u32 %v681, 4294901760
    %v1074 = vsub.f32 %v681, %v1073
    %v1075 = vand.u32 %v1074, 4294901760
    %v1076 = vsub.f32 %v1074, %v1075
    %v1077 = vand.u32 %v1076, 4294901760
    %1078 = vmatmul.f32.gmra.mxu0 %v1077
    %v1079 = vpop.f32.mrf.mxu0
    %v1080 = vadd.f32 %v1039, %v1079
    %1081 = vdwg.mxu0
    %v1082 = vand.u32 %v395, 4294901760
    %v1083 = vsub.f32 %v395, %v1082
    %v1084 = vand.u32 %v1083, 4294901760
    %v1085 = vsub.f32 %v1083, %v1084
    %v1086 = vand.u32 %v1085, 4294901760
    %1087 = vmatpush.msra.mxu0 %v1086
    %v1088 = vand.u32 %v393, 4294901760
    %v1089 = vsub.f32 %v393, %v1088
    %v1090 = vand.u32 %v1089, 4294901760
    %v1091 = vsub.f32 %v1089, %v1090
    %v1092 = vand.u32 %v1091, 4294901760
    %1093 = vmatpush.msra.mxu0 %v1092
    %v1094 = vand.u32 %v391, 4294901760
    %v1095 = vsub.f32 %v391, %v1094
    %v1096 = vand.u32 %v1095, 4294901760
    %v1097 = vsub.f32 %v1095, %v1096
    %v1098 = vand.u32 %v1097, 4294901760
    %1099 = vmatpush.msra.mxu0 %v1098
    %v1100 = vand.u32 %v389, 4294901760
    %v1101 = vsub.f32 %v389, %v1100
    %v1102 = vand.u32 %v1101, 4294901760
    %v1103 = vsub.f32 %v1101, %v1102
    %v1104 = vand.u32 %v1103, 4294901760
    %1105 = vmatpush.msra.mxu0 %v1104
    %v1106 = vand.u32 %v387, 4294901760
    %v1107 = vsub.f32 %v387, %v1106
    %v1108 = vand.u32 %v1107, 4294901760
    %v1109 = vsub.f32 %v1107, %v1108
    %v1110 = vand.u32 %v1109, 4294901760
    %1111 = vmatpush.msra.mxu0 %v1110
    %v1112 = vand.u32 %v385, 4294901760
    %v1113 = vsub.f32 %v385, %v1112
    %v1114 = vand.u32 %v1113, 4294901760
    %v1115 = vsub.f32 %v1113, %v1114
    %v1116 = vand.u32 %v1115, 4294901760
    %1117 = vmatpush.msra.mxu0 %v1116
    %v1118 = vand.u32 %v383, 4294901760
    %v1119 = vsub.f32 %v383, %v1118
    %v1120 = vand.u32 %v1119, 4294901760
    %v1121 = vsub.f32 %v1119, %v1120
    %v1122 = vand.u32 %v1121, 4294901760
    %1123 = vmatpush.msra.mxu0 %v1122
    %v1124 = vand.u32 %v381, 4294901760
    %v1125 = vsub.f32 %v381, %v1124
    %v1126 = vand.u32 %v1125, 4294901760
    %v1127 = vsub.f32 %v1125, %v1126
    %v1128 = vand.u32 %v1127, 4294901760
    %1129 = vmatpush.msra.mxu0 %v1128
    %v1130 = vand.u32 %v379, 4294901760
    %v1131 = vsub.f32 %v379, %v1130
    %v1132 = vand.u32 %v1131, 4294901760
    %v1133 = vsub.f32 %v1131, %v1132
    %v1134 = vand.u32 %v1133, 4294901760
    %1135 = vmatpush.msra.mxu0 %v1134
    %v1136 = vand.u32 %v377, 4294901760
    %v1137 = vsub.f32 %v377, %v1136
    %v1138 = vand.u32 %v1137, 4294901760
    %v1139 = vsub.f32 %v1137, %v1138
    %v1140 = vand.u32 %v1139, 4294901760
    %1141 = vmatpush.msra.mxu0 %v1140
    %v1142 = vand.u32 %v375, 4294901760
    %v1143 = vsub.f32 %v375, %v1142
    %v1144 = vand.u32 %v1143, 4294901760
    %v1145 = vsub.f32 %v1143, %v1144
    %v1146 = vand.u32 %v1145, 4294901760
    %1147 = vmatpush.msra.mxu0 %v1146
    %v1148 = vand.u32 %v373, 4294901760
    %v1149 = vsub.f32 %v373, %v1148
    %v1150 = vand.u32 %v1149, 4294901760
    %v1151 = vsub.f32 %v1149, %v1150
    %v1152 = vand.u32 %v1151, 4294901760
    %1153 = vmatpush.msra.mxu0 %v1152
    %v1154 = vand.u32 %v371, 4294901760
    %v1155 = vsub.f32 %v371, %v1154
    %v1156 = vand.u32 %v1155, 4294901760
    %v1157 = vsub.f32 %v1155, %v1156
    %v1158 = vand.u32 %v1157, 4294901760
    %1159 = vmatpush.msra.mxu0 %v1158
    %v1160 = vand.u32 %v369, 4294901760
    %v1161 = vsub.f32 %v369, %v1160
    %v1162 = vand.u32 %v1161, 4294901760
    %v1163 = vsub.f32 %v1161, %v1162
    %v1164 = vand.u32 %v1163, 4294901760
    %1165 = vmatpush.msra.mxu0 %v1164
    %v1166 = vand.u32 %v367, 4294901760
    %v1167 = vsub.f32 %v367, %v1166
    %v1168 = vand.u32 %v1167, 4294901760
    %v1169 = vsub.f32 %v1167, %v1168
    %v1170 = vand.u32 %v1169, 4294901760
    %1171 = vmatpush.msra.mxu0 %v1170
    %v1172 = vand.u32 %v365, 4294901760
    %v1173 = vsub.f32 %v365, %v1172
    %v1174 = vand.u32 %v1173, 4294901760
    %v1175 = vsub.f32 %v1173, %v1174
    %v1176 = vand.u32 %v1175, 4294901760
    %1177 = vmatpush.msra.mxu0 %v1176
    %v1178 = vand.u32 %v681, 4294901760
    %1179 = vmatmul.f32.gmra.mxu0 %v1178
    %v1180 = vpop.f32.mrf.mxu0
    %v1181 = vadd.f32 %v1080, %v1180
    %1182 = vdwg.mxu0
    %v1183 = vand.u32 %v395, 4294901760
    %v1184 = vsub.f32 %v395, %v1183
    %1185 = vmatpush.msra.mxu0 %v1184
    %v1186 = vand.u32 %v393, 4294901760
    %v1187 = vsub.f32 %v393, %v1186
    %1188 = vmatpush.msra.mxu0 %v1187
    %v1189 = vand.u32 %v391, 4294901760
    %v1190 = vsub.f32 %v391, %v1189
    %1191 = vmatpush.msra.mxu0 %v1190
    %v1192 = vand.u32 %v389, 4294901760
    %v1193 = vsub.f32 %v389, %v1192
    %1194 = vmatpush.msra.mxu0 %v1193
    %v1195 = vand.u32 %v387, 4294901760
    %v1196 = vsub.f32 %v387, %v1195
    %1197 = vmatpush.msra.mxu0 %v1196
    %v1198 = vand.u32 %v385, 4294901760
    %v1199 = vsub.f32 %v385, %v1198
    %1200 = vmatpush.msra.mxu0 %v1199
    %v1201 = vand.u32 %v383, 4294901760
    %v1202 = vsub.f32 %v383, %v1201
    %1203 = vmatpush.msra.mxu0 %v1202
    %v1204 = vand.u32 %v381, 4294901760
    %v1205 = vsub.f32 %v381, %v1204
    %1206 = vmatpush.msra.mxu0 %v1205
    %v1207 = vand.u32 %v379, 4294901760
    %v1208 = vsub.f32 %v379, %v1207
    %1209 = vmatpush.msra.mxu0 %v1208
    %v1210 = vand.u32 %v377, 4294901760
    %v1211 = vsub.f32 %v377, %v1210
    %1212 = vmatpush.msra.mxu0 %v1211
    %v1213 = vand.u32 %v375, 4294901760
    %v1214 = vsub.f32 %v375, %v1213
    %1215 = vmatpush.msra.mxu0 %v1214
    %v1216 = vand.u32 %v373, 4294901760
    %v1217 = vsub.f32 %v373, %v1216
    %1218 = vmatpush.msra.mxu0 %v1217
    %v1219 = vand.u32 %v371, 4294901760
    %v1220 = vsub.f32 %v371, %v1219
    %1221 = vmatpush.msra.mxu0 %v1220
    %v1222 = vand.u32 %v369, 4294901760
    %v1223 = vsub.f32 %v369, %v1222
    %1224 = vmatpush.msra.mxu0 %v1223
    %v1225 = vand.u32 %v367, 4294901760
    %v1226 = vsub.f32 %v367, %v1225
    %1227 = vmatpush.msra.mxu0 %v1226
    %v1228 = vand.u32 %v365, 4294901760
    %v1229 = vsub.f32 %v365, %v1228
    %1230 = vmatpush.msra.mxu0 %v1229
    %v1231 = vand.u32 %v681, 4294901760
    %v1232 = vsub.f32 %v681, %v1231
    %1233 = vmatmul.f32.gmra.mxu0 %v1232
    %v1234 = vpop.f32.mrf.mxu0
    %v1235 = vadd.f32 %v1181, %v1234
    %1236 = vdwg.mxu0
    %v1237 = vand.u32 %v395, 4294901760
    %1238 = vmatpush.msra.mxu0 %v1237
    %v1239 = vand.u32 %v393, 4294901760
    %1240 = vmatpush.msra.mxu0 %v1239
    %v1241 = vand.u32 %v391, 4294901760
    %1242 = vmatpush.msra.mxu0 %v1241
    %v1243 = vand.u32 %v389, 4294901760
    %1244 = vmatpush.msra.mxu0 %v1243
    %v1245 = vand.u32 %v387, 4294901760
    %1246 = vmatpush.msra.mxu0 %v1245
    %v1247 = vand.u32 %v385, 4294901760
    %1248 = vmatpush.msra.mxu0 %v1247
    %v1249 = vand.u32 %v383, 4294901760
    %1250 = vmatpush.msra.mxu0 %v1249
    %v1251 = vand.u32 %v381, 4294901760
    %1252 = vmatpush.msra.mxu0 %v1251
    %v1253 = vand.u32 %v379, 4294901760
    %1254 = vmatpush.msra.mxu0 %v1253
    %v1255 = vand.u32 %v377, 4294901760
    %1256 = vmatpush.msra.mxu0 %v1255
    %v1257 = vand.u32 %v375, 4294901760
    %1258 = vmatpush.msra.mxu0 %v1257
    %v1259 = vand.u32 %v373, 4294901760
    %1260 = vmatpush.msra.mxu0 %v1259
    %v1261 = vand.u32 %v371, 4294901760
    %1262 = vmatpush.msra.mxu0 %v1261
    %v1263 = vand.u32 %v369, 4294901760
    %1264 = vmatpush.msra.mxu0 %v1263
    %v1265 = vand.u32 %v367, 4294901760
    %1266 = vmatpush.msra.mxu0 %v1265
    %v1267 = vand.u32 %v365, 4294901760
    %1268 = vmatpush.msra.mxu0 %v1267
    %v1269 = vand.u32 %v681, 4294901760
    %v1270 = vsub.f32 %v681, %v1269
    %v1271 = vand.u32 %v1270, 4294901760
    %1272 = vmatmul.f32.gmra.mxu0 %v1271
    %v1273 = vpop.f32.mrf.mxu0
    %v1274 = vadd.f32 %v1235, %v1273
    %1275 = vdwg.mxu0
    %v1276 = vand.u32 %v395, 4294901760
    %v1277 = vsub.f32 %v395, %v1276
    %v1278 = vand.u32 %v1277, 4294901760
    %1279 = vmatpush.msra.mxu0 %v1278
    %v1280 = vand.u32 %v393, 4294901760
    %v1281 = vsub.f32 %v393, %v1280
    %v1282 = vand.u32 %v1281, 4294901760
    %1283 = vmatpush.msra.mxu0 %v1282
    %v1284 = vand.u32 %v391, 4294901760
    %v1285 = vsub.f32 %v391, %v1284
    %v1286 = vand.u32 %v1285, 4294901760
    %1287 = vmatpush.msra.mxu0 %v1286
    %v1288 = vand.u32 %v389, 4294901760
    %v1289 = vsub.f32 %v389, %v1288
    %v1290 = vand.u32 %v1289, 4294901760
    %1291 = vmatpush.msra.mxu0 %v1290
    %v1292 = vand.u32 %v387, 4294901760
    %v1293 = vsub.f32 %v387, %v1292
    %v1294 = vand.u32 %v1293, 4294901760
    %1295 = vmatpush.msra.mxu0 %v1294
    %v1296 = vand.u32 %v385, 4294901760
    %v1297 = vsub.f32 %v385, %v1296
    %v1298 = vand.u32 %v1297, 4294901760
    %1299 = vmatpush.msra.mxu0 %v1298
    %v1300 = vand.u32 %v383, 4294901760
    %v1301 = vsub.f32 %v383, %v1300
    %v1302 = vand.u32 %v1301, 4294901760
    %1303 = vmatpush.msra.mxu0 %v1302
    %v1304 = vand.u32 %v381, 4294901760
    %v1305 = vsub.f32 %v381, %v1304
    %v1306 = vand.u32 %v1305, 4294901760
    %1307 = vmatpush.msra.mxu0 %v1306
    %v1308 = vand.u32 %v379, 4294901760
    %v1309 = vsub.f32 %v379, %v1308
    %v1310 = vand.u32 %v1309, 4294901760
    %1311 = vmatpush.msra.mxu0 %v1310
    %v1312 = vand.u32 %v377, 4294901760
    %v1313 = vsub.f32 %v377, %v1312
    %v1314 = vand.u32 %v1313, 4294901760
    %1315 = vmatpush.msra.mxu0 %v1314
    %v1316 = vand.u32 %v375, 4294901760
    %v1317 = vsub.f32 %v375, %v1316
    %v1318 = vand.u32 %v1317, 4294901760
    %1319 = vmatpush.msra.mxu0 %v1318
    %v1320 = vand.u32 %v373, 4294901760
    %v1321 = vsub.f32 %v373, %v1320
    %v1322 = vand.u32 %v1321, 4294901760
    %1323 = vmatpush.msra.mxu0 %v1322
    %v1324 = vand.u32 %v371, 4294901760
    %v1325 = vsub.f32 %v371, %v1324
    %v1326 = vand.u32 %v1325, 4294901760
    %1327 = vmatpush.msra.mxu0 %v1326
    %v1328 = vand.u32 %v369, 4294901760
    %v1329 = vsub.f32 %v369, %v1328
    %v1330 = vand.u32 %v1329, 4294901760
    %1331 = vmatpush.msra.mxu0 %v1330
    %v1332 = vand.u32 %v367, 4294901760
    %v1333 = vsub.f32 %v367, %v1332
    %v1334 = vand.u32 %v1333, 4294901760
    %1335 = vmatpush.msra.mxu0 %v1334
    %v1336 = vand.u32 %v365, 4294901760
    %v1337 = vsub.f32 %v365, %v1336
    %v1338 = vand.u32 %v1337, 4294901760
    %1339 = vmatpush.msra.mxu0 %v1338
    %v1340 = vand.u32 %v681, 4294901760
    %1341 = vmatmul.f32.gmra.mxu0 %v1340
    %v1342 = vpop.f32.mrf.mxu0
    %v1343 = vadd.f32 %v1274, %v1342
    %1344 = vdwg.mxu0
    %v1345 = vand.u32 %v395, 4294901760
    %1346 = vmatpush.msra.mxu0 %v1345
    %v1347 = vand.u32 %v393, 4294901760
    %1348 = vmatpush.msra.mxu0 %v1347
    %v1349 = vand.u32 %v391, 4294901760
    %1350 = vmatpush.msra.mxu0 %v1349
    %v1351 = vand.u32 %v389, 4294901760
    %1352 = vmatpush.msra.mxu0 %v1351
    %v1353 = vand.u32 %v387, 4294901760
    %1354 = vmatpush.msra.mxu0 %v1353
    %v1355 = vand.u32 %v385, 4294901760
    %1356 = vmatpush.msra.mxu0 %v1355
    %v1357 = vand.u32 %v383, 4294901760
    %1358 = vmatpush.msra.mxu0 %v1357
    %v1359 = vand.u32 %v381, 4294901760
    %1360 = vmatpush.msra.mxu0 %v1359
    %v1361 = vand.u32 %v379, 4294901760
    %1362 = vmatpush.msra.mxu0 %v1361
    %v1363 = vand.u32 %v377, 4294901760
    %1364 = vmatpush.msra.mxu0 %v1363
    %v1365 = vand.u32 %v375, 4294901760
    %1366 = vmatpush.msra.mxu0 %v1365
    %v1367 = vand.u32 %v373, 4294901760
    %1368 = vmatpush.msra.mxu0 %v1367
    %v1369 = vand.u32 %v371, 4294901760
    %1370 = vmatpush.msra.mxu0 %v1369
    %v1371 = vand.u32 %v369, 4294901760
    %1372 = vmatpush.msra.mxu0 %v1371
    %v1373 = vand.u32 %v367, 4294901760
    %1374 = vmatpush.msra.mxu0 %v1373
    %v1375 = vand.u32 %v365, 4294901760
    %1376 = vmatpush.msra.mxu0 %v1375
    %v1377 = vand.u32 %v681, 4294901760
    %1378 = vmatmul.f32.gmra.mxu0 %v1377
    %v1379 = vpop.f32.mrf.mxu0
    %v1380 = vadd.f32 %v1343, %v1379
    %1381 = vdwg.mxu0
    %v1382 = vand.u32 %v427, 4294901760
    %1383 = vmatpush.msra.mxu0 %v1382
    %v1384 = vand.u32 %v425, 4294901760
    %1385 = vmatpush.msra.mxu0 %v1384
    %v1386 = vand.u32 %v423, 4294901760
    %1387 = vmatpush.msra.mxu0 %v1386
    %v1388 = vand.u32 %v421, 4294901760
    %1389 = vmatpush.msra.mxu0 %v1388
    %v1390 = vand.u32 %v419, 4294901760
    %1391 = vmatpush.msra.mxu0 %v1390
    %v1392 = vand.u32 %v417, 4294901760
    %1393 = vmatpush.msra.mxu0 %v1392
    %v1394 = vand.u32 %v415, 4294901760
    %1395 = vmatpush.msra.mxu0 %v1394
    %v1396 = vand.u32 %v413, 4294901760
    %1397 = vmatpush.msra.mxu0 %v1396
    %v1398 = vand.u32 %v411, 4294901760
    %1399 = vmatpush.msra.mxu0 %v1398
    %v1400 = vand.u32 %v409, 4294901760
    %1401 = vmatpush.msra.mxu0 %v1400
    %v1402 = vand.u32 %v407, 4294901760
    %1403 = vmatpush.msra.mxu0 %v1402
    %v1404 = vand.u32 %v405, 4294901760
    %1405 = vmatpush.msra.mxu0 %v1404
    %v1406 = vand.u32 %v403, 4294901760
    %1407 = vmatpush.msra.mxu0 %v1406
    %v1408 = vand.u32 %v401, 4294901760
    %1409 = vmatpush.msra.mxu0 %v1408
    %v1410 = vand.u32 %v399, 4294901760
    %1411 = vmatpush.msra.mxu0 %v1410
    %v1412 = vand.u32 %v397, 4294901760
    %1413 = vmatpush.msra.mxu0 %v1412
    %v1414 = vand.u32 %v682, 4294901760
    %v1415 = vsub.f32 %v682, %v1414
    %v1416 = vand.u32 %v1415, 4294901760
    %v1417 = vsub.f32 %v1415, %v1416
    %v1418 = vand.u32 %v1417, 4294901760
    %1419 = vmatmul.f32.gmra.mxu0 %v1418
    %v1420 = vpop.f32.mrf.mxu0
    %v1421 = vadd.f32 %v1380, %v1420
    %1422 = vdwg.mxu0
    %v1423 = vand.u32 %v427, 4294901760
    %v1424 = vsub.f32 %v427, %v1423
    %v1425 = vand.u32 %v1424, 4294901760
    %v1426 = vsub.f32 %v1424, %v1425
    %v1427 = vand.u32 %v1426, 4294901760
    %1428 = vmatpush.msra.mxu0 %v1427
    %v1429 = vand.u32 %v425, 4294901760
    %v1430 = vsub.f32 %v425, %v1429
    %v1431 = vand.u32 %v1430, 4294901760
    %v1432 = vsub.f32 %v1430, %v1431
    %v1433 = vand.u32 %v1432, 4294901760
    %1434 = vmatpush.msra.mxu0 %v1433
    %v1435 = vand.u32 %v423, 4294901760
    %v1436 = vsub.f32 %v423, %v1435
    %v1437 = vand.u32 %v1436, 4294901760
    %v1438 = vsub.f32 %v1436, %v1437
    %v1439 = vand.u32 %v1438, 4294901760
    %1440 = vmatpush.msra.mxu0 %v1439
    %v1441 = vand.u32 %v421, 4294901760
    %v1442 = vsub.f32 %v421, %v1441
    %v1443 = vand.u32 %v1442, 4294901760
    %v1444 = vsub.f32 %v1442, %v1443
    %v1445 = vand.u32 %v1444, 4294901760
    %1446 = vmatpush.msra.mxu0 %v1445
    %v1447 = vand.u32 %v419, 4294901760
    %v1448 = vsub.f32 %v419, %v1447
    %v1449 = vand.u32 %v1448, 4294901760
    %v1450 = vsub.f32 %v1448, %v1449
    %v1451 = vand.u32 %v1450, 4294901760
    %1452 = vmatpush.msra.mxu0 %v1451
    %v1453 = vand.u32 %v417, 4294901760
    %v1454 = vsub.f32 %v417, %v1453
    %v1455 = vand.u32 %v1454, 4294901760
    %v1456 = vsub.f32 %v1454, %v1455
    %v1457 = vand.u32 %v1456, 4294901760
    %1458 = vmatpush.msra.mxu0 %v1457
    %v1459 = vand.u32 %v415, 4294901760
    %v1460 = vsub.f32 %v415, %v1459
    %v1461 = vand.u32 %v1460, 4294901760
    %v1462 = vsub.f32 %v1460, %v1461
    %v1463 = vand.u32 %v1462, 4294901760
    %1464 = vmatpush.msra.mxu0 %v1463
    %v1465 = vand.u32 %v413, 4294901760
    %v1466 = vsub.f32 %v413, %v1465
    %v1467 = vand.u32 %v1466, 4294901760
    %v1468 = vsub.f32 %v1466, %v1467
    %v1469 = vand.u32 %v1468, 4294901760
    %1470 = vmatpush.msra.mxu0 %v1469
    %v1471 = vand.u32 %v411, 4294901760
    %v1472 = vsub.f32 %v411, %v1471
    %v1473 = vand.u32 %v1472, 4294901760
    %v1474 = vsub.f32 %v1472, %v1473
    %v1475 = vand.u32 %v1474, 4294901760
    %1476 = vmatpush.msra.mxu0 %v1475
    %v1477 = vand.u32 %v409, 4294901760
    %v1478 = vsub.f32 %v409, %v1477
    %v1479 = vand.u32 %v1478, 4294901760
    %v1480 = vsub.f32 %v1478, %v1479
    %v1481 = vand.u32 %v1480, 4294901760
    %1482 = vmatpush.msra.mxu0 %v1481
    %v1483 = vand.u32 %v407, 4294901760
    %v1484 = vsub.f32 %v407, %v1483
    %v1485 = vand.u32 %v1484, 4294901760
    %v1486 = vsub.f32 %v1484, %v1485
    %v1487 = vand.u32 %v1486, 4294901760
    %1488 = vmatpush.msra.mxu0 %v1487
    %v1489 = vand.u32 %v405, 4294901760
    %v1490 = vsub.f32 %v405, %v1489
    %v1491 = vand.u32 %v1490, 4294901760
    %v1492 = vsub.f32 %v1490, %v1491
    %v1493 = vand.u32 %v1492, 4294901760
    %1494 = vmatpush.msra.mxu0 %v1493
    %v1495 = vand.u32 %v403, 4294901760
    %v1496 = vsub.f32 %v403, %v1495
    %v1497 = vand.u32 %v1496, 4294901760
    %v1498 = vsub.f32 %v1496, %v1497
    %v1499 = vand.u32 %v1498, 4294901760
    %1500 = vmatpush.msra.mxu0 %v1499
    %v1501 = vand.u32 %v401, 4294901760
    %v1502 = vsub.f32 %v401, %v1501
    %v1503 = vand.u32 %v1502, 4294901760
    %v1504 = vsub.f32 %v1502, %v1503
    %v1505 = vand.u32 %v1504, 4294901760
    %1506 = vmatpush.msra.mxu0 %v1505
    %v1507 = vand.u32 %v399, 4294901760
    %v1508 = vsub.f32 %v399, %v1507
    %v1509 = vand.u32 %v1508, 4294901760
    %v1510 = vsub.f32 %v1508, %v1509
    %v1511 = vand.u32 %v1510, 4294901760
    %1512 = vmatpush.msra.mxu0 %v1511
    %v1513 = vand.u32 %v397, 4294901760
    %v1514 = vsub.f32 %v397, %v1513
    %v1515 = vand.u32 %v1514, 4294901760
    %v1516 = vsub.f32 %v1514, %v1515
    %v1517 = vand.u32 %v1516, 4294901760
    %1518 = vmatpush.msra.mxu0 %v1517
    %v1519 = vand.u32 %v682, 4294901760
    %1520 = vmatmul.f32.gmra.mxu0 %v1519
    %v1521 = vpop.f32.mrf.mxu0
    %v1522 = vadd.f32 %v1421, %v1521
    %1523 = vdwg.mxu0
    %v1524 = vand.u32 %v427, 4294901760
    %v1525 = vsub.f32 %v427, %v1524
    %1526 = vmatpush.msra.mxu0 %v1525
    %v1527 = vand.u32 %v425, 4294901760
    %v1528 = vsub.f32 %v425, %v1527
    %1529 = vmatpush.msra.mxu0 %v1528
    %v1530 = vand.u32 %v423, 4294901760
    %v1531 = vsub.f32 %v423, %v1530
    %1532 = vmatpush.msra.mxu0 %v1531
    %v1533 = vand.u32 %v421, 4294901760
    %v1534 = vsub.f32 %v421, %v1533
    %1535 = vmatpush.msra.mxu0 %v1534
    %v1536 = vand.u32 %v419, 4294901760
    %v1537 = vsub.f32 %v419, %v1536
    %1538 = vmatpush.msra.mxu0 %v1537
    %v1539 = vand.u32 %v417, 4294901760
    %v1540 = vsub.f32 %v417, %v1539
    %1541 = vmatpush.msra.mxu0 %v1540
    %v1542 = vand.u32 %v415, 4294901760
    %v1543 = vsub.f32 %v415, %v1542
    %1544 = vmatpush.msra.mxu0 %v1543
    %v1545 = vand.u32 %v413, 4294901760
    %v1546 = vsub.f32 %v413, %v1545
    %1547 = vmatpush.msra.mxu0 %v1546
    %v1548 = vand.u32 %v411, 4294901760
    %v1549 = vsub.f32 %v411, %v1548
    %1550 = vmatpush.msra.mxu0 %v1549
    %v1551 = vand.u32 %v409, 4294901760
    %v1552 = vsub.f32 %v409, %v1551
    %1553 = vmatpush.msra.mxu0 %v1552
    %v1554 = vand.u32 %v407, 4294901760
    %v1555 = vsub.f32 %v407, %v1554
    %1556 = vmatpush.msra.mxu0 %v1555
    %v1557 = vand.u32 %v405, 4294901760
    %v1558 = vsub.f32 %v405, %v1557
    %1559 = vmatpush.msra.mxu0 %v1558
    %v1560 = vand.u32 %v403, 4294901760
    %v1561 = vsub.f32 %v403, %v1560
    %1562 = vmatpush.msra.mxu0 %v1561
    %v1563 = vand.u32 %v401, 4294901760
    %v1564 = vsub.f32 %v401, %v1563
    %1565 = vmatpush.msra.mxu0 %v1564
    %v1566 = vand.u32 %v399, 4294901760
    %v1567 = vsub.f32 %v399, %v1566
    %1568 = vmatpush.msra.mxu0 %v1567
    %v1569 = vand.u32 %v397, 4294901760
    %v1570 = vsub.f32 %v397, %v1569
    %1571 = vmatpush.msra.mxu0 %v1570
    %v1572 = vand.u32 %v682, 4294901760
    %v1573 = vsub.f32 %v682, %v1572
    %1574 = vmatmul.f32.gmra.mxu0 %v1573
    %v1575 = vpop.f32.mrf.mxu0
    %v1576 = vadd.f32 %v1522, %v1575
    %1577 = vdwg.mxu0
    %v1578 = vand.u32 %v427, 4294901760
    %1579 = vmatpush.msra.mxu0 %v1578
    %v1580 = vand.u32 %v425, 4294901760
    %1581 = vmatpush.msra.mxu0 %v1580
    %v1582 = vand.u32 %v423, 4294901760
    %1583 = vmatpush.msra.mxu0 %v1582
    %v1584 = vand.u32 %v421, 4294901760
    %1585 = vmatpush.msra.mxu0 %v1584
    %v1586 = vand.u32 %v419, 4294901760
    %1587 = vmatpush.msra.mxu0 %v1586
    %v1588 = vand.u32 %v417, 4294901760
    %1589 = vmatpush.msra.mxu0 %v1588
    %v1590 = vand.u32 %v415, 4294901760
    %1591 = vmatpush.msra.mxu0 %v1590
    %v1592 = vand.u32 %v413, 4294901760
    %1593 = vmatpush.msra.mxu0 %v1592
    %v1594 = vand.u32 %v411, 4294901760
    %1595 = vmatpush.msra.mxu0 %v1594
    %v1596 = vand.u32 %v409, 4294901760
    %1597 = vmatpush.msra.mxu0 %v1596
    %v1598 = vand.u32 %v407, 4294901760
    %1599 = vmatpush.msra.mxu0 %v1598
    %v1600 = vand.u32 %v405, 4294901760
    %1601 = vmatpush.msra.mxu0 %v1600
    %v1602 = vand.u32 %v403, 4294901760
    %1603 = vmatpush.msra.mxu0 %v1602
    %v1604 = vand.u32 %v401, 4294901760
    %1605 = vmatpush.msra.mxu0 %v1604
    %v1606 = vand.u32 %v399, 4294901760
    %1607 = vmatpush.msra.mxu0 %v1606
    %v1608 = vand.u32 %v397, 4294901760
    %1609 = vmatpush.msra.mxu0 %v1608
    %v1610 = vand.u32 %v682, 4294901760
    %v1611 = vsub.f32 %v682, %v1610
    %v1612 = vand.u32 %v1611, 4294901760
    %1613 = vmatmul.f32.gmra.mxu0 %v1612
    %v1614 = vpop.f32.mrf.mxu0
    %v1615 = vadd.f32 %v1576, %v1614
    %1616 = vdwg.mxu0
    %v1617 = vand.u32 %v427, 4294901760
    %v1618 = vsub.f32 %v427, %v1617
    %v1619 = vand.u32 %v1618, 4294901760
    %1620 = vmatpush.msra.mxu0 %v1619
    %v1621 = vand.u32 %v425, 4294901760
    %v1622 = vsub.f32 %v425, %v1621
    %v1623 = vand.u32 %v1622, 4294901760
    %1624 = vmatpush.msra.mxu0 %v1623
    %v1625 = vand.u32 %v423, 4294901760
    %v1626 = vsub.f32 %v423, %v1625
    %v1627 = vand.u32 %v1626, 4294901760
    %1628 = vmatpush.msra.mxu0 %v1627
    %v1629 = vand.u32 %v421, 4294901760
    %v1630 = vsub.f32 %v421, %v1629
    %v1631 = vand.u32 %v1630, 4294901760
    %1632 = vmatpush.msra.mxu0 %v1631
    %v1633 = vand.u32 %v419, 4294901760
    %v1634 = vsub.f32 %v419, %v1633
    %v1635 = vand.u32 %v1634, 4294901760
    %1636 = vmatpush.msra.mxu0 %v1635
    %v1637 = vand.u32 %v417, 4294901760
    %v1638 = vsub.f32 %v417, %v1637
    %v1639 = vand.u32 %v1638, 4294901760
    %1640 = vmatpush.msra.mxu0 %v1639
    %v1641 = vand.u32 %v415, 4294901760
    %v1642 = vsub.f32 %v415, %v1641
    %v1643 = vand.u32 %v1642, 4294901760
    %1644 = vmatpush.msra.mxu0 %v1643
    %v1645 = vand.u32 %v413, 4294901760
    %v1646 = vsub.f32 %v413, %v1645
    %v1647 = vand.u32 %v1646, 4294901760
    %1648 = vmatpush.msra.mxu0 %v1647
    %v1649 = vand.u32 %v411, 4294901760
    %v1650 = vsub.f32 %v411, %v1649
    %v1651 = vand.u32 %v1650, 4294901760
    %1652 = vmatpush.msra.mxu0 %v1651
    %v1653 = vand.u32 %v409, 4294901760
    %v1654 = vsub.f32 %v409, %v1653
    %v1655 = vand.u32 %v1654, 4294901760
    %1656 = vmatpush.msra.mxu0 %v1655
    %v1657 = vand.u32 %v407, 4294901760
    %v1658 = vsub.f32 %v407, %v1657
    %v1659 = vand.u32 %v1658, 4294901760
    %1660 = vmatpush.msra.mxu0 %v1659
    %v1661 = vand.u32 %v405, 4294901760
    %v1662 = vsub.f32 %v405, %v1661
    %v1663 = vand.u32 %v1662, 4294901760
    %1664 = vmatpush.msra.mxu0 %v1663
    %v1665 = vand.u32 %v403, 4294901760
    %v1666 = vsub.f32 %v403, %v1665
    %v1667 = vand.u32 %v1666, 4294901760
    %1668 = vmatpush.msra.mxu0 %v1667
    %v1669 = vand.u32 %v401, 4294901760
    %v1670 = vsub.f32 %v401, %v1669
    %v1671 = vand.u32 %v1670, 4294901760
    %1672 = vmatpush.msra.mxu0 %v1671
    %v1673 = vand.u32 %v399, 4294901760
    %v1674 = vsub.f32 %v399, %v1673
    %v1675 = vand.u32 %v1674, 4294901760
    %1676 = vmatpush.msra.mxu0 %v1675
    %v1677 = vand.u32 %v397, 4294901760
    %v1678 = vsub.f32 %v397, %v1677
    %v1679 = vand.u32 %v1678, 4294901760
    %1680 = vmatpush.msra.mxu0 %v1679
    %v1681 = vand.u32 %v682, 4294901760
    %1682 = vmatmul.f32.gmra.mxu0 %v1681
    %v1683 = vpop.f32.mrf.mxu0
    %v1684 = vadd.f32 %v1615, %v1683
    %1685 = vdwg.mxu0
    %v1686 = vand.u32 %v427, 4294901760
    %1687 = vmatpush.msra.mxu0 %v1686
    %v1688 = vand.u32 %v425, 4294901760
    %1689 = vmatpush.msra.mxu0 %v1688
    %v1690 = vand.u32 %v423, 4294901760
    %1691 = vmatpush.msra.mxu0 %v1690
    %v1692 = vand.u32 %v421, 4294901760
    %1693 = vmatpush.msra.mxu0 %v1692
    %v1694 = vand.u32 %v419, 4294901760
    %1695 = vmatpush.msra.mxu0 %v1694
    %v1696 = vand.u32 %v417, 4294901760
    %1697 = vmatpush.msra.mxu0 %v1696
    %v1698 = vand.u32 %v415, 4294901760
    %1699 = vmatpush.msra.mxu0 %v1698
    %v1700 = vand.u32 %v413, 4294901760
    %1701 = vmatpush.msra.mxu0 %v1700
    %v1702 = vand.u32 %v411, 4294901760
    %1703 = vmatpush.msra.mxu0 %v1702
    %v1704 = vand.u32 %v409, 4294901760
    %1705 = vmatpush.msra.mxu0 %v1704
    %v1706 = vand.u32 %v407, 4294901760
    %1707 = vmatpush.msra.mxu0 %v1706
    %v1708 = vand.u32 %v405, 4294901760
    %1709 = vmatpush.msra.mxu0 %v1708
    %v1710 = vand.u32 %v403, 4294901760
    %1711 = vmatpush.msra.mxu0 %v1710
    %v1712 = vand.u32 %v401, 4294901760
    %1713 = vmatpush.msra.mxu0 %v1712
    %v1714 = vand.u32 %v399, 4294901760
    %1715 = vmatpush.msra.mxu0 %v1714
    %v1716 = vand.u32 %v397, 4294901760
    %1717 = vmatpush.msra.mxu0 %v1716
    %v1718 = vand.u32 %v682, 4294901760
    %1719 = vmatmul.f32.gmra.mxu0 %v1718
    %v1720 = vpop.f32.mrf.mxu0
    %v1721 = vadd.f32 %v1684, %v1720
    %1722 = vdwg.mxu0
    %v1723 = vand.u32 %v459, 4294901760
    %1724 = vmatpush.msra.mxu0 %v1723
    %v1725 = vand.u32 %v457, 4294901760
    %1726 = vmatpush.msra.mxu0 %v1725
    %v1727 = vand.u32 %v455, 4294901760
    %1728 = vmatpush.msra.mxu0 %v1727
    %v1729 = vand.u32 %v453, 4294901760
    %1730 = vmatpush.msra.mxu0 %v1729
    %v1731 = vand.u32 %v451, 4294901760
    %1732 = vmatpush.msra.mxu0 %v1731
    %v1733 = vand.u32 %v449, 4294901760
    %1734 = vmatpush.msra.mxu0 %v1733
    %v1735 = vand.u32 %v447, 4294901760
    %1736 = vmatpush.msra.mxu0 %v1735
    %v1737 = vand.u32 %v445, 4294901760
    %1738 = vmatpush.msra.mxu0 %v1737
    %v1739 = vand.u32 %v443, 4294901760
    %1740 = vmatpush.msra.mxu0 %v1739
    %v1741 = vand.u32 %v441, 4294901760
    %1742 = vmatpush.msra.mxu0 %v1741
    %v1743 = vand.u32 %v439, 4294901760
    %1744 = vmatpush.msra.mxu0 %v1743
    %v1745 = vand.u32 %v437, 4294901760
    %1746 = vmatpush.msra.mxu0 %v1745
    %v1747 = vand.u32 %v435, 4294901760
    %1748 = vmatpush.msra.mxu0 %v1747
    %v1749 = vand.u32 %v433, 4294901760
    %1750 = vmatpush.msra.mxu0 %v1749
    %v1751 = vand.u32 %v431, 4294901760
    %1752 = vmatpush.msra.mxu0 %v1751
    %v1753 = vand.u32 %v429, 4294901760
    %1754 = vmatpush.msra.mxu0 %v1753
    %v1755 = vand.u32 %v683, 4294901760
    %v1756 = vsub.f32 %v683, %v1755
    %v1757 = vand.u32 %v1756, 4294901760
    %v1758 = vsub.f32 %v1756, %v1757
    %v1759 = vand.u32 %v1758, 4294901760
    %1760 = vmatmul.f32.gmra.mxu0 %v1759
    %v1761 = vpop.f32.mrf.mxu0
    %v1762 = vadd.f32 %v1721, %v1761
    %1763 = vdwg.mxu0
    %v1764 = vand.u32 %v459, 4294901760
    %v1765 = vsub.f32 %v459, %v1764
    %v1766 = vand.u32 %v1765, 4294901760
    %v1767 = vsub.f32 %v1765, %v1766
    %v1768 = vand.u32 %v1767, 4294901760
    %1769 = vmatpush.msra.mxu0 %v1768
    %v1770 = vand.u32 %v457, 4294901760
    %v1771 = vsub.f32 %v457, %v1770
    %v1772 = vand.u32 %v1771, 4294901760
    %v1773 = vsub.f32 %v1771, %v1772
    %v1774 = vand.u32 %v1773, 4294901760
    %1775 = vmatpush.msra.mxu0 %v1774
    %v1776 = vand.u32 %v455, 4294901760
    %v1777 = vsub.f32 %v455, %v1776
    %v1778 = vand.u32 %v1777, 4294901760
    %v1779 = vsub.f32 %v1777, %v1778
    %v1780 = vand.u32 %v1779, 4294901760
    %1781 = vmatpush.msra.mxu0 %v1780
    %v1782 = vand.u32 %v453, 4294901760
    %v1783 = vsub.f32 %v453, %v1782
    %v1784 = vand.u32 %v1783, 4294901760
    %v1785 = vsub.f32 %v1783, %v1784
    %v1786 = vand.u32 %v1785, 4294901760
    %1787 = vmatpush.msra.mxu0 %v1786
    %v1788 = vand.u32 %v451, 4294901760
    %v1789 = vsub.f32 %v451, %v1788
    %v1790 = vand.u32 %v1789, 4294901760
    %v1791 = vsub.f32 %v1789, %v1790
    %v1792 = vand.u32 %v1791, 4294901760
    %1793 = vmatpush.msra.mxu0 %v1792
    %v1794 = vand.u32 %v449, 4294901760
    %v1795 = vsub.f32 %v449, %v1794
    %v1796 = vand.u32 %v1795, 4294901760
    %v1797 = vsub.f32 %v1795, %v1796
    %v1798 = vand.u32 %v1797, 4294901760
    %1799 = vmatpush.msra.mxu0 %v1798
    %v1800 = vand.u32 %v447, 4294901760
    %v1801 = vsub.f32 %v447, %v1800
    %v1802 = vand.u32 %v1801, 4294901760
    %v1803 = vsub.f32 %v1801, %v1802
    %v1804 = vand.u32 %v1803, 4294901760
    %1805 = vmatpush.msra.mxu0 %v1804
    %v1806 = vand.u32 %v445, 4294901760
    %v1807 = vsub.f32 %v445, %v1806
    %v1808 = vand.u32 %v1807, 4294901760
    %v1809 = vsub.f32 %v1807, %v1808
    %v1810 = vand.u32 %v1809, 4294901760
    %1811 = vmatpush.msra.mxu0 %v1810
    %v1812 = vand.u32 %v443, 4294901760
    %v1813 = vsub.f32 %v443, %v1812
    %v1814 = vand.u32 %v1813, 4294901760
    %v1815 = vsub.f32 %v1813, %v1814
    %v1816 = vand.u32 %v1815, 4294901760
    %1817 = vmatpush.msra.mxu0 %v1816
    %v1818 = vand.u32 %v441, 4294901760
    %v1819 = vsub.f32 %v441, %v1818
    %v1820 = vand.u32 %v1819, 4294901760
    %v1821 = vsub.f32 %v1819, %v1820
    %v1822 = vand.u32 %v1821, 4294901760
    %1823 = vmatpush.msra.mxu0 %v1822
    %v1824 = vand.u32 %v439, 4294901760
    %v1825 = vsub.f32 %v439, %v1824
    %v1826 = vand.u32 %v1825, 4294901760
    %v1827 = vsub.f32 %v1825, %v1826
    %v1828 = vand.u32 %v1827, 4294901760
    %1829 = vmatpush.msra.mxu0 %v1828
    %v1830 = vand.u32 %v437, 4294901760
    %v1831 = vsub.f32 %v437, %v1830
    %v1832 = vand.u32 %v1831, 4294901760
    %v1833 = vsub.f32 %v1831, %v1832
    %v1834 = vand.u32 %v1833, 4294901760
    %1835 = vmatpush.msra.mxu0 %v1834
    %v1836 = vand.u32 %v435, 4294901760
    %v1837 = vsub.f32 %v435, %v1836
    %v1838 = vand.u32 %v1837, 4294901760
    %v1839 = vsub.f32 %v1837, %v1838
    %v1840 = vand.u32 %v1839, 4294901760
    %1841 = vmatpush.msra.mxu0 %v1840
    %v1842 = vand.u32 %v433, 4294901760
    %v1843 = vsub.f32 %v433, %v1842
    %v1844 = vand.u32 %v1843, 4294901760
    %v1845 = vsub.f32 %v1843, %v1844
    %v1846 = vand.u32 %v1845, 4294901760
    %1847 = vmatpush.msra.mxu0 %v1846
    %v1848 = vand.u32 %v431, 4294901760
    %v1849 = vsub.f32 %v431, %v1848
    %v1850 = vand.u32 %v1849, 4294901760
    %v1851 = vsub.f32 %v1849, %v1850
    %v1852 = vand.u32 %v1851, 4294901760
    %1853 = vmatpush.msra.mxu0 %v1852
    %v1854 = vand.u32 %v429, 4294901760
    %v1855 = vsub.f32 %v429, %v1854
    %v1856 = vand.u32 %v1855, 4294901760
    %v1857 = vsub.f32 %v1855, %v1856
    %v1858 = vand.u32 %v1857, 4294901760
    %1859 = vmatpush.msra.mxu0 %v1858
    %v1860 = vand.u32 %v683, 4294901760
    %1861 = vmatmul.f32.gmra.mxu0 %v1860
    %v1862 = vpop.f32.mrf.mxu0
    %v1863 = vadd.f32 %v1762, %v1862
    %1864 = vdwg.mxu0
    %v1865 = vand.u32 %v459, 4294901760
    %v1866 = vsub.f32 %v459, %v1865
    %1867 = vmatpush.msra.mxu0 %v1866
    %v1868 = vand.u32 %v457, 4294901760
    %v1869 = vsub.f32 %v457, %v1868
    %1870 = vmatpush.msra.mxu0 %v1869
    %v1871 = vand.u32 %v455, 4294901760
    %v1872 = vsub.f32 %v455, %v1871
    %1873 = vmatpush.msra.mxu0 %v1872
    %v1874 = vand.u32 %v453, 4294901760
    %v1875 = vsub.f32 %v453, %v1874
    %1876 = vmatpush.msra.mxu0 %v1875
    %v1877 = vand.u32 %v451, 4294901760
    %v1878 = vsub.f32 %v451, %v1877
    %1879 = vmatpush.msra.mxu0 %v1878
    %v1880 = vand.u32 %v449, 4294901760
    %v1881 = vsub.f32 %v449, %v1880
    %1882 = vmatpush.msra.mxu0 %v1881
    %v1883 = vand.u32 %v447, 4294901760
    %v1884 = vsub.f32 %v447, %v1883
    %1885 = vmatpush.msra.mxu0 %v1884
    %v1886 = vand.u32 %v445, 4294901760
    %v1887 = vsub.f32 %v445, %v1886
    %1888 = vmatpush.msra.mxu0 %v1887
    %v1889 = vand.u32 %v443, 4294901760
    %v1890 = vsub.f32 %v443, %v1889
    %1891 = vmatpush.msra.mxu0 %v1890
    %v1892 = vand.u32 %v441, 4294901760
    %v1893 = vsub.f32 %v441, %v1892
    %1894 = vmatpush.msra.mxu0 %v1893
    %v1895 = vand.u32 %v439, 4294901760
    %v1896 = vsub.f32 %v439, %v1895
    %1897 = vmatpush.msra.mxu0 %v1896
    %v1898 = vand.u32 %v437, 4294901760
    %v1899 = vsub.f32 %v437, %v1898
    %1900 = vmatpush.msra.mxu0 %v1899
    %v1901 = vand.u32 %v435, 4294901760
    %v1902 = vsub.f32 %v435, %v1901
    %1903 = vmatpush.msra.mxu0 %v1902
    %v1904 = vand.u32 %v433, 4294901760
    %v1905 = vsub.f32 %v433, %v1904
    %1906 = vmatpush.msra.mxu0 %v1905
    %v1907 = vand.u32 %v431, 4294901760
    %v1908 = vsub.f32 %v431, %v1907
    %1909 = vmatpush.msra.mxu0 %v1908
    %v1910 = vand.u32 %v429, 4294901760
    %v1911 = vsub.f32 %v429, %v1910
    %1912 = vmatpush.msra.mxu0 %v1911
    %v1913 = vand.u32 %v683, 4294901760
    %v1914 = vsub.f32 %v683, %v1913
    %1915 = vmatmul.f32.gmra.mxu0 %v1914
    %v1916 = vpop.f32.mrf.mxu0
    %v1917 = vadd.f32 %v1863, %v1916
    %1918 = vdwg.mxu0
    %v1919 = vand.u32 %v459, 4294901760
    %1920 = vmatpush.msra.mxu0 %v1919
    %v1921 = vand.u32 %v457, 4294901760
    %1922 = vmatpush.msra.mxu0 %v1921
    %v1923 = vand.u32 %v455, 4294901760
    %1924 = vmatpush.msra.mxu0 %v1923
    %v1925 = vand.u32 %v453, 4294901760
    %1926 = vmatpush.msra.mxu0 %v1925
    %v1927 = vand.u32 %v451, 4294901760
    %1928 = vmatpush.msra.mxu0 %v1927
    %v1929 = vand.u32 %v449, 4294901760
    %1930 = vmatpush.msra.mxu0 %v1929
    %v1931 = vand.u32 %v447, 4294901760
    %1932 = vmatpush.msra.mxu0 %v1931
    %v1933 = vand.u32 %v445, 4294901760
    %1934 = vmatpush.msra.mxu0 %v1933
    %v1935 = vand.u32 %v443, 4294901760
    %1936 = vmatpush.msra.mxu0 %v1935
    %v1937 = vand.u32 %v441, 4294901760
    %1938 = vmatpush.msra.mxu0 %v1937
    %v1939 = vand.u32 %v439, 4294901760
    %1940 = vmatpush.msra.mxu0 %v1939
    %v1941 = vand.u32 %v437, 4294901760
    %1942 = vmatpush.msra.mxu0 %v1941
    %v1943 = vand.u32 %v435, 4294901760
    %1944 = vmatpush.msra.mxu0 %v1943
    %v1945 = vand.u32 %v433, 4294901760
    %1946 = vmatpush.msra.mxu0 %v1945
    %v1947 = vand.u32 %v431, 4294901760
    %1948 = vmatpush.msra.mxu0 %v1947
    %v1949 = vand.u32 %v429, 4294901760
    %1950 = vmatpush.msra.mxu0 %v1949
    %v1951 = vand.u32 %v683, 4294901760
    %v1952 = vsub.f32 %v683, %v1951
    %v1953 = vand.u32 %v1952, 4294901760
    %1954 = vmatmul.f32.gmra.mxu0 %v1953
    %v1955 = vpop.f32.mrf.mxu0
    %v1956 = vadd.f32 %v1917, %v1955
    %1957 = vdwg.mxu0
    %v1958 = vand.u32 %v459, 4294901760
    %v1959 = vsub.f32 %v459, %v1958
    %v1960 = vand.u32 %v1959, 4294901760
    %1961 = vmatpush.msra.mxu0 %v1960
    %v1962 = vand.u32 %v457, 4294901760
    %v1963 = vsub.f32 %v457, %v1962
    %v1964 = vand.u32 %v1963, 4294901760
    %1965 = vmatpush.msra.mxu0 %v1964
    %v1966 = vand.u32 %v455, 4294901760
    %v1967 = vsub.f32 %v455, %v1966
    %v1968 = vand.u32 %v1967, 4294901760
    %1969 = vmatpush.msra.mxu0 %v1968
    %v1970 = vand.u32 %v453, 4294901760
    %v1971 = vsub.f32 %v453, %v1970
    %v1972 = vand.u32 %v1971, 4294901760
    %1973 = vmatpush.msra.mxu0 %v1972
    %v1974 = vand.u32 %v451, 4294901760
    %v1975 = vsub.f32 %v451, %v1974
    %v1976 = vand.u32 %v1975, 4294901760
    %1977 = vmatpush.msra.mxu0 %v1976
    %v1978 = vand.u32 %v449, 4294901760
    %v1979 = vsub.f32 %v449, %v1978
    %v1980 = vand.u32 %v1979, 4294901760
    %1981 = vmatpush.msra.mxu0 %v1980
    %v1982 = vand.u32 %v447, 4294901760
    %v1983 = vsub.f32 %v447, %v1982
    %v1984 = vand.u32 %v1983, 4294901760
    %1985 = vmatpush.msra.mxu0 %v1984
    %v1986 = vand.u32 %v445, 4294901760
    %v1987 = vsub.f32 %v445, %v1986
    %v1988 = vand.u32 %v1987, 4294901760
    %1989 = vmatpush.msra.mxu0 %v1988
    %v1990 = vand.u32 %v443, 4294901760
    %v1991 = vsub.f32 %v443, %v1990
    %v1992 = vand.u32 %v1991, 4294901760
    %1993 = vmatpush.msra.mxu0 %v1992
    %v1994 = vand.u32 %v441, 4294901760
    %v1995 = vsub.f32 %v441, %v1994
    %v1996 = vand.u32 %v1995, 4294901760
    %1997 = vmatpush.msra.mxu0 %v1996
    %v1998 = vand.u32 %v439, 4294901760
    %v1999 = vsub.f32 %v439, %v1998
    %v2000 = vand.u32 %v1999, 4294901760
    %2001 = vmatpush.msra.mxu0 %v2000
    %v2002 = vand.u32 %v437, 4294901760
    %v2003 = vsub.f32 %v437, %v2002
    %v2004 = vand.u32 %v2003, 4294901760
    %2005 = vmatpush.msra.mxu0 %v2004
    %v2006 = vand.u32 %v435, 4294901760
    %v2007 = vsub.f32 %v435, %v2006
    %v2008 = vand.u32 %v2007, 4294901760
    %2009 = vmatpush.msra.mxu0 %v2008
    %v2010 = vand.u32 %v433, 4294901760
    %v2011 = vsub.f32 %v433, %v2010
    %v2012 = vand.u32 %v2011, 4294901760
    %2013 = vmatpush.msra.mxu0 %v2012
    %v2014 = vand.u32 %v431, 4294901760
    %v2015 = vsub.f32 %v431, %v2014
    %v2016 = vand.u32 %v2015, 4294901760
    %2017 = vmatpush.msra.mxu0 %v2016
    %v2018 = vand.u32 %v429, 4294901760
    %v2019 = vsub.f32 %v429, %v2018
    %v2020 = vand.u32 %v2019, 4294901760
    %2021 = vmatpush.msra.mxu0 %v2020
    %v2022 = vand.u32 %v683, 4294901760
    %2023 = vmatmul.f32.gmra.mxu0 %v2022
    %v2024 = vpop.f32.mrf.mxu0
    %v2025 = vadd.f32 %v1956, %v2024
    %2026 = vdwg.mxu0
    %v2027 = vand.u32 %v459, 4294901760
    %2028 = vmatpush.msra.mxu0 %v2027
    %v2029 = vand.u32 %v457, 4294901760
    %2030 = vmatpush.msra.mxu0 %v2029
    %v2031 = vand.u32 %v455, 4294901760
    %2032 = vmatpush.msra.mxu0 %v2031
    %v2033 = vand.u32 %v453, 4294901760
    %2034 = vmatpush.msra.mxu0 %v2033
    %v2035 = vand.u32 %v451, 4294901760
    %2036 = vmatpush.msra.mxu0 %v2035
    %v2037 = vand.u32 %v449, 4294901760
    %2038 = vmatpush.msra.mxu0 %v2037
    %v2039 = vand.u32 %v447, 4294901760
    %2040 = vmatpush.msra.mxu0 %v2039
    %v2041 = vand.u32 %v445, 4294901760
    %2042 = vmatpush.msra.mxu0 %v2041
    %v2043 = vand.u32 %v443, 4294901760
    %2044 = vmatpush.msra.mxu0 %v2043
    %v2045 = vand.u32 %v441, 4294901760
    %2046 = vmatpush.msra.mxu0 %v2045
    %v2047 = vand.u32 %v439, 4294901760
    %2048 = vmatpush.msra.mxu0 %v2047
    %v2049 = vand.u32 %v437, 4294901760
    %2050 = vmatpush.msra.mxu0 %v2049
    %v2051 = vand.u32 %v435, 4294901760
    %2052 = vmatpush.msra.mxu0 %v2051
    %v2053 = vand.u32 %v433, 4294901760
    %2054 = vmatpush.msra.mxu0 %v2053
    %v2055 = vand.u32 %v431, 4294901760
    %2056 = vmatpush.msra.mxu0 %v2055
    %v2057 = vand.u32 %v429, 4294901760
    %2058 = vmatpush.msra.mxu0 %v2057
    %v2059 = vand.u32 %v683, 4294901760
    %2060 = vmatmul.f32.gmra.mxu0 %v2059
    %v2061 = vpop.f32.mrf.mxu0
    %v2062 = vadd.f32 %v2025, %v2061
    %2063 = vdwg.mxu0
    %v2064 = vand.u32 %v491, 4294901760
    %2065 = vmatpush.msra.mxu0 %v2064
    %v2066 = vand.u32 %v489, 4294901760
    %2067 = vmatpush.msra.mxu0 %v2066
    %v2068 = vand.u32 %v487, 4294901760
    %2069 = vmatpush.msra.mxu0 %v2068
    %v2070 = vand.u32 %v485, 4294901760
    %2071 = vmatpush.msra.mxu0 %v2070
    %v2072 = vand.u32 %v483, 4294901760
    %2073 = vmatpush.msra.mxu0 %v2072
    %v2074 = vand.u32 %v481, 4294901760
    %2075 = vmatpush.msra.mxu0 %v2074
    %v2076 = vand.u32 %v479, 4294901760
    %2077 = vmatpush.msra.mxu0 %v2076
    %v2078 = vand.u32 %v477, 4294901760
    %2079 = vmatpush.msra.mxu0 %v2078
    %v2080 = vand.u32 %v475, 4294901760
    %2081 = vmatpush.msra.mxu0 %v2080
    %v2082 = vand.u32 %v473, 4294901760
    %2083 = vmatpush.msra.mxu0 %v2082
    %v2084 = vand.u32 %v471, 4294901760
    %2085 = vmatpush.msra.mxu0 %v2084
    %v2086 = vand.u32 %v469, 4294901760
    %2087 = vmatpush.msra.mxu0 %v2086
    %v2088 = vand.u32 %v467, 4294901760
    %2089 = vmatpush.msra.mxu0 %v2088
    %v2090 = vand.u32 %v465, 4294901760
    %2091 = vmatpush.msra.mxu0 %v2090
    %v2092 = vand.u32 %v463, 4294901760
    %2093 = vmatpush.msra.mxu0 %v2092
    %v2094 = vand.u32 %v461, 4294901760
    %2095 = vmatpush.msra.mxu0 %v2094
    %v2096 = vand.u32 %v684, 4294901760
    %v2097 = vsub.f32 %v684, %v2096
    %v2098 = vand.u32 %v2097, 4294901760
    %v2099 = vsub.f32 %v2097, %v2098
    %v2100 = vand.u32 %v2099, 4294901760
    %2101 = vmatmul.f32.gmra.mxu0 %v2100
    %v2102 = vpop.f32.mrf.mxu0
    %v2103 = vadd.f32 %v2062, %v2102
    %2104 = vdwg.mxu0
    %v2105 = vand.u32 %v491, 4294901760
    %v2106 = vsub.f32 %v491, %v2105
    %v2107 = vand.u32 %v2106, 4294901760
    %v2108 = vsub.f32 %v2106, %v2107
    %v2109 = vand.u32 %v2108, 4294901760
    %2110 = vmatpush.msra.mxu0 %v2109
    %v2111 = vand.u32 %v489, 4294901760
    %v2112 = vsub.f32 %v489, %v2111
    %v2113 = vand.u32 %v2112, 4294901760
    %v2114 = vsub.f32 %v2112, %v2113
    %v2115 = vand.u32 %v2114, 4294901760
    %2116 = vmatpush.msra.mxu0 %v2115
    %v2117 = vand.u32 %v487, 4294901760
    %v2118 = vsub.f32 %v487, %v2117
    %v2119 = vand.u32 %v2118, 4294901760
    %v2120 = vsub.f32 %v2118, %v2119
    %v2121 = vand.u32 %v2120, 4294901760
    %2122 = vmatpush.msra.mxu0 %v2121
    %v2123 = vand.u32 %v485, 4294901760
    %v2124 = vsub.f32 %v485, %v2123
    %v2125 = vand.u32 %v2124, 4294901760
    %v2126 = vsub.f32 %v2124, %v2125
    %v2127 = vand.u32 %v2126, 4294901760
    %2128 = vmatpush.msra.mxu0 %v2127
    %v2129 = vand.u32 %v483, 4294901760
    %v2130 = vsub.f32 %v483, %v2129
    %v2131 = vand.u32 %v2130, 4294901760
    %v2132 = vsub.f32 %v2130, %v2131
    %v2133 = vand.u32 %v2132, 4294901760
    %2134 = vmatpush.msra.mxu0 %v2133
    %v2135 = vand.u32 %v481, 4294901760
    %v2136 = vsub.f32 %v481, %v2135
    %v2137 = vand.u32 %v2136, 4294901760
    %v2138 = vsub.f32 %v2136, %v2137
    %v2139 = vand.u32 %v2138, 4294901760
    %2140 = vmatpush.msra.mxu0 %v2139
    %v2141 = vand.u32 %v479, 4294901760
    %v2142 = vsub.f32 %v479, %v2141
    %v2143 = vand.u32 %v2142, 4294901760
    %v2144 = vsub.f32 %v2142, %v2143
    %v2145 = vand.u32 %v2144, 4294901760
    %2146 = vmatpush.msra.mxu0 %v2145
    %v2147 = vand.u32 %v477, 4294901760
    %v2148 = vsub.f32 %v477, %v2147
    %v2149 = vand.u32 %v2148, 4294901760
    %v2150 = vsub.f32 %v2148, %v2149
    %v2151 = vand.u32 %v2150, 4294901760
    %2152 = vmatpush.msra.mxu0 %v2151
    %v2153 = vand.u32 %v475, 4294901760
    %v2154 = vsub.f32 %v475, %v2153
    %v2155 = vand.u32 %v2154, 4294901760
    %v2156 = vsub.f32 %v2154, %v2155
    %v2157 = vand.u32 %v2156, 4294901760
    %2158 = vmatpush.msra.mxu0 %v2157
    %v2159 = vand.u32 %v473, 4294901760
    %v2160 = vsub.f32 %v473, %v2159
    %v2161 = vand.u32 %v2160, 4294901760
    %v2162 = vsub.f32 %v2160, %v2161
    %v2163 = vand.u32 %v2162, 4294901760
    %2164 = vmatpush.msra.mxu0 %v2163
    %v2165 = vand.u32 %v471, 4294901760
    %v2166 = vsub.f32 %v471, %v2165
    %v2167 = vand.u32 %v2166, 4294901760
    %v2168 = vsub.f32 %v2166, %v2167
    %v2169 = vand.u32 %v2168, 4294901760
    %2170 = vmatpush.msra.mxu0 %v2169
    %v2171 = vand.u32 %v469, 4294901760
    %v2172 = vsub.f32 %v469, %v2171
    %v2173 = vand.u32 %v2172, 4294901760
    %v2174 = vsub.f32 %v2172, %v2173
    %v2175 = vand.u32 %v2174, 4294901760
    %2176 = vmatpush.msra.mxu0 %v2175
    %v2177 = vand.u32 %v467, 4294901760
    %v2178 = vsub.f32 %v467, %v2177
    %v2179 = vand.u32 %v2178, 4294901760
    %v2180 = vsub.f32 %v2178, %v2179
    %v2181 = vand.u32 %v2180, 4294901760
    %2182 = vmatpush.msra.mxu0 %v2181
    %v2183 = vand.u32 %v465, 4294901760
    %v2184 = vsub.f32 %v465, %v2183
    %v2185 = vand.u32 %v2184, 4294901760
    %v2186 = vsub.f32 %v2184, %v2185
    %v2187 = vand.u32 %v2186, 4294901760
    %2188 = vmatpush.msra.mxu0 %v2187
    %v2189 = vand.u32 %v463, 4294901760
    %v2190 = vsub.f32 %v463, %v2189
    %v2191 = vand.u32 %v2190, 4294901760
    %v2192 = vsub.f32 %v2190, %v2191
    %v2193 = vand.u32 %v2192, 4294901760
    %2194 = vmatpush.msra.mxu0 %v2193
    %v2195 = vand.u32 %v461, 4294901760
    %v2196 = vsub.f32 %v461, %v2195
    %v2197 = vand.u32 %v2196, 4294901760
    %v2198 = vsub.f32 %v2196, %v2197
    %v2199 = vand.u32 %v2198, 4294901760
    %2200 = vmatpush.msra.mxu0 %v2199
    %v2201 = vand.u32 %v684, 4294901760
    %2202 = vmatmul.f32.gmra.mxu0 %v2201
    %v2203 = vpop.f32.mrf.mxu0
    %v2204 = vadd.f32 %v2103, %v2203
    %2205 = vdwg.mxu0
    %v2206 = vand.u32 %v491, 4294901760
    %v2207 = vsub.f32 %v491, %v2206
    %2208 = vmatpush.msra.mxu0 %v2207
    %v2209 = vand.u32 %v489, 4294901760
    %v2210 = vsub.f32 %v489, %v2209
    %2211 = vmatpush.msra.mxu0 %v2210
    %v2212 = vand.u32 %v487, 4294901760
    %v2213 = vsub.f32 %v487, %v2212
    %2214 = vmatpush.msra.mxu0 %v2213
    %v2215 = vand.u32 %v485, 4294901760
    %v2216 = vsub.f32 %v485, %v2215
    %2217 = vmatpush.msra.mxu0 %v2216
    %v2218 = vand.u32 %v483, 4294901760
    %v2219 = vsub.f32 %v483, %v2218
    %2220 = vmatpush.msra.mxu0 %v2219
    %v2221 = vand.u32 %v481, 4294901760
    %v2222 = vsub.f32 %v481, %v2221
    %2223 = vmatpush.msra.mxu0 %v2222
    %v2224 = vand.u32 %v479, 4294901760
    %v2225 = vsub.f32 %v479, %v2224
    %2226 = vmatpush.msra.mxu0 %v2225
    %v2227 = vand.u32 %v477, 4294901760
    %v2228 = vsub.f32 %v477, %v2227
    %2229 = vmatpush.msra.mxu0 %v2228
    %v2230 = vand.u32 %v475, 4294901760
    %v2231 = vsub.f32 %v475, %v2230
    %2232 = vmatpush.msra.mxu0 %v2231
    %v2233 = vand.u32 %v473, 4294901760
    %v2234 = vsub.f32 %v473, %v2233
    %2235 = vmatpush.msra.mxu0 %v2234
    %v2236 = vand.u32 %v471, 4294901760
    %v2237 = vsub.f32 %v471, %v2236
    %2238 = vmatpush.msra.mxu0 %v2237
    %v2239 = vand.u32 %v469, 4294901760
    %v2240 = vsub.f32 %v469, %v2239
    %2241 = vmatpush.msra.mxu0 %v2240
    %v2242 = vand.u32 %v467, 4294901760
    %v2243 = vsub.f32 %v467, %v2242
    %2244 = vmatpush.msra.mxu0 %v2243
    %v2245 = vand.u32 %v465, 4294901760
    %v2246 = vsub.f32 %v465, %v2245
    %2247 = vmatpush.msra.mxu0 %v2246
    %v2248 = vand.u32 %v463, 4294901760
    %v2249 = vsub.f32 %v463, %v2248
    %2250 = vmatpush.msra.mxu0 %v2249
    %v2251 = vand.u32 %v461, 4294901760
    %v2252 = vsub.f32 %v461, %v2251
    %2253 = vmatpush.msra.mxu0 %v2252
    %v2254 = vand.u32 %v684, 4294901760
    %v2255 = vsub.f32 %v684, %v2254
    %2256 = vmatmul.f32.gmra.mxu0 %v2255
    %v2257 = vpop.f32.mrf.mxu0
    %v2258 = vadd.f32 %v2204, %v2257
    %2259 = vdwg.mxu0
    %v2260 = vand.u32 %v491, 4294901760
    %2261 = vmatpush.msra.mxu0 %v2260
    %v2262 = vand.u32 %v489, 4294901760
    %2263 = vmatpush.msra.mxu0 %v2262
    %v2264 = vand.u32 %v487, 4294901760
    %2265 = vmatpush.msra.mxu0 %v2264
    %v2266 = vand.u32 %v485, 4294901760
    %2267 = vmatpush.msra.mxu0 %v2266
    %v2268 = vand.u32 %v483, 4294901760
    %2269 = vmatpush.msra.mxu0 %v2268
    %v2270 = vand.u32 %v481, 4294901760
    %2271 = vmatpush.msra.mxu0 %v2270
    %v2272 = vand.u32 %v479, 4294901760
    %2273 = vmatpush.msra.mxu0 %v2272
    %v2274 = vand.u32 %v477, 4294901760
    %2275 = vmatpush.msra.mxu0 %v2274
    %v2276 = vand.u32 %v475, 4294901760
    %2277 = vmatpush.msra.mxu0 %v2276
    %v2278 = vand.u32 %v473, 4294901760
    %2279 = vmatpush.msra.mxu0 %v2278
    %v2280 = vand.u32 %v471, 4294901760
    %2281 = vmatpush.msra.mxu0 %v2280
    %v2282 = vand.u32 %v469, 4294901760
    %2283 = vmatpush.msra.mxu0 %v2282
    %v2284 = vand.u32 %v467, 4294901760
    %2285 = vmatpush.msra.mxu0 %v2284
    %v2286 = vand.u32 %v465, 4294901760
    %2287 = vmatpush.msra.mxu0 %v2286
    %v2288 = vand.u32 %v463, 4294901760
    %2289 = vmatpush.msra.mxu0 %v2288
    %v2290 = vand.u32 %v461, 4294901760
    %2291 = vmatpush.msra.mxu0 %v2290
    %v2292 = vand.u32 %v684, 4294901760
    %v2293 = vsub.f32 %v684, %v2292
    %v2294 = vand.u32 %v2293, 4294901760
    %2295 = vmatmul.f32.gmra.mxu0 %v2294
    %v2296 = vpop.f32.mrf.mxu0
    %v2297 = vadd.f32 %v2258, %v2296
    %2298 = vdwg.mxu0
    %v2299 = vand.u32 %v491, 4294901760
    %v2300 = vsub.f32 %v491, %v2299
    %v2301 = vand.u32 %v2300, 4294901760
    %2302 = vmatpush.msra.mxu0 %v2301
    %v2303 = vand.u32 %v489, 4294901760
    %v2304 = vsub.f32 %v489, %v2303
    %v2305 = vand.u32 %v2304, 4294901760
    %2306 = vmatpush.msra.mxu0 %v2305
    %v2307 = vand.u32 %v487, 4294901760
    %v2308 = vsub.f32 %v487, %v2307
    %v2309 = vand.u32 %v2308, 4294901760
    %2310 = vmatpush.msra.mxu0 %v2309
    %v2311 = vand.u32 %v485, 4294901760
    %v2312 = vsub.f32 %v485, %v2311
    %v2313 = vand.u32 %v2312, 4294901760
    %2314 = vmatpush.msra.mxu0 %v2313
    %v2315 = vand.u32 %v483, 4294901760
    %v2316 = vsub.f32 %v483, %v2315
    %v2317 = vand.u32 %v2316, 4294901760
    %2318 = vmatpush.msra.mxu0 %v2317
    %v2319 = vand.u32 %v481, 4294901760
    %v2320 = vsub.f32 %v481, %v2319
    %v2321 = vand.u32 %v2320, 4294901760
    %2322 = vmatpush.msra.mxu0 %v2321
    %v2323 = vand.u32 %v479, 4294901760
    %v2324 = vsub.f32 %v479, %v2323
    %v2325 = vand.u32 %v2324, 4294901760
    %2326 = vmatpush.msra.mxu0 %v2325
    %v2327 = vand.u32 %v477, 4294901760
    %v2328 = vsub.f32 %v477, %v2327
    %v2329 = vand.u32 %v2328, 4294901760
    %2330 = vmatpush.msra.mxu0 %v2329
    %v2331 = vand.u32 %v475, 4294901760
    %v2332 = vsub.f32 %v475, %v2331
    %v2333 = vand.u32 %v2332, 4294901760
    %2334 = vmatpush.msra.mxu0 %v2333
    %v2335 = vand.u32 %v473, 4294901760
    %v2336 = vsub.f32 %v473, %v2335
    %v2337 = vand.u32 %v2336, 4294901760
    %2338 = vmatpush.msra.mxu0 %v2337
    %v2339 = vand.u32 %v471, 4294901760
    %v2340 = vsub.f32 %v471, %v2339
    %v2341 = vand.u32 %v2340, 4294901760
    %2342 = vmatpush.msra.mxu0 %v2341
    %v2343 = vand.u32 %v469, 4294901760
    %v2344 = vsub.f32 %v469, %v2343
    %v2345 = vand.u32 %v2344, 4294901760
    %2346 = vmatpush.msra.mxu0 %v2345
    %v2347 = vand.u32 %v467, 4294901760
    %v2348 = vsub.f32 %v467, %v2347
    %v2349 = vand.u32 %v2348, 4294901760
    %2350 = vmatpush.msra.mxu0 %v2349
    %v2351 = vand.u32 %v465, 4294901760
    %v2352 = vsub.f32 %v465, %v2351
    %v2353 = vand.u32 %v2352, 4294901760
    %2354 = vmatpush.msra.mxu0 %v2353
    %v2355 = vand.u32 %v463, 4294901760
    %v2356 = vsub.f32 %v463, %v2355
    %v2357 = vand.u32 %v2356, 4294901760
    %2358 = vmatpush.msra.mxu0 %v2357
    %v2359 = vand.u32 %v461, 4294901760
    %v2360 = vsub.f32 %v461, %v2359
    %v2361 = vand.u32 %v2360, 4294901760
    %2362 = vmatpush.msra.mxu0 %v2361
    %v2363 = vand.u32 %v684, 4294901760
    %2364 = vmatmul.f32.gmra.mxu0 %v2363
    %v2365 = vpop.f32.mrf.mxu0
    %v2366 = vadd.f32 %v2297, %v2365
    %2367 = vdwg.mxu0
    %v2368 = vand.u32 %v491, 4294901760
    %2369 = vmatpush.msra.mxu0 %v2368
    %v2370 = vand.u32 %v489, 4294901760
    %2371 = vmatpush.msra.mxu0 %v2370
    %v2372 = vand.u32 %v487, 4294901760
    %2373 = vmatpush.msra.mxu0 %v2372
    %v2374 = vand.u32 %v485, 4294901760
    %2375 = vmatpush.msra.mxu0 %v2374
    %v2376 = vand.u32 %v483, 4294901760
    %2377 = vmatpush.msra.mxu0 %v2376
    %v2378 = vand.u32 %v481, 4294901760
    %2379 = vmatpush.msra.mxu0 %v2378
    %v2380 = vand.u32 %v479, 4294901760
    %2381 = vmatpush.msra.mxu0 %v2380
    %v2382 = vand.u32 %v477, 4294901760
    %2383 = vmatpush.msra.mxu0 %v2382
    %v2384 = vand.u32 %v475, 4294901760
    %2385 = vmatpush.msra.mxu0 %v2384
    %v2386 = vand.u32 %v473, 4294901760
    %2387 = vmatpush.msra.mxu0 %v2386
    %v2388 = vand.u32 %v471, 4294901760
    %2389 = vmatpush.msra.mxu0 %v2388
    %v2390 = vand.u32 %v469, 4294901760
    %2391 = vmatpush.msra.mxu0 %v2390
    %v2392 = vand.u32 %v467, 4294901760
    %2393 = vmatpush.msra.mxu0 %v2392
    %v2394 = vand.u32 %v465, 4294901760
    %2395 = vmatpush.msra.mxu0 %v2394
    %v2396 = vand.u32 %v463, 4294901760
    %2397 = vmatpush.msra.mxu0 %v2396
    %v2398 = vand.u32 %v461, 4294901760
    %2399 = vmatpush.msra.mxu0 %v2398
    %v2400 = vand.u32 %v684, 4294901760
    %2401 = vmatmul.f32.gmra.mxu0 %v2400
    %v2402 = vpop.f32.mrf.mxu0
    %v2403 = vadd.f32 %v2366, %v2402
    %2404 = vdwg.mxu0
    %v2405 = vand.u32 %v523, 4294901760
    %2406 = vmatpush.msra.mxu0 %v2405
    %v2407 = vand.u32 %v521, 4294901760
    %2408 = vmatpush.msra.mxu0 %v2407
    %v2409 = vand.u32 %v519, 4294901760
    %2410 = vmatpush.msra.mxu0 %v2409
    %v2411 = vand.u32 %v517, 4294901760
    %2412 = vmatpush.msra.mxu0 %v2411
    %v2413 = vand.u32 %v515, 4294901760
    %2414 = vmatpush.msra.mxu0 %v2413
    %v2415 = vand.u32 %v513, 4294901760
    %2416 = vmatpush.msra.mxu0 %v2415
    %v2417 = vand.u32 %v511, 4294901760
    %2418 = vmatpush.msra.mxu0 %v2417
    %v2419 = vand.u32 %v509, 4294901760
    %2420 = vmatpush.msra.mxu0 %v2419
    %v2421 = vand.u32 %v507, 4294901760
    %2422 = vmatpush.msra.mxu0 %v2421
    %v2423 = vand.u32 %v505, 4294901760
    %2424 = vmatpush.msra.mxu0 %v2423
    %v2425 = vand.u32 %v503, 4294901760
    %2426 = vmatpush.msra.mxu0 %v2425
    %v2427 = vand.u32 %v501, 4294901760
    %2428 = vmatpush.msra.mxu0 %v2427
    %v2429 = vand.u32 %v499, 4294901760
    %2430 = vmatpush.msra.mxu0 %v2429
    %v2431 = vand.u32 %v497, 4294901760
    %2432 = vmatpush.msra.mxu0 %v2431
    %v2433 = vand.u32 %v495, 4294901760
    %2434 = vmatpush.msra.mxu0 %v2433
    %v2435 = vand.u32 %v493, 4294901760
    %2436 = vmatpush.msra.mxu0 %v2435
    %v2437 = vand.u32 %v685, 4294901760
    %v2438 = vsub.f32 %v685, %v2437
    %v2439 = vand.u32 %v2438, 4294901760
    %v2440 = vsub.f32 %v2438, %v2439
    %v2441 = vand.u32 %v2440, 4294901760
    %2442 = vmatmul.f32.gmra.mxu0 %v2441
    %v2443 = vpop.f32.mrf.mxu0
    %v2444 = vadd.f32 %v2403, %v2443
    %2445 = vdwg.mxu0
    %v2446 = vand.u32 %v523, 4294901760
    %v2447 = vsub.f32 %v523, %v2446
    %v2448 = vand.u32 %v2447, 4294901760
    %v2449 = vsub.f32 %v2447, %v2448
    %v2450 = vand.u32 %v2449, 4294901760
    %2451 = vmatpush.msra.mxu0 %v2450
    %v2452 = vand.u32 %v521, 4294901760
    %v2453 = vsub.f32 %v521, %v2452
    %v2454 = vand.u32 %v2453, 4294901760
    %v2455 = vsub.f32 %v2453, %v2454
    %v2456 = vand.u32 %v2455, 4294901760
    %2457 = vmatpush.msra.mxu0 %v2456
    %v2458 = vand.u32 %v519, 4294901760
    %v2459 = vsub.f32 %v519, %v2458
    %v2460 = vand.u32 %v2459, 4294901760
    %v2461 = vsub.f32 %v2459, %v2460
    %v2462 = vand.u32 %v2461, 4294901760
    %2463 = vmatpush.msra.mxu0 %v2462
    %v2464 = vand.u32 %v517, 4294901760
    %v2465 = vsub.f32 %v517, %v2464
    %v2466 = vand.u32 %v2465, 4294901760
    %v2467 = vsub.f32 %v2465, %v2466
    %v2468 = vand.u32 %v2467, 4294901760
    %2469 = vmatpush.msra.mxu0 %v2468
    %v2470 = vand.u32 %v515, 4294901760
    %v2471 = vsub.f32 %v515, %v2470
    %v2472 = vand.u32 %v2471, 4294901760
    %v2473 = vsub.f32 %v2471, %v2472
    %v2474 = vand.u32 %v2473, 4294901760
    %2475 = vmatpush.msra.mxu0 %v2474
    %v2476 = vand.u32 %v513, 4294901760
    %v2477 = vsub.f32 %v513, %v2476
    %v2478 = vand.u32 %v2477, 4294901760
    %v2479 = vsub.f32 %v2477, %v2478
    %v2480 = vand.u32 %v2479, 4294901760
    %2481 = vmatpush.msra.mxu0 %v2480
    %v2482 = vand.u32 %v511, 4294901760
    %v2483 = vsub.f32 %v511, %v2482
    %v2484 = vand.u32 %v2483, 4294901760
    %v2485 = vsub.f32 %v2483, %v2484
    %v2486 = vand.u32 %v2485, 4294901760
    %2487 = vmatpush.msra.mxu0 %v2486
    %v2488 = vand.u32 %v509, 4294901760
    %v2489 = vsub.f32 %v509, %v2488
    %v2490 = vand.u32 %v2489, 4294901760
    %v2491 = vsub.f32 %v2489, %v2490
    %v2492 = vand.u32 %v2491, 4294901760
    %2493 = vmatpush.msra.mxu0 %v2492
    %v2494 = vand.u32 %v507, 4294901760
    %v2495 = vsub.f32 %v507, %v2494
    %v2496 = vand.u32 %v2495, 4294901760
    %v2497 = vsub.f32 %v2495, %v2496
    %v2498 = vand.u32 %v2497, 4294901760
    %2499 = vmatpush.msra.mxu0 %v2498
    %v2500 = vand.u32 %v505, 4294901760
    %v2501 = vsub.f32 %v505, %v2500
    %v2502 = vand.u32 %v2501, 4294901760
    %v2503 = vsub.f32 %v2501, %v2502
    %v2504 = vand.u32 %v2503, 4294901760
    %2505 = vmatpush.msra.mxu0 %v2504
    %v2506 = vand.u32 %v503, 4294901760
    %v2507 = vsub.f32 %v503, %v2506
    %v2508 = vand.u32 %v2507, 4294901760
    %v2509 = vsub.f32 %v2507, %v2508
    %v2510 = vand.u32 %v2509, 4294901760
    %2511 = vmatpush.msra.mxu0 %v2510
    %v2512 = vand.u32 %v501, 4294901760
    %v2513 = vsub.f32 %v501, %v2512
    %v2514 = vand.u32 %v2513, 4294901760
    %v2515 = vsub.f32 %v2513, %v2514
    %v2516 = vand.u32 %v2515, 4294901760
    %2517 = vmatpush.msra.mxu0 %v2516
    %v2518 = vand.u32 %v499, 4294901760
    %v2519 = vsub.f32 %v499, %v2518
    %v2520 = vand.u32 %v2519, 4294901760
    %v2521 = vsub.f32 %v2519, %v2520
    %v2522 = vand.u32 %v2521, 4294901760
    %2523 = vmatpush.msra.mxu0 %v2522
    %v2524 = vand.u32 %v497, 4294901760
    %v2525 = vsub.f32 %v497, %v2524
    %v2526 = vand.u32 %v2525, 4294901760
    %v2527 = vsub.f32 %v2525, %v2526
    %v2528 = vand.u32 %v2527, 4294901760
    %2529 = vmatpush.msra.mxu0 %v2528
    %v2530 = vand.u32 %v495, 4294901760
    %v2531 = vsub.f32 %v495, %v2530
    %v2532 = vand.u32 %v2531, 4294901760
    %v2533 = vsub.f32 %v2531, %v2532
    %v2534 = vand.u32 %v2533, 4294901760
    %2535 = vmatpush.msra.mxu0 %v2534
    %v2536 = vand.u32 %v493, 4294901760
    %v2537 = vsub.f32 %v493, %v2536
    %v2538 = vand.u32 %v2537, 4294901760
    %v2539 = vsub.f32 %v2537, %v2538
    %v2540 = vand.u32 %v2539, 4294901760
    %2541 = vmatpush.msra.mxu0 %v2540
    %v2542 = vand.u32 %v685, 4294901760
    %2543 = vmatmul.f32.gmra.mxu0 %v2542
    %v2544 = vpop.f32.mrf.mxu0
    %v2545 = vadd.f32 %v2444, %v2544
    %2546 = vdwg.mxu0
    %v2547 = vand.u32 %v523, 4294901760
    %v2548 = vsub.f32 %v523, %v2547
    %2549 = vmatpush.msra.mxu0 %v2548
    %v2550 = vand.u32 %v521, 4294901760
    %v2551 = vsub.f32 %v521, %v2550
    %2552 = vmatpush.msra.mxu0 %v2551
    %v2553 = vand.u32 %v519, 4294901760
    %v2554 = vsub.f32 %v519, %v2553
    %2555 = vmatpush.msra.mxu0 %v2554
    %v2556 = vand.u32 %v517, 4294901760
    %v2557 = vsub.f32 %v517, %v2556
    %2558 = vmatpush.msra.mxu0 %v2557
    %v2559 = vand.u32 %v515, 4294901760
    %v2560 = vsub.f32 %v515, %v2559
    %2561 = vmatpush.msra.mxu0 %v2560
    %v2562 = vand.u32 %v513, 4294901760
    %v2563 = vsub.f32 %v513, %v2562
    %2564 = vmatpush.msra.mxu0 %v2563
    %v2565 = vand.u32 %v511, 4294901760
    %v2566 = vsub.f32 %v511, %v2565
    %2567 = vmatpush.msra.mxu0 %v2566
    %v2568 = vand.u32 %v509, 4294901760
    %v2569 = vsub.f32 %v509, %v2568
    %2570 = vmatpush.msra.mxu0 %v2569
    %v2571 = vand.u32 %v507, 4294901760
    %v2572 = vsub.f32 %v507, %v2571
    %2573 = vmatpush.msra.mxu0 %v2572
    %v2574 = vand.u32 %v505, 4294901760
    %v2575 = vsub.f32 %v505, %v2574
    %2576 = vmatpush.msra.mxu0 %v2575
    %v2577 = vand.u32 %v503, 4294901760
    %v2578 = vsub.f32 %v503, %v2577
    %2579 = vmatpush.msra.mxu0 %v2578
    %v2580 = vand.u32 %v501, 4294901760
    %v2581 = vsub.f32 %v501, %v2580
    %2582 = vmatpush.msra.mxu0 %v2581
    %v2583 = vand.u32 %v499, 4294901760
    %v2584 = vsub.f32 %v499, %v2583
    %2585 = vmatpush.msra.mxu0 %v2584
    %v2586 = vand.u32 %v497, 4294901760
    %v2587 = vsub.f32 %v497, %v2586
    %2588 = vmatpush.msra.mxu0 %v2587
    %v2589 = vand.u32 %v495, 4294901760
    %v2590 = vsub.f32 %v495, %v2589
    %2591 = vmatpush.msra.mxu0 %v2590
    %v2592 = vand.u32 %v493, 4294901760
    %v2593 = vsub.f32 %v493, %v2592
    %2594 = vmatpush.msra.mxu0 %v2593
    %v2595 = vand.u32 %v685, 4294901760
    %v2596 = vsub.f32 %v685, %v2595
    %2597 = vmatmul.f32.gmra.mxu0 %v2596
    %v2598 = vpop.f32.mrf.mxu0
    %v2599 = vadd.f32 %v2545, %v2598
    %2600 = vdwg.mxu0
    %v2601 = vand.u32 %v523, 4294901760
    %2602 = vmatpush.msra.mxu0 %v2601
    %v2603 = vand.u32 %v521, 4294901760
    %2604 = vmatpush.msra.mxu0 %v2603
    %v2605 = vand.u32 %v519, 4294901760
    %2606 = vmatpush.msra.mxu0 %v2605
    %v2607 = vand.u32 %v517, 4294901760
    %2608 = vmatpush.msra.mxu0 %v2607
    %v2609 = vand.u32 %v515, 4294901760
    %2610 = vmatpush.msra.mxu0 %v2609
    %v2611 = vand.u32 %v513, 4294901760
    %2612 = vmatpush.msra.mxu0 %v2611
    %v2613 = vand.u32 %v511, 4294901760
    %2614 = vmatpush.msra.mxu0 %v2613
    %v2615 = vand.u32 %v509, 4294901760
    %2616 = vmatpush.msra.mxu0 %v2615
    %v2617 = vand.u32 %v507, 4294901760
    %2618 = vmatpush.msra.mxu0 %v2617
    %v2619 = vand.u32 %v505, 4294901760
    %2620 = vmatpush.msra.mxu0 %v2619
    %v2621 = vand.u32 %v503, 4294901760
    %2622 = vmatpush.msra.mxu0 %v2621
    %v2623 = vand.u32 %v501, 4294901760
    %2624 = vmatpush.msra.mxu0 %v2623
    %v2625 = vand.u32 %v499, 4294901760
    %2626 = vmatpush.msra.mxu0 %v2625
    %v2627 = vand.u32 %v497, 4294901760
    %2628 = vmatpush.msra.mxu0 %v2627
    %v2629 = vand.u32 %v495, 4294901760
    %2630 = vmatpush.msra.mxu0 %v2629
    %v2631 = vand.u32 %v493, 4294901760
    %2632 = vmatpush.msra.mxu0 %v2631
    %v2633 = vand.u32 %v685, 4294901760
    %v2634 = vsub.f32 %v685, %v2633
    %v2635 = vand.u32 %v2634, 4294901760
    %2636 = vmatmul.f32.gmra.mxu0 %v2635
    %v2637 = vpop.f32.mrf.mxu0
    %v2638 = vadd.f32 %v2599, %v2637
    %2639 = vdwg.mxu0
    %v2640 = vand.u32 %v523, 4294901760
    %v2641 = vsub.f32 %v523, %v2640
    %v2642 = vand.u32 %v2641, 4294901760
    %2643 = vmatpush.msra.mxu0 %v2642
    %v2644 = vand.u32 %v521, 4294901760
    %v2645 = vsub.f32 %v521, %v2644
    %v2646 = vand.u32 %v2645, 4294901760
    %2647 = vmatpush.msra.mxu0 %v2646
    %v2648 = vand.u32 %v519, 4294901760
    %v2649 = vsub.f32 %v519, %v2648
    %v2650 = vand.u32 %v2649, 4294901760
    %2651 = vmatpush.msra.mxu0 %v2650
    %v2652 = vand.u32 %v517, 4294901760
    %v2653 = vsub.f32 %v517, %v2652
    %v2654 = vand.u32 %v2653, 4294901760
    %2655 = vmatpush.msra.mxu0 %v2654
    %v2656 = vand.u32 %v515, 4294901760
    %v2657 = vsub.f32 %v515, %v2656
    %v2658 = vand.u32 %v2657, 4294901760
    %2659 = vmatpush.msra.mxu0 %v2658
    %v2660 = vand.u32 %v513, 4294901760
    %v2661 = vsub.f32 %v513, %v2660
    %v2662 = vand.u32 %v2661, 4294901760
    %2663 = vmatpush.msra.mxu0 %v2662
    %v2664 = vand.u32 %v511, 4294901760
    %v2665 = vsub.f32 %v511, %v2664
    %v2666 = vand.u32 %v2665, 4294901760
    %2667 = vmatpush.msra.mxu0 %v2666
    %v2668 = vand.u32 %v509, 4294901760
    %v2669 = vsub.f32 %v509, %v2668
    %v2670 = vand.u32 %v2669, 4294901760
    %2671 = vmatpush.msra.mxu0 %v2670
    %v2672 = vand.u32 %v507, 4294901760
    %v2673 = vsub.f32 %v507, %v2672
    %v2674 = vand.u32 %v2673, 4294901760
    %2675 = vmatpush.msra.mxu0 %v2674
    %v2676 = vand.u32 %v505, 4294901760
    %v2677 = vsub.f32 %v505, %v2676
    %v2678 = vand.u32 %v2677, 4294901760
    %2679 = vmatpush.msra.mxu0 %v2678
    %v2680 = vand.u32 %v503, 4294901760
    %v2681 = vsub.f32 %v503, %v2680
    %v2682 = vand.u32 %v2681, 4294901760
    %2683 = vmatpush.msra.mxu0 %v2682
    %v2684 = vand.u32 %v501, 4294901760
    %v2685 = vsub.f32 %v501, %v2684
    %v2686 = vand.u32 %v2685, 4294901760
    %2687 = vmatpush.msra.mxu0 %v2686
    %v2688 = vand.u32 %v499, 4294901760
    %v2689 = vsub.f32 %v499, %v2688
    %v2690 = vand.u32 %v2689, 4294901760
    %2691 = vmatpush.msra.mxu0 %v2690
    %v2692 = vand.u32 %v497, 4294901760
    %v2693 = vsub.f32 %v497, %v2692
    %v2694 = vand.u32 %v2693, 4294901760
    %2695 = vmatpush.msra.mxu0 %v2694
    %v2696 = vand.u32 %v495, 4294901760
    %v2697 = vsub.f32 %v495, %v2696
    %v2698 = vand.u32 %v2697, 4294901760
    %2699 = vmatpush.msra.mxu0 %v2698
    %v2700 = vand.u32 %v493, 4294901760
    %v2701 = vsub.f32 %v493, %v2700
    %v2702 = vand.u32 %v2701, 4294901760
    %2703 = vmatpush.msra.mxu0 %v2702
    %v2704 = vand.u32 %v685, 4294901760
    %2705 = vmatmul.f32.gmra.mxu0 %v2704
    %v2706 = vpop.f32.mrf.mxu0
    %v2707 = vadd.f32 %v2638, %v2706
    %2708 = vdwg.mxu0
    %v2709 = vand.u32 %v523, 4294901760
    %2710 = vmatpush.msra.mxu0 %v2709
    %v2711 = vand.u32 %v521, 4294901760
    %2712 = vmatpush.msra.mxu0 %v2711
    %v2713 = vand.u32 %v519, 4294901760
    %2714 = vmatpush.msra.mxu0 %v2713
    %v2715 = vand.u32 %v517, 4294901760
    %2716 = vmatpush.msra.mxu0 %v2715
    %v2717 = vand.u32 %v515, 4294901760
    %2718 = vmatpush.msra.mxu0 %v2717
    %v2719 = vand.u32 %v513, 4294901760
    %2720 = vmatpush.msra.mxu0 %v2719
    %v2721 = vand.u32 %v511, 4294901760
    %2722 = vmatpush.msra.mxu0 %v2721
    %v2723 = vand.u32 %v509, 4294901760
    %2724 = vmatpush.msra.mxu0 %v2723
    %v2725 = vand.u32 %v507, 4294901760
    %2726 = vmatpush.msra.mxu0 %v2725
    %v2727 = vand.u32 %v505, 4294901760
    %2728 = vmatpush.msra.mxu0 %v2727
    %v2729 = vand.u32 %v503, 4294901760
    %2730 = vmatpush.msra.mxu0 %v2729
    %v2731 = vand.u32 %v501, 4294901760
    %2732 = vmatpush.msra.mxu0 %v2731
    %v2733 = vand.u32 %v499, 4294901760
    %2734 = vmatpush.msra.mxu0 %v2733
    %v2735 = vand.u32 %v497, 4294901760
    %2736 = vmatpush.msra.mxu0 %v2735
    %v2737 = vand.u32 %v495, 4294901760
    %2738 = vmatpush.msra.mxu0 %v2737
    %v2739 = vand.u32 %v493, 4294901760
    %2740 = vmatpush.msra.mxu0 %v2739
    %v2741 = vand.u32 %v685, 4294901760
    %2742 = vmatmul.f32.gmra.mxu0 %v2741
    %v2743 = vpop.f32.mrf.mxu0
    %v2744 = vadd.f32 %v2707, %v2743
    %2745 = vdwg.mxu0
    %v2746 = vand.u32 %v555, 4294901760
    %2747 = vmatpush.msra.mxu0 %v2746
    %v2748 = vand.u32 %v553, 4294901760
    %2749 = vmatpush.msra.mxu0 %v2748
    %v2750 = vand.u32 %v551, 4294901760
    %2751 = vmatpush.msra.mxu0 %v2750
    %v2752 = vand.u32 %v549, 4294901760
    %2753 = vmatpush.msra.mxu0 %v2752
    %v2754 = vand.u32 %v547, 4294901760
    %2755 = vmatpush.msra.mxu0 %v2754
    %v2756 = vand.u32 %v545, 4294901760
    %2757 = vmatpush.msra.mxu0 %v2756
    %v2758 = vand.u32 %v543, 4294901760
    %2759 = vmatpush.msra.mxu0 %v2758
    %v2760 = vand.u32 %v541, 4294901760
    %2761 = vmatpush.msra.mxu0 %v2760
    %v2762 = vand.u32 %v539, 4294901760
    %2763 = vmatpush.msra.mxu0 %v2762
    %v2764 = vand.u32 %v537, 4294901760
    %2765 = vmatpush.msra.mxu0 %v2764
    %v2766 = vand.u32 %v535, 4294901760
    %2767 = vmatpush.msra.mxu0 %v2766
    %v2768 = vand.u32 %v533, 4294901760
    %2769 = vmatpush.msra.mxu0 %v2768
    %v2770 = vand.u32 %v531, 4294901760
    %2771 = vmatpush.msra.mxu0 %v2770
    %v2772 = vand.u32 %v529, 4294901760
    %2773 = vmatpush.msra.mxu0 %v2772
    %v2774 = vand.u32 %v527, 4294901760
    %2775 = vmatpush.msra.mxu0 %v2774
    %v2776 = vand.u32 %v525, 4294901760
    %2777 = vmatpush.msra.mxu0 %v2776
    %v2778 = vand.u32 %v686, 4294901760
    %v2779 = vsub.f32 %v686, %v2778
    %v2780 = vand.u32 %v2779, 4294901760
    %v2781 = vsub.f32 %v2779, %v2780
    %v2782 = vand.u32 %v2781, 4294901760
    %2783 = vmatmul.f32.gmra.mxu0 %v2782
    %v2784 = vpop.f32.mrf.mxu0
    %v2785 = vadd.f32 %v2744, %v2784
    %2786 = vdwg.mxu0
    %v2787 = vand.u32 %v555, 4294901760
    %v2788 = vsub.f32 %v555, %v2787
    %v2789 = vand.u32 %v2788, 4294901760
    %v2790 = vsub.f32 %v2788, %v2789
    %v2791 = vand.u32 %v2790, 4294901760
    %2792 = vmatpush.msra.mxu0 %v2791
    %v2793 = vand.u32 %v553, 4294901760
    %v2794 = vsub.f32 %v553, %v2793
    %v2795 = vand.u32 %v2794, 4294901760
    %v2796 = vsub.f32 %v2794, %v2795
    %v2797 = vand.u32 %v2796, 4294901760
    %2798 = vmatpush.msra.mxu0 %v2797
    %v2799 = vand.u32 %v551, 4294901760
    %v2800 = vsub.f32 %v551, %v2799
    %v2801 = vand.u32 %v2800, 4294901760
    %v2802 = vsub.f32 %v2800, %v2801
    %v2803 = vand.u32 %v2802, 4294901760
    %2804 = vmatpush.msra.mxu0 %v2803
    %v2805 = vand.u32 %v549, 4294901760
    %v2806 = vsub.f32 %v549, %v2805
    %v2807 = vand.u32 %v2806, 4294901760
    %v2808 = vsub.f32 %v2806, %v2807
    %v2809 = vand.u32 %v2808, 4294901760
    %2810 = vmatpush.msra.mxu0 %v2809
    %v2811 = vand.u32 %v547, 4294901760
    %v2812 = vsub.f32 %v547, %v2811
    %v2813 = vand.u32 %v2812, 4294901760
    %v2814 = vsub.f32 %v2812, %v2813
    %v2815 = vand.u32 %v2814, 4294901760
    %2816 = vmatpush.msra.mxu0 %v2815
    %v2817 = vand.u32 %v545, 4294901760
    %v2818 = vsub.f32 %v545, %v2817
    %v2819 = vand.u32 %v2818, 4294901760
    %v2820 = vsub.f32 %v2818, %v2819
    %v2821 = vand.u32 %v2820, 4294901760
    %2822 = vmatpush.msra.mxu0 %v2821
    %v2823 = vand.u32 %v543, 4294901760
    %v2824 = vsub.f32 %v543, %v2823
    %v2825 = vand.u32 %v2824, 4294901760
    %v2826 = vsub.f32 %v2824, %v2825
    %v2827 = vand.u32 %v2826, 4294901760
    %2828 = vmatpush.msra.mxu0 %v2827
    %v2829 = vand.u32 %v541, 4294901760
    %v2830 = vsub.f32 %v541, %v2829
    %v2831 = vand.u32 %v2830, 4294901760
    %v2832 = vsub.f32 %v2830, %v2831
    %v2833 = vand.u32 %v2832, 4294901760
    %2834 = vmatpush.msra.mxu0 %v2833
    %v2835 = vand.u32 %v539, 4294901760
    %v2836 = vsub.f32 %v539, %v2835
    %v2837 = vand.u32 %v2836, 4294901760
    %v2838 = vsub.f32 %v2836, %v2837
    %v2839 = vand.u32 %v2838, 4294901760
    %2840 = vmatpush.msra.mxu0 %v2839
    %v2841 = vand.u32 %v537, 4294901760
    %v2842 = vsub.f32 %v537, %v2841
    %v2843 = vand.u32 %v2842, 4294901760
    %v2844 = vsub.f32 %v2842, %v2843
    %v2845 = vand.u32 %v2844, 4294901760
    %2846 = vmatpush.msra.mxu0 %v2845
    %v2847 = vand.u32 %v535, 4294901760
    %v2848 = vsub.f32 %v535, %v2847
    %v2849 = vand.u32 %v2848, 4294901760
    %v2850 = vsub.f32 %v2848, %v2849
    %v2851 = vand.u32 %v2850, 4294901760
    %2852 = vmatpush.msra.mxu0 %v2851
    %v2853 = vand.u32 %v533, 4294901760
    %v2854 = vsub.f32 %v533, %v2853
    %v2855 = vand.u32 %v2854, 4294901760
    %v2856 = vsub.f32 %v2854, %v2855
    %v2857 = vand.u32 %v2856, 4294901760
    %2858 = vmatpush.msra.mxu0 %v2857
    %v2859 = vand.u32 %v531, 4294901760
    %v2860 = vsub.f32 %v531, %v2859
    %v2861 = vand.u32 %v2860, 4294901760
    %v2862 = vsub.f32 %v2860, %v2861
    %v2863 = vand.u32 %v2862, 4294901760
    %2864 = vmatpush.msra.mxu0 %v2863
    %v2865 = vand.u32 %v529, 4294901760
    %v2866 = vsub.f32 %v529, %v2865
    %v2867 = vand.u32 %v2866, 4294901760
    %v2868 = vsub.f32 %v2866, %v2867
    %v2869 = vand.u32 %v2868, 4294901760
    %2870 = vmatpush.msra.mxu0 %v2869
    %v2871 = vand.u32 %v527, 4294901760
    %v2872 = vsub.f32 %v527, %v2871
    %v2873 = vand.u32 %v2872, 4294901760
    %v2874 = vsub.f32 %v2872, %v2873
    %v2875 = vand.u32 %v2874, 4294901760
    %2876 = vmatpush.msra.mxu0 %v2875
    %v2877 = vand.u32 %v525, 4294901760
    %v2878 = vsub.f32 %v525, %v2877
    %v2879 = vand.u32 %v2878, 4294901760
    %v2880 = vsub.f32 %v2878, %v2879
    %v2881 = vand.u32 %v2880, 4294901760
    %2882 = vmatpush.msra.mxu0 %v2881
    %v2883 = vand.u32 %v686, 4294901760
    %2884 = vmatmul.f32.gmra.mxu0 %v2883
    %v2885 = vpop.f32.mrf.mxu0
    %v2886 = vadd.f32 %v2785, %v2885
    %2887 = vdwg.mxu0
    %v2888 = vand.u32 %v555, 4294901760
    %v2889 = vsub.f32 %v555, %v2888
    %2890 = vmatpush.msra.mxu0 %v2889
    %v2891 = vand.u32 %v553, 4294901760
    %v2892 = vsub.f32 %v553, %v2891
    %2893 = vmatpush.msra.mxu0 %v2892
    %v2894 = vand.u32 %v551, 4294901760
    %v2895 = vsub.f32 %v551, %v2894
    %2896 = vmatpush.msra.mxu0 %v2895
    %v2897 = vand.u32 %v549, 4294901760
    %v2898 = vsub.f32 %v549, %v2897
    %2899 = vmatpush.msra.mxu0 %v2898
    %v2900 = vand.u32 %v547, 4294901760
    %v2901 = vsub.f32 %v547, %v2900
    %2902 = vmatpush.msra.mxu0 %v2901
    %v2903 = vand.u32 %v545, 4294901760
    %v2904 = vsub.f32 %v545, %v2903
    %2905 = vmatpush.msra.mxu0 %v2904
    %v2906 = vand.u32 %v543, 4294901760
    %v2907 = vsub.f32 %v543, %v2906
    %2908 = vmatpush.msra.mxu0 %v2907
    %v2909 = vand.u32 %v541, 4294901760
    %v2910 = vsub.f32 %v541, %v2909
    %2911 = vmatpush.msra.mxu0 %v2910
    %v2912 = vand.u32 %v539, 4294901760
    %v2913 = vsub.f32 %v539, %v2912
    %2914 = vmatpush.msra.mxu0 %v2913
    %v2915 = vand.u32 %v537, 4294901760
    %v2916 = vsub.f32 %v537, %v2915
    %2917 = vmatpush.msra.mxu0 %v2916
    %v2918 = vand.u32 %v535, 4294901760
    %v2919 = vsub.f32 %v535, %v2918
    %2920 = vmatpush.msra.mxu0 %v2919
    %v2921 = vand.u32 %v533, 4294901760
    %v2922 = vsub.f32 %v533, %v2921
    %2923 = vmatpush.msra.mxu0 %v2922
    %v2924 = vand.u32 %v531, 4294901760
    %v2925 = vsub.f32 %v531, %v2924
    %2926 = vmatpush.msra.mxu0 %v2925
    %v2927 = vand.u32 %v529, 4294901760
    %v2928 = vsub.f32 %v529, %v2927
    %2929 = vmatpush.msra.mxu0 %v2928
    %v2930 = vand.u32 %v527, 4294901760
    %v2931 = vsub.f32 %v527, %v2930
    %2932 = vmatpush.msra.mxu0 %v2931
    %v2933 = vand.u32 %v525, 4294901760
    %v2934 = vsub.f32 %v525, %v2933
    %2935 = vmatpush.msra.mxu0 %v2934
    %v2936 = vand.u32 %v686, 4294901760
    %v2937 = vsub.f32 %v686, %v2936
    %2938 = vmatmul.f32.gmra.mxu0 %v2937
    %v2939 = vpop.f32.mrf.mxu0
    %v2940 = vadd.f32 %v2886, %v2939
    %2941 = vdwg.mxu0
    %v2942 = vand.u32 %v555, 4294901760
    %2943 = vmatpush.msra.mxu0 %v2942
    %v2944 = vand.u32 %v553, 4294901760
    %2945 = vmatpush.msra.mxu0 %v2944
    %v2946 = vand.u32 %v551, 4294901760
    %2947 = vmatpush.msra.mxu0 %v2946
    %v2948 = vand.u32 %v549, 4294901760
    %2949 = vmatpush.msra.mxu0 %v2948
    %v2950 = vand.u32 %v547, 4294901760
    %2951 = vmatpush.msra.mxu0 %v2950
    %v2952 = vand.u32 %v545, 4294901760
    %2953 = vmatpush.msra.mxu0 %v2952
    %v2954 = vand.u32 %v543, 4294901760
    %2955 = vmatpush.msra.mxu0 %v2954
    %v2956 = vand.u32 %v541, 4294901760
    %2957 = vmatpush.msra.mxu0 %v2956
    %v2958 = vand.u32 %v539, 4294901760
    %2959 = vmatpush.msra.mxu0 %v2958
    %v2960 = vand.u32 %v537, 4294901760
    %2961 = vmatpush.msra.mxu0 %v2960
    %v2962 = vand.u32 %v535, 4294901760
    %2963 = vmatpush.msra.mxu0 %v2962
    %v2964 = vand.u32 %v533, 4294901760
    %2965 = vmatpush.msra.mxu0 %v2964
    %v2966 = vand.u32 %v531, 4294901760
    %2967 = vmatpush.msra.mxu0 %v2966
    %v2968 = vand.u32 %v529, 4294901760
    %2969 = vmatpush.msra.mxu0 %v2968
    %v2970 = vand.u32 %v527, 4294901760
    %2971 = vmatpush.msra.mxu0 %v2970
    %v2972 = vand.u32 %v525, 4294901760
    %2973 = vmatpush.msra.mxu0 %v2972
    %v2974 = vand.u32 %v686, 4294901760
    %v2975 = vsub.f32 %v686, %v2974
    %v2976 = vand.u32 %v2975, 4294901760
    %2977 = vmatmul.f32.gmra.mxu0 %v2976
    %v2978 = vpop.f32.mrf.mxu0
    %v2979 = vadd.f32 %v2940, %v2978
    %2980 = vdwg.mxu0
    %v2981 = vand.u32 %v555, 4294901760
    %v2982 = vsub.f32 %v555, %v2981
    %v2983 = vand.u32 %v2982, 4294901760
    %2984 = vmatpush.msra.mxu0 %v2983
    %v2985 = vand.u32 %v553, 4294901760
    %v2986 = vsub.f32 %v553, %v2985
    %v2987 = vand.u32 %v2986, 4294901760
    %2988 = vmatpush.msra.mxu0 %v2987
    %v2989 = vand.u32 %v551, 4294901760
    %v2990 = vsub.f32 %v551, %v2989
    %v2991 = vand.u32 %v2990, 4294901760
    %2992 = vmatpush.msra.mxu0 %v2991
    %v2993 = vand.u32 %v549, 4294901760
    %v2994 = vsub.f32 %v549, %v2993
    %v2995 = vand.u32 %v2994, 4294901760
    %2996 = vmatpush.msra.mxu0 %v2995
    %v2997 = vand.u32 %v547, 4294901760
    %v2998 = vsub.f32 %v547, %v2997
    %v2999 = vand.u32 %v2998, 4294901760
    %3000 = vmatpush.msra.mxu0 %v2999
    %v3001 = vand.u32 %v545, 4294901760
    %v3002 = vsub.f32 %v545, %v3001
    %v3003 = vand.u32 %v3002, 4294901760
    %3004 = vmatpush.msra.mxu0 %v3003
    %v3005 = vand.u32 %v543, 4294901760
    %v3006 = vsub.f32 %v543, %v3005
    %v3007 = vand.u32 %v3006, 4294901760
    %3008 = vmatpush.msra.mxu0 %v3007
    %v3009 = vand.u32 %v541, 4294901760
    %v3010 = vsub.f32 %v541, %v3009
    %v3011 = vand.u32 %v3010, 4294901760
    %3012 = vmatpush.msra.mxu0 %v3011
    %v3013 = vand.u32 %v539, 4294901760
    %v3014 = vsub.f32 %v539, %v3013
    %v3015 = vand.u32 %v3014, 4294901760
    %3016 = vmatpush.msra.mxu0 %v3015
    %v3017 = vand.u32 %v537, 4294901760
    %v3018 = vsub.f32 %v537, %v3017
    %v3019 = vand.u32 %v3018, 4294901760
    %3020 = vmatpush.msra.mxu0 %v3019
    %v3021 = vand.u32 %v535, 4294901760
    %v3022 = vsub.f32 %v535, %v3021
    %v3023 = vand.u32 %v3022, 4294901760
    %3024 = vmatpush.msra.mxu0 %v3023
    %v3025 = vand.u32 %v533, 4294901760
    %v3026 = vsub.f32 %v533, %v3025
    %v3027 = vand.u32 %v3026, 4294901760
    %3028 = vmatpush.msra.mxu0 %v3027
    %v3029 = vand.u32 %v531, 4294901760
    %v3030 = vsub.f32 %v531, %v3029
    %v3031 = vand.u32 %v3030, 4294901760
    %3032 = vmatpush.msra.mxu0 %v3031
    %v3033 = vand.u32 %v529, 4294901760
    %v3034 = vsub.f32 %v529, %v3033
    %v3035 = vand.u32 %v3034, 4294901760
    %3036 = vmatpush.msra.mxu0 %v3035
    %v3037 = vand.u32 %v527, 4294901760
    %v3038 = vsub.f32 %v527, %v3037
    %v3039 = vand.u32 %v3038, 4294901760
    %3040 = vmatpush.msra.mxu0 %v3039
    %v3041 = vand.u32 %v525, 4294901760
    %v3042 = vsub.f32 %v525, %v3041
    %v3043 = vand.u32 %v3042, 4294901760
    %3044 = vmatpush.msra.mxu0 %v3043
    %v3045 = vand.u32 %v686, 4294901760
    %3046 = vmatmul.f32.gmra.mxu0 %v3045
    %v3047 = vpop.f32.mrf.mxu0
    %v3048 = vadd.f32 %v2979, %v3047
    %3049 = vdwg.mxu0
    %v3050 = vand.u32 %v555, 4294901760
    %3051 = vmatpush.msra.mxu0 %v3050
    %v3052 = vand.u32 %v553, 4294901760
    %3053 = vmatpush.msra.mxu0 %v3052
    %v3054 = vand.u32 %v551, 4294901760
    %3055 = vmatpush.msra.mxu0 %v3054
    %v3056 = vand.u32 %v549, 4294901760
    %3057 = vmatpush.msra.mxu0 %v3056
    %v3058 = vand.u32 %v547, 4294901760
    %3059 = vmatpush.msra.mxu0 %v3058
    %v3060 = vand.u32 %v545, 4294901760
    %3061 = vmatpush.msra.mxu0 %v3060
    %v3062 = vand.u32 %v543, 4294901760
    %3063 = vmatpush.msra.mxu0 %v3062
    %v3064 = vand.u32 %v541, 4294901760
    %3065 = vmatpush.msra.mxu0 %v3064
    %v3066 = vand.u32 %v539, 4294901760
    %3067 = vmatpush.msra.mxu0 %v3066
    %v3068 = vand.u32 %v537, 4294901760
    %3069 = vmatpush.msra.mxu0 %v3068
    %v3070 = vand.u32 %v535, 4294901760
    %3071 = vmatpush.msra.mxu0 %v3070
    %v3072 = vand.u32 %v533, 4294901760
    %3073 = vmatpush.msra.mxu0 %v3072
    %v3074 = vand.u32 %v531, 4294901760
    %3075 = vmatpush.msra.mxu0 %v3074
    %v3076 = vand.u32 %v529, 4294901760
    %3077 = vmatpush.msra.mxu0 %v3076
    %v3078 = vand.u32 %v527, 4294901760
    %3079 = vmatpush.msra.mxu0 %v3078
    %v3080 = vand.u32 %v525, 4294901760
    %3081 = vmatpush.msra.mxu0 %v3080
    %v3082 = vand.u32 %v686, 4294901760
    %3083 = vmatmul.f32.gmra.mxu0 %v3082
    %v3084 = vpop.f32.mrf.mxu0
    %v3085 = vadd.f32 %v3048, %v3084
    %3086 = vdwg.mxu0
    %v3087 = vand.u32 %v587, 4294901760
    %3088 = vmatpush.msra.mxu0 %v3087
    %v3089 = vand.u32 %v585, 4294901760
    %3090 = vmatpush.msra.mxu0 %v3089
    %v3091 = vand.u32 %v583, 4294901760
    %3092 = vmatpush.msra.mxu0 %v3091
    %v3093 = vand.u32 %v581, 4294901760
    %3094 = vmatpush.msra.mxu0 %v3093
    %v3095 = vand.u32 %v579, 4294901760
    %3096 = vmatpush.msra.mxu0 %v3095
    %v3097 = vand.u32 %v577, 4294901760
    %3098 = vmatpush.msra.mxu0 %v3097
    %v3099 = vand.u32 %v575, 4294901760
    %3100 = vmatpush.msra.mxu0 %v3099
    %v3101 = vand.u32 %v573, 4294901760
    %3102 = vmatpush.msra.mxu0 %v3101
    %v3103 = vand.u32 %v571, 4294901760
    %3104 = vmatpush.msra.mxu0 %v3103
    %v3105 = vand.u32 %v569, 4294901760
    %3106 = vmatpush.msra.mxu0 %v3105
    %v3107 = vand.u32 %v567, 4294901760
    %3108 = vmatpush.msra.mxu0 %v3107
    %v3109 = vand.u32 %v565, 4294901760
    %3110 = vmatpush.msra.mxu0 %v3109
    %v3111 = vand.u32 %v563, 4294901760
    %3112 = vmatpush.msra.mxu0 %v3111
    %v3113 = vand.u32 %v561, 4294901760
    %3114 = vmatpush.msra.mxu0 %v3113
    %v3115 = vand.u32 %v559, 4294901760
    %3116 = vmatpush.msra.mxu0 %v3115
    %v3117 = vand.u32 %v557, 4294901760
    %3118 = vmatpush.msra.mxu0 %v3117
    %v3119 = vand.u32 %v687, 4294901760
    %v3120 = vsub.f32 %v687, %v3119
    %v3121 = vand.u32 %v3120, 4294901760
    %v3122 = vsub.f32 %v3120, %v3121
    %v3123 = vand.u32 %v3122, 4294901760
    %3124 = vmatmul.f32.gmra.mxu0 %v3123
    %v3125 = vpop.f32.mrf.mxu0
    %v3126 = vadd.f32 %v3085, %v3125
    %3127 = vdwg.mxu0
    %v3128 = vand.u32 %v587, 4294901760
    %v3129 = vsub.f32 %v587, %v3128
    %v3130 = vand.u32 %v3129, 4294901760
    %v3131 = vsub.f32 %v3129, %v3130
    %v3132 = vand.u32 %v3131, 4294901760
    %3133 = vmatpush.msra.mxu0 %v3132
    %v3134 = vand.u32 %v585, 4294901760
    %v3135 = vsub.f32 %v585, %v3134
    %v3136 = vand.u32 %v3135, 4294901760
    %v3137 = vsub.f32 %v3135, %v3136
    %v3138 = vand.u32 %v3137, 4294901760
    %3139 = vmatpush.msra.mxu0 %v3138
    %v3140 = vand.u32 %v583, 4294901760
    %v3141 = vsub.f32 %v583, %v3140
    %v3142 = vand.u32 %v3141, 4294901760
    %v3143 = vsub.f32 %v3141, %v3142
    %v3144 = vand.u32 %v3143, 4294901760
    %3145 = vmatpush.msra.mxu0 %v3144
    %v3146 = vand.u32 %v581, 4294901760
    %v3147 = vsub.f32 %v581, %v3146
    %v3148 = vand.u32 %v3147, 4294901760
    %v3149 = vsub.f32 %v3147, %v3148
    %v3150 = vand.u32 %v3149, 4294901760
    %3151 = vmatpush.msra.mxu0 %v3150
    %v3152 = vand.u32 %v579, 4294901760
    %v3153 = vsub.f32 %v579, %v3152
    %v3154 = vand.u32 %v3153, 4294901760
    %v3155 = vsub.f32 %v3153, %v3154
    %v3156 = vand.u32 %v3155, 4294901760
    %3157 = vmatpush.msra.mxu0 %v3156
    %v3158 = vand.u32 %v577, 4294901760
    %v3159 = vsub.f32 %v577, %v3158
    %v3160 = vand.u32 %v3159, 4294901760
    %v3161 = vsub.f32 %v3159, %v3160
    %v3162 = vand.u32 %v3161, 4294901760
    %3163 = vmatpush.msra.mxu0 %v3162
    %v3164 = vand.u32 %v575, 4294901760
    %v3165 = vsub.f32 %v575, %v3164
    %v3166 = vand.u32 %v3165, 4294901760
    %v3167 = vsub.f32 %v3165, %v3166
    %v3168 = vand.u32 %v3167, 4294901760
    %3169 = vmatpush.msra.mxu0 %v3168
    %v3170 = vand.u32 %v573, 4294901760
    %v3171 = vsub.f32 %v573, %v3170
    %v3172 = vand.u32 %v3171, 4294901760
    %v3173 = vsub.f32 %v3171, %v3172
    %v3174 = vand.u32 %v3173, 4294901760
    %3175 = vmatpush.msra.mxu0 %v3174
    %v3176 = vand.u32 %v571, 4294901760
    %v3177 = vsub.f32 %v571, %v3176
    %v3178 = vand.u32 %v3177, 4294901760
    %v3179 = vsub.f32 %v3177, %v3178
    %v3180 = vand.u32 %v3179, 4294901760
    %3181 = vmatpush.msra.mxu0 %v3180
    %v3182 = vand.u32 %v569, 4294901760
    %v3183 = vsub.f32 %v569, %v3182
    %v3184 = vand.u32 %v3183, 4294901760
    %v3185 = vsub.f32 %v3183, %v3184
    %v3186 = vand.u32 %v3185, 4294901760
    %3187 = vmatpush.msra.mxu0 %v3186
    %v3188 = vand.u32 %v567, 4294901760
    %v3189 = vsub.f32 %v567, %v3188
    %v3190 = vand.u32 %v3189, 4294901760
    %v3191 = vsub.f32 %v3189, %v3190
    %v3192 = vand.u32 %v3191, 4294901760
    %3193 = vmatpush.msra.mxu0 %v3192
    %v3194 = vand.u32 %v565, 4294901760
    %v3195 = vsub.f32 %v565, %v3194
    %v3196 = vand.u32 %v3195, 4294901760
    %v3197 = vsub.f32 %v3195, %v3196
    %v3198 = vand.u32 %v3197, 4294901760
    %3199 = vmatpush.msra.mxu0 %v3198
    %v3200 = vand.u32 %v563, 4294901760
    %v3201 = vsub.f32 %v563, %v3200
    %v3202 = vand.u32 %v3201, 4294901760
    %v3203 = vsub.f32 %v3201, %v3202
    %v3204 = vand.u32 %v3203, 4294901760
    %3205 = vmatpush.msra.mxu0 %v3204
    %v3206 = vand.u32 %v561, 4294901760
    %v3207 = vsub.f32 %v561, %v3206
    %v3208 = vand.u32 %v3207, 4294901760
    %v3209 = vsub.f32 %v3207, %v3208
    %v3210 = vand.u32 %v3209, 4294901760
    %3211 = vmatpush.msra.mxu0 %v3210
    %v3212 = vand.u32 %v559, 4294901760
    %v3213 = vsub.f32 %v559, %v3212
    %v3214 = vand.u32 %v3213, 4294901760
    %v3215 = vsub.f32 %v3213, %v3214
    %v3216 = vand.u32 %v3215, 4294901760
    %3217 = vmatpush.msra.mxu0 %v3216
    %v3218 = vand.u32 %v557, 4294901760
    %v3219 = vsub.f32 %v557, %v3218
    %v3220 = vand.u32 %v3219, 4294901760
    %v3221 = vsub.f32 %v3219, %v3220
    %v3222 = vand.u32 %v3221, 4294901760
    %3223 = vmatpush.msra.mxu0 %v3222
    %v3224 = vand.u32 %v687, 4294901760
    %3225 = vmatmul.f32.gmra.mxu0 %v3224
    %v3226 = vpop.f32.mrf.mxu0
    %v3227 = vadd.f32 %v3126, %v3226
    %3228 = vdwg.mxu0
    %v3229 = vand.u32 %v587, 4294901760
    %v3230 = vsub.f32 %v587, %v3229
    %3231 = vmatpush.msra.mxu0 %v3230
    %v3232 = vand.u32 %v585, 4294901760
    %v3233 = vsub.f32 %v585, %v3232
    %3234 = vmatpush.msra.mxu0 %v3233
    %v3235 = vand.u32 %v583, 4294901760
    %v3236 = vsub.f32 %v583, %v3235
    %3237 = vmatpush.msra.mxu0 %v3236
    %v3238 = vand.u32 %v581, 4294901760
    %v3239 = vsub.f32 %v581, %v3238
    %3240 = vmatpush.msra.mxu0 %v3239
    %v3241 = vand.u32 %v579, 4294901760
    %v3242 = vsub.f32 %v579, %v3241
    %3243 = vmatpush.msra.mxu0 %v3242
    %v3244 = vand.u32 %v577, 4294901760
    %v3245 = vsub.f32 %v577, %v3244
    %3246 = vmatpush.msra.mxu0 %v3245
    %v3247 = vand.u32 %v575, 4294901760
    %v3248 = vsub.f32 %v575, %v3247
    %3249 = vmatpush.msra.mxu0 %v3248
    %v3250 = vand.u32 %v573, 4294901760
    %v3251 = vsub.f32 %v573, %v3250
    %3252 = vmatpush.msra.mxu0 %v3251
    %v3253 = vand.u32 %v571, 4294901760
    %v3254 = vsub.f32 %v571, %v3253
    %3255 = vmatpush.msra.mxu0 %v3254
    %v3256 = vand.u32 %v569, 4294901760
    %v3257 = vsub.f32 %v569, %v3256
    %3258 = vmatpush.msra.mxu0 %v3257
    %v3259 = vand.u32 %v567, 4294901760
    %v3260 = vsub.f32 %v567, %v3259
    %3261 = vmatpush.msra.mxu0 %v3260
    %v3262 = vand.u32 %v565, 4294901760
    %v3263 = vsub.f32 %v565, %v3262
    %3264 = vmatpush.msra.mxu0 %v3263
    %v3265 = vand.u32 %v563, 4294901760
    %v3266 = vsub.f32 %v563, %v3265
    %3267 = vmatpush.msra.mxu0 %v3266
    %v3268 = vand.u32 %v561, 4294901760
    %v3269 = vsub.f32 %v561, %v3268
    %3270 = vmatpush.msra.mxu0 %v3269
    %v3271 = vand.u32 %v559, 4294901760
    %v3272 = vsub.f32 %v559, %v3271
    %3273 = vmatpush.msra.mxu0 %v3272
    %v3274 = vand.u32 %v557, 4294901760
    %v3275 = vsub.f32 %v557, %v3274
    %3276 = vmatpush.msra.mxu0 %v3275
    %v3277 = vand.u32 %v687, 4294901760
    %v3278 = vsub.f32 %v687, %v3277
    %3279 = vmatmul.f32.gmra.mxu0 %v3278
    %v3280 = vpop.f32.mrf.mxu0
    %v3281 = vadd.f32 %v3227, %v3280
    %3282 = vdwg.mxu0
    %v3283 = vand.u32 %v587, 4294901760
    %3284 = vmatpush.msra.mxu0 %v3283
    %v3285 = vand.u32 %v585, 4294901760
    %3286 = vmatpush.msra.mxu0 %v3285
    %v3287 = vand.u32 %v583, 4294901760
    %3288 = vmatpush.msra.mxu0 %v3287
    %v3289 = vand.u32 %v581, 4294901760
    %3290 = vmatpush.msra.mxu0 %v3289
    %v3291 = vand.u32 %v579, 4294901760
    %3292 = vmatpush.msra.mxu0 %v3291
    %v3293 = vand.u32 %v577, 4294901760
    %3294 = vmatpush.msra.mxu0 %v3293
    %v3295 = vand.u32 %v575, 4294901760
    %3296 = vmatpush.msra.mxu0 %v3295
    %v3297 = vand.u32 %v573, 4294901760
    %3298 = vmatpush.msra.mxu0 %v3297
    %v3299 = vand.u32 %v571, 4294901760
    %3300 = vmatpush.msra.mxu0 %v3299
    %v3301 = vand.u32 %v569, 4294901760
    %3302 = vmatpush.msra.mxu0 %v3301
    %v3303 = vand.u32 %v567, 4294901760
    %3304 = vmatpush.msra.mxu0 %v3303
    %v3305 = vand.u32 %v565, 4294901760
    %3306 = vmatpush.msra.mxu0 %v3305
    %v3307 = vand.u32 %v563, 4294901760
    %3308 = vmatpush.msra.mxu0 %v3307
    %v3309 = vand.u32 %v561, 4294901760
    %3310 = vmatpush.msra.mxu0 %v3309
    %v3311 = vand.u32 %v559, 4294901760
    %3312 = vmatpush.msra.mxu0 %v3311
    %v3313 = vand.u32 %v557, 4294901760
    %3314 = vmatpush.msra.mxu0 %v3313
    %v3315 = vand.u32 %v687, 4294901760
    %v3316 = vsub.f32 %v687, %v3315
    %v3317 = vand.u32 %v3316, 4294901760
    %3318 = vmatmul.f32.gmra.mxu0 %v3317
    %v3319 = vpop.f32.mrf.mxu0
    %v3320 = vadd.f32 %v3281, %v3319
    %3321 = vdwg.mxu0
    %v3322 = vand.u32 %v587, 4294901760
    %v3323 = vsub.f32 %v587, %v3322
    %v3324 = vand.u32 %v3323, 4294901760
    %3325 = vmatpush.msra.mxu0 %v3324
    %v3326 = vand.u32 %v585, 4294901760
    %v3327 = vsub.f32 %v585, %v3326
    %v3328 = vand.u32 %v3327, 4294901760
    %3329 = vmatpush.msra.mxu0 %v3328
    %v3330 = vand.u32 %v583, 4294901760
    %v3331 = vsub.f32 %v583, %v3330
    %v3332 = vand.u32 %v3331, 4294901760
    %3333 = vmatpush.msra.mxu0 %v3332
    %v3334 = vand.u32 %v581, 4294901760
    %v3335 = vsub.f32 %v581, %v3334
    %v3336 = vand.u32 %v3335, 4294901760
    %3337 = vmatpush.msra.mxu0 %v3336
    %v3338 = vand.u32 %v579, 4294901760
    %v3339 = vsub.f32 %v579, %v3338
    %v3340 = vand.u32 %v3339, 4294901760
    %3341 = vmatpush.msra.mxu0 %v3340
    %v3342 = vand.u32 %v577, 4294901760
    %v3343 = vsub.f32 %v577, %v3342
    %v3344 = vand.u32 %v3343, 4294901760
    %3345 = vmatpush.msra.mxu0 %v3344
    %v3346 = vand.u32 %v575, 4294901760
    %v3347 = vsub.f32 %v575, %v3346
    %v3348 = vand.u32 %v3347, 4294901760
    %3349 = vmatpush.msra.mxu0 %v3348
    %v3350 = vand.u32 %v573, 4294901760
    %v3351 = vsub.f32 %v573, %v3350
    %v3352 = vand.u32 %v3351, 4294901760
    %3353 = vmatpush.msra.mxu0 %v3352
    %v3354 = vand.u32 %v571, 4294901760
    %v3355 = vsub.f32 %v571, %v3354
    %v3356 = vand.u32 %v3355, 4294901760
    %3357 = vmatpush.msra.mxu0 %v3356
    %v3358 = vand.u32 %v569, 4294901760
    %v3359 = vsub.f32 %v569, %v3358
    %v3360 = vand.u32 %v3359, 4294901760
    %3361 = vmatpush.msra.mxu0 %v3360
    %v3362 = vand.u32 %v567, 4294901760
    %v3363 = vsub.f32 %v567, %v3362
    %v3364 = vand.u32 %v3363, 4294901760
    %3365 = vmatpush.msra.mxu0 %v3364
    %v3366 = vand.u32 %v565, 4294901760
    %v3367 = vsub.f32 %v565, %v3366
    %v3368 = vand.u32 %v3367, 4294901760
    %3369 = vmatpush.msra.mxu0 %v3368
    %v3370 = vand.u32 %v563, 4294901760
    %v3371 = vsub.f32 %v563, %v3370
    %v3372 = vand.u32 %v3371, 4294901760
    %3373 = vmatpush.msra.mxu0 %v3372
    %v3374 = vand.u32 %v561, 4294901760
    %v3375 = vsub.f32 %v561, %v3374
    %v3376 = vand.u32 %v3375, 4294901760
    %3377 = vmatpush.msra.mxu0 %v3376
    %v3378 = vand.u32 %v559, 4294901760
    %v3379 = vsub.f32 %v559, %v3378
    %v3380 = vand.u32 %v3379, 4294901760
    %3381 = vmatpush.msra.mxu0 %v3380
    %v3382 = vand.u32 %v557, 4294901760
    %v3383 = vsub.f32 %v557, %v3382
    %v3384 = vand.u32 %v3383, 4294901760
    %3385 = vmatpush.msra.mxu0 %v3384
    %v3386 = vand.u32 %v687, 4294901760
    %3387 = vmatmul.f32.gmra.mxu0 %v3386
    %v3388 = vpop.f32.mrf.mxu0
    %v3389 = vadd.f32 %v3320, %v3388
    %3390 = vdwg.mxu0
    %v3391 = vand.u32 %v587, 4294901760
    %3392 = vmatpush.msra.mxu0 %v3391
    %v3393 = vand.u32 %v585, 4294901760
    %3394 = vmatpush.msra.mxu0 %v3393
    %v3395 = vand.u32 %v583, 4294901760
    %3396 = vmatpush.msra.mxu0 %v3395
    %v3397 = vand.u32 %v581, 4294901760
    %3398 = vmatpush.msra.mxu0 %v3397
    %v3399 = vand.u32 %v579, 4294901760
    %3400 = vmatpush.msra.mxu0 %v3399
    %v3401 = vand.u32 %v577, 4294901760
    %3402 = vmatpush.msra.mxu0 %v3401
    %v3403 = vand.u32 %v575, 4294901760
    %3404 = vmatpush.msra.mxu0 %v3403
    %v3405 = vand.u32 %v573, 4294901760
    %3406 = vmatpush.msra.mxu0 %v3405
    %v3407 = vand.u32 %v571, 4294901760
    %3408 = vmatpush.msra.mxu0 %v3407
    %v3409 = vand.u32 %v569, 4294901760
    %3410 = vmatpush.msra.mxu0 %v3409
    %v3411 = vand.u32 %v567, 4294901760
    %3412 = vmatpush.msra.mxu0 %v3411
    %v3413 = vand.u32 %v565, 4294901760
    %3414 = vmatpush.msra.mxu0 %v3413
    %v3415 = vand.u32 %v563, 4294901760
    %3416 = vmatpush.msra.mxu0 %v3415
    %v3417 = vand.u32 %v561, 4294901760
    %3418 = vmatpush.msra.mxu0 %v3417
    %v3419 = vand.u32 %v559, 4294901760
    %3420 = vmatpush.msra.mxu0 %v3419
    %v3421 = vand.u32 %v557, 4294901760
    %3422 = vmatpush.msra.mxu0 %v3421
    %v3423 = vand.u32 %v687, 4294901760
    %3424 = vmatmul.f32.gmra.mxu0 %v3423
    %v3425 = vpop.f32.mrf.mxu0
    %v3426 = vadd.f32 %v3389, %v3425
    %3427 = vdwg.mxu0
    %v3428 = vand.u32 %v619, 4294901760
    %3429 = vmatpush.msra.mxu0 %v3428
    %v3430 = vand.u32 %v617, 4294901760
    %3431 = vmatpush.msra.mxu0 %v3430
    %v3432 = vand.u32 %v615, 4294901760
    %3433 = vmatpush.msra.mxu0 %v3432
    %v3434 = vand.u32 %v613, 4294901760
    %3435 = vmatpush.msra.mxu0 %v3434
    %v3436 = vand.u32 %v611, 4294901760
    %3437 = vmatpush.msra.mxu0 %v3436
    %v3438 = vand.u32 %v609, 4294901760
    %3439 = vmatpush.msra.mxu0 %v3438
    %v3440 = vand.u32 %v607, 4294901760
    %3441 = vmatpush.msra.mxu0 %v3440
    %v3442 = vand.u32 %v605, 4294901760
    %3443 = vmatpush.msra.mxu0 %v3442
    %v3444 = vand.u32 %v603, 4294901760
    %3445 = vmatpush.msra.mxu0 %v3444
    %v3446 = vand.u32 %v601, 4294901760
    %3447 = vmatpush.msra.mxu0 %v3446
    %v3448 = vand.u32 %v599, 4294901760
    %3449 = vmatpush.msra.mxu0 %v3448
    %v3450 = vand.u32 %v597, 4294901760
    %3451 = vmatpush.msra.mxu0 %v3450
    %v3452 = vand.u32 %v595, 4294901760
    %3453 = vmatpush.msra.mxu0 %v3452
    %v3454 = vand.u32 %v593, 4294901760
    %3455 = vmatpush.msra.mxu0 %v3454
    %v3456 = vand.u32 %v591, 4294901760
    %3457 = vmatpush.msra.mxu0 %v3456
    %v3458 = vand.u32 %v589, 4294901760
    %3459 = vmatpush.msra.mxu0 %v3458
    %v3460 = vand.u32 %v688, 4294901760
    %v3461 = vsub.f32 %v688, %v3460
    %v3462 = vand.u32 %v3461, 4294901760
    %v3463 = vsub.f32 %v3461, %v3462
    %v3464 = vand.u32 %v3463, 4294901760
    %3465 = vmatmul.f32.gmra.mxu0 %v3464
    %v3466 = vpop.f32.mrf.mxu0
    %v3467 = vadd.f32 %v3426, %v3466
    %3468 = vdwg.mxu0
    %v3469 = vand.u32 %v619, 4294901760
    %v3470 = vsub.f32 %v619, %v3469
    %v3471 = vand.u32 %v3470, 4294901760
    %v3472 = vsub.f32 %v3470, %v3471
    %v3473 = vand.u32 %v3472, 4294901760
    %3474 = vmatpush.msra.mxu0 %v3473
    %v3475 = vand.u32 %v617, 4294901760
    %v3476 = vsub.f32 %v617, %v3475
    %v3477 = vand.u32 %v3476, 4294901760
    %v3478 = vsub.f32 %v3476, %v3477
    %v3479 = vand.u32 %v3478, 4294901760
    %3480 = vmatpush.msra.mxu0 %v3479
    %v3481 = vand.u32 %v615, 4294901760
    %v3482 = vsub.f32 %v615, %v3481
    %v3483 = vand.u32 %v3482, 4294901760
    %v3484 = vsub.f32 %v3482, %v3483
    %v3485 = vand.u32 %v3484, 4294901760
    %3486 = vmatpush.msra.mxu0 %v3485
    %v3487 = vand.u32 %v613, 4294901760
    %v3488 = vsub.f32 %v613, %v3487
    %v3489 = vand.u32 %v3488, 4294901760
    %v3490 = vsub.f32 %v3488, %v3489
    %v3491 = vand.u32 %v3490, 4294901760
    %3492 = vmatpush.msra.mxu0 %v3491
    %v3493 = vand.u32 %v611, 4294901760
    %v3494 = vsub.f32 %v611, %v3493
    %v3495 = vand.u32 %v3494, 4294901760
    %v3496 = vsub.f32 %v3494, %v3495
    %v3497 = vand.u32 %v3496, 4294901760
    %3498 = vmatpush.msra.mxu0 %v3497
    %v3499 = vand.u32 %v609, 4294901760
    %v3500 = vsub.f32 %v609, %v3499
    %v3501 = vand.u32 %v3500, 4294901760
    %v3502 = vsub.f32 %v3500, %v3501
    %v3503 = vand.u32 %v3502, 4294901760
    %3504 = vmatpush.msra.mxu0 %v3503
    %v3505 = vand.u32 %v607, 4294901760
    %v3506 = vsub.f32 %v607, %v3505
    %v3507 = vand.u32 %v3506, 4294901760
    %v3508 = vsub.f32 %v3506, %v3507
    %v3509 = vand.u32 %v3508, 4294901760
    %3510 = vmatpush.msra.mxu0 %v3509
    %v3511 = vand.u32 %v605, 4294901760
    %v3512 = vsub.f32 %v605, %v3511
    %v3513 = vand.u32 %v3512, 4294901760
    %v3514 = vsub.f32 %v3512, %v3513
    %v3515 = vand.u32 %v3514, 4294901760
    %3516 = vmatpush.msra.mxu0 %v3515
    %v3517 = vand.u32 %v603, 4294901760
    %v3518 = vsub.f32 %v603, %v3517
    %v3519 = vand.u32 %v3518, 4294901760
    %v3520 = vsub.f32 %v3518, %v3519
    %v3521 = vand.u32 %v3520, 4294901760
    %3522 = vmatpush.msra.mxu0 %v3521
    %v3523 = vand.u32 %v601, 4294901760
    %v3524 = vsub.f32 %v601, %v3523
    %v3525 = vand.u32 %v3524, 4294901760
    %v3526 = vsub.f32 %v3524, %v3525
    %v3527 = vand.u32 %v3526, 4294901760
    %3528 = vmatpush.msra.mxu0 %v3527
    %v3529 = vand.u32 %v599, 4294901760
    %v3530 = vsub.f32 %v599, %v3529
    %v3531 = vand.u32 %v3530, 4294901760
    %v3532 = vsub.f32 %v3530, %v3531
    %v3533 = vand.u32 %v3532, 4294901760
    %3534 = vmatpush.msra.mxu0 %v3533
    %v3535 = vand.u32 %v597, 4294901760
    %v3536 = vsub.f32 %v597, %v3535
    %v3537 = vand.u32 %v3536, 4294901760
    %v3538 = vsub.f32 %v3536, %v3537
    %v3539 = vand.u32 %v3538, 4294901760
    %3540 = vmatpush.msra.mxu0 %v3539
    %v3541 = vand.u32 %v595, 4294901760
    %v3542 = vsub.f32 %v595, %v3541
    %v3543 = vand.u32 %v3542, 4294901760
    %v3544 = vsub.f32 %v3542, %v3543
    %v3545 = vand.u32 %v3544, 4294901760
    %3546 = vmatpush.msra.mxu0 %v3545
    %v3547 = vand.u32 %v593, 4294901760
    %v3548 = vsub.f32 %v593, %v3547
    %v3549 = vand.u32 %v3548, 4294901760
    %v3550 = vsub.f32 %v3548, %v3549
    %v3551 = vand.u32 %v3550, 4294901760
    %3552 = vmatpush.msra.mxu0 %v3551
    %v3553 = vand.u32 %v591, 4294901760
    %v3554 = vsub.f32 %v591, %v3553
    %v3555 = vand.u32 %v3554, 4294901760
    %v3556 = vsub.f32 %v3554, %v3555
    %v3557 = vand.u32 %v3556, 4294901760
    %3558 = vmatpush.msra.mxu0 %v3557
    %v3559 = vand.u32 %v589, 4294901760
    %v3560 = vsub.f32 %v589, %v3559
    %v3561 = vand.u32 %v3560, 4294901760
    %v3562 = vsub.f32 %v3560, %v3561
    %v3563 = vand.u32 %v3562, 4294901760
    %3564 = vmatpush.msra.mxu0 %v3563
    %v3565 = vand.u32 %v688, 4294901760
    %3566 = vmatmul.f32.gmra.mxu0 %v3565
    %v3567 = vpop.f32.mrf.mxu0
    %v3568 = vadd.f32 %v3467, %v3567
    %3569 = vdwg.mxu0
    %v3570 = vand.u32 %v619, 4294901760
    %v3571 = vsub.f32 %v619, %v3570
    %3572 = vmatpush.msra.mxu0 %v3571
    %v3573 = vand.u32 %v617, 4294901760
    %v3574 = vsub.f32 %v617, %v3573
    %3575 = vmatpush.msra.mxu0 %v3574
    %v3576 = vand.u32 %v615, 4294901760
    %v3577 = vsub.f32 %v615, %v3576
    %3578 = vmatpush.msra.mxu0 %v3577
    %v3579 = vand.u32 %v613, 4294901760
    %v3580 = vsub.f32 %v613, %v3579
    %3581 = vmatpush.msra.mxu0 %v3580
    %v3582 = vand.u32 %v611, 4294901760
    %v3583 = vsub.f32 %v611, %v3582
    %3584 = vmatpush.msra.mxu0 %v3583
    %v3585 = vand.u32 %v609, 4294901760
    %v3586 = vsub.f32 %v609, %v3585
    %3587 = vmatpush.msra.mxu0 %v3586
    %v3588 = vand.u32 %v607, 4294901760
    %v3589 = vsub.f32 %v607, %v3588
    %3590 = vmatpush.msra.mxu0 %v3589
    %v3591 = vand.u32 %v605, 4294901760
    %v3592 = vsub.f32 %v605, %v3591
    %3593 = vmatpush.msra.mxu0 %v3592
    %v3594 = vand.u32 %v603, 4294901760
    %v3595 = vsub.f32 %v603, %v3594
    %3596 = vmatpush.msra.mxu0 %v3595
    %v3597 = vand.u32 %v601, 4294901760
    %v3598 = vsub.f32 %v601, %v3597
    %3599 = vmatpush.msra.mxu0 %v3598
    %v3600 = vand.u32 %v599, 4294901760
    %v3601 = vsub.f32 %v599, %v3600
    %3602 = vmatpush.msra.mxu0 %v3601
    %v3603 = vand.u32 %v597, 4294901760
    %v3604 = vsub.f32 %v597, %v3603
    %3605 = vmatpush.msra.mxu0 %v3604
    %v3606 = vand.u32 %v595, 4294901760
    %v3607 = vsub.f32 %v595, %v3606
    %3608 = vmatpush.msra.mxu0 %v3607
    %v3609 = vand.u32 %v593, 4294901760
    %v3610 = vsub.f32 %v593, %v3609
    %3611 = vmatpush.msra.mxu0 %v3610
    %v3612 = vand.u32 %v591, 4294901760
    %v3613 = vsub.f32 %v591, %v3612
    %3614 = vmatpush.msra.mxu0 %v3613
    %v3615 = vand.u32 %v589, 4294901760
    %v3616 = vsub.f32 %v589, %v3615
    %3617 = vmatpush.msra.mxu0 %v3616
    %v3618 = vand.u32 %v688, 4294901760
    %v3619 = vsub.f32 %v688, %v3618
    %3620 = vmatmul.f32.gmra.mxu0 %v3619
    %v3621 = vpop.f32.mrf.mxu0
    %v3622 = vadd.f32 %v3568, %v3621
    %3623 = vdwg.mxu0
    %v3624 = vand.u32 %v619, 4294901760
    %3625 = vmatpush.msra.mxu0 %v3624
    %v3626 = vand.u32 %v617, 4294901760
    %3627 = vmatpush.msra.mxu0 %v3626
    %v3628 = vand.u32 %v615, 4294901760
    %3629 = vmatpush.msra.mxu0 %v3628
    %v3630 = vand.u32 %v613, 4294901760
    %3631 = vmatpush.msra.mxu0 %v3630
    %v3632 = vand.u32 %v611, 4294901760
    %3633 = vmatpush.msra.mxu0 %v3632
    %v3634 = vand.u32 %v609, 4294901760
    %3635 = vmatpush.msra.mxu0 %v3634
    %v3636 = vand.u32 %v607, 4294901760
    %3637 = vmatpush.msra.mxu0 %v3636
    %v3638 = vand.u32 %v605, 4294901760
    %3639 = vmatpush.msra.mxu0 %v3638
    %v3640 = vand.u32 %v603, 4294901760
    %3641 = vmatpush.msra.mxu0 %v3640
    %v3642 = vand.u32 %v601, 4294901760
    %3643 = vmatpush.msra.mxu0 %v3642
    %v3644 = vand.u32 %v599, 4294901760
    %3645 = vmatpush.msra.mxu0 %v3644
    %v3646 = vand.u32 %v597, 4294901760
    %3647 = vmatpush.msra.mxu0 %v3646
    %v3648 = vand.u32 %v595, 4294901760
    %3649 = vmatpush.msra.mxu0 %v3648
    %v3650 = vand.u32 %v593, 4294901760
    %3651 = vmatpush.msra.mxu0 %v3650
    %v3652 = vand.u32 %v591, 4294901760
    %3653 = vmatpush.msra.mxu0 %v3652
    %v3654 = vand.u32 %v589, 4294901760
    %3655 = vmatpush.msra.mxu0 %v3654
    %v3656 = vand.u32 %v688, 4294901760
    %v3657 = vsub.f32 %v688, %v3656
    %v3658 = vand.u32 %v3657, 4294901760
    %3659 = vmatmul.f32.gmra.mxu0 %v3658
    %v3660 = vpop.f32.mrf.mxu0
    %v3661 = vadd.f32 %v3622, %v3660
    %3662 = vdwg.mxu0
    %v3663 = vand.u32 %v619, 4294901760
    %v3664 = vsub.f32 %v619, %v3663
    %v3665 = vand.u32 %v3664, 4294901760
    %3666 = vmatpush.msra.mxu0 %v3665
    %v3667 = vand.u32 %v617, 4294901760
    %v3668 = vsub.f32 %v617, %v3667
    %v3669 = vand.u32 %v3668, 4294901760
    %3670 = vmatpush.msra.mxu0 %v3669
    %v3671 = vand.u32 %v615, 4294901760
    %v3672 = vsub.f32 %v615, %v3671
    %v3673 = vand.u32 %v3672, 4294901760
    %3674 = vmatpush.msra.mxu0 %v3673
    %v3675 = vand.u32 %v613, 4294901760
    %v3676 = vsub.f32 %v613, %v3675
    %v3677 = vand.u32 %v3676, 4294901760
    %3678 = vmatpush.msra.mxu0 %v3677
    %v3679 = vand.u32 %v611, 4294901760
    %v3680 = vsub.f32 %v611, %v3679
    %v3681 = vand.u32 %v3680, 4294901760
    %3682 = vmatpush.msra.mxu0 %v3681
    %v3683 = vand.u32 %v609, 4294901760
    %v3684 = vsub.f32 %v609, %v3683
    %v3685 = vand.u32 %v3684, 4294901760
    %3686 = vmatpush.msra.mxu0 %v3685
    %v3687 = vand.u32 %v607, 4294901760
    %v3688 = vsub.f32 %v607, %v3687
    %v3689 = vand.u32 %v3688, 4294901760
    %3690 = vmatpush.msra.mxu0 %v3689
    %v3691 = vand.u32 %v605, 4294901760
    %v3692 = vsub.f32 %v605, %v3691
    %v3693 = vand.u32 %v3692, 4294901760
    %3694 = vmatpush.msra.mxu0 %v3693
    %v3695 = vand.u32 %v603, 4294901760
    %v3696 = vsub.f32 %v603, %v3695
    %v3697 = vand.u32 %v3696, 4294901760
    %3698 = vmatpush.msra.mxu0 %v3697
    %v3699 = vand.u32 %v601, 4294901760
    %v3700 = vsub.f32 %v601, %v3699
    %v3701 = vand.u32 %v3700, 4294901760
    %3702 = vmatpush.msra.mxu0 %v3701
    %v3703 = vand.u32 %v599, 4294901760
    %v3704 = vsub.f32 %v599, %v3703
    %v3705 = vand.u32 %v3704, 4294901760
    %3706 = vmatpush.msra.mxu0 %v3705
    %v3707 = vand.u32 %v597, 4294901760
    %v3708 = vsub.f32 %v597, %v3707
    %v3709 = vand.u32 %v3708, 4294901760
    %3710 = vmatpush.msra.mxu0 %v3709
    %v3711 = vand.u32 %v595, 4294901760
    %v3712 = vsub.f32 %v595, %v3711
    %v3713 = vand.u32 %v3712, 4294901760
    %3714 = vmatpush.msra.mxu0 %v3713
    %v3715 = vand.u32 %v593, 4294901760
    %v3716 = vsub.f32 %v593, %v3715
    %v3717 = vand.u32 %v3716, 4294901760
    %3718 = vmatpush.msra.mxu0 %v3717
    %v3719 = vand.u32 %v591, 4294901760
    %v3720 = vsub.f32 %v591, %v3719
    %v3721 = vand.u32 %v3720, 4294901760
    %3722 = vmatpush.msra.mxu0 %v3721
    %v3723 = vand.u32 %v589, 4294901760
    %v3724 = vsub.f32 %v589, %v3723
    %v3725 = vand.u32 %v3724, 4294901760
    %3726 = vmatpush.msra.mxu0 %v3725
    %v3727 = vand.u32 %v688, 4294901760
    %3728 = vmatmul.f32.gmra.mxu0 %v3727
    %v3729 = vpop.f32.mrf.mxu0
    %v3730 = vadd.f32 %v3661, %v3729
    %3731 = vdwg.mxu0
    %v3732 = vand.u32 %v619, 4294901760
    %3733 = vmatpush.msra.mxu0 %v3732
    %v3734 = vand.u32 %v617, 4294901760
    %3735 = vmatpush.msra.mxu0 %v3734
    %v3736 = vand.u32 %v615, 4294901760
    %3737 = vmatpush.msra.mxu0 %v3736
    %v3738 = vand.u32 %v613, 4294901760
    %3739 = vmatpush.msra.mxu0 %v3738
    %v3740 = vand.u32 %v611, 4294901760
    %3741 = vmatpush.msra.mxu0 %v3740
    %v3742 = vand.u32 %v609, 4294901760
    %3743 = vmatpush.msra.mxu0 %v3742
    %v3744 = vand.u32 %v607, 4294901760
    %3745 = vmatpush.msra.mxu0 %v3744
    %v3746 = vand.u32 %v605, 4294901760
    %3747 = vmatpush.msra.mxu0 %v3746
    %v3748 = vand.u32 %v603, 4294901760
    %3749 = vmatpush.msra.mxu0 %v3748
    %v3750 = vand.u32 %v601, 4294901760
    %3751 = vmatpush.msra.mxu0 %v3750
    %v3752 = vand.u32 %v599, 4294901760
    %3753 = vmatpush.msra.mxu0 %v3752
    %v3754 = vand.u32 %v597, 4294901760
    %3755 = vmatpush.msra.mxu0 %v3754
    %v3756 = vand.u32 %v595, 4294901760
    %3757 = vmatpush.msra.mxu0 %v3756
    %v3758 = vand.u32 %v593, 4294901760
    %3759 = vmatpush.msra.mxu0 %v3758
    %v3760 = vand.u32 %v591, 4294901760
    %3761 = vmatpush.msra.mxu0 %v3760
    %v3762 = vand.u32 %v589, 4294901760
    %3763 = vmatpush.msra.mxu0 %v3762
    %v3764 = vand.u32 %v688, 4294901760
    %3765 = vmatmul.f32.gmra.mxu0 %v3764
    %v3766 = vpop.f32.mrf.mxu0
    %v3767 = vadd.f32 %v3730, %v3766
    %3768 = vdwg.mxu0
    %v3769 = vand.u32 %v651, 4294901760
    %3770 = vmatpush.msra.mxu0 %v3769
    %v3771 = vand.u32 %v649, 4294901760
    %3772 = vmatpush.msra.mxu0 %v3771
    %v3773 = vand.u32 %v647, 4294901760
    %3774 = vmatpush.msra.mxu0 %v3773
    %v3775 = vand.u32 %v645, 4294901760
    %3776 = vmatpush.msra.mxu0 %v3775
    %v3777 = vand.u32 %v643, 4294901760
    %3778 = vmatpush.msra.mxu0 %v3777
    %v3779 = vand.u32 %v641, 4294901760
    %3780 = vmatpush.msra.mxu0 %v3779
    %v3781 = vand.u32 %v639, 4294901760
    %3782 = vmatpush.msra.mxu0 %v3781
    %v3783 = vand.u32 %v637, 4294901760
    %3784 = vmatpush.msra.mxu0 %v3783
    %v3785 = vand.u32 %v635, 4294901760
    %3786 = vmatpush.msra.mxu0 %v3785
    %v3787 = vand.u32 %v633, 4294901760
    %3788 = vmatpush.msra.mxu0 %v3787
    %v3789 = vand.u32 %v631, 4294901760
    %3790 = vmatpush.msra.mxu0 %v3789
    %v3791 = vand.u32 %v629, 4294901760
    %3792 = vmatpush.msra.mxu0 %v3791
    %v3793 = vand.u32 %v627, 4294901760
    %3794 = vmatpush.msra.mxu0 %v3793
    %v3795 = vand.u32 %v625, 4294901760
    %3796 = vmatpush.msra.mxu0 %v3795
    %v3797 = vand.u32 %v623, 4294901760
    %3798 = vmatpush.msra.mxu0 %v3797
    %v3799 = vand.u32 %v621, 4294901760
    %3800 = vmatpush.msra.mxu0 %v3799
    %v3801 = vand.u32 %v689, 4294901760
    %v3802 = vsub.f32 %v689, %v3801
    %v3803 = vand.u32 %v3802, 4294901760
    %v3804 = vsub.f32 %v3802, %v3803
    %v3805 = vand.u32 %v3804, 4294901760
    %3806 = vmatmul.f32.gmra.mxu0 %v3805
    %v3807 = vpop.f32.mrf.mxu0
    %v3808 = vadd.f32 %v3767, %v3807
    %3809 = vdwg.mxu0
    %v3810 = vand.u32 %v651, 4294901760
    %v3811 = vsub.f32 %v651, %v3810
    %v3812 = vand.u32 %v3811, 4294901760
    %v3813 = vsub.f32 %v3811, %v3812
    %v3814 = vand.u32 %v3813, 4294901760
    %3815 = vmatpush.msra.mxu0 %v3814
    %v3816 = vand.u32 %v649, 4294901760
    %v3817 = vsub.f32 %v649, %v3816
    %v3818 = vand.u32 %v3817, 4294901760
    %v3819 = vsub.f32 %v3817, %v3818
    %v3820 = vand.u32 %v3819, 4294901760
    %3821 = vmatpush.msra.mxu0 %v3820
    %v3822 = vand.u32 %v647, 4294901760
    %v3823 = vsub.f32 %v647, %v3822
    %v3824 = vand.u32 %v3823, 4294901760
    %v3825 = vsub.f32 %v3823, %v3824
    %v3826 = vand.u32 %v3825, 4294901760
    %3827 = vmatpush.msra.mxu0 %v3826
    %v3828 = vand.u32 %v645, 4294901760
    %v3829 = vsub.f32 %v645, %v3828
    %v3830 = vand.u32 %v3829, 4294901760
    %v3831 = vsub.f32 %v3829, %v3830
    %v3832 = vand.u32 %v3831, 4294901760
    %3833 = vmatpush.msra.mxu0 %v3832
    %v3834 = vand.u32 %v643, 4294901760
    %v3835 = vsub.f32 %v643, %v3834
    %v3836 = vand.u32 %v3835, 4294901760
    %v3837 = vsub.f32 %v3835, %v3836
    %v3838 = vand.u32 %v3837, 4294901760
    %3839 = vmatpush.msra.mxu0 %v3838
    %v3840 = vand.u32 %v641, 4294901760
    %v3841 = vsub.f32 %v641, %v3840
    %v3842 = vand.u32 %v3841, 4294901760
    %v3843 = vsub.f32 %v3841, %v3842
    %v3844 = vand.u32 %v3843, 4294901760
    %3845 = vmatpush.msra.mxu0 %v3844
    %v3846 = vand.u32 %v639, 4294901760
    %v3847 = vsub.f32 %v639, %v3846
    %v3848 = vand.u32 %v3847, 4294901760
    %v3849 = vsub.f32 %v3847, %v3848
    %v3850 = vand.u32 %v3849, 4294901760
    %3851 = vmatpush.msra.mxu0 %v3850
    %v3852 = vand.u32 %v637, 4294901760
    %v3853 = vsub.f32 %v637, %v3852
    %v3854 = vand.u32 %v3853, 4294901760
    %v3855 = vsub.f32 %v3853, %v3854
    %v3856 = vand.u32 %v3855, 4294901760
    %3857 = vmatpush.msra.mxu0 %v3856
    %v3858 = vand.u32 %v635, 4294901760
    %v3859 = vsub.f32 %v635, %v3858
    %v3860 = vand.u32 %v3859, 4294901760
    %v3861 = vsub.f32 %v3859, %v3860
    %v3862 = vand.u32 %v3861, 4294901760
    %3863 = vmatpush.msra.mxu0 %v3862
    %v3864 = vand.u32 %v633, 4294901760
    %v3865 = vsub.f32 %v633, %v3864
    %v3866 = vand.u32 %v3865, 4294901760
    %v3867 = vsub.f32 %v3865, %v3866
    %v3868 = vand.u32 %v3867, 4294901760
    %3869 = vmatpush.msra.mxu0 %v3868
    %v3870 = vand.u32 %v631, 4294901760
    %v3871 = vsub.f32 %v631, %v3870
    %v3872 = vand.u32 %v3871, 4294901760
    %v3873 = vsub.f32 %v3871, %v3872
    %v3874 = vand.u32 %v3873, 4294901760
    %3875 = vmatpush.msra.mxu0 %v3874
    %v3876 = vand.u32 %v629, 4294901760
    %v3877 = vsub.f32 %v629, %v3876
    %v3878 = vand.u32 %v3877, 4294901760
    %v3879 = vsub.f32 %v3877, %v3878
    %v3880 = vand.u32 %v3879, 4294901760
    %3881 = vmatpush.msra.mxu0 %v3880
    %v3882 = vand.u32 %v627, 4294901760
    %v3883 = vsub.f32 %v627, %v3882
    %v3884 = vand.u32 %v3883, 4294901760
    %v3885 = vsub.f32 %v3883, %v3884
    %v3886 = vand.u32 %v3885, 4294901760
    %3887 = vmatpush.msra.mxu0 %v3886
    %v3888 = vand.u32 %v625, 4294901760
    %v3889 = vsub.f32 %v625, %v3888
    %v3890 = vand.u32 %v3889, 4294901760
    %v3891 = vsub.f32 %v3889, %v3890
    %v3892 = vand.u32 %v3891, 4294901760
    %3893 = vmatpush.msra.mxu0 %v3892
    %v3894 = vand.u32 %v623, 4294901760
    %v3895 = vsub.f32 %v623, %v3894
    %v3896 = vand.u32 %v3895, 4294901760
    %v3897 = vsub.f32 %v3895, %v3896
    %v3898 = vand.u32 %v3897, 4294901760
    %3899 = vmatpush.msra.mxu0 %v3898
    %v3900 = vand.u32 %v621, 4294901760
    %v3901 = vsub.f32 %v621, %v3900
    %v3902 = vand.u32 %v3901, 4294901760
    %v3903 = vsub.f32 %v3901, %v3902
    %v3904 = vand.u32 %v3903, 4294901760
    %3905 = vmatpush.msra.mxu0 %v3904
    %v3906 = vand.u32 %v689, 4294901760
    %3907 = vmatmul.f32.gmra.mxu0 %v3906
    %v3908 = vpop.f32.mrf.mxu0
    %v3909 = vadd.f32 %v3808, %v3908
    %3910 = vdwg.mxu0
    %v3911 = vand.u32 %v651, 4294901760
    %v3912 = vsub.f32 %v651, %v3911
    %3913 = vmatpush.msra.mxu0 %v3912
    %v3914 = vand.u32 %v649, 4294901760
    %v3915 = vsub.f32 %v649, %v3914
    %3916 = vmatpush.msra.mxu0 %v3915
    %v3917 = vand.u32 %v647, 4294901760
    %v3918 = vsub.f32 %v647, %v3917
    %3919 = vmatpush.msra.mxu0 %v3918
    %v3920 = vand.u32 %v645, 4294901760
    %v3921 = vsub.f32 %v645, %v3920
    %3922 = vmatpush.msra.mxu0 %v3921
    %v3923 = vand.u32 %v643, 4294901760
    %v3924 = vsub.f32 %v643, %v3923
    %3925 = vmatpush.msra.mxu0 %v3924
    %v3926 = vand.u32 %v641, 4294901760
    %v3927 = vsub.f32 %v641, %v3926
    %3928 = vmatpush.msra.mxu0 %v3927
    %v3929 = vand.u32 %v639, 4294901760
    %v3930 = vsub.f32 %v639, %v3929
    %3931 = vmatpush.msra.mxu0 %v3930
    %v3932 = vand.u32 %v637, 4294901760
    %v3933 = vsub.f32 %v637, %v3932
    %3934 = vmatpush.msra.mxu0 %v3933
    %v3935 = vand.u32 %v635, 4294901760
    %v3936 = vsub.f32 %v635, %v3935
    %3937 = vmatpush.msra.mxu0 %v3936
    %v3938 = vand.u32 %v633, 4294901760
    %v3939 = vsub.f32 %v633, %v3938
    %3940 = vmatpush.msra.mxu0 %v3939
    %v3941 = vand.u32 %v631, 4294901760
    %v3942 = vsub.f32 %v631, %v3941
    %3943 = vmatpush.msra.mxu0 %v3942
    %v3944 = vand.u32 %v629, 4294901760
    %v3945 = vsub.f32 %v629, %v3944
    %3946 = vmatpush.msra.mxu0 %v3945
    %v3947 = vand.u32 %v627, 4294901760
    %v3948 = vsub.f32 %v627, %v3947
    %3949 = vmatpush.msra.mxu0 %v3948
    %v3950 = vand.u32 %v625, 4294901760
    %v3951 = vsub.f32 %v625, %v3950
    %3952 = vmatpush.msra.mxu0 %v3951
    %v3953 = vand.u32 %v623, 4294901760
    %v3954 = vsub.f32 %v623, %v3953
    %3955 = vmatpush.msra.mxu0 %v3954
    %v3956 = vand.u32 %v621, 4294901760
    %v3957 = vsub.f32 %v621, %v3956
    %3958 = vmatpush.msra.mxu0 %v3957
    %v3959 = vand.u32 %v689, 4294901760
    %v3960 = vsub.f32 %v689, %v3959
    %3961 = vmatmul.f32.gmra.mxu0 %v3960
    %v3962 = vpop.f32.mrf.mxu0
    %v3963 = vadd.f32 %v3909, %v3962
    %3964 = vdwg.mxu0
    %v3965 = vand.u32 %v651, 4294901760
    %3966 = vmatpush.msra.mxu0 %v3965
    %v3967 = vand.u32 %v649, 4294901760
    %3968 = vmatpush.msra.mxu0 %v3967
    %v3969 = vand.u32 %v647, 4294901760
    %3970 = vmatpush.msra.mxu0 %v3969
    %v3971 = vand.u32 %v645, 4294901760
    %3972 = vmatpush.msra.mxu0 %v3971
    %v3973 = vand.u32 %v643, 4294901760
    %3974 = vmatpush.msra.mxu0 %v3973
    %v3975 = vand.u32 %v641, 4294901760
    %3976 = vmatpush.msra.mxu0 %v3975
    %v3977 = vand.u32 %v639, 4294901760
    %3978 = vmatpush.msra.mxu0 %v3977
    %v3979 = vand.u32 %v637, 4294901760
    %3980 = vmatpush.msra.mxu0 %v3979
    %v3981 = vand.u32 %v635, 4294901760
    %3982 = vmatpush.msra.mxu0 %v3981
    %v3983 = vand.u32 %v633, 4294901760
    %3984 = vmatpush.msra.mxu0 %v3983
    %v3985 = vand.u32 %v631, 4294901760
    %3986 = vmatpush.msra.mxu0 %v3985
    %v3987 = vand.u32 %v629, 4294901760
    %3988 = vmatpush.msra.mxu0 %v3987
    %v3989 = vand.u32 %v627, 4294901760
    %3990 = vmatpush.msra.mxu0 %v3989
    %v3991 = vand.u32 %v625, 4294901760
    %3992 = vmatpush.msra.mxu0 %v3991
    %v3993 = vand.u32 %v623, 4294901760
    %3994 = vmatpush.msra.mxu0 %v3993
    %v3995 = vand.u32 %v621, 4294901760
    %3996 = vmatpush.msra.mxu0 %v3995
    %v3997 = vand.u32 %v689, 4294901760
    %v3998 = vsub.f32 %v689, %v3997
    %v3999 = vand.u32 %v3998, 4294901760
    %4000 = vmatmul.f32.gmra.mxu0 %v3999
    %v4001 = vpop.f32.mrf.mxu0
    %v4002 = vadd.f32 %v3963, %v4001
    %4003 = vdwg.mxu0
    %v4004 = vand.u32 %v651, 4294901760
    %v4005 = vsub.f32 %v651, %v4004
    %v4006 = vand.u32 %v4005, 4294901760
    %4007 = vmatpush.msra.mxu0 %v4006
    %v4008 = vand.u32 %v649, 4294901760
    %v4009 = vsub.f32 %v649, %v4008
    %v4010 = vand.u32 %v4009, 4294901760
    %4011 = vmatpush.msra.mxu0 %v4010
    %v4012 = vand.u32 %v647, 4294901760
    %v4013 = vsub.f32 %v647, %v4012
    %v4014 = vand.u32 %v4013, 4294901760
    %4015 = vmatpush.msra.mxu0 %v4014
    %v4016 = vand.u32 %v645, 4294901760
    %v4017 = vsub.f32 %v645, %v4016
    %v4018 = vand.u32 %v4017, 4294901760
    %4019 = vmatpush.msra.mxu0 %v4018
    %v4020 = vand.u32 %v643, 4294901760
    %v4021 = vsub.f32 %v643, %v4020
    %v4022 = vand.u32 %v4021, 4294901760
    %4023 = vmatpush.msra.mxu0 %v4022
    %v4024 = vand.u32 %v641, 4294901760
    %v4025 = vsub.f32 %v641, %v4024
    %v4026 = vand.u32 %v4025, 4294901760
    %4027 = vmatpush.msra.mxu0 %v4026
    %v4028 = vand.u32 %v639, 4294901760
    %v4029 = vsub.f32 %v639, %v4028
    %v4030 = vand.u32 %v4029, 4294901760
    %4031 = vmatpush.msra.mxu0 %v4030
    %v4032 = vand.u32 %v637, 4294901760
    %v4033 = vsub.f32 %v637, %v4032
    %v4034 = vand.u32 %v4033, 4294901760
    %4035 = vmatpush.msra.mxu0 %v4034
    %v4036 = vand.u32 %v635, 4294901760
    %v4037 = vsub.f32 %v635, %v4036
    %v4038 = vand.u32 %v4037, 4294901760
    %4039 = vmatpush.msra.mxu0 %v4038
    %v4040 = vand.u32 %v633, 4294901760
    %v4041 = vsub.f32 %v633, %v4040
    %v4042 = vand.u32 %v4041, 4294901760
    %4043 = vmatpush.msra.mxu0 %v4042
    %v4044 = vand.u32 %v631, 4294901760
    %v4045 = vsub.f32 %v631, %v4044
    %v4046 = vand.u32 %v4045, 4294901760
    %4047 = vmatpush.msra.mxu0 %v4046
    %v4048 = vand.u32 %v629, 4294901760
    %v4049 = vsub.f32 %v629, %v4048
    %v4050 = vand.u32 %v4049, 4294901760
    %4051 = vmatpush.msra.mxu0 %v4050
    %v4052 = vand.u32 %v627, 4294901760
    %v4053 = vsub.f32 %v627, %v4052
    %v4054 = vand.u32 %v4053, 4294901760
    %4055 = vmatpush.msra.mxu0 %v4054
    %v4056 = vand.u32 %v625, 4294901760
    %v4057 = vsub.f32 %v625, %v4056
    %v4058 = vand.u32 %v4057, 4294901760
    %4059 = vmatpush.msra.mxu0 %v4058
    %v4060 = vand.u32 %v623, 4294901760
    %v4061 = vsub.f32 %v623, %v4060
    %v4062 = vand.u32 %v4061, 4294901760
    %4063 = vmatpush.msra.mxu0 %v4062
    %v4064 = vand.u32 %v621, 4294901760
    %v4065 = vsub.f32 %v621, %v4064
    %v4066 = vand.u32 %v4065, 4294901760
    %4067 = vmatpush.msra.mxu0 %v4066
    %v4068 = vand.u32 %v689, 4294901760
    %4069 = vmatmul.f32.gmra.mxu0 %v4068
    %v4070 = vpop.f32.mrf.mxu0
    %v4071 = vadd.f32 %v4002, %v4070
    %4072 = vdwg.mxu0
    %v4073 = vand.u32 %v651, 4294901760
    %4074 = vmatpush.msra.mxu0 %v4073
    %v4075 = vand.u32 %v649, 4294901760
    %4076 = vmatpush.msra.mxu0 %v4075
    %v4077 = vand.u32 %v647, 4294901760
    %4078 = vmatpush.msra.mxu0 %v4077
    %v4079 = vand.u32 %v645, 4294901760
    %4080 = vmatpush.msra.mxu0 %v4079
    %v4081 = vand.u32 %v643, 4294901760
    %4082 = vmatpush.msra.mxu0 %v4081
    %v4083 = vand.u32 %v641, 4294901760
    %4084 = vmatpush.msra.mxu0 %v4083
    %v4085 = vand.u32 %v639, 4294901760
    %4086 = vmatpush.msra.mxu0 %v4085
    %v4087 = vand.u32 %v637, 4294901760
    %4088 = vmatpush.msra.mxu0 %v4087
    %v4089 = vand.u32 %v635, 4294901760
    %4090 = vmatpush.msra.mxu0 %v4089
    %v4091 = vand.u32 %v633, 4294901760
    %4092 = vmatpush.msra.mxu0 %v4091
    %v4093 = vand.u32 %v631, 4294901760
    %4094 = vmatpush.msra.mxu0 %v4093
    %v4095 = vand.u32 %v629, 4294901760
    %4096 = vmatpush.msra.mxu0 %v4095
    %v4097 = vand.u32 %v627, 4294901760
    %4098 = vmatpush.msra.mxu0 %v4097
    %v4099 = vand.u32 %v625, 4294901760
    %4100 = vmatpush.msra.mxu0 %v4099
    %v4101 = vand.u32 %v623, 4294901760
    %4102 = vmatpush.msra.mxu0 %v4101
    %v4103 = vand.u32 %v621, 4294901760
    %4104 = vmatpush.msra.mxu0 %v4103
    %v4105 = vand.u32 %v689, 4294901760
    %4106 = vmatmul.f32.gmra.mxu0 %v4105
    %v4107 = vpop.f32.mrf.mxu0
    %v4108 = vadd.f32 %v4071, %v4107
    %4109 = vdwg.mxu0
    %v4110 = vand.u32 %v364, 4294901760
    %4111 = vmatpush.msra.mxu0 %v4110
    %v4112 = vand.u32 %v362, 4294901760
    %4113 = vmatpush.msra.mxu0 %v4112
    %v4114 = vand.u32 %v360, 4294901760
    %4115 = vmatpush.msra.mxu0 %v4114
    %v4116 = vand.u32 %v358, 4294901760
    %4117 = vmatpush.msra.mxu0 %v4116
    %v4118 = vand.u32 %v356, 4294901760
    %4119 = vmatpush.msra.mxu0 %v4118
    %v4120 = vand.u32 %v354, 4294901760
    %4121 = vmatpush.msra.mxu0 %v4120
    %v4122 = vand.u32 %v352, 4294901760
    %4123 = vmatpush.msra.mxu0 %v4122
    %v4124 = vand.u32 %v350, 4294901760
    %4125 = vmatpush.msra.mxu0 %v4124
    %v4126 = vand.u32 %v348, 4294901760
    %4127 = vmatpush.msra.mxu0 %v4126
    %v4128 = vand.u32 %v346, 4294901760
    %4129 = vmatpush.msra.mxu0 %v4128
    %v4130 = vand.u32 %v344, 4294901760
    %4131 = vmatpush.msra.mxu0 %v4130
    %v4132 = vand.u32 %v342, 4294901760
    %4133 = vmatpush.msra.mxu0 %v4132
    %v4134 = vand.u32 %v340, 4294901760
    %4135 = vmatpush.msra.mxu0 %v4134
    %v4136 = vand.u32 %v338, 4294901760
    %4137 = vmatpush.msra.mxu0 %v4136
    %v4138 = vand.u32 %v336, 4294901760
    %4139 = vmatpush.msra.mxu0 %v4138
    %v4140 = vand.u32 %v334, 4294901760
    %4141 = vmatpush.msra.mxu0 %v4140
    %v4142 = vand.u32 %v680, 4294901760
    %v4143 = vsub.f32 %v680, %v4142
    %v4144 = vand.u32 %v4143, 4294901760
    %v4145 = vsub.f32 %v4143, %v4144
    %v4146 = vand.u32 %v4145, 4294901760
    %4147 = vmatmul.f32.gmra.mxu0 %v4146
    %v4148 = vpop.f32.mrf.mxu0
    %v4149 = vadd.f32 %v656, %v4148
    %4150 = vdwg.mxu0
    %v4151 = vand.u32 %v364, 4294901760
    %v4152 = vsub.f32 %v364, %v4151
    %v4153 = vand.u32 %v4152, 4294901760
    %v4154 = vsub.f32 %v4152, %v4153
    %v4155 = vand.u32 %v4154, 4294901760
    %4156 = vmatpush.msra.mxu0 %v4155
    %v4157 = vand.u32 %v362, 4294901760
    %v4158 = vsub.f32 %v362, %v4157
    %v4159 = vand.u32 %v4158, 4294901760
    %v4160 = vsub.f32 %v4158, %v4159
    %v4161 = vand.u32 %v4160, 4294901760
    %4162 = vmatpush.msra.mxu0 %v4161
    %v4163 = vand.u32 %v360, 4294901760
    %v4164 = vsub.f32 %v360, %v4163
    %v4165 = vand.u32 %v4164, 4294901760
    %v4166 = vsub.f32 %v4164, %v4165
    %v4167 = vand.u32 %v4166, 4294901760
    %4168 = vmatpush.msra.mxu0 %v4167
    %v4169 = vand.u32 %v358, 4294901760
    %v4170 = vsub.f32 %v358, %v4169
    %v4171 = vand.u32 %v4170, 4294901760
    %v4172 = vsub.f32 %v4170, %v4171
    %v4173 = vand.u32 %v4172, 4294901760
    %4174 = vmatpush.msra.mxu0 %v4173
    %v4175 = vand.u32 %v356, 4294901760
    %v4176 = vsub.f32 %v356, %v4175
    %v4177 = vand.u32 %v4176, 4294901760
    %v4178 = vsub.f32 %v4176, %v4177
    %v4179 = vand.u32 %v4178, 4294901760
    %4180 = vmatpush.msra.mxu0 %v4179
    %v4181 = vand.u32 %v354, 4294901760
    %v4182 = vsub.f32 %v354, %v4181
    %v4183 = vand.u32 %v4182, 4294901760
    %v4184 = vsub.f32 %v4182, %v4183
    %v4185 = vand.u32 %v4184, 4294901760
    %4186 = vmatpush.msra.mxu0 %v4185
    %v4187 = vand.u32 %v352, 4294901760
    %v4188 = vsub.f32 %v352, %v4187
    %v4189 = vand.u32 %v4188, 4294901760
    %v4190 = vsub.f32 %v4188, %v4189
    %v4191 = vand.u32 %v4190, 4294901760
    %4192 = vmatpush.msra.mxu0 %v4191
    %v4193 = vand.u32 %v350, 4294901760
    %v4194 = vsub.f32 %v350, %v4193
    %v4195 = vand.u32 %v4194, 4294901760
    %v4196 = vsub.f32 %v4194, %v4195
    %v4197 = vand.u32 %v4196, 4294901760
    %4198 = vmatpush.msra.mxu0 %v4197
    %v4199 = vand.u32 %v348, 4294901760
    %v4200 = vsub.f32 %v348, %v4199
    %v4201 = vand.u32 %v4200, 4294901760
    %v4202 = vsub.f32 %v4200, %v4201
    %v4203 = vand.u32 %v4202, 4294901760
    %4204 = vmatpush.msra.mxu0 %v4203
    %v4205 = vand.u32 %v346, 4294901760
    %v4206 = vsub.f32 %v346, %v4205
    %v4207 = vand.u32 %v4206, 4294901760
    %v4208 = vsub.f32 %v4206, %v4207
    %v4209 = vand.u32 %v4208, 4294901760
    %4210 = vmatpush.msra.mxu0 %v4209
    %v4211 = vand.u32 %v344, 4294901760
    %v4212 = vsub.f32 %v344, %v4211
    %v4213 = vand.u32 %v4212, 4294901760
    %v4214 = vsub.f32 %v4212, %v4213
    %v4215 = vand.u32 %v4214, 4294901760
    %4216 = vmatpush.msra.mxu0 %v4215
    %v4217 = vand.u32 %v342, 4294901760
    %v4218 = vsub.f32 %v342, %v4217
    %v4219 = vand.u32 %v4218, 4294901760
    %v4220 = vsub.f32 %v4218, %v4219
    %v4221 = vand.u32 %v4220, 4294901760
    %4222 = vmatpush.msra.mxu0 %v4221
    %v4223 = vand.u32 %v340, 4294901760
    %v4224 = vsub.f32 %v340, %v4223
    %v4225 = vand.u32 %v4224, 4294901760
    %v4226 = vsub.f32 %v4224, %v4225
    %v4227 = vand.u32 %v4226, 4294901760
    %4228 = vmatpush.msra.mxu0 %v4227
    %v4229 = vand.u32 %v338, 4294901760
    %v4230 = vsub.f32 %v338, %v4229
    %v4231 = vand.u32 %v4230, 4294901760
    %v4232 = vsub.f32 %v4230, %v4231
    %v4233 = vand.u32 %v4232, 4294901760
    %4234 = vmatpush.msra.mxu0 %v4233
    %v4235 = vand.u32 %v336, 4294901760
    %v4236 = vsub.f32 %v336, %v4235
    %v4237 = vand.u32 %v4236, 4294901760
    %v4238 = vsub.f32 %v4236, %v4237
    %v4239 = vand.u32 %v4238, 4294901760
    %4240 = vmatpush.msra.mxu0 %v4239
    %v4241 = vand.u32 %v334, 4294901760
    %v4242 = vsub.f32 %v334, %v4241
    %v4243 = vand.u32 %v4242, 4294901760
    %v4244 = vsub.f32 %v4242, %v4243
    %v4245 = vand.u32 %v4244, 4294901760
    %4246 = vmatpush.msra.mxu0 %v4245
    %v4247 = vand.u32 %v680, 4294901760
    %4248 = vmatmul.f32.gmra.mxu0 %v4247
    %v4249 = vpop.f32.mrf.mxu0
    %v4250 = vadd.f32 %v4149, %v4249
    %4251 = vdwg.mxu0
    %v4252 = vand.u32 %v364, 4294901760
    %v4253 = vsub.f32 %v364, %v4252
    %4254 = vmatpush.msra.mxu0 %v4253
    %v4255 = vand.u32 %v362, 4294901760
    %v4256 = vsub.f32 %v362, %v4255
    %4257 = vmatpush.msra.mxu0 %v4256
    %v4258 = vand.u32 %v360, 4294901760
    %v4259 = vsub.f32 %v360, %v4258
    %4260 = vmatpush.msra.mxu0 %v4259
    %v4261 = vand.u32 %v358, 4294901760
    %v4262 = vsub.f32 %v358, %v4261
    %4263 = vmatpush.msra.mxu0 %v4262
    %v4264 = vand.u32 %v356, 4294901760
    %v4265 = vsub.f32 %v356, %v4264
    %4266 = vmatpush.msra.mxu0 %v4265
    %v4267 = vand.u32 %v354, 4294901760
    %v4268 = vsub.f32 %v354, %v4267
    %4269 = vmatpush.msra.mxu0 %v4268
    %v4270 = vand.u32 %v352, 4294901760
    %v4271 = vsub.f32 %v352, %v4270
    %4272 = vmatpush.msra.mxu0 %v4271
    %v4273 = vand.u32 %v350, 4294901760
    %v4274 = vsub.f32 %v350, %v4273
    %4275 = vmatpush.msra.mxu0 %v4274
    %v4276 = vand.u32 %v348, 4294901760
    %v4277 = vsub.f32 %v348, %v4276
    %4278 = vmatpush.msra.mxu0 %v4277
    %v4279 = vand.u32 %v346, 4294901760
    %v4280 = vsub.f32 %v346, %v4279
    %4281 = vmatpush.msra.mxu0 %v4280
    %v4282 = vand.u32 %v344, 4294901760
    %v4283 = vsub.f32 %v344, %v4282
    %4284 = vmatpush.msra.mxu0 %v4283
    %v4285 = vand.u32 %v342, 4294901760
    %v4286 = vsub.f32 %v342, %v4285
    %4287 = vmatpush.msra.mxu0 %v4286
    %v4288 = vand.u32 %v340, 4294901760
    %v4289 = vsub.f32 %v340, %v4288
    %4290 = vmatpush.msra.mxu0 %v4289
    %v4291 = vand.u32 %v338, 4294901760
    %v4292 = vsub.f32 %v338, %v4291
    %4293 = vmatpush.msra.mxu0 %v4292
    %v4294 = vand.u32 %v336, 4294901760
    %v4295 = vsub.f32 %v336, %v4294
    %4296 = vmatpush.msra.mxu0 %v4295
    %v4297 = vand.u32 %v334, 4294901760
    %v4298 = vsub.f32 %v334, %v4297
    %4299 = vmatpush.msra.mxu0 %v4298
    %v4300 = vand.u32 %v680, 4294901760
    %v4301 = vsub.f32 %v680, %v4300
    %4302 = vmatmul.f32.gmra.mxu0 %v4301
    %v4303 = vpop.f32.mrf.mxu0
    %v4304 = vadd.f32 %v4250, %v4303
    %4305 = vdwg.mxu0
    %v4306 = vand.u32 %v364, 4294901760
    %4307 = vmatpush.msra.mxu0 %v4306
    %v4308 = vand.u32 %v362, 4294901760
    %4309 = vmatpush.msra.mxu0 %v4308
    %v4310 = vand.u32 %v360, 4294901760
    %4311 = vmatpush.msra.mxu0 %v4310
    %v4312 = vand.u32 %v358, 4294901760
    %4313 = vmatpush.msra.mxu0 %v4312
    %v4314 = vand.u32 %v356, 4294901760
    %4315 = vmatpush.msra.mxu0 %v4314
    %v4316 = vand.u32 %v354, 4294901760
    %4317 = vmatpush.msra.mxu0 %v4316
    %v4318 = vand.u32 %v352, 4294901760
    %4319 = vmatpush.msra.mxu0 %v4318
    %v4320 = vand.u32 %v350, 4294901760
    %4321 = vmatpush.msra.mxu0 %v4320
    %v4322 = vand.u32 %v348, 4294901760
    %4323 = vmatpush.msra.mxu0 %v4322
    %v4324 = vand.u32 %v346, 4294901760
    %4325 = vmatpush.msra.mxu0 %v4324
    %v4326 = vand.u32 %v344, 4294901760
    %4327 = vmatpush.msra.mxu0 %v4326
    %v4328 = vand.u32 %v342, 4294901760
    %4329 = vmatpush.msra.mxu0 %v4328
    %v4330 = vand.u32 %v340, 4294901760
    %4331 = vmatpush.msra.mxu0 %v4330
    %v4332 = vand.u32 %v338, 4294901760
    %4333 = vmatpush.msra.mxu0 %v4332
    %v4334 = vand.u32 %v336, 4294901760
    %4335 = vmatpush.msra.mxu0 %v4334
    %v4336 = vand.u32 %v334, 4294901760
    %4337 = vmatpush.msra.mxu0 %v4336
    %v4338 = vand.u32 %v680, 4294901760
    %v4339 = vsub.f32 %v680, %v4338
    %v4340 = vand.u32 %v4339, 4294901760
    %4341 = vmatmul.f32.gmra.mxu0 %v4340
    %v4342 = vpop.f32.mrf.mxu0
    %v4343 = vadd.f32 %v4304, %v4342
    %4344 = vdwg.mxu0
    %v4345 = vand.u32 %v364, 4294901760
    %v4346 = vsub.f32 %v364, %v4345
    %v4347 = vand.u32 %v4346, 4294901760
    %4348 = vmatpush.msra.mxu0 %v4347
    %v4349 = vand.u32 %v362, 4294901760
    %v4350 = vsub.f32 %v362, %v4349
    %v4351 = vand.u32 %v4350, 4294901760
    %4352 = vmatpush.msra.mxu0 %v4351
    %v4353 = vand.u32 %v360, 4294901760
    %v4354 = vsub.f32 %v360, %v4353
    %v4355 = vand.u32 %v4354, 4294901760
    %4356 = vmatpush.msra.mxu0 %v4355
    %v4357 = vand.u32 %v358, 4294901760
    %v4358 = vsub.f32 %v358, %v4357
    %v4359 = vand.u32 %v4358, 4294901760
    %4360 = vmatpush.msra.mxu0 %v4359
    %v4361 = vand.u32 %v356, 4294901760
    %v4362 = vsub.f32 %v356, %v4361
    %v4363 = vand.u32 %v4362, 4294901760
    %4364 = vmatpush.msra.mxu0 %v4363
    %v4365 = vand.u32 %v354, 4294901760
    %v4366 = vsub.f32 %v354, %v4365
    %v4367 = vand.u32 %v4366, 4294901760
    %4368 = vmatpush.msra.mxu0 %v4367
    %v4369 = vand.u32 %v352, 4294901760
    %v4370 = vsub.f32 %v352, %v4369
    %v4371 = vand.u32 %v4370, 4294901760
    %4372 = vmatpush.msra.mxu0 %v4371
    %v4373 = vand.u32 %v350, 4294901760
    %v4374 = vsub.f32 %v350, %v4373
    %v4375 = vand.u32 %v4374, 4294901760
    %4376 = vmatpush.msra.mxu0 %v4375
    %v4377 = vand.u32 %v348, 4294901760
    %v4378 = vsub.f32 %v348, %v4377
    %v4379 = vand.u32 %v4378, 4294901760
    %4380 = vmatpush.msra.mxu0 %v4379
    %v4381 = vand.u32 %v346, 4294901760
    %v4382 = vsub.f32 %v346, %v4381
    %v4383 = vand.u32 %v4382, 4294901760
    %4384 = vmatpush.msra.mxu0 %v4383
    %v4385 = vand.u32 %v344, 4294901760
    %v4386 = vsub.f32 %v344, %v4385
    %v4387 = vand.u32 %v4386, 4294901760
    %4388 = vmatpush.msra.mxu0 %v4387
    %v4389 = vand.u32 %v342, 4294901760
    %v4390 = vsub.f32 %v342, %v4389
    %v4391 = vand.u32 %v4390, 4294901760
    %4392 = vmatpush.msra.mxu0 %v4391
    %v4393 = vand.u32 %v340, 4294901760
    %v4394 = vsub.f32 %v340, %v4393
    %v4395 = vand.u32 %v4394, 4294901760
    %4396 = vmatpush.msra.mxu0 %v4395
    %v4397 = vand.u32 %v338, 4294901760
    %v4398 = vsub.f32 %v338, %v4397
    %v4399 = vand.u32 %v4398, 4294901760
    %4400 = vmatpush.msra.mxu0 %v4399
    %v4401 = vand.u32 %v336, 4294901760
    %v4402 = vsub.f32 %v336, %v4401
    %v4403 = vand.u32 %v4402, 4294901760
    %4404 = vmatpush.msra.mxu0 %v4403
    %v4405 = vand.u32 %v334, 4294901760
    %v4406 = vsub.f32 %v334, %v4405
    %v4407 = vand.u32 %v4406, 4294901760
    %4408 = vmatpush.msra.mxu0 %v4407
    %v4409 = vand.u32 %v680, 4294901760
    %4410 = vmatmul.f32.gmra.mxu0 %v4409
    %v4411 = vpop.f32.mrf.mxu0
    %v4412 = vadd.f32 %v4343, %v4411
    %4413 = vdwg.mxu0
    %v4414 = vand.u32 %v364, 4294901760
    %4415 = vmatpush.msra.mxu0 %v4414
    %v4416 = vand.u32 %v362, 4294901760
    %4417 = vmatpush.msra.mxu0 %v4416
    %v4418 = vand.u32 %v360, 4294901760
    %4419 = vmatpush.msra.mxu0 %v4418
    %v4420 = vand.u32 %v358, 4294901760
    %4421 = vmatpush.msra.mxu0 %v4420
    %v4422 = vand.u32 %v356, 4294901760
    %4423 = vmatpush.msra.mxu0 %v4422
    %v4424 = vand.u32 %v354, 4294901760
    %4425 = vmatpush.msra.mxu0 %v4424
    %v4426 = vand.u32 %v352, 4294901760
    %4427 = vmatpush.msra.mxu0 %v4426
    %v4428 = vand.u32 %v350, 4294901760
    %4429 = vmatpush.msra.mxu0 %v4428
    %v4430 = vand.u32 %v348, 4294901760
    %4431 = vmatpush.msra.mxu0 %v4430
    %v4432 = vand.u32 %v346, 4294901760
    %4433 = vmatpush.msra.mxu0 %v4432
    %v4434 = vand.u32 %v344, 4294901760
    %4435 = vmatpush.msra.mxu0 %v4434
    %v4436 = vand.u32 %v342, 4294901760
    %4437 = vmatpush.msra.mxu0 %v4436
    %v4438 = vand.u32 %v340, 4294901760
    %4439 = vmatpush.msra.mxu0 %v4438
    %v4440 = vand.u32 %v338, 4294901760
    %4441 = vmatpush.msra.mxu0 %v4440
    %v4442 = vand.u32 %v336, 4294901760
    %4443 = vmatpush.msra.mxu0 %v4442
    %v4444 = vand.u32 %v334, 4294901760
    %4445 = vmatpush.msra.mxu0 %v4444
    %v4446 = vand.u32 %v680, 4294901760
    %4447 = vmatmul.f32.gmra.mxu0 %v4446
    %v4448 = vpop.f32.mrf.mxu0
    %v4449 = vadd.f32 %v4412, %v4448
    %4450 = vdwg.mxu0
    %v4451 = vand.u32 %v396, 4294901760
    %4452 = vmatpush.msra.mxu0 %v4451
    %v4453 = vand.u32 %v394, 4294901760
    %4454 = vmatpush.msra.mxu0 %v4453
    %v4455 = vand.u32 %v392, 4294901760
    %4456 = vmatpush.msra.mxu0 %v4455
    %v4457 = vand.u32 %v390, 4294901760
    %4458 = vmatpush.msra.mxu0 %v4457
    %v4459 = vand.u32 %v388, 4294901760
    %4460 = vmatpush.msra.mxu0 %v4459
    %v4461 = vand.u32 %v386, 4294901760
    %4462 = vmatpush.msra.mxu0 %v4461
    %v4463 = vand.u32 %v384, 4294901760
    %4464 = vmatpush.msra.mxu0 %v4463
    %v4465 = vand.u32 %v382, 4294901760
    %4466 = vmatpush.msra.mxu0 %v4465
    %v4467 = vand.u32 %v380, 4294901760
    %4468 = vmatpush.msra.mxu0 %v4467
    %v4469 = vand.u32 %v378, 4294901760
    %4470 = vmatpush.msra.mxu0 %v4469
    %v4471 = vand.u32 %v376, 4294901760
    %4472 = vmatpush.msra.mxu0 %v4471
    %v4473 = vand.u32 %v374, 4294901760
    %4474 = vmatpush.msra.mxu0 %v4473
    %v4475 = vand.u32 %v372, 4294901760
    %4476 = vmatpush.msra.mxu0 %v4475
    %v4477 = vand.u32 %v370, 4294901760
    %4478 = vmatpush.msra.mxu0 %v4477
    %v4479 = vand.u32 %v368, 4294901760
    %4480 = vmatpush.msra.mxu0 %v4479
    %v4481 = vand.u32 %v366, 4294901760
    %4482 = vmatpush.msra.mxu0 %v4481
    %v4483 = vand.u32 %v681, 4294901760
    %v4484 = vsub.f32 %v681, %v4483
    %v4485 = vand.u32 %v4484, 4294901760
    %v4486 = vsub.f32 %v4484, %v4485
    %v4487 = vand.u32 %v4486, 4294901760
    %4488 = vmatmul.f32.gmra.mxu0 %v4487
    %v4489 = vpop.f32.mrf.mxu0
    %v4490 = vadd.f32 %v4449, %v4489
    %4491 = vdwg.mxu0
    %v4492 = vand.u32 %v396, 4294901760
    %v4493 = vsub.f32 %v396, %v4492
    %v4494 = vand.u32 %v4493, 4294901760
    %v4495 = vsub.f32 %v4493, %v4494
    %v4496 = vand.u32 %v4495, 4294901760
    %4497 = vmatpush.msra.mxu0 %v4496
    %v4498 = vand.u32 %v394, 4294901760
    %v4499 = vsub.f32 %v394, %v4498
    %v4500 = vand.u32 %v4499, 4294901760
    %v4501 = vsub.f32 %v4499, %v4500
    %v4502 = vand.u32 %v4501, 4294901760
    %4503 = vmatpush.msra.mxu0 %v4502
    %v4504 = vand.u32 %v392, 4294901760
    %v4505 = vsub.f32 %v392, %v4504
    %v4506 = vand.u32 %v4505, 4294901760
    %v4507 = vsub.f32 %v4505, %v4506
    %v4508 = vand.u32 %v4507, 4294901760
    %4509 = vmatpush.msra.mxu0 %v4508
    %v4510 = vand.u32 %v390, 4294901760
    %v4511 = vsub.f32 %v390, %v4510
    %v4512 = vand.u32 %v4511, 4294901760
    %v4513 = vsub.f32 %v4511, %v4512
    %v4514 = vand.u32 %v4513, 4294901760
    %4515 = vmatpush.msra.mxu0 %v4514
    %v4516 = vand.u32 %v388, 4294901760
    %v4517 = vsub.f32 %v388, %v4516
    %v4518 = vand.u32 %v4517, 4294901760
    %v4519 = vsub.f32 %v4517, %v4518
    %v4520 = vand.u32 %v4519, 4294901760
    %4521 = vmatpush.msra.mxu0 %v4520
    %v4522 = vand.u32 %v386, 4294901760
    %v4523 = vsub.f32 %v386, %v4522
    %v4524 = vand.u32 %v4523, 4294901760
    %v4525 = vsub.f32 %v4523, %v4524
    %v4526 = vand.u32 %v4525, 4294901760
    %4527 = vmatpush.msra.mxu0 %v4526
    %v4528 = vand.u32 %v384, 4294901760
    %v4529 = vsub.f32 %v384, %v4528
    %v4530 = vand.u32 %v4529, 4294901760
    %v4531 = vsub.f32 %v4529, %v4530
    %v4532 = vand.u32 %v4531, 4294901760
    %4533 = vmatpush.msra.mxu0 %v4532
    %v4534 = vand.u32 %v382, 4294901760
    %v4535 = vsub.f32 %v382, %v4534
    %v4536 = vand.u32 %v4535, 4294901760
    %v4537 = vsub.f32 %v4535, %v4536
    %v4538 = vand.u32 %v4537, 4294901760
    %4539 = vmatpush.msra.mxu0 %v4538
    %v4540 = vand.u32 %v380, 4294901760
    %v4541 = vsub.f32 %v380, %v4540
    %v4542 = vand.u32 %v4541, 4294901760
    %v4543 = vsub.f32 %v4541, %v4542
    %v4544 = vand.u32 %v4543, 4294901760
    %4545 = vmatpush.msra.mxu0 %v4544
    %v4546 = vand.u32 %v378, 4294901760
    %v4547 = vsub.f32 %v378, %v4546
    %v4548 = vand.u32 %v4547, 4294901760
    %v4549 = vsub.f32 %v4547, %v4548
    %v4550 = vand.u32 %v4549, 4294901760
    %4551 = vmatpush.msra.mxu0 %v4550
    %v4552 = vand.u32 %v376, 4294901760
    %v4553 = vsub.f32 %v376, %v4552
    %v4554 = vand.u32 %v4553, 4294901760
    %v4555 = vsub.f32 %v4553, %v4554
    %v4556 = vand.u32 %v4555, 4294901760
    %4557 = vmatpush.msra.mxu0 %v4556
    %v4558 = vand.u32 %v374, 4294901760
    %v4559 = vsub.f32 %v374, %v4558
    %v4560 = vand.u32 %v4559, 4294901760
    %v4561 = vsub.f32 %v4559, %v4560
    %v4562 = vand.u32 %v4561, 4294901760
    %4563 = vmatpush.msra.mxu0 %v4562
    %v4564 = vand.u32 %v372, 4294901760
    %v4565 = vsub.f32 %v372, %v4564
    %v4566 = vand.u32 %v4565, 4294901760
    %v4567 = vsub.f32 %v4565, %v4566
    %v4568 = vand.u32 %v4567, 4294901760
    %4569 = vmatpush.msra.mxu0 %v4568
    %v4570 = vand.u32 %v370, 4294901760
    %v4571 = vsub.f32 %v370, %v4570
    %v4572 = vand.u32 %v4571, 4294901760
    %v4573 = vsub.f32 %v4571, %v4572
    %v4574 = vand.u32 %v4573, 4294901760
    %4575 = vmatpush.msra.mxu0 %v4574
    %v4576 = vand.u32 %v368, 4294901760
    %v4577 = vsub.f32 %v368, %v4576
    %v4578 = vand.u32 %v4577, 4294901760
    %v4579 = vsub.f32 %v4577, %v4578
    %v4580 = vand.u32 %v4579, 4294901760
    %4581 = vmatpush.msra.mxu0 %v4580
    %v4582 = vand.u32 %v366, 4294901760
    %v4583 = vsub.f32 %v366, %v4582
    %v4584 = vand.u32 %v4583, 4294901760
    %v4585 = vsub.f32 %v4583, %v4584
    %v4586 = vand.u32 %v4585, 4294901760
    %4587 = vmatpush.msra.mxu0 %v4586
    %v4588 = vand.u32 %v681, 4294901760
    %4589 = vmatmul.f32.gmra.mxu0 %v4588
    %v4590 = vpop.f32.mrf.mxu0
    %v4591 = vadd.f32 %v4490, %v4590
    %4592 = vdwg.mxu0
    %v4593 = vand.u32 %v396, 4294901760
    %v4594 = vsub.f32 %v396, %v4593
    %4595 = vmatpush.msra.mxu0 %v4594
    %v4596 = vand.u32 %v394, 4294901760
    %v4597 = vsub.f32 %v394, %v4596
    %4598 = vmatpush.msra.mxu0 %v4597
    %v4599 = vand.u32 %v392, 4294901760
    %v4600 = vsub.f32 %v392, %v4599
    %4601 = vmatpush.msra.mxu0 %v4600
    %v4602 = vand.u32 %v390, 4294901760
    %v4603 = vsub.f32 %v390, %v4602
    %4604 = vmatpush.msra.mxu0 %v4603
    %v4605 = vand.u32 %v388, 4294901760
    %v4606 = vsub.f32 %v388, %v4605
    %4607 = vmatpush.msra.mxu0 %v4606
    %v4608 = vand.u32 %v386, 4294901760
    %v4609 = vsub.f32 %v386, %v4608
    %4610 = vmatpush.msra.mxu0 %v4609
    %v4611 = vand.u32 %v384, 4294901760
    %v4612 = vsub.f32 %v384, %v4611
    %4613 = vmatpush.msra.mxu0 %v4612
    %v4614 = vand.u32 %v382, 4294901760
    %v4615 = vsub.f32 %v382, %v4614
    %4616 = vmatpush.msra.mxu0 %v4615
    %v4617 = vand.u32 %v380, 4294901760
    %v4618 = vsub.f32 %v380, %v4617
    %4619 = vmatpush.msra.mxu0 %v4618
    %v4620 = vand.u32 %v378, 4294901760
    %v4621 = vsub.f32 %v378, %v4620
    %4622 = vmatpush.msra.mxu0 %v4621
    %v4623 = vand.u32 %v376, 4294901760
    %v4624 = vsub.f32 %v376, %v4623
    %4625 = vmatpush.msra.mxu0 %v4624
    %v4626 = vand.u32 %v374, 4294901760
    %v4627 = vsub.f32 %v374, %v4626
    %4628 = vmatpush.msra.mxu0 %v4627
    %v4629 = vand.u32 %v372, 4294901760
    %v4630 = vsub.f32 %v372, %v4629
    %4631 = vmatpush.msra.mxu0 %v4630
    %v4632 = vand.u32 %v370, 4294901760
    %v4633 = vsub.f32 %v370, %v4632
    %4634 = vmatpush.msra.mxu0 %v4633
    %v4635 = vand.u32 %v368, 4294901760
    %v4636 = vsub.f32 %v368, %v4635
    %4637 = vmatpush.msra.mxu0 %v4636
    %v4638 = vand.u32 %v366, 4294901760
    %v4639 = vsub.f32 %v366, %v4638
    %4640 = vmatpush.msra.mxu0 %v4639
    %v4641 = vand.u32 %v681, 4294901760
    %v4642 = vsub.f32 %v681, %v4641
    %4643 = vmatmul.f32.gmra.mxu0 %v4642
    %v4644 = vpop.f32.mrf.mxu0
    %v4645 = vadd.f32 %v4591, %v4644
    %4646 = vdwg.mxu0
    %v4647 = vand.u32 %v396, 4294901760
    %4648 = vmatpush.msra.mxu0 %v4647
    %v4649 = vand.u32 %v394, 4294901760
    %4650 = vmatpush.msra.mxu0 %v4649
    %v4651 = vand.u32 %v392, 4294901760
    %4652 = vmatpush.msra.mxu0 %v4651
    %v4653 = vand.u32 %v390, 4294901760
    %4654 = vmatpush.msra.mxu0 %v4653
    %v4655 = vand.u32 %v388, 4294901760
    %4656 = vmatpush.msra.mxu0 %v4655
    %v4657 = vand.u32 %v386, 4294901760
    %4658 = vmatpush.msra.mxu0 %v4657
    %v4659 = vand.u32 %v384, 4294901760
    %4660 = vmatpush.msra.mxu0 %v4659
    %v4661 = vand.u32 %v382, 4294901760
    %4662 = vmatpush.msra.mxu0 %v4661
    %v4663 = vand.u32 %v380, 4294901760
    %4664 = vmatpush.msra.mxu0 %v4663
    %v4665 = vand.u32 %v378, 4294901760
    %4666 = vmatpush.msra.mxu0 %v4665
    %v4667 = vand.u32 %v376, 4294901760
    %4668 = vmatpush.msra.mxu0 %v4667
    %v4669 = vand.u32 %v374, 4294901760
    %4670 = vmatpush.msra.mxu0 %v4669
    %v4671 = vand.u32 %v372, 4294901760
    %4672 = vmatpush.msra.mxu0 %v4671
    %v4673 = vand.u32 %v370, 4294901760
    %4674 = vmatpush.msra.mxu0 %v4673
    %v4675 = vand.u32 %v368, 4294901760
    %4676 = vmatpush.msra.mxu0 %v4675
    %v4677 = vand.u32 %v366, 4294901760
    %4678 = vmatpush.msra.mxu0 %v4677
    %v4679 = vand.u32 %v681, 4294901760
    %v4680 = vsub.f32 %v681, %v4679
    %v4681 = vand.u32 %v4680, 4294901760
    %4682 = vmatmul.f32.gmra.mxu0 %v4681
    %v4683 = vpop.f32.mrf.mxu0
    %v4684 = vadd.f32 %v4645, %v4683
    %4685 = vdwg.mxu0
    %v4686 = vand.u32 %v396, 4294901760
    %v4687 = vsub.f32 %v396, %v4686
    %v4688 = vand.u32 %v4687, 4294901760
    %4689 = vmatpush.msra.mxu0 %v4688
    %v4690 = vand.u32 %v394, 4294901760
    %v4691 = vsub.f32 %v394, %v4690
    %v4692 = vand.u32 %v4691, 4294901760
    %4693 = vmatpush.msra.mxu0 %v4692
    %v4694 = vand.u32 %v392, 4294901760
    %v4695 = vsub.f32 %v392, %v4694
    %v4696 = vand.u32 %v4695, 4294901760
    %4697 = vmatpush.msra.mxu0 %v4696
    %v4698 = vand.u32 %v390, 4294901760
    %v4699 = vsub.f32 %v390, %v4698
    %v4700 = vand.u32 %v4699, 4294901760
    %4701 = vmatpush.msra.mxu0 %v4700
    %v4702 = vand.u32 %v388, 4294901760
    %v4703 = vsub.f32 %v388, %v4702
    %v4704 = vand.u32 %v4703, 4294901760
    %4705 = vmatpush.msra.mxu0 %v4704
    %v4706 = vand.u32 %v386, 4294901760
    %v4707 = vsub.f32 %v386, %v4706
    %v4708 = vand.u32 %v4707, 4294901760
    %4709 = vmatpush.msra.mxu0 %v4708
    %v4710 = vand.u32 %v384, 4294901760
    %v4711 = vsub.f32 %v384, %v4710
    %v4712 = vand.u32 %v4711, 4294901760
    %4713 = vmatpush.msra.mxu0 %v4712
    %v4714 = vand.u32 %v382, 4294901760
    %v4715 = vsub.f32 %v382, %v4714
    %v4716 = vand.u32 %v4715, 4294901760
    %4717 = vmatpush.msra.mxu0 %v4716
    %v4718 = vand.u32 %v380, 4294901760
    %v4719 = vsub.f32 %v380, %v4718
    %v4720 = vand.u32 %v4719, 4294901760
    %4721 = vmatpush.msra.mxu0 %v4720
    %v4722 = vand.u32 %v378, 4294901760
    %v4723 = vsub.f32 %v378, %v4722
    %v4724 = vand.u32 %v4723, 4294901760
    %4725 = vmatpush.msra.mxu0 %v4724
    %v4726 = vand.u32 %v376, 4294901760
    %v4727 = vsub.f32 %v376, %v4726
    %v4728 = vand.u32 %v4727, 4294901760
    %4729 = vmatpush.msra.mxu0 %v4728
    %v4730 = vand.u32 %v374, 4294901760
    %v4731 = vsub.f32 %v374, %v4730
    %v4732 = vand.u32 %v4731, 4294901760
    %4733 = vmatpush.msra.mxu0 %v4732
    %v4734 = vand.u32 %v372, 4294901760
    %v4735 = vsub.f32 %v372, %v4734
    %v4736 = vand.u32 %v4735, 4294901760
    %4737 = vmatpush.msra.mxu0 %v4736
    %v4738 = vand.u32 %v370, 4294901760
    %v4739 = vsub.f32 %v370, %v4738
    %v4740 = vand.u32 %v4739, 4294901760
    %4741 = vmatpush.msra.mxu0 %v4740
    %v4742 = vand.u32 %v368, 4294901760
    %v4743 = vsub.f32 %v368, %v4742
    %v4744 = vand.u32 %v4743, 4294901760
    %4745 = vmatpush.msra.mxu0 %v4744
    %v4746 = vand.u32 %v366, 4294901760
    %v4747 = vsub.f32 %v366, %v4746
    %v4748 = vand.u32 %v4747, 4294901760
    %4749 = vmatpush.msra.mxu0 %v4748
    %v4750 = vand.u32 %v681, 4294901760
    %4751 = vmatmul.f32.gmra.mxu0 %v4750
    %v4752 = vpop.f32.mrf.mxu0
    %v4753 = vadd.f32 %v4684, %v4752
    %4754 = vdwg.mxu0
    %v4755 = vand.u32 %v396, 4294901760
    %4756 = vmatpush.msra.mxu0 %v4755
    %v4757 = vand.u32 %v394, 4294901760
    %4758 = vmatpush.msra.mxu0 %v4757
    %v4759 = vand.u32 %v392, 4294901760
    %4760 = vmatpush.msra.mxu0 %v4759
    %v4761 = vand.u32 %v390, 4294901760
    %4762 = vmatpush.msra.mxu0 %v4761
    %v4763 = vand.u32 %v388, 4294901760
    %4764 = vmatpush.msra.mxu0 %v4763
    %v4765 = vand.u32 %v386, 4294901760
    %4766 = vmatpush.msra.mxu0 %v4765
    %v4767 = vand.u32 %v384, 4294901760
    %4768 = vmatpush.msra.mxu0 %v4767
    %v4769 = vand.u32 %v382, 4294901760
    %4770 = vmatpush.msra.mxu0 %v4769
    %v4771 = vand.u32 %v380, 4294901760
    %4772 = vmatpush.msra.mxu0 %v4771
    %v4773 = vand.u32 %v378, 4294901760
    %4774 = vmatpush.msra.mxu0 %v4773
    %v4775 = vand.u32 %v376, 4294901760
    %4776 = vmatpush.msra.mxu0 %v4775
    %v4777 = vand.u32 %v374, 4294901760
    %4778 = vmatpush.msra.mxu0 %v4777
    %v4779 = vand.u32 %v372, 4294901760
    %4780 = vmatpush.msra.mxu0 %v4779
    %v4781 = vand.u32 %v370, 4294901760
    %4782 = vmatpush.msra.mxu0 %v4781
    %v4783 = vand.u32 %v368, 4294901760
    %4784 = vmatpush.msra.mxu0 %v4783
    %v4785 = vand.u32 %v366, 4294901760
    %4786 = vmatpush.msra.mxu0 %v4785
    %v4787 = vand.u32 %v681, 4294901760
    %4788 = vmatmul.f32.gmra.mxu0 %v4787
    %v4789 = vpop.f32.mrf.mxu0
    %v4790 = vadd.f32 %v4753, %v4789
    %4791 = vdwg.mxu0
    %v4792 = vand.u32 %v428, 4294901760
    %4793 = vmatpush.msra.mxu0 %v4792
    %v4794 = vand.u32 %v426, 4294901760
    %4795 = vmatpush.msra.mxu0 %v4794
    %v4796 = vand.u32 %v424, 4294901760
    %4797 = vmatpush.msra.mxu0 %v4796
    %v4798 = vand.u32 %v422, 4294901760
    %4799 = vmatpush.msra.mxu0 %v4798
    %v4800 = vand.u32 %v420, 4294901760
    %4801 = vmatpush.msra.mxu0 %v4800
    %v4802 = vand.u32 %v418, 4294901760
    %4803 = vmatpush.msra.mxu0 %v4802
    %v4804 = vand.u32 %v416, 4294901760
    %4805 = vmatpush.msra.mxu0 %v4804
    %v4806 = vand.u32 %v414, 4294901760
    %4807 = vmatpush.msra.mxu0 %v4806
    %v4808 = vand.u32 %v412, 4294901760
    %4809 = vmatpush.msra.mxu0 %v4808
    %v4810 = vand.u32 %v410, 4294901760
    %4811 = vmatpush.msra.mxu0 %v4810
    %v4812 = vand.u32 %v408, 4294901760
    %4813 = vmatpush.msra.mxu0 %v4812
    %v4814 = vand.u32 %v406, 4294901760
    %4815 = vmatpush.msra.mxu0 %v4814
    %v4816 = vand.u32 %v404, 4294901760
    %4817 = vmatpush.msra.mxu0 %v4816
    %v4818 = vand.u32 %v402, 4294901760
    %4819 = vmatpush.msra.mxu0 %v4818
    %v4820 = vand.u32 %v400, 4294901760
    %4821 = vmatpush.msra.mxu0 %v4820
    %v4822 = vand.u32 %v398, 4294901760
    %4823 = vmatpush.msra.mxu0 %v4822
    %v4824 = vand.u32 %v682, 4294901760
    %v4825 = vsub.f32 %v682, %v4824
    %v4826 = vand.u32 %v4825, 4294901760
    %v4827 = vsub.f32 %v4825, %v4826
    %v4828 = vand.u32 %v4827, 4294901760
    %4829 = vmatmul.f32.gmra.mxu0 %v4828
    %v4830 = vpop.f32.mrf.mxu0
    %v4831 = vadd.f32 %v4790, %v4830
    %4832 = vdwg.mxu0
    %v4833 = vand.u32 %v428, 4294901760
    %v4834 = vsub.f32 %v428, %v4833
    %v4835 = vand.u32 %v4834, 4294901760
    %v4836 = vsub.f32 %v4834, %v4835
    %v4837 = vand.u32 %v4836, 4294901760
    %4838 = vmatpush.msra.mxu0 %v4837
    %v4839 = vand.u32 %v426, 4294901760
    %v4840 = vsub.f32 %v426, %v4839
    %v4841 = vand.u32 %v4840, 4294901760
    %v4842 = vsub.f32 %v4840, %v4841
    %v4843 = vand.u32 %v4842, 4294901760
    %4844 = vmatpush.msra.mxu0 %v4843
    %v4845 = vand.u32 %v424, 4294901760
    %v4846 = vsub.f32 %v424, %v4845
    %v4847 = vand.u32 %v4846, 4294901760
    %v4848 = vsub.f32 %v4846, %v4847
    %v4849 = vand.u32 %v4848, 4294901760
    %4850 = vmatpush.msra.mxu0 %v4849
    %v4851 = vand.u32 %v422, 4294901760
    %v4852 = vsub.f32 %v422, %v4851
    %v4853 = vand.u32 %v4852, 4294901760
    %v4854 = vsub.f32 %v4852, %v4853
    %v4855 = vand.u32 %v4854, 4294901760
    %4856 = vmatpush.msra.mxu0 %v4855
    %v4857 = vand.u32 %v420, 4294901760
    %v4858 = vsub.f32 %v420, %v4857
    %v4859 = vand.u32 %v4858, 4294901760
    %v4860 = vsub.f32 %v4858, %v4859
    %v4861 = vand.u32 %v4860, 4294901760
    %4862 = vmatpush.msra.mxu0 %v4861
    %v4863 = vand.u32 %v418, 4294901760
    %v4864 = vsub.f32 %v418, %v4863
    %v4865 = vand.u32 %v4864, 4294901760
    %v4866 = vsub.f32 %v4864, %v4865
    %v4867 = vand.u32 %v4866, 4294901760
    %4868 = vmatpush.msra.mxu0 %v4867
    %v4869 = vand.u32 %v416, 4294901760
    %v4870 = vsub.f32 %v416, %v4869
    %v4871 = vand.u32 %v4870, 4294901760
    %v4872 = vsub.f32 %v4870, %v4871
    %v4873 = vand.u32 %v4872, 4294901760
    %4874 = vmatpush.msra.mxu0 %v4873
    %v4875 = vand.u32 %v414, 4294901760
    %v4876 = vsub.f32 %v414, %v4875
    %v4877 = vand.u32 %v4876, 4294901760
    %v4878 = vsub.f32 %v4876, %v4877
    %v4879 = vand.u32 %v4878, 4294901760
    %4880 = vmatpush.msra.mxu0 %v4879
    %v4881 = vand.u32 %v412, 4294901760
    %v4882 = vsub.f32 %v412, %v4881
    %v4883 = vand.u32 %v4882, 4294901760
    %v4884 = vsub.f32 %v4882, %v4883
    %v4885 = vand.u32 %v4884, 4294901760
    %4886 = vmatpush.msra.mxu0 %v4885
    %v4887 = vand.u32 %v410, 4294901760
    %v4888 = vsub.f32 %v410, %v4887
    %v4889 = vand.u32 %v4888, 4294901760
    %v4890 = vsub.f32 %v4888, %v4889
    %v4891 = vand.u32 %v4890, 4294901760
    %4892 = vmatpush.msra.mxu0 %v4891
    %v4893 = vand.u32 %v408, 4294901760
    %v4894 = vsub.f32 %v408, %v4893
    %v4895 = vand.u32 %v4894, 4294901760
    %v4896 = vsub.f32 %v4894, %v4895
    %v4897 = vand.u32 %v4896, 4294901760
    %4898 = vmatpush.msra.mxu0 %v4897
    %v4899 = vand.u32 %v406, 4294901760
    %v4900 = vsub.f32 %v406, %v4899
    %v4901 = vand.u32 %v4900, 4294901760
    %v4902 = vsub.f32 %v4900, %v4901
    %v4903 = vand.u32 %v4902, 4294901760
    %4904 = vmatpush.msra.mxu0 %v4903
    %v4905 = vand.u32 %v404, 4294901760
    %v4906 = vsub.f32 %v404, %v4905
    %v4907 = vand.u32 %v4906, 4294901760
    %v4908 = vsub.f32 %v4906, %v4907
    %v4909 = vand.u32 %v4908, 4294901760
    %4910 = vmatpush.msra.mxu0 %v4909
    %v4911 = vand.u32 %v402, 4294901760
    %v4912 = vsub.f32 %v402, %v4911
    %v4913 = vand.u32 %v4912, 4294901760
    %v4914 = vsub.f32 %v4912, %v4913
    %v4915 = vand.u32 %v4914, 4294901760
    %4916 = vmatpush.msra.mxu0 %v4915
    %v4917 = vand.u32 %v400, 4294901760
    %v4918 = vsub.f32 %v400, %v4917
    %v4919 = vand.u32 %v4918, 4294901760
    %v4920 = vsub.f32 %v4918, %v4919
    %v4921 = vand.u32 %v4920, 4294901760
    %4922 = vmatpush.msra.mxu0 %v4921
    %v4923 = vand.u32 %v398, 4294901760
    %v4924 = vsub.f32 %v398, %v4923
    %v4925 = vand.u32 %v4924, 4294901760
    %v4926 = vsub.f32 %v4924, %v4925
    %v4927 = vand.u32 %v4926, 4294901760
    %4928 = vmatpush.msra.mxu0 %v4927
    %v4929 = vand.u32 %v682, 4294901760
    %4930 = vmatmul.f32.gmra.mxu0 %v4929
    %v4931 = vpop.f32.mrf.mxu0
    %v4932 = vadd.f32 %v4831, %v4931
    %4933 = vdwg.mxu0
    %v4934 = vand.u32 %v428, 4294901760
    %v4935 = vsub.f32 %v428, %v4934
    %4936 = vmatpush.msra.mxu0 %v4935
    %v4937 = vand.u32 %v426, 4294901760
    %v4938 = vsub.f32 %v426, %v4937
    %4939 = vmatpush.msra.mxu0 %v4938
    %v4940 = vand.u32 %v424, 4294901760
    %v4941 = vsub.f32 %v424, %v4940
    %4942 = vmatpush.msra.mxu0 %v4941
    %v4943 = vand.u32 %v422, 4294901760
    %v4944 = vsub.f32 %v422, %v4943
    %4945 = vmatpush.msra.mxu0 %v4944
    %v4946 = vand.u32 %v420, 4294901760
    %v4947 = vsub.f32 %v420, %v4946
    %4948 = vmatpush.msra.mxu0 %v4947
    %v4949 = vand.u32 %v418, 4294901760
    %v4950 = vsub.f32 %v418, %v4949
    %4951 = vmatpush.msra.mxu0 %v4950
    %v4952 = vand.u32 %v416, 4294901760
    %v4953 = vsub.f32 %v416, %v4952
    %4954 = vmatpush.msra.mxu0 %v4953
    %v4955 = vand.u32 %v414, 4294901760
    %v4956 = vsub.f32 %v414, %v4955
    %4957 = vmatpush.msra.mxu0 %v4956
    %v4958 = vand.u32 %v412, 4294901760
    %v4959 = vsub.f32 %v412, %v4958
    %4960 = vmatpush.msra.mxu0 %v4959
    %v4961 = vand.u32 %v410, 4294901760
    %v4962 = vsub.f32 %v410, %v4961
    %4963 = vmatpush.msra.mxu0 %v4962
    %v4964 = vand.u32 %v408, 4294901760
    %v4965 = vsub.f32 %v408, %v4964
    %4966 = vmatpush.msra.mxu0 %v4965
    %v4967 = vand.u32 %v406, 4294901760
    %v4968 = vsub.f32 %v406, %v4967
    %4969 = vmatpush.msra.mxu0 %v4968
    %v4970 = vand.u32 %v404, 4294901760
    %v4971 = vsub.f32 %v404, %v4970
    %4972 = vmatpush.msra.mxu0 %v4971
    %v4973 = vand.u32 %v402, 4294901760
    %v4974 = vsub.f32 %v402, %v4973
    %4975 = vmatpush.msra.mxu0 %v4974
    %v4976 = vand.u32 %v400, 4294901760
    %v4977 = vsub.f32 %v400, %v4976
    %4978 = vmatpush.msra.mxu0 %v4977
    %v4979 = vand.u32 %v398, 4294901760
    %v4980 = vsub.f32 %v398, %v4979
    %4981 = vmatpush.msra.mxu0 %v4980
    %v4982 = vand.u32 %v682, 4294901760
    %v4983 = vsub.f32 %v682, %v4982
    %4984 = vmatmul.f32.gmra.mxu0 %v4983
    %v4985 = vpop.f32.mrf.mxu0
    %v4986 = vadd.f32 %v4932, %v4985
    %4987 = vdwg.mxu0
    %v4988 = vand.u32 %v428, 4294901760
    %4989 = vmatpush.msra.mxu0 %v4988
    %v4990 = vand.u32 %v426, 4294901760
    %4991 = vmatpush.msra.mxu0 %v4990
    %v4992 = vand.u32 %v424, 4294901760
    %4993 = vmatpush.msra.mxu0 %v4992
    %v4994 = vand.u32 %v422, 4294901760
    %4995 = vmatpush.msra.mxu0 %v4994
    %v4996 = vand.u32 %v420, 4294901760
    %4997 = vmatpush.msra.mxu0 %v4996
    %v4998 = vand.u32 %v418, 4294901760
    %4999 = vmatpush.msra.mxu0 %v4998
    %v5000 = vand.u32 %v416, 4294901760
    %5001 = vmatpush.msra.mxu0 %v5000
    %v5002 = vand.u32 %v414, 4294901760
    %5003 = vmatpush.msra.mxu0 %v5002
    %v5004 = vand.u32 %v412, 4294901760
    %5005 = vmatpush.msra.mxu0 %v5004
    %v5006 = vand.u32 %v410, 4294901760
    %5007 = vmatpush.msra.mxu0 %v5006
    %v5008 = vand.u32 %v408, 4294901760
    %5009 = vmatpush.msra.mxu0 %v5008
    %v5010 = vand.u32 %v406, 4294901760
    %5011 = vmatpush.msra.mxu0 %v5010
    %v5012 = vand.u32 %v404, 4294901760
    %5013 = vmatpush.msra.mxu0 %v5012
    %v5014 = vand.u32 %v402, 4294901760
    %5015 = vmatpush.msra.mxu0 %v5014
    %v5016 = vand.u32 %v400, 4294901760
    %5017 = vmatpush.msra.mxu0 %v5016
    %v5018 = vand.u32 %v398, 4294901760
    %5019 = vmatpush.msra.mxu0 %v5018
    %v5020 = vand.u32 %v682, 4294901760
    %v5021 = vsub.f32 %v682, %v5020
    %v5022 = vand.u32 %v5021, 4294901760
    %5023 = vmatmul.f32.gmra.mxu0 %v5022
    %v5024 = vpop.f32.mrf.mxu0
    %v5025 = vadd.f32 %v4986, %v5024
    %5026 = vdwg.mxu0
    %v5027 = vand.u32 %v428, 4294901760
    %v5028 = vsub.f32 %v428, %v5027
    %v5029 = vand.u32 %v5028, 4294901760
    %5030 = vmatpush.msra.mxu0 %v5029
    %v5031 = vand.u32 %v426, 4294901760
    %v5032 = vsub.f32 %v426, %v5031
    %v5033 = vand.u32 %v5032, 4294901760
    %5034 = vmatpush.msra.mxu0 %v5033
    %v5035 = vand.u32 %v424, 4294901760
    %v5036 = vsub.f32 %v424, %v5035
    %v5037 = vand.u32 %v5036, 4294901760
    %5038 = vmatpush.msra.mxu0 %v5037
    %v5039 = vand.u32 %v422, 4294901760
    %v5040 = vsub.f32 %v422, %v5039
    %v5041 = vand.u32 %v5040, 4294901760
    %5042 = vmatpush.msra.mxu0 %v5041
    %v5043 = vand.u32 %v420, 4294901760
    %v5044 = vsub.f32 %v420, %v5043
    %v5045 = vand.u32 %v5044, 4294901760
    %5046 = vmatpush.msra.mxu0 %v5045
    %v5047 = vand.u32 %v418, 4294901760
    %v5048 = vsub.f32 %v418, %v5047
    %v5049 = vand.u32 %v5048, 4294901760
    %5050 = vmatpush.msra.mxu0 %v5049
    %v5051 = vand.u32 %v416, 4294901760
    %v5052 = vsub.f32 %v416, %v5051
    %v5053 = vand.u32 %v5052, 4294901760
    %5054 = vmatpush.msra.mxu0 %v5053
    %v5055 = vand.u32 %v414, 4294901760
    %v5056 = vsub.f32 %v414, %v5055
    %v5057 = vand.u32 %v5056, 4294901760
    %5058 = vmatpush.msra.mxu0 %v5057
    %v5059 = vand.u32 %v412, 4294901760
    %v5060 = vsub.f32 %v412, %v5059
    %v5061 = vand.u32 %v5060, 4294901760
    %5062 = vmatpush.msra.mxu0 %v5061
    %v5063 = vand.u32 %v410, 4294901760
    %v5064 = vsub.f32 %v410, %v5063
    %v5065 = vand.u32 %v5064, 4294901760
    %5066 = vmatpush.msra.mxu0 %v5065
    %v5067 = vand.u32 %v408, 4294901760
    %v5068 = vsub.f32 %v408, %v5067
    %v5069 = vand.u32 %v5068, 4294901760
    %5070 = vmatpush.msra.mxu0 %v5069
    %v5071 = vand.u32 %v406, 4294901760
    %v5072 = vsub.f32 %v406, %v5071
    %v5073 = vand.u32 %v5072, 4294901760
    %5074 = vmatpush.msra.mxu0 %v5073
    %v5075 = vand.u32 %v404, 4294901760
    %v5076 = vsub.f32 %v404, %v5075
    %v5077 = vand.u32 %v5076, 4294901760
    %5078 = vmatpush.msra.mxu0 %v5077
    %v5079 = vand.u32 %v402, 4294901760
    %v5080 = vsub.f32 %v402, %v5079
    %v5081 = vand.u32 %v5080, 4294901760
    %5082 = vmatpush.msra.mxu0 %v5081
    %v5083 = vand.u32 %v400, 4294901760
    %v5084 = vsub.f32 %v400, %v5083
    %v5085 = vand.u32 %v5084, 4294901760
    %5086 = vmatpush.msra.mxu0 %v5085
    %v5087 = vand.u32 %v398, 4294901760
    %v5088 = vsub.f32 %v398, %v5087
    %v5089 = vand.u32 %v5088, 4294901760
    %5090 = vmatpush.msra.mxu0 %v5089
    %v5091 = vand.u32 %v682, 4294901760
    %5092 = vmatmul.f32.gmra.mxu0 %v5091
    %v5093 = vpop.f32.mrf.mxu0
    %v5094 = vadd.f32 %v5025, %v5093
    %5095 = vdwg.mxu0
    %v5096 = vand.u32 %v428, 4294901760
    %5097 = vmatpush.msra.mxu0 %v5096
    %v5098 = vand.u32 %v426, 4294901760
    %5099 = vmatpush.msra.mxu0 %v5098
    %v5100 = vand.u32 %v424, 4294901760
    %5101 = vmatpush.msra.mxu0 %v5100
    %v5102 = vand.u32 %v422, 4294901760
    %5103 = vmatpush.msra.mxu0 %v5102
    %v5104 = vand.u32 %v420, 4294901760
    %5105 = vmatpush.msra.mxu0 %v5104
    %v5106 = vand.u32 %v418, 4294901760
    %5107 = vmatpush.msra.mxu0 %v5106
    %v5108 = vand.u32 %v416, 4294901760
    %5109 = vmatpush.msra.mxu0 %v5108
    %v5110 = vand.u32 %v414, 4294901760
    %5111 = vmatpush.msra.mxu0 %v5110
    %v5112 = vand.u32 %v412, 4294901760
    %5113 = vmatpush.msra.mxu0 %v5112
    %v5114 = vand.u32 %v410, 4294901760
    %5115 = vmatpush.msra.mxu0 %v5114
    %v5116 = vand.u32 %v408, 4294901760
    %5117 = vmatpush.msra.mxu0 %v5116
    %v5118 = vand.u32 %v406, 4294901760
    %5119 = vmatpush.msra.mxu0 %v5118
    %v5120 = vand.u32 %v404, 4294901760
    %5121 = vmatpush.msra.mxu0 %v5120
    %v5122 = vand.u32 %v402, 4294901760
    %5123 = vmatpush.msra.mxu0 %v5122
    %v5124 = vand.u32 %v400, 4294901760
    %5125 = vmatpush.msra.mxu0 %v5124
    %v5126 = vand.u32 %v398, 4294901760
    %5127 = vmatpush.msra.mxu0 %v5126
    %v5128 = vand.u32 %v682, 4294901760
    %5129 = vmatmul.f32.gmra.mxu0 %v5128
    %v5130 = vpop.f32.mrf.mxu0
    %v5131 = vadd.f32 %v5094, %v5130
    %5132 = vdwg.mxu0
    %v5133 = vand.u32 %v460, 4294901760
    %5134 = vmatpush.msra.mxu0 %v5133
    %v5135 = vand.u32 %v458, 4294901760
    %5136 = vmatpush.msra.mxu0 %v5135
    %v5137 = vand.u32 %v456, 4294901760
    %5138 = vmatpush.msra.mxu0 %v5137
    %v5139 = vand.u32 %v454, 4294901760
    %5140 = vmatpush.msra.mxu0 %v5139
    %v5141 = vand.u32 %v452, 4294901760
    %5142 = vmatpush.msra.mxu0 %v5141
    %v5143 = vand.u32 %v450, 4294901760
    %5144 = vmatpush.msra.mxu0 %v5143
    %v5145 = vand.u32 %v448, 4294901760
    %5146 = vmatpush.msra.mxu0 %v5145
    %v5147 = vand.u32 %v446, 4294901760
    %5148 = vmatpush.msra.mxu0 %v5147
    %v5149 = vand.u32 %v444, 4294901760
    %5150 = vmatpush.msra.mxu0 %v5149
    %v5151 = vand.u32 %v442, 4294901760
    %5152 = vmatpush.msra.mxu0 %v5151
    %v5153 = vand.u32 %v440, 4294901760
    %5154 = vmatpush.msra.mxu0 %v5153
    %v5155 = vand.u32 %v438, 4294901760
    %5156 = vmatpush.msra.mxu0 %v5155
    %v5157 = vand.u32 %v436, 4294901760
    %5158 = vmatpush.msra.mxu0 %v5157
    %v5159 = vand.u32 %v434, 4294901760
    %5160 = vmatpush.msra.mxu0 %v5159
    %v5161 = vand.u32 %v432, 4294901760
    %5162 = vmatpush.msra.mxu0 %v5161
    %v5163 = vand.u32 %v430, 4294901760
    %5164 = vmatpush.msra.mxu0 %v5163
    %v5165 = vand.u32 %v683, 4294901760
    %v5166 = vsub.f32 %v683, %v5165
    %v5167 = vand.u32 %v5166, 4294901760
    %v5168 = vsub.f32 %v5166, %v5167
    %v5169 = vand.u32 %v5168, 4294901760
    %5170 = vmatmul.f32.gmra.mxu0 %v5169
    %v5171 = vpop.f32.mrf.mxu0
    %v5172 = vadd.f32 %v5131, %v5171
    %5173 = vdwg.mxu0
    %v5174 = vand.u32 %v460, 4294901760
    %v5175 = vsub.f32 %v460, %v5174
    %v5176 = vand.u32 %v5175, 4294901760
    %v5177 = vsub.f32 %v5175, %v5176
    %v5178 = vand.u32 %v5177, 4294901760
    %5179 = vmatpush.msra.mxu0 %v5178
    %v5180 = vand.u32 %v458, 4294901760
    %v5181 = vsub.f32 %v458, %v5180
    %v5182 = vand.u32 %v5181, 4294901760
    %v5183 = vsub.f32 %v5181, %v5182
    %v5184 = vand.u32 %v5183, 4294901760
    %5185 = vmatpush.msra.mxu0 %v5184
    %v5186 = vand.u32 %v456, 4294901760
    %v5187 = vsub.f32 %v456, %v5186
    %v5188 = vand.u32 %v5187, 4294901760
    %v5189 = vsub.f32 %v5187, %v5188
    %v5190 = vand.u32 %v5189, 4294901760
    %5191 = vmatpush.msra.mxu0 %v5190
    %v5192 = vand.u32 %v454, 4294901760
    %v5193 = vsub.f32 %v454, %v5192
    %v5194 = vand.u32 %v5193, 4294901760
    %v5195 = vsub.f32 %v5193, %v5194
    %v5196 = vand.u32 %v5195, 4294901760
    %5197 = vmatpush.msra.mxu0 %v5196
    %v5198 = vand.u32 %v452, 4294901760
    %v5199 = vsub.f32 %v452, %v5198
    %v5200 = vand.u32 %v5199, 4294901760
    %v5201 = vsub.f32 %v5199, %v5200
    %v5202 = vand.u32 %v5201, 4294901760
    %5203 = vmatpush.msra.mxu0 %v5202
    %v5204 = vand.u32 %v450, 4294901760
    %v5205 = vsub.f32 %v450, %v5204
    %v5206 = vand.u32 %v5205, 4294901760
    %v5207 = vsub.f32 %v5205, %v5206
    %v5208 = vand.u32 %v5207, 4294901760
    %5209 = vmatpush.msra.mxu0 %v5208
    %v5210 = vand.u32 %v448, 4294901760
    %v5211 = vsub.f32 %v448, %v5210
    %v5212 = vand.u32 %v5211, 4294901760
    %v5213 = vsub.f32 %v5211, %v5212
    %v5214 = vand.u32 %v5213, 4294901760
    %5215 = vmatpush.msra.mxu0 %v5214
    %v5216 = vand.u32 %v446, 4294901760
    %v5217 = vsub.f32 %v446, %v5216
    %v5218 = vand.u32 %v5217, 4294901760
    %v5219 = vsub.f32 %v5217, %v5218
    %v5220 = vand.u32 %v5219, 4294901760
    %5221 = vmatpush.msra.mxu0 %v5220
    %v5222 = vand.u32 %v444, 4294901760
    %v5223 = vsub.f32 %v444, %v5222
    %v5224 = vand.u32 %v5223, 4294901760
    %v5225 = vsub.f32 %v5223, %v5224
    %v5226 = vand.u32 %v5225, 4294901760
    %5227 = vmatpush.msra.mxu0 %v5226
    %v5228 = vand.u32 %v442, 4294901760
    %v5229 = vsub.f32 %v442, %v5228
    %v5230 = vand.u32 %v5229, 4294901760
    %v5231 = vsub.f32 %v5229, %v5230
    %v5232 = vand.u32 %v5231, 4294901760
    %5233 = vmatpush.msra.mxu0 %v5232
    %v5234 = vand.u32 %v440, 4294901760
    %v5235 = vsub.f32 %v440, %v5234
    %v5236 = vand.u32 %v5235, 4294901760
    %v5237 = vsub.f32 %v5235, %v5236
    %v5238 = vand.u32 %v5237, 4294901760
    %5239 = vmatpush.msra.mxu0 %v5238
    %v5240 = vand.u32 %v438, 4294901760
    %v5241 = vsub.f32 %v438, %v5240
    %v5242 = vand.u32 %v5241, 4294901760
    %v5243 = vsub.f32 %v5241, %v5242
    %v5244 = vand.u32 %v5243, 4294901760
    %5245 = vmatpush.msra.mxu0 %v5244
    %v5246 = vand.u32 %v436, 4294901760
    %v5247 = vsub.f32 %v436, %v5246
    %v5248 = vand.u32 %v5247, 4294901760
    %v5249 = vsub.f32 %v5247, %v5248
    %v5250 = vand.u32 %v5249, 4294901760
    %5251 = vmatpush.msra.mxu0 %v5250
    %v5252 = vand.u32 %v434, 4294901760
    %v5253 = vsub.f32 %v434, %v5252
    %v5254 = vand.u32 %v5253, 4294901760
    %v5255 = vsub.f32 %v5253, %v5254
    %v5256 = vand.u32 %v5255, 4294901760
    %5257 = vmatpush.msra.mxu0 %v5256
    %v5258 = vand.u32 %v432, 4294901760
    %v5259 = vsub.f32 %v432, %v5258
    %v5260 = vand.u32 %v5259, 4294901760
    %v5261 = vsub.f32 %v5259, %v5260
    %v5262 = vand.u32 %v5261, 4294901760
    %5263 = vmatpush.msra.mxu0 %v5262
    %v5264 = vand.u32 %v430, 4294901760
    %v5265 = vsub.f32 %v430, %v5264
    %v5266 = vand.u32 %v5265, 4294901760
    %v5267 = vsub.f32 %v5265, %v5266
    %v5268 = vand.u32 %v5267, 4294901760
    %5269 = vmatpush.msra.mxu0 %v5268
    %v5270 = vand.u32 %v683, 4294901760
    %5271 = vmatmul.f32.gmra.mxu0 %v5270
    %v5272 = vpop.f32.mrf.mxu0
    %v5273 = vadd.f32 %v5172, %v5272
    %5274 = vdwg.mxu0
    %v5275 = vand.u32 %v460, 4294901760
    %v5276 = vsub.f32 %v460, %v5275
    %5277 = vmatpush.msra.mxu0 %v5276
    %v5278 = vand.u32 %v458, 4294901760
    %v5279 = vsub.f32 %v458, %v5278
    %5280 = vmatpush.msra.mxu0 %v5279
    %v5281 = vand.u32 %v456, 4294901760
    %v5282 = vsub.f32 %v456, %v5281
    %5283 = vmatpush.msra.mxu0 %v5282
    %v5284 = vand.u32 %v454, 4294901760
    %v5285 = vsub.f32 %v454, %v5284
    %5286 = vmatpush.msra.mxu0 %v5285
    %v5287 = vand.u32 %v452, 4294901760
    %v5288 = vsub.f32 %v452, %v5287
    %5289 = vmatpush.msra.mxu0 %v5288
    %v5290 = vand.u32 %v450, 4294901760
    %v5291 = vsub.f32 %v450, %v5290
    %5292 = vmatpush.msra.mxu0 %v5291
    %v5293 = vand.u32 %v448, 4294901760
    %v5294 = vsub.f32 %v448, %v5293
    %5295 = vmatpush.msra.mxu0 %v5294
    %v5296 = vand.u32 %v446, 4294901760
    %v5297 = vsub.f32 %v446, %v5296
    %5298 = vmatpush.msra.mxu0 %v5297
    %v5299 = vand.u32 %v444, 4294901760
    %v5300 = vsub.f32 %v444, %v5299
    %5301 = vmatpush.msra.mxu0 %v5300
    %v5302 = vand.u32 %v442, 4294901760
    %v5303 = vsub.f32 %v442, %v5302
    %5304 = vmatpush.msra.mxu0 %v5303
    %v5305 = vand.u32 %v440, 4294901760
    %v5306 = vsub.f32 %v440, %v5305
    %5307 = vmatpush.msra.mxu0 %v5306
    %v5308 = vand.u32 %v438, 4294901760
    %v5309 = vsub.f32 %v438, %v5308
    %5310 = vmatpush.msra.mxu0 %v5309
    %v5311 = vand.u32 %v436, 4294901760
    %v5312 = vsub.f32 %v436, %v5311
    %5313 = vmatpush.msra.mxu0 %v5312
    %v5314 = vand.u32 %v434, 4294901760
    %v5315 = vsub.f32 %v434, %v5314
    %5316 = vmatpush.msra.mxu0 %v5315
    %v5317 = vand.u32 %v432, 4294901760
    %v5318 = vsub.f32 %v432, %v5317
    %5319 = vmatpush.msra.mxu0 %v5318
    %v5320 = vand.u32 %v430, 4294901760
    %v5321 = vsub.f32 %v430, %v5320
    %5322 = vmatpush.msra.mxu0 %v5321
    %v5323 = vand.u32 %v683, 4294901760
    %v5324 = vsub.f32 %v683, %v5323
    %5325 = vmatmul.f32.gmra.mxu0 %v5324
    %v5326 = vpop.f32.mrf.mxu0
    %v5327 = vadd.f32 %v5273, %v5326
    %5328 = vdwg.mxu0
    %v5329 = vand.u32 %v460, 4294901760
    %5330 = vmatpush.msra.mxu0 %v5329
    %v5331 = vand.u32 %v458, 4294901760
    %5332 = vmatpush.msra.mxu0 %v5331
    %v5333 = vand.u32 %v456, 4294901760
    %5334 = vmatpush.msra.mxu0 %v5333
    %v5335 = vand.u32 %v454, 4294901760
    %5336 = vmatpush.msra.mxu0 %v5335
    %v5337 = vand.u32 %v452, 4294901760
    %5338 = vmatpush.msra.mxu0 %v5337
    %v5339 = vand.u32 %v450, 4294901760
    %5340 = vmatpush.msra.mxu0 %v5339
    %v5341 = vand.u32 %v448, 4294901760
    %5342 = vmatpush.msra.mxu0 %v5341
    %v5343 = vand.u32 %v446, 4294901760
    %5344 = vmatpush.msra.mxu0 %v5343
    %v5345 = vand.u32 %v444, 4294901760
    %5346 = vmatpush.msra.mxu0 %v5345
    %v5347 = vand.u32 %v442, 4294901760
    %5348 = vmatpush.msra.mxu0 %v5347
    %v5349 = vand.u32 %v440, 4294901760
    %5350 = vmatpush.msra.mxu0 %v5349
    %v5351 = vand.u32 %v438, 4294901760
    %5352 = vmatpush.msra.mxu0 %v5351
    %v5353 = vand.u32 %v436, 4294901760
    %5354 = vmatpush.msra.mxu0 %v5353
    %v5355 = vand.u32 %v434, 4294901760
    %5356 = vmatpush.msra.mxu0 %v5355
    %v5357 = vand.u32 %v432, 4294901760
    %5358 = vmatpush.msra.mxu0 %v5357
    %v5359 = vand.u32 %v430, 4294901760
    %5360 = vmatpush.msra.mxu0 %v5359
    %v5361 = vand.u32 %v683, 4294901760
    %v5362 = vsub.f32 %v683, %v5361
    %v5363 = vand.u32 %v5362, 4294901760
    %5364 = vmatmul.f32.gmra.mxu0 %v5363
    %v5365 = vpop.f32.mrf.mxu0
    %v5366 = vadd.f32 %v5327, %v5365
    %5367 = vdwg.mxu0
    %v5368 = vand.u32 %v460, 4294901760
    %v5369 = vsub.f32 %v460, %v5368
    %v5370 = vand.u32 %v5369, 4294901760
    %5371 = vmatpush.msra.mxu0 %v5370
    %v5372 = vand.u32 %v458, 4294901760
    %v5373 = vsub.f32 %v458, %v5372
    %v5374 = vand.u32 %v5373, 4294901760
    %5375 = vmatpush.msra.mxu0 %v5374
    %v5376 = vand.u32 %v456, 4294901760
    %v5377 = vsub.f32 %v456, %v5376
    %v5378 = vand.u32 %v5377, 4294901760
    %5379 = vmatpush.msra.mxu0 %v5378
    %v5380 = vand.u32 %v454, 4294901760
    %v5381 = vsub.f32 %v454, %v5380
    %v5382 = vand.u32 %v5381, 4294901760
    %5383 = vmatpush.msra.mxu0 %v5382
    %v5384 = vand.u32 %v452, 4294901760
    %v5385 = vsub.f32 %v452, %v5384
    %v5386 = vand.u32 %v5385, 4294901760
    %5387 = vmatpush.msra.mxu0 %v5386
    %v5388 = vand.u32 %v450, 4294901760
    %v5389 = vsub.f32 %v450, %v5388
    %v5390 = vand.u32 %v5389, 4294901760
    %5391 = vmatpush.msra.mxu0 %v5390
    %v5392 = vand.u32 %v448, 4294901760
    %v5393 = vsub.f32 %v448, %v5392
    %v5394 = vand.u32 %v5393, 4294901760
    %5395 = vmatpush.msra.mxu0 %v5394
    %v5396 = vand.u32 %v446, 4294901760
    %v5397 = vsub.f32 %v446, %v5396
    %v5398 = vand.u32 %v5397, 4294901760
    %5399 = vmatpush.msra.mxu0 %v5398
    %v5400 = vand.u32 %v444, 4294901760
    %v5401 = vsub.f32 %v444, %v5400
    %v5402 = vand.u32 %v5401, 4294901760
    %5403 = vmatpush.msra.mxu0 %v5402
    %v5404 = vand.u32 %v442, 4294901760
    %v5405 = vsub.f32 %v442, %v5404
    %v5406 = vand.u32 %v5405, 4294901760
    %5407 = vmatpush.msra.mxu0 %v5406
    %v5408 = vand.u32 %v440, 4294901760
    %v5409 = vsub.f32 %v440, %v5408
    %v5410 = vand.u32 %v5409, 4294901760
    %5411 = vmatpush.msra.mxu0 %v5410
    %v5412 = vand.u32 %v438, 4294901760
    %v5413 = vsub.f32 %v438, %v5412
    %v5414 = vand.u32 %v5413, 4294901760
    %5415 = vmatpush.msra.mxu0 %v5414
    %v5416 = vand.u32 %v436, 4294901760
    %v5417 = vsub.f32 %v436, %v5416
    %v5418 = vand.u32 %v5417, 4294901760
    %5419 = vmatpush.msra.mxu0 %v5418
    %v5420 = vand.u32 %v434, 4294901760
    %v5421 = vsub.f32 %v434, %v5420
    %v5422 = vand.u32 %v5421, 4294901760
    %5423 = vmatpush.msra.mxu0 %v5422
    %v5424 = vand.u32 %v432, 4294901760
    %v5425 = vsub.f32 %v432, %v5424
    %v5426 = vand.u32 %v5425, 4294901760
    %5427 = vmatpush.msra.mxu0 %v5426
    %v5428 = vand.u32 %v430, 4294901760
    %v5429 = vsub.f32 %v430, %v5428
    %v5430 = vand.u32 %v5429, 4294901760
    %5431 = vmatpush.msra.mxu0 %v5430
    %v5432 = vand.u32 %v683, 4294901760
    %5433 = vmatmul.f32.gmra.mxu0 %v5432
    %v5434 = vpop.f32.mrf.mxu0
    %v5435 = vadd.f32 %v5366, %v5434
    %5436 = vdwg.mxu0
    %v5437 = vand.u32 %v460, 4294901760
    %5438 = vmatpush.msra.mxu0 %v5437
    %v5439 = vand.u32 %v458, 4294901760
    %5440 = vmatpush.msra.mxu0 %v5439
    %v5441 = vand.u32 %v456, 4294901760
    %5442 = vmatpush.msra.mxu0 %v5441
    %v5443 = vand.u32 %v454, 4294901760
    %5444 = vmatpush.msra.mxu0 %v5443
    %v5445 = vand.u32 %v452, 4294901760
    %5446 = vmatpush.msra.mxu0 %v5445
    %v5447 = vand.u32 %v450, 4294901760
    %5448 = vmatpush.msra.mxu0 %v5447
    %v5449 = vand.u32 %v448, 4294901760
    %5450 = vmatpush.msra.mxu0 %v5449
    %v5451 = vand.u32 %v446, 4294901760
    %5452 = vmatpush.msra.mxu0 %v5451
    %v5453 = vand.u32 %v444, 4294901760
    %5454 = vmatpush.msra.mxu0 %v5453
    %v5455 = vand.u32 %v442, 4294901760
    %5456 = vmatpush.msra.mxu0 %v5455
    %v5457 = vand.u32 %v440, 4294901760
    %5458 = vmatpush.msra.mxu0 %v5457
    %v5459 = vand.u32 %v438, 4294901760
    %5460 = vmatpush.msra.mxu0 %v5459
    %v5461 = vand.u32 %v436, 4294901760
    %5462 = vmatpush.msra.mxu0 %v5461
    %v5463 = vand.u32 %v434, 4294901760
    %5464 = vmatpush.msra.mxu0 %v5463
    %v5465 = vand.u32 %v432, 4294901760
    %5466 = vmatpush.msra.mxu0 %v5465
    %v5467 = vand.u32 %v430, 4294901760
    %5468 = vmatpush.msra.mxu0 %v5467
    %v5469 = vand.u32 %v683, 4294901760
    %5470 = vmatmul.f32.gmra.mxu0 %v5469
    %v5471 = vpop.f32.mrf.mxu0
    %v5472 = vadd.f32 %v5435, %v5471
    %5473 = vdwg.mxu0
    %v5474 = vand.u32 %v492, 4294901760
    %5475 = vmatpush.msra.mxu0 %v5474
    %v5476 = vand.u32 %v490, 4294901760
    %5477 = vmatpush.msra.mxu0 %v5476
    %v5478 = vand.u32 %v488, 4294901760
    %5479 = vmatpush.msra.mxu0 %v5478
    %v5480 = vand.u32 %v486, 4294901760
    %5481 = vmatpush.msra.mxu0 %v5480
    %v5482 = vand.u32 %v484, 4294901760
    %5483 = vmatpush.msra.mxu0 %v5482
    %v5484 = vand.u32 %v482, 4294901760
    %5485 = vmatpush.msra.mxu0 %v5484
    %v5486 = vand.u32 %v480, 4294901760
    %5487 = vmatpush.msra.mxu0 %v5486
    %v5488 = vand.u32 %v478, 4294901760
    %5489 = vmatpush.msra.mxu0 %v5488
    %v5490 = vand.u32 %v476, 4294901760
    %5491 = vmatpush.msra.mxu0 %v5490
    %v5492 = vand.u32 %v474, 4294901760
    %5493 = vmatpush.msra.mxu0 %v5492
    %v5494 = vand.u32 %v472, 4294901760
    %5495 = vmatpush.msra.mxu0 %v5494
    %v5496 = vand.u32 %v470, 4294901760
    %5497 = vmatpush.msra.mxu0 %v5496
    %v5498 = vand.u32 %v468, 4294901760
    %5499 = vmatpush.msra.mxu0 %v5498
    %v5500 = vand.u32 %v466, 4294901760
    %5501 = vmatpush.msra.mxu0 %v5500
    %v5502 = vand.u32 %v464, 4294901760
    %5503 = vmatpush.msra.mxu0 %v5502
    %v5504 = vand.u32 %v462, 4294901760
    %5505 = vmatpush.msra.mxu0 %v5504
    %v5506 = vand.u32 %v684, 4294901760
    %v5507 = vsub.f32 %v684, %v5506
    %v5508 = vand.u32 %v5507, 4294901760
    %v5509 = vsub.f32 %v5507, %v5508
    %v5510 = vand.u32 %v5509, 4294901760
    %5511 = vmatmul.f32.gmra.mxu0 %v5510
    %v5512 = vpop.f32.mrf.mxu0
    %v5513 = vadd.f32 %v5472, %v5512
    %5514 = vdwg.mxu0
    %v5515 = vand.u32 %v492, 4294901760
    %v5516 = vsub.f32 %v492, %v5515
    %v5517 = vand.u32 %v5516, 4294901760
    %v5518 = vsub.f32 %v5516, %v5517
    %v5519 = vand.u32 %v5518, 4294901760
    %5520 = vmatpush.msra.mxu0 %v5519
    %v5521 = vand.u32 %v490, 4294901760
    %v5522 = vsub.f32 %v490, %v5521
    %v5523 = vand.u32 %v5522, 4294901760
    %v5524 = vsub.f32 %v5522, %v5523
    %v5525 = vand.u32 %v5524, 4294901760
    %5526 = vmatpush.msra.mxu0 %v5525
    %v5527 = vand.u32 %v488, 4294901760
    %v5528 = vsub.f32 %v488, %v5527
    %v5529 = vand.u32 %v5528, 4294901760
    %v5530 = vsub.f32 %v5528, %v5529
    %v5531 = vand.u32 %v5530, 4294901760
    %5532 = vmatpush.msra.mxu0 %v5531
    %v5533 = vand.u32 %v486, 4294901760
    %v5534 = vsub.f32 %v486, %v5533
    %v5535 = vand.u32 %v5534, 4294901760
    %v5536 = vsub.f32 %v5534, %v5535
    %v5537 = vand.u32 %v5536, 4294901760
    %5538 = vmatpush.msra.mxu0 %v5537
    %v5539 = vand.u32 %v484, 4294901760
    %v5540 = vsub.f32 %v484, %v5539
    %v5541 = vand.u32 %v5540, 4294901760
    %v5542 = vsub.f32 %v5540, %v5541
    %v5543 = vand.u32 %v5542, 4294901760
    %5544 = vmatpush.msra.mxu0 %v5543
    %v5545 = vand.u32 %v482, 4294901760
    %v5546 = vsub.f32 %v482, %v5545
    %v5547 = vand.u32 %v5546, 4294901760
    %v5548 = vsub.f32 %v5546, %v5547
    %v5549 = vand.u32 %v5548, 4294901760
    %5550 = vmatpush.msra.mxu0 %v5549
    %v5551 = vand.u32 %v480, 4294901760
    %v5552 = vsub.f32 %v480, %v5551
    %v5553 = vand.u32 %v5552, 4294901760
    %v5554 = vsub.f32 %v5552, %v5553
    %v5555 = vand.u32 %v5554, 4294901760
    %5556 = vmatpush.msra.mxu0 %v5555
    %v5557 = vand.u32 %v478, 4294901760
    %v5558 = vsub.f32 %v478, %v5557
    %v5559 = vand.u32 %v5558, 4294901760
    %v5560 = vsub.f32 %v5558, %v5559
    %v5561 = vand.u32 %v5560, 4294901760
    %5562 = vmatpush.msra.mxu0 %v5561
    %v5563 = vand.u32 %v476, 4294901760
    %v5564 = vsub.f32 %v476, %v5563
    %v5565 = vand.u32 %v5564, 4294901760
    %v5566 = vsub.f32 %v5564, %v5565
    %v5567 = vand.u32 %v5566, 4294901760
    %5568 = vmatpush.msra.mxu0 %v5567
    %v5569 = vand.u32 %v474, 4294901760
    %v5570 = vsub.f32 %v474, %v5569
    %v5571 = vand.u32 %v5570, 4294901760
    %v5572 = vsub.f32 %v5570, %v5571
    %v5573 = vand.u32 %v5572, 4294901760
    %5574 = vmatpush.msra.mxu0 %v5573
    %v5575 = vand.u32 %v472, 4294901760
    %v5576 = vsub.f32 %v472, %v5575
    %v5577 = vand.u32 %v5576, 4294901760
    %v5578 = vsub.f32 %v5576, %v5577
    %v5579 = vand.u32 %v5578, 4294901760
    %5580 = vmatpush.msra.mxu0 %v5579
    %v5581 = vand.u32 %v470, 4294901760
    %v5582 = vsub.f32 %v470, %v5581
    %v5583 = vand.u32 %v5582, 4294901760
    %v5584 = vsub.f32 %v5582, %v5583
    %v5585 = vand.u32 %v5584, 4294901760
    %5586 = vmatpush.msra.mxu0 %v5585
    %v5587 = vand.u32 %v468, 4294901760
    %v5588 = vsub.f32 %v468, %v5587
    %v5589 = vand.u32 %v5588, 4294901760
    %v5590 = vsub.f32 %v5588, %v5589
    %v5591 = vand.u32 %v5590, 4294901760
    %5592 = vmatpush.msra.mxu0 %v5591
    %v5593 = vand.u32 %v466, 4294901760
    %v5594 = vsub.f32 %v466, %v5593
    %v5595 = vand.u32 %v5594, 4294901760
    %v5596 = vsub.f32 %v5594, %v5595
    %v5597 = vand.u32 %v5596, 4294901760
    %5598 = vmatpush.msra.mxu0 %v5597
    %v5599 = vand.u32 %v464, 4294901760
    %v5600 = vsub.f32 %v464, %v5599
    %v5601 = vand.u32 %v5600, 4294901760
    %v5602 = vsub.f32 %v5600, %v5601
    %v5603 = vand.u32 %v5602, 4294901760
    %5604 = vmatpush.msra.mxu0 %v5603
    %v5605 = vand.u32 %v462, 4294901760
    %v5606 = vsub.f32 %v462, %v5605
    %v5607 = vand.u32 %v5606, 4294901760
    %v5608 = vsub.f32 %v5606, %v5607
    %v5609 = vand.u32 %v5608, 4294901760
    %5610 = vmatpush.msra.mxu0 %v5609
    %v5611 = vand.u32 %v684, 4294901760
    %5612 = vmatmul.f32.gmra.mxu0 %v5611
    %v5613 = vpop.f32.mrf.mxu0
    %v5614 = vadd.f32 %v5513, %v5613
    %5615 = vdwg.mxu0
    %v5616 = vand.u32 %v492, 4294901760
    %v5617 = vsub.f32 %v492, %v5616
    %5618 = vmatpush.msra.mxu0 %v5617
    %v5619 = vand.u32 %v490, 4294901760
    %v5620 = vsub.f32 %v490, %v5619
    %5621 = vmatpush.msra.mxu0 %v5620
    %v5622 = vand.u32 %v488, 4294901760
    %v5623 = vsub.f32 %v488, %v5622
    %5624 = vmatpush.msra.mxu0 %v5623
    %v5625 = vand.u32 %v486, 4294901760
    %v5626 = vsub.f32 %v486, %v5625
    %5627 = vmatpush.msra.mxu0 %v5626
    %v5628 = vand.u32 %v484, 4294901760
    %v5629 = vsub.f32 %v484, %v5628
    %5630 = vmatpush.msra.mxu0 %v5629
    %v5631 = vand.u32 %v482, 4294901760
    %v5632 = vsub.f32 %v482, %v5631
    %5633 = vmatpush.msra.mxu0 %v5632
    %v5634 = vand.u32 %v480, 4294901760
    %v5635 = vsub.f32 %v480, %v5634
    %5636 = vmatpush.msra.mxu0 %v5635
    %v5637 = vand.u32 %v478, 4294901760
    %v5638 = vsub.f32 %v478, %v5637
    %5639 = vmatpush.msra.mxu0 %v5638
    %v5640 = vand.u32 %v476, 4294901760
    %v5641 = vsub.f32 %v476, %v5640
    %5642 = vmatpush.msra.mxu0 %v5641
    %v5643 = vand.u32 %v474, 4294901760
    %v5644 = vsub.f32 %v474, %v5643
    %5645 = vmatpush.msra.mxu0 %v5644
    %v5646 = vand.u32 %v472, 4294901760
    %v5647 = vsub.f32 %v472, %v5646
    %5648 = vmatpush.msra.mxu0 %v5647
    %v5649 = vand.u32 %v470, 4294901760
    %v5650 = vsub.f32 %v470, %v5649
    %5651 = vmatpush.msra.mxu0 %v5650
    %v5652 = vand.u32 %v468, 4294901760
    %v5653 = vsub.f32 %v468, %v5652
    %5654 = vmatpush.msra.mxu0 %v5653
    %v5655 = vand.u32 %v466, 4294901760
    %v5656 = vsub.f32 %v466, %v5655
    %5657 = vmatpush.msra.mxu0 %v5656
    %v5658 = vand.u32 %v464, 4294901760
    %v5659 = vsub.f32 %v464, %v5658
    %5660 = vmatpush.msra.mxu0 %v5659
    %v5661 = vand.u32 %v462, 4294901760
    %v5662 = vsub.f32 %v462, %v5661
    %5663 = vmatpush.msra.mxu0 %v5662
    %v5664 = vand.u32 %v684, 4294901760
    %v5665 = vsub.f32 %v684, %v5664
    %5666 = vmatmul.f32.gmra.mxu0 %v5665
    %v5667 = vpop.f32.mrf.mxu0
    %v5668 = vadd.f32 %v5614, %v5667
    %5669 = vdwg.mxu0
    %v5670 = vand.u32 %v492, 4294901760
    %5671 = vmatpush.msra.mxu0 %v5670
    %v5672 = vand.u32 %v490, 4294901760
    %5673 = vmatpush.msra.mxu0 %v5672
    %v5674 = vand.u32 %v488, 4294901760
    %5675 = vmatpush.msra.mxu0 %v5674
    %v5676 = vand.u32 %v486, 4294901760
    %5677 = vmatpush.msra.mxu0 %v5676
    %v5678 = vand.u32 %v484, 4294901760
    %5679 = vmatpush.msra.mxu0 %v5678
    %v5680 = vand.u32 %v482, 4294901760
    %5681 = vmatpush.msra.mxu0 %v5680
    %v5682 = vand.u32 %v480, 4294901760
    %5683 = vmatpush.msra.mxu0 %v5682
    %v5684 = vand.u32 %v478, 4294901760
    %5685 = vmatpush.msra.mxu0 %v5684
    %v5686 = vand.u32 %v476, 4294901760
    %5687 = vmatpush.msra.mxu0 %v5686
    %v5688 = vand.u32 %v474, 4294901760
    %5689 = vmatpush.msra.mxu0 %v5688
    %v5690 = vand.u32 %v472, 4294901760
    %5691 = vmatpush.msra.mxu0 %v5690
    %v5692 = vand.u32 %v470, 4294901760
    %5693 = vmatpush.msra.mxu0 %v5692
    %v5694 = vand.u32 %v468, 4294901760
    %5695 = vmatpush.msra.mxu0 %v5694
    %v5696 = vand.u32 %v466, 4294901760
    %5697 = vmatpush.msra.mxu0 %v5696
    %v5698 = vand.u32 %v464, 4294901760
    %5699 = vmatpush.msra.mxu0 %v5698
    %v5700 = vand.u32 %v462, 4294901760
    %5701 = vmatpush.msra.mxu0 %v5700
    %v5702 = vand.u32 %v684, 4294901760
    %v5703 = vsub.f32 %v684, %v5702
    %v5704 = vand.u32 %v5703, 4294901760
    %5705 = vmatmul.f32.gmra.mxu0 %v5704
    %v5706 = vpop.f32.mrf.mxu0
    %v5707 = vadd.f32 %v5668, %v5706
    %5708 = vdwg.mxu0
    %v5709 = vand.u32 %v492, 4294901760
    %v5710 = vsub.f32 %v492, %v5709
    %v5711 = vand.u32 %v5710, 4294901760
    %5712 = vmatpush.msra.mxu0 %v5711
    %v5713 = vand.u32 %v490, 4294901760
    %v5714 = vsub.f32 %v490, %v5713
    %v5715 = vand.u32 %v5714, 4294901760
    %5716 = vmatpush.msra.mxu0 %v5715
    %v5717 = vand.u32 %v488, 4294901760
    %v5718 = vsub.f32 %v488, %v5717
    %v5719 = vand.u32 %v5718, 4294901760
    %5720 = vmatpush.msra.mxu0 %v5719
    %v5721 = vand.u32 %v486, 4294901760
    %v5722 = vsub.f32 %v486, %v5721
    %v5723 = vand.u32 %v5722, 4294901760
    %5724 = vmatpush.msra.mxu0 %v5723
    %v5725 = vand.u32 %v484, 4294901760
    %v5726 = vsub.f32 %v484, %v5725
    %v5727 = vand.u32 %v5726, 4294901760
    %5728 = vmatpush.msra.mxu0 %v5727
    %v5729 = vand.u32 %v482, 4294901760
    %v5730 = vsub.f32 %v482, %v5729
    %v5731 = vand.u32 %v5730, 4294901760
    %5732 = vmatpush.msra.mxu0 %v5731
    %v5733 = vand.u32 %v480, 4294901760
    %v5734 = vsub.f32 %v480, %v5733
    %v5735 = vand.u32 %v5734, 4294901760
    %5736 = vmatpush.msra.mxu0 %v5735
    %v5737 = vand.u32 %v478, 4294901760
    %v5738 = vsub.f32 %v478, %v5737
    %v5739 = vand.u32 %v5738, 4294901760
    %5740 = vmatpush.msra.mxu0 %v5739
    %v5741 = vand.u32 %v476, 4294901760
    %v5742 = vsub.f32 %v476, %v5741
    %v5743 = vand.u32 %v5742, 4294901760
    %5744 = vmatpush.msra.mxu0 %v5743
    %v5745 = vand.u32 %v474, 4294901760
    %v5746 = vsub.f32 %v474, %v5745
    %v5747 = vand.u32 %v5746, 4294901760
    %5748 = vmatpush.msra.mxu0 %v5747
    %v5749 = vand.u32 %v472, 4294901760
    %v5750 = vsub.f32 %v472, %v5749
    %v5751 = vand.u32 %v5750, 4294901760
    %5752 = vmatpush.msra.mxu0 %v5751
    %v5753 = vand.u32 %v470, 4294901760
    %v5754 = vsub.f32 %v470, %v5753
    %v5755 = vand.u32 %v5754, 4294901760
    %5756 = vmatpush.msra.mxu0 %v5755
    %v5757 = vand.u32 %v468, 4294901760
    %v5758 = vsub.f32 %v468, %v5757
    %v5759 = vand.u32 %v5758, 4294901760
    %5760 = vmatpush.msra.mxu0 %v5759
    %v5761 = vand.u32 %v466, 4294901760
    %v5762 = vsub.f32 %v466, %v5761
    %v5763 = vand.u32 %v5762, 4294901760
    %5764 = vmatpush.msra.mxu0 %v5763
    %v5765 = vand.u32 %v464, 4294901760
    %v5766 = vsub.f32 %v464, %v5765
    %v5767 = vand.u32 %v5766, 4294901760
    %5768 = vmatpush.msra.mxu0 %v5767
    %v5769 = vand.u32 %v462, 4294901760
    %v5770 = vsub.f32 %v462, %v5769
    %v5771 = vand.u32 %v5770, 4294901760
    %5772 = vmatpush.msra.mxu0 %v5771
    %v5773 = vand.u32 %v684, 4294901760
    %5774 = vmatmul.f32.gmra.mxu0 %v5773
    %v5775 = vpop.f32.mrf.mxu0
    %v5776 = vadd.f32 %v5707, %v5775
    %5777 = vdwg.mxu0
    %v5778 = vand.u32 %v492, 4294901760
    %5779 = vmatpush.msra.mxu0 %v5778
    %v5780 = vand.u32 %v490, 4294901760
    %5781 = vmatpush.msra.mxu0 %v5780
    %v5782 = vand.u32 %v488, 4294901760
    %5783 = vmatpush.msra.mxu0 %v5782
    %v5784 = vand.u32 %v486, 4294901760
    %5785 = vmatpush.msra.mxu0 %v5784
    %v5786 = vand.u32 %v484, 4294901760
    %5787 = vmatpush.msra.mxu0 %v5786
    %v5788 = vand.u32 %v482, 4294901760
    %5789 = vmatpush.msra.mxu0 %v5788
    %v5790 = vand.u32 %v480, 4294901760
    %5791 = vmatpush.msra.mxu0 %v5790
    %v5792 = vand.u32 %v478, 4294901760
    %5793 = vmatpush.msra.mxu0 %v5792
    %v5794 = vand.u32 %v476, 4294901760
    %5795 = vmatpush.msra.mxu0 %v5794
    %v5796 = vand.u32 %v474, 4294901760
    %5797 = vmatpush.msra.mxu0 %v5796
    %v5798 = vand.u32 %v472, 4294901760
    %5799 = vmatpush.msra.mxu0 %v5798
    %v5800 = vand.u32 %v470, 4294901760
    %5801 = vmatpush.msra.mxu0 %v5800
    %v5802 = vand.u32 %v468, 4294901760
    %5803 = vmatpush.msra.mxu0 %v5802
    %v5804 = vand.u32 %v466, 4294901760
    %5805 = vmatpush.msra.mxu0 %v5804
    %v5806 = vand.u32 %v464, 4294901760
    %5807 = vmatpush.msra.mxu0 %v5806
    %v5808 = vand.u32 %v462, 4294901760
    %5809 = vmatpush.msra.mxu0 %v5808
    %v5810 = vand.u32 %v684, 4294901760
    %5811 = vmatmul.f32.gmra.mxu0 %v5810
    %v5812 = vpop.f32.mrf.mxu0
    %v5813 = vadd.f32 %v5776, %v5812
    %5814 = vdwg.mxu0
    %v5815 = vand.u32 %v524, 4294901760
    %5816 = vmatpush.msra.mxu0 %v5815
    %v5817 = vand.u32 %v522, 4294901760
    %5818 = vmatpush.msra.mxu0 %v5817
    %v5819 = vand.u32 %v520, 4294901760
    %5820 = vmatpush.msra.mxu0 %v5819
    %v5821 = vand.u32 %v518, 4294901760
    %5822 = vmatpush.msra.mxu0 %v5821
    %v5823 = vand.u32 %v516, 4294901760
    %5824 = vmatpush.msra.mxu0 %v5823
    %v5825 = vand.u32 %v514, 4294901760
    %5826 = vmatpush.msra.mxu0 %v5825
    %v5827 = vand.u32 %v512, 4294901760
    %5828 = vmatpush.msra.mxu0 %v5827
    %v5829 = vand.u32 %v510, 4294901760
    %5830 = vmatpush.msra.mxu0 %v5829
    %v5831 = vand.u32 %v508, 4294901760
    %5832 = vmatpush.msra.mxu0 %v5831
    %v5833 = vand.u32 %v506, 4294901760
    %5834 = vmatpush.msra.mxu0 %v5833
    %v5835 = vand.u32 %v504, 4294901760
    %5836 = vmatpush.msra.mxu0 %v5835
    %v5837 = vand.u32 %v502, 4294901760
    %5838 = vmatpush.msra.mxu0 %v5837
    %v5839 = vand.u32 %v500, 4294901760
    %5840 = vmatpush.msra.mxu0 %v5839
    %v5841 = vand.u32 %v498, 4294901760
    %5842 = vmatpush.msra.mxu0 %v5841
    %v5843 = vand.u32 %v496, 4294901760
    %5844 = vmatpush.msra.mxu0 %v5843
    %v5845 = vand.u32 %v494, 4294901760
    %5846 = vmatpush.msra.mxu0 %v5845
    %v5847 = vand.u32 %v685, 4294901760
    %v5848 = vsub.f32 %v685, %v5847
    %v5849 = vand.u32 %v5848, 4294901760
    %v5850 = vsub.f32 %v5848, %v5849
    %v5851 = vand.u32 %v5850, 4294901760
    %5852 = vmatmul.f32.gmra.mxu0 %v5851
    %v5853 = vpop.f32.mrf.mxu0
    %v5854 = vadd.f32 %v5813, %v5853
    %5855 = vdwg.mxu0
    %v5856 = vand.u32 %v524, 4294901760
    %v5857 = vsub.f32 %v524, %v5856
    %v5858 = vand.u32 %v5857, 4294901760
    %v5859 = vsub.f32 %v5857, %v5858
    %v5860 = vand.u32 %v5859, 4294901760
    %5861 = vmatpush.msra.mxu0 %v5860
    %v5862 = vand.u32 %v522, 4294901760
    %v5863 = vsub.f32 %v522, %v5862
    %v5864 = vand.u32 %v5863, 4294901760
    %v5865 = vsub.f32 %v5863, %v5864
    %v5866 = vand.u32 %v5865, 4294901760
    %5867 = vmatpush.msra.mxu0 %v5866
    %v5868 = vand.u32 %v520, 4294901760
    %v5869 = vsub.f32 %v520, %v5868
    %v5870 = vand.u32 %v5869, 4294901760
    %v5871 = vsub.f32 %v5869, %v5870
    %v5872 = vand.u32 %v5871, 4294901760
    %5873 = vmatpush.msra.mxu0 %v5872
    %v5874 = vand.u32 %v518, 4294901760
    %v5875 = vsub.f32 %v518, %v5874
    %v5876 = vand.u32 %v5875, 4294901760
    %v5877 = vsub.f32 %v5875, %v5876
    %v5878 = vand.u32 %v5877, 4294901760
    %5879 = vmatpush.msra.mxu0 %v5878
    %v5880 = vand.u32 %v516, 4294901760
    %v5881 = vsub.f32 %v516, %v5880
    %v5882 = vand.u32 %v5881, 4294901760
    %v5883 = vsub.f32 %v5881, %v5882
    %v5884 = vand.u32 %v5883, 4294901760
    %5885 = vmatpush.msra.mxu0 %v5884
    %v5886 = vand.u32 %v514, 4294901760
    %v5887 = vsub.f32 %v514, %v5886
    %v5888 = vand.u32 %v5887, 4294901760
    %v5889 = vsub.f32 %v5887, %v5888
    %v5890 = vand.u32 %v5889, 4294901760
    %5891 = vmatpush.msra.mxu0 %v5890
    %v5892 = vand.u32 %v512, 4294901760
    %v5893 = vsub.f32 %v512, %v5892
    %v5894 = vand.u32 %v5893, 4294901760
    %v5895 = vsub.f32 %v5893, %v5894
    %v5896 = vand.u32 %v5895, 4294901760
    %5897 = vmatpush.msra.mxu0 %v5896
    %v5898 = vand.u32 %v510, 4294901760
    %v5899 = vsub.f32 %v510, %v5898
    %v5900 = vand.u32 %v5899, 4294901760
    %v5901 = vsub.f32 %v5899, %v5900
    %v5902 = vand.u32 %v5901, 4294901760
    %5903 = vmatpush.msra.mxu0 %v5902
    %v5904 = vand.u32 %v508, 4294901760
    %v5905 = vsub.f32 %v508, %v5904
    %v5906 = vand.u32 %v5905, 4294901760
    %v5907 = vsub.f32 %v5905, %v5906
    %v5908 = vand.u32 %v5907, 4294901760
    %5909 = vmatpush.msra.mxu0 %v5908
    %v5910 = vand.u32 %v506, 4294901760
    %v5911 = vsub.f32 %v506, %v5910
    %v5912 = vand.u32 %v5911, 4294901760
    %v5913 = vsub.f32 %v5911, %v5912
    %v5914 = vand.u32 %v5913, 4294901760
    %5915 = vmatpush.msra.mxu0 %v5914
    %v5916 = vand.u32 %v504, 4294901760
    %v5917 = vsub.f32 %v504, %v5916
    %v5918 = vand.u32 %v5917, 4294901760
    %v5919 = vsub.f32 %v5917, %v5918
    %v5920 = vand.u32 %v5919, 4294901760
    %5921 = vmatpush.msra.mxu0 %v5920
    %v5922 = vand.u32 %v502, 4294901760
    %v5923 = vsub.f32 %v502, %v5922
    %v5924 = vand.u32 %v5923, 4294901760
    %v5925 = vsub.f32 %v5923, %v5924
    %v5926 = vand.u32 %v5925, 4294901760
    %5927 = vmatpush.msra.mxu0 %v5926
    %v5928 = vand.u32 %v500, 4294901760
    %v5929 = vsub.f32 %v500, %v5928
    %v5930 = vand.u32 %v5929, 4294901760
    %v5931 = vsub.f32 %v5929, %v5930
    %v5932 = vand.u32 %v5931, 4294901760
    %5933 = vmatpush.msra.mxu0 %v5932
    %v5934 = vand.u32 %v498, 4294901760
    %v5935 = vsub.f32 %v498, %v5934
    %v5936 = vand.u32 %v5935, 4294901760
    %v5937 = vsub.f32 %v5935, %v5936
    %v5938 = vand.u32 %v5937, 4294901760
    %5939 = vmatpush.msra.mxu0 %v5938
    %v5940 = vand.u32 %v496, 4294901760
    %v5941 = vsub.f32 %v496, %v5940
    %v5942 = vand.u32 %v5941, 4294901760
    %v5943 = vsub.f32 %v5941, %v5942
    %v5944 = vand.u32 %v5943, 4294901760
    %5945 = vmatpush.msra.mxu0 %v5944
    %v5946 = vand.u32 %v494, 4294901760
    %v5947 = vsub.f32 %v494, %v5946
    %v5948 = vand.u32 %v5947, 4294901760
    %v5949 = vsub.f32 %v5947, %v5948
    %v5950 = vand.u32 %v5949, 4294901760
    %5951 = vmatpush.msra.mxu0 %v5950
    %v5952 = vand.u32 %v685, 4294901760
    %5953 = vmatmul.f32.gmra.mxu0 %v5952
    %v5954 = vpop.f32.mrf.mxu0
    %v5955 = vadd.f32 %v5854, %v5954
    %5956 = vdwg.mxu0
    %v5957 = vand.u32 %v524, 4294901760
    %v5958 = vsub.f32 %v524, %v5957
    %5959 = vmatpush.msra.mxu0 %v5958
    %v5960 = vand.u32 %v522, 4294901760
    %v5961 = vsub.f32 %v522, %v5960
    %5962 = vmatpush.msra.mxu0 %v5961
    %v5963 = vand.u32 %v520, 4294901760
    %v5964 = vsub.f32 %v520, %v5963
    %5965 = vmatpush.msra.mxu0 %v5964
    %v5966 = vand.u32 %v518, 4294901760
    %v5967 = vsub.f32 %v518, %v5966
    %5968 = vmatpush.msra.mxu0 %v5967
    %v5969 = vand.u32 %v516, 4294901760
    %v5970 = vsub.f32 %v516, %v5969
    %5971 = vmatpush.msra.mxu0 %v5970
    %v5972 = vand.u32 %v514, 4294901760
    %v5973 = vsub.f32 %v514, %v5972
    %5974 = vmatpush.msra.mxu0 %v5973
    %v5975 = vand.u32 %v512, 4294901760
    %v5976 = vsub.f32 %v512, %v5975
    %5977 = vmatpush.msra.mxu0 %v5976
    %v5978 = vand.u32 %v510, 4294901760
    %v5979 = vsub.f32 %v510, %v5978
    %5980 = vmatpush.msra.mxu0 %v5979
    %v5981 = vand.u32 %v508, 4294901760
    %v5982 = vsub.f32 %v508, %v5981
    %5983 = vmatpush.msra.mxu0 %v5982
    %v5984 = vand.u32 %v506, 4294901760
    %v5985 = vsub.f32 %v506, %v5984
    %5986 = vmatpush.msra.mxu0 %v5985
    %v5987 = vand.u32 %v504, 4294901760
    %v5988 = vsub.f32 %v504, %v5987
    %5989 = vmatpush.msra.mxu0 %v5988
    %v5990 = vand.u32 %v502, 4294901760
    %v5991 = vsub.f32 %v502, %v5990
    %5992 = vmatpush.msra.mxu0 %v5991
    %v5993 = vand.u32 %v500, 4294901760
    %v5994 = vsub.f32 %v500, %v5993
    %5995 = vmatpush.msra.mxu0 %v5994
    %v5996 = vand.u32 %v498, 4294901760
    %v5997 = vsub.f32 %v498, %v5996
    %5998 = vmatpush.msra.mxu0 %v5997
    %v5999 = vand.u32 %v496, 4294901760
    %v6000 = vsub.f32 %v496, %v5999
    %6001 = vmatpush.msra.mxu0 %v6000
    %v6002 = vand.u32 %v494, 4294901760
    %v6003 = vsub.f32 %v494, %v6002
    %6004 = vmatpush.msra.mxu0 %v6003
    %v6005 = vand.u32 %v685, 4294901760
    %v6006 = vsub.f32 %v685, %v6005
    %6007 = vmatmul.f32.gmra.mxu0 %v6006
    %v6008 = vpop.f32.mrf.mxu0
    %v6009 = vadd.f32 %v5955, %v6008
    %6010 = vdwg.mxu0
    %v6011 = vand.u32 %v524, 4294901760
    %6012 = vmatpush.msra.mxu0 %v6011
    %v6013 = vand.u32 %v522, 4294901760
    %6014 = vmatpush.msra.mxu0 %v6013
    %v6015 = vand.u32 %v520, 4294901760
    %6016 = vmatpush.msra.mxu0 %v6015
    %v6017 = vand.u32 %v518, 4294901760
    %6018 = vmatpush.msra.mxu0 %v6017
    %v6019 = vand.u32 %v516, 4294901760
    %6020 = vmatpush.msra.mxu0 %v6019
    %v6021 = vand.u32 %v514, 4294901760
    %6022 = vmatpush.msra.mxu0 %v6021
    %v6023 = vand.u32 %v512, 4294901760
    %6024 = vmatpush.msra.mxu0 %v6023
    %v6025 = vand.u32 %v510, 4294901760
    %6026 = vmatpush.msra.mxu0 %v6025
    %v6027 = vand.u32 %v508, 4294901760
    %6028 = vmatpush.msra.mxu0 %v6027
    %v6029 = vand.u32 %v506, 4294901760
    %6030 = vmatpush.msra.mxu0 %v6029
    %v6031 = vand.u32 %v504, 4294901760
    %6032 = vmatpush.msra.mxu0 %v6031
    %v6033 = vand.u32 %v502, 4294901760
    %6034 = vmatpush.msra.mxu0 %v6033
    %v6035 = vand.u32 %v500, 4294901760
    %6036 = vmatpush.msra.mxu0 %v6035
    %v6037 = vand.u32 %v498, 4294901760
    %6038 = vmatpush.msra.mxu0 %v6037
    %v6039 = vand.u32 %v496, 4294901760
    %6040 = vmatpush.msra.mxu0 %v6039
    %v6041 = vand.u32 %v494, 4294901760
    %6042 = vmatpush.msra.mxu0 %v6041
    %v6043 = vand.u32 %v685, 4294901760
    %v6044 = vsub.f32 %v685, %v6043
    %v6045 = vand.u32 %v6044, 4294901760
    %6046 = vmatmul.f32.gmra.mxu0 %v6045
    %v6047 = vpop.f32.mrf.mxu0
    %v6048 = vadd.f32 %v6009, %v6047
    %6049 = vdwg.mxu0
    %v6050 = vand.u32 %v524, 4294901760
    %v6051 = vsub.f32 %v524, %v6050
    %v6052 = vand.u32 %v6051, 4294901760
    %6053 = vmatpush.msra.mxu0 %v6052
    %v6054 = vand.u32 %v522, 4294901760
    %v6055 = vsub.f32 %v522, %v6054
    %v6056 = vand.u32 %v6055, 4294901760
    %6057 = vmatpush.msra.mxu0 %v6056
    %v6058 = vand.u32 %v520, 4294901760
    %v6059 = vsub.f32 %v520, %v6058
    %v6060 = vand.u32 %v6059, 4294901760
    %6061 = vmatpush.msra.mxu0 %v6060
    %v6062 = vand.u32 %v518, 4294901760
    %v6063 = vsub.f32 %v518, %v6062
    %v6064 = vand.u32 %v6063, 4294901760
    %6065 = vmatpush.msra.mxu0 %v6064
    %v6066 = vand.u32 %v516, 4294901760
    %v6067 = vsub.f32 %v516, %v6066
    %v6068 = vand.u32 %v6067, 4294901760
    %6069 = vmatpush.msra.mxu0 %v6068
    %v6070 = vand.u32 %v514, 4294901760
    %v6071 = vsub.f32 %v514, %v6070
    %v6072 = vand.u32 %v6071, 4294901760
    %6073 = vmatpush.msra.mxu0 %v6072
    %v6074 = vand.u32 %v512, 4294901760
    %v6075 = vsub.f32 %v512, %v6074
    %v6076 = vand.u32 %v6075, 4294901760
    %6077 = vmatpush.msra.mxu0 %v6076
    %v6078 = vand.u32 %v510, 4294901760
    %v6079 = vsub.f32 %v510, %v6078
    %v6080 = vand.u32 %v6079, 4294901760
    %6081 = vmatpush.msra.mxu0 %v6080
    %v6082 = vand.u32 %v508, 4294901760
    %v6083 = vsub.f32 %v508, %v6082
    %v6084 = vand.u32 %v6083, 4294901760
    %6085 = vmatpush.msra.mxu0 %v6084
    %v6086 = vand.u32 %v506, 4294901760
    %v6087 = vsub.f32 %v506, %v6086
    %v6088 = vand.u32 %v6087, 4294901760
    %6089 = vmatpush.msra.mxu0 %v6088
    %v6090 = vand.u32 %v504, 4294901760
    %v6091 = vsub.f32 %v504, %v6090
    %v6092 = vand.u32 %v6091, 4294901760
    %6093 = vmatpush.msra.mxu0 %v6092
    %v6094 = vand.u32 %v502, 4294901760
    %v6095 = vsub.f32 %v502, %v6094
    %v6096 = vand.u32 %v6095, 4294901760
    %6097 = vmatpush.msra.mxu0 %v6096
    %v6098 = vand.u32 %v500, 4294901760
    %v6099 = vsub.f32 %v500, %v6098
    %v6100 = vand.u32 %v6099, 4294901760
    %6101 = vmatpush.msra.mxu0 %v6100
    %v6102 = vand.u32 %v498, 4294901760
    %v6103 = vsub.f32 %v498, %v6102
    %v6104 = vand.u32 %v6103, 4294901760
    %6105 = vmatpush.msra.mxu0 %v6104
    %v6106 = vand.u32 %v496, 4294901760
    %v6107 = vsub.f32 %v496, %v6106
    %v6108 = vand.u32 %v6107, 4294901760
    %6109 = vmatpush.msra.mxu0 %v6108
    %v6110 = vand.u32 %v494, 4294901760
    %v6111 = vsub.f32 %v494, %v6110
    %v6112 = vand.u32 %v6111, 4294901760
    %6113 = vmatpush.msra.mxu0 %v6112
    %v6114 = vand.u32 %v685, 4294901760
    %6115 = vmatmul.f32.gmra.mxu0 %v6114
    %v6116 = vpop.f32.mrf.mxu0
    %v6117 = vadd.f32 %v6048, %v6116
    %6118 = vdwg.mxu0
    %v6119 = vand.u32 %v524, 4294901760
    %6120 = vmatpush.msra.mxu0 %v6119
    %v6121 = vand.u32 %v522, 4294901760
    %6122 = vmatpush.msra.mxu0 %v6121
    %v6123 = vand.u32 %v520, 4294901760
    %6124 = vmatpush.msra.mxu0 %v6123
    %v6125 = vand.u32 %v518, 4294901760
    %6126 = vmatpush.msra.mxu0 %v6125
    %v6127 = vand.u32 %v516, 4294901760
    %6128 = vmatpush.msra.mxu0 %v6127
    %v6129 = vand.u32 %v514, 4294901760
    %6130 = vmatpush.msra.mxu0 %v6129
    %v6131 = vand.u32 %v512, 4294901760
    %6132 = vmatpush.msra.mxu0 %v6131
    %v6133 = vand.u32 %v510, 4294901760
    %6134 = vmatpush.msra.mxu0 %v6133
    %v6135 = vand.u32 %v508, 4294901760
    %6136 = vmatpush.msra.mxu0 %v6135
    %v6137 = vand.u32 %v506, 4294901760
    %6138 = vmatpush.msra.mxu0 %v6137
    %v6139 = vand.u32 %v504, 4294901760
    %6140 = vmatpush.msra.mxu0 %v6139
    %v6141 = vand.u32 %v502, 4294901760
    %6142 = vmatpush.msra.mxu0 %v6141
    %v6143 = vand.u32 %v500, 4294901760
    %6144 = vmatpush.msra.mxu0 %v6143
    %v6145 = vand.u32 %v498, 4294901760
    %6146 = vmatpush.msra.mxu0 %v6145
    %v6147 = vand.u32 %v496, 4294901760
    %6148 = vmatpush.msra.mxu0 %v6147
    %v6149 = vand.u32 %v494, 4294901760
    %6150 = vmatpush.msra.mxu0 %v6149
    %v6151 = vand.u32 %v685, 4294901760
    %6152 = vmatmul.f32.gmra.mxu0 %v6151
    %v6153 = vpop.f32.mrf.mxu0
    %v6154 = vadd.f32 %v6117, %v6153
    %6155 = vdwg.mxu0
    %v6156 = vand.u32 %v556, 4294901760
    %6157 = vmatpush.msra.mxu0 %v6156
    %v6158 = vand.u32 %v554, 4294901760
    %6159 = vmatpush.msra.mxu0 %v6158
    %v6160 = vand.u32 %v552, 4294901760
    %6161 = vmatpush.msra.mxu0 %v6160
    %v6162 = vand.u32 %v550, 4294901760
    %6163 = vmatpush.msra.mxu0 %v6162
    %v6164 = vand.u32 %v548, 4294901760
    %6165 = vmatpush.msra.mxu0 %v6164
    %v6166 = vand.u32 %v546, 4294901760
    %6167 = vmatpush.msra.mxu0 %v6166
    %v6168 = vand.u32 %v544, 4294901760
    %6169 = vmatpush.msra.mxu0 %v6168
    %v6170 = vand.u32 %v542, 4294901760
    %6171 = vmatpush.msra.mxu0 %v6170
    %v6172 = vand.u32 %v540, 4294901760
    %6173 = vmatpush.msra.mxu0 %v6172
    %v6174 = vand.u32 %v538, 4294901760
    %6175 = vmatpush.msra.mxu0 %v6174
    %v6176 = vand.u32 %v536, 4294901760
    %6177 = vmatpush.msra.mxu0 %v6176
    %v6178 = vand.u32 %v534, 4294901760
    %6179 = vmatpush.msra.mxu0 %v6178
    %v6180 = vand.u32 %v532, 4294901760
    %6181 = vmatpush.msra.mxu0 %v6180
    %v6182 = vand.u32 %v530, 4294901760
    %6183 = vmatpush.msra.mxu0 %v6182
    %v6184 = vand.u32 %v528, 4294901760
    %6185 = vmatpush.msra.mxu0 %v6184
    %v6186 = vand.u32 %v526, 4294901760
    %6187 = vmatpush.msra.mxu0 %v6186
    %v6188 = vand.u32 %v686, 4294901760
    %v6189 = vsub.f32 %v686, %v6188
    %v6190 = vand.u32 %v6189, 4294901760
    %v6191 = vsub.f32 %v6189, %v6190
    %v6192 = vand.u32 %v6191, 4294901760
    %6193 = vmatmul.f32.gmra.mxu0 %v6192
    %v6194 = vpop.f32.mrf.mxu0
    %v6195 = vadd.f32 %v6154, %v6194
    %6196 = vdwg.mxu0
    %v6197 = vand.u32 %v556, 4294901760
    %v6198 = vsub.f32 %v556, %v6197
    %v6199 = vand.u32 %v6198, 4294901760
    %v6200 = vsub.f32 %v6198, %v6199
    %v6201 = vand.u32 %v6200, 4294901760
    %6202 = vmatpush.msra.mxu0 %v6201
    %v6203 = vand.u32 %v554, 4294901760
    %v6204 = vsub.f32 %v554, %v6203
    %v6205 = vand.u32 %v6204, 4294901760
    %v6206 = vsub.f32 %v6204, %v6205
    %v6207 = vand.u32 %v6206, 4294901760
    %6208 = vmatpush.msra.mxu0 %v6207
    %v6209 = vand.u32 %v552, 4294901760
    %v6210 = vsub.f32 %v552, %v6209
    %v6211 = vand.u32 %v6210, 4294901760
    %v6212 = vsub.f32 %v6210, %v6211
    %v6213 = vand.u32 %v6212, 4294901760
    %6214 = vmatpush.msra.mxu0 %v6213
    %v6215 = vand.u32 %v550, 4294901760
    %v6216 = vsub.f32 %v550, %v6215
    %v6217 = vand.u32 %v6216, 4294901760
    %v6218 = vsub.f32 %v6216, %v6217
    %v6219 = vand.u32 %v6218, 4294901760
    %6220 = vmatpush.msra.mxu0 %v6219
    %v6221 = vand.u32 %v548, 4294901760
    %v6222 = vsub.f32 %v548, %v6221
    %v6223 = vand.u32 %v6222, 4294901760
    %v6224 = vsub.f32 %v6222, %v6223
    %v6225 = vand.u32 %v6224, 4294901760
    %6226 = vmatpush.msra.mxu0 %v6225
    %v6227 = vand.u32 %v546, 4294901760
    %v6228 = vsub.f32 %v546, %v6227
    %v6229 = vand.u32 %v6228, 4294901760
    %v6230 = vsub.f32 %v6228, %v6229
    %v6231 = vand.u32 %v6230, 4294901760
    %6232 = vmatpush.msra.mxu0 %v6231
    %v6233 = vand.u32 %v544, 4294901760
    %v6234 = vsub.f32 %v544, %v6233
    %v6235 = vand.u32 %v6234, 4294901760
    %v6236 = vsub.f32 %v6234, %v6235
    %v6237 = vand.u32 %v6236, 4294901760
    %6238 = vmatpush.msra.mxu0 %v6237
    %v6239 = vand.u32 %v542, 4294901760
    %v6240 = vsub.f32 %v542, %v6239
    %v6241 = vand.u32 %v6240, 4294901760
    %v6242 = vsub.f32 %v6240, %v6241
    %v6243 = vand.u32 %v6242, 4294901760
    %6244 = vmatpush.msra.mxu0 %v6243
    %v6245 = vand.u32 %v540, 4294901760
    %v6246 = vsub.f32 %v540, %v6245
    %v6247 = vand.u32 %v6246, 4294901760
    %v6248 = vsub.f32 %v6246, %v6247
    %v6249 = vand.u32 %v6248, 4294901760
    %6250 = vmatpush.msra.mxu0 %v6249
    %v6251 = vand.u32 %v538, 4294901760
    %v6252 = vsub.f32 %v538, %v6251
    %v6253 = vand.u32 %v6252, 4294901760
    %v6254 = vsub.f32 %v6252, %v6253
    %v6255 = vand.u32 %v6254, 4294901760
    %6256 = vmatpush.msra.mxu0 %v6255
    %v6257 = vand.u32 %v536, 4294901760
    %v6258 = vsub.f32 %v536, %v6257
    %v6259 = vand.u32 %v6258, 4294901760
    %v6260 = vsub.f32 %v6258, %v6259
    %v6261 = vand.u32 %v6260, 4294901760
    %6262 = vmatpush.msra.mxu0 %v6261
    %v6263 = vand.u32 %v534, 4294901760
    %v6264 = vsub.f32 %v534, %v6263
    %v6265 = vand.u32 %v6264, 4294901760
    %v6266 = vsub.f32 %v6264, %v6265
    %v6267 = vand.u32 %v6266, 4294901760
    %6268 = vmatpush.msra.mxu0 %v6267
    %v6269 = vand.u32 %v532, 4294901760
    %v6270 = vsub.f32 %v532, %v6269
    %v6271 = vand.u32 %v6270, 4294901760
    %v6272 = vsub.f32 %v6270, %v6271
    %v6273 = vand.u32 %v6272, 4294901760
    %6274 = vmatpush.msra.mxu0 %v6273
    %v6275 = vand.u32 %v530, 4294901760
    %v6276 = vsub.f32 %v530, %v6275
    %v6277 = vand.u32 %v6276, 4294901760
    %v6278 = vsub.f32 %v6276, %v6277
    %v6279 = vand.u32 %v6278, 4294901760
    %6280 = vmatpush.msra.mxu0 %v6279
    %v6281 = vand.u32 %v528, 4294901760
    %v6282 = vsub.f32 %v528, %v6281
    %v6283 = vand.u32 %v6282, 4294901760
    %v6284 = vsub.f32 %v6282, %v6283
    %v6285 = vand.u32 %v6284, 4294901760
    %6286 = vmatpush.msra.mxu0 %v6285
    %v6287 = vand.u32 %v526, 4294901760
    %v6288 = vsub.f32 %v526, %v6287
    %v6289 = vand.u32 %v6288, 4294901760
    %v6290 = vsub.f32 %v6288, %v6289
    %v6291 = vand.u32 %v6290, 4294901760
    %6292 = vmatpush.msra.mxu0 %v6291
    %v6293 = vand.u32 %v686, 4294901760
    %6294 = vmatmul.f32.gmra.mxu0 %v6293
    %v6295 = vpop.f32.mrf.mxu0
    %v6296 = vadd.f32 %v6195, %v6295
    %6297 = vdwg.mxu0
    %v6298 = vand.u32 %v556, 4294901760
    %v6299 = vsub.f32 %v556, %v6298
    %6300 = vmatpush.msra.mxu0 %v6299
    %v6301 = vand.u32 %v554, 4294901760
    %v6302 = vsub.f32 %v554, %v6301
    %6303 = vmatpush.msra.mxu0 %v6302
    %v6304 = vand.u32 %v552, 4294901760
    %v6305 = vsub.f32 %v552, %v6304
    %6306 = vmatpush.msra.mxu0 %v6305
    %v6307 = vand.u32 %v550, 4294901760
    %v6308 = vsub.f32 %v550, %v6307
    %6309 = vmatpush.msra.mxu0 %v6308
    %v6310 = vand.u32 %v548, 4294901760
    %v6311 = vsub.f32 %v548, %v6310
    %6312 = vmatpush.msra.mxu0 %v6311
    %v6313 = vand.u32 %v546, 4294901760
    %v6314 = vsub.f32 %v546, %v6313
    %6315 = vmatpush.msra.mxu0 %v6314
    %v6316 = vand.u32 %v544, 4294901760
    %v6317 = vsub.f32 %v544, %v6316
    %6318 = vmatpush.msra.mxu0 %v6317
    %v6319 = vand.u32 %v542, 4294901760
    %v6320 = vsub.f32 %v542, %v6319
    %6321 = vmatpush.msra.mxu0 %v6320
    %v6322 = vand.u32 %v540, 4294901760
    %v6323 = vsub.f32 %v540, %v6322
    %6324 = vmatpush.msra.mxu0 %v6323
    %v6325 = vand.u32 %v538, 4294901760
    %v6326 = vsub.f32 %v538, %v6325
    %6327 = vmatpush.msra.mxu0 %v6326
    %v6328 = vand.u32 %v536, 4294901760
    %v6329 = vsub.f32 %v536, %v6328
    %6330 = vmatpush.msra.mxu0 %v6329
    %v6331 = vand.u32 %v534, 4294901760
    %v6332 = vsub.f32 %v534, %v6331
    %6333 = vmatpush.msra.mxu0 %v6332
    %v6334 = vand.u32 %v532, 4294901760
    %v6335 = vsub.f32 %v532, %v6334
    %6336 = vmatpush.msra.mxu0 %v6335
    %v6337 = vand.u32 %v530, 4294901760
    %v6338 = vsub.f32 %v530, %v6337
    %6339 = vmatpush.msra.mxu0 %v6338
    %v6340 = vand.u32 %v528, 4294901760
    %v6341 = vsub.f32 %v528, %v6340
    %6342 = vmatpush.msra.mxu0 %v6341
    %v6343 = vand.u32 %v526, 4294901760
    %v6344 = vsub.f32 %v526, %v6343
    %6345 = vmatpush.msra.mxu0 %v6344
    %v6346 = vand.u32 %v686, 4294901760
    %v6347 = vsub.f32 %v686, %v6346
    %6348 = vmatmul.f32.gmra.mxu0 %v6347
    %v6349 = vpop.f32.mrf.mxu0
    %v6350 = vadd.f32 %v6296, %v6349
    %6351 = vdwg.mxu0
    %v6352 = vand.u32 %v556, 4294901760
    %6353 = vmatpush.msra.mxu0 %v6352
    %v6354 = vand.u32 %v554, 4294901760
    %6355 = vmatpush.msra.mxu0 %v6354
    %v6356 = vand.u32 %v552, 4294901760
    %6357 = vmatpush.msra.mxu0 %v6356
    %v6358 = vand.u32 %v550, 4294901760
    %6359 = vmatpush.msra.mxu0 %v6358
    %v6360 = vand.u32 %v548, 4294901760
    %6361 = vmatpush.msra.mxu0 %v6360
    %v6362 = vand.u32 %v546, 4294901760
    %6363 = vmatpush.msra.mxu0 %v6362
    %v6364 = vand.u32 %v544, 4294901760
    %6365 = vmatpush.msra.mxu0 %v6364
    %v6366 = vand.u32 %v542, 4294901760
    %6367 = vmatpush.msra.mxu0 %v6366
    %v6368 = vand.u32 %v540, 4294901760
    %6369 = vmatpush.msra.mxu0 %v6368
    %v6370 = vand.u32 %v538, 4294901760
    %6371 = vmatpush.msra.mxu0 %v6370
    %v6372 = vand.u32 %v536, 4294901760
    %6373 = vmatpush.msra.mxu0 %v6372
    %v6374 = vand.u32 %v534, 4294901760
    %6375 = vmatpush.msra.mxu0 %v6374
    %v6376 = vand.u32 %v532, 4294901760
    %6377 = vmatpush.msra.mxu0 %v6376
    %v6378 = vand.u32 %v530, 4294901760
    %6379 = vmatpush.msra.mxu0 %v6378
    %v6380 = vand.u32 %v528, 4294901760
    %6381 = vmatpush.msra.mxu0 %v6380
    %v6382 = vand.u32 %v526, 4294901760
    %6383 = vmatpush.msra.mxu0 %v6382
    %v6384 = vand.u32 %v686, 4294901760
    %v6385 = vsub.f32 %v686, %v6384
    %v6386 = vand.u32 %v6385, 4294901760
    %6387 = vmatmul.f32.gmra.mxu0 %v6386
    %v6388 = vpop.f32.mrf.mxu0
    %v6389 = vadd.f32 %v6350, %v6388
    %6390 = vdwg.mxu0
    %v6391 = vand.u32 %v556, 4294901760
    %v6392 = vsub.f32 %v556, %v6391
    %v6393 = vand.u32 %v6392, 4294901760
    %6394 = vmatpush.msra.mxu0 %v6393
    %v6395 = vand.u32 %v554, 4294901760
    %v6396 = vsub.f32 %v554, %v6395
    %v6397 = vand.u32 %v6396, 4294901760
    %6398 = vmatpush.msra.mxu0 %v6397
    %v6399 = vand.u32 %v552, 4294901760
    %v6400 = vsub.f32 %v552, %v6399
    %v6401 = vand.u32 %v6400, 4294901760
    %6402 = vmatpush.msra.mxu0 %v6401
    %v6403 = vand.u32 %v550, 4294901760
    %v6404 = vsub.f32 %v550, %v6403
    %v6405 = vand.u32 %v6404, 4294901760
    %6406 = vmatpush.msra.mxu0 %v6405
    %v6407 = vand.u32 %v548, 4294901760
    %v6408 = vsub.f32 %v548, %v6407
    %v6409 = vand.u32 %v6408, 4294901760
    %6410 = vmatpush.msra.mxu0 %v6409
    %v6411 = vand.u32 %v546, 4294901760
    %v6412 = vsub.f32 %v546, %v6411
    %v6413 = vand.u32 %v6412, 4294901760
    %6414 = vmatpush.msra.mxu0 %v6413
    %v6415 = vand.u32 %v544, 4294901760
    %v6416 = vsub.f32 %v544, %v6415
    %v6417 = vand.u32 %v6416, 4294901760
    %6418 = vmatpush.msra.mxu0 %v6417
    %v6419 = vand.u32 %v542, 4294901760
    %v6420 = vsub.f32 %v542, %v6419
    %v6421 = vand.u32 %v6420, 4294901760
    %6422 = vmatpush.msra.mxu0 %v6421
    %v6423 = vand.u32 %v540, 4294901760
    %v6424 = vsub.f32 %v540, %v6423
    %v6425 = vand.u32 %v6424, 4294901760
    %6426 = vmatpush.msra.mxu0 %v6425
    %v6427 = vand.u32 %v538, 4294901760
    %v6428 = vsub.f32 %v538, %v6427
    %v6429 = vand.u32 %v6428, 4294901760
    %6430 = vmatpush.msra.mxu0 %v6429
    %v6431 = vand.u32 %v536, 4294901760
    %v6432 = vsub.f32 %v536, %v6431
    %v6433 = vand.u32 %v6432, 4294901760
    %6434 = vmatpush.msra.mxu0 %v6433
    %v6435 = vand.u32 %v534, 4294901760
    %v6436 = vsub.f32 %v534, %v6435
    %v6437 = vand.u32 %v6436, 4294901760
    %6438 = vmatpush.msra.mxu0 %v6437
    %v6439 = vand.u32 %v532, 4294901760
    %v6440 = vsub.f32 %v532, %v6439
    %v6441 = vand.u32 %v6440, 4294901760
    %6442 = vmatpush.msra.mxu0 %v6441
    %v6443 = vand.u32 %v530, 4294901760
    %v6444 = vsub.f32 %v530, %v6443
    %v6445 = vand.u32 %v6444, 4294901760
    %6446 = vmatpush.msra.mxu0 %v6445
    %v6447 = vand.u32 %v528, 4294901760
    %v6448 = vsub.f32 %v528, %v6447
    %v6449 = vand.u32 %v6448, 4294901760
    %6450 = vmatpush.msra.mxu0 %v6449
    %v6451 = vand.u32 %v526, 4294901760
    %v6452 = vsub.f32 %v526, %v6451
    %v6453 = vand.u32 %v6452, 4294901760
    %6454 = vmatpush.msra.mxu0 %v6453
    %v6455 = vand.u32 %v686, 4294901760
    %6456 = vmatmul.f32.gmra.mxu0 %v6455
    %v6457 = vpop.f32.mrf.mxu0
    %v6458 = vadd.f32 %v6389, %v6457
    %6459 = vdwg.mxu0
    %v6460 = vand.u32 %v556, 4294901760
    %6461 = vmatpush.msra.mxu0 %v6460
    %v6462 = vand.u32 %v554, 4294901760
    %6463 = vmatpush.msra.mxu0 %v6462
    %v6464 = vand.u32 %v552, 4294901760
    %6465 = vmatpush.msra.mxu0 %v6464
    %v6466 = vand.u32 %v550, 4294901760
    %6467 = vmatpush.msra.mxu0 %v6466
    %v6468 = vand.u32 %v548, 4294901760
    %6469 = vmatpush.msra.mxu0 %v6468
    %v6470 = vand.u32 %v546, 4294901760
    %6471 = vmatpush.msra.mxu0 %v6470
    %v6472 = vand.u32 %v544, 4294901760
    %6473 = vmatpush.msra.mxu0 %v6472
    %v6474 = vand.u32 %v542, 4294901760
    %6475 = vmatpush.msra.mxu0 %v6474
    %v6476 = vand.u32 %v540, 4294901760
    %6477 = vmatpush.msra.mxu0 %v6476
    %v6478 = vand.u32 %v538, 4294901760
    %6479 = vmatpush.msra.mxu0 %v6478
    %v6480 = vand.u32 %v536, 4294901760
    %6481 = vmatpush.msra.mxu0 %v6480
    %v6482 = vand.u32 %v534, 4294901760
    %6483 = vmatpush.msra.mxu0 %v6482
    %v6484 = vand.u32 %v532, 4294901760
    %6485 = vmatpush.msra.mxu0 %v6484
    %v6486 = vand.u32 %v530, 4294901760
    %6487 = vmatpush.msra.mxu0 %v6486
    %v6488 = vand.u32 %v528, 4294901760
    %6489 = vmatpush.msra.mxu0 %v6488
    %v6490 = vand.u32 %v526, 4294901760
    %6491 = vmatpush.msra.mxu0 %v6490
    %v6492 = vand.u32 %v686, 4294901760
    %6493 = vmatmul.f32.gmra.mxu0 %v6492
    %v6494 = vpop.f32.mrf.mxu0
    %v6495 = vadd.f32 %v6458, %v6494
    %6496 = vdwg.mxu0
    %v6497 = vand.u32 %v588, 4294901760
    %6498 = vmatpush.msra.mxu0 %v6497
    %v6499 = vand.u32 %v586, 4294901760
    %6500 = vmatpush.msra.mxu0 %v6499
    %v6501 = vand.u32 %v584, 4294901760
    %6502 = vmatpush.msra.mxu0 %v6501
    %v6503 = vand.u32 %v582, 4294901760
    %6504 = vmatpush.msra.mxu0 %v6503
    %v6505 = vand.u32 %v580, 4294901760
    %6506 = vmatpush.msra.mxu0 %v6505
    %v6507 = vand.u32 %v578, 4294901760
    %6508 = vmatpush.msra.mxu0 %v6507
    %v6509 = vand.u32 %v576, 4294901760
    %6510 = vmatpush.msra.mxu0 %v6509
    %v6511 = vand.u32 %v574, 4294901760
    %6512 = vmatpush.msra.mxu0 %v6511
    %v6513 = vand.u32 %v572, 4294901760
    %6514 = vmatpush.msra.mxu0 %v6513
    %v6515 = vand.u32 %v570, 4294901760
    %6516 = vmatpush.msra.mxu0 %v6515
    %v6517 = vand.u32 %v568, 4294901760
    %6518 = vmatpush.msra.mxu0 %v6517
    %v6519 = vand.u32 %v566, 4294901760
    %6520 = vmatpush.msra.mxu0 %v6519
    %v6521 = vand.u32 %v564, 4294901760
    %6522 = vmatpush.msra.mxu0 %v6521
    %v6523 = vand.u32 %v562, 4294901760
    %6524 = vmatpush.msra.mxu0 %v6523
    %v6525 = vand.u32 %v560, 4294901760
    %6526 = vmatpush.msra.mxu0 %v6525
    %v6527 = vand.u32 %v558, 4294901760
    %6528 = vmatpush.msra.mxu0 %v6527
    %v6529 = vand.u32 %v687, 4294901760
    %v6530 = vsub.f32 %v687, %v6529
    %v6531 = vand.u32 %v6530, 4294901760
    %v6532 = vsub.f32 %v6530, %v6531
    %v6533 = vand.u32 %v6532, 4294901760
    %6534 = vmatmul.f32.gmra.mxu0 %v6533
    %v6535 = vpop.f32.mrf.mxu0
    %v6536 = vadd.f32 %v6495, %v6535
    %6537 = vdwg.mxu0
    %v6538 = vand.u32 %v588, 4294901760
    %v6539 = vsub.f32 %v588, %v6538
    %v6540 = vand.u32 %v6539, 4294901760
    %v6541 = vsub.f32 %v6539, %v6540
    %v6542 = vand.u32 %v6541, 4294901760
    %6543 = vmatpush.msra.mxu0 %v6542
    %v6544 = vand.u32 %v586, 4294901760
    %v6545 = vsub.f32 %v586, %v6544
    %v6546 = vand.u32 %v6545, 4294901760
    %v6547 = vsub.f32 %v6545, %v6546
    %v6548 = vand.u32 %v6547, 4294901760
    %6549 = vmatpush.msra.mxu0 %v6548
    %v6550 = vand.u32 %v584, 4294901760
    %v6551 = vsub.f32 %v584, %v6550
    %v6552 = vand.u32 %v6551, 4294901760
    %v6553 = vsub.f32 %v6551, %v6552
    %v6554 = vand.u32 %v6553, 4294901760
    %6555 = vmatpush.msra.mxu0 %v6554
    %v6556 = vand.u32 %v582, 4294901760
    %v6557 = vsub.f32 %v582, %v6556
    %v6558 = vand.u32 %v6557, 4294901760
    %v6559 = vsub.f32 %v6557, %v6558
    %v6560 = vand.u32 %v6559, 4294901760
    %6561 = vmatpush.msra.mxu0 %v6560
    %v6562 = vand.u32 %v580, 4294901760
    %v6563 = vsub.f32 %v580, %v6562
    %v6564 = vand.u32 %v6563, 4294901760
    %v6565 = vsub.f32 %v6563, %v6564
    %v6566 = vand.u32 %v6565, 4294901760
    %6567 = vmatpush.msra.mxu0 %v6566
    %v6568 = vand.u32 %v578, 4294901760
    %v6569 = vsub.f32 %v578, %v6568
    %v6570 = vand.u32 %v6569, 4294901760
    %v6571 = vsub.f32 %v6569, %v6570
    %v6572 = vand.u32 %v6571, 4294901760
    %6573 = vmatpush.msra.mxu0 %v6572
    %v6574 = vand.u32 %v576, 4294901760
    %v6575 = vsub.f32 %v576, %v6574
    %v6576 = vand.u32 %v6575, 4294901760
    %v6577 = vsub.f32 %v6575, %v6576
    %v6578 = vand.u32 %v6577, 4294901760
    %6579 = vmatpush.msra.mxu0 %v6578
    %v6580 = vand.u32 %v574, 4294901760
    %v6581 = vsub.f32 %v574, %v6580
    %v6582 = vand.u32 %v6581, 4294901760
    %v6583 = vsub.f32 %v6581, %v6582
    %v6584 = vand.u32 %v6583, 4294901760
    %6585 = vmatpush.msra.mxu0 %v6584
    %v6586 = vand.u32 %v572, 4294901760
    %v6587 = vsub.f32 %v572, %v6586
    %v6588 = vand.u32 %v6587, 4294901760
    %v6589 = vsub.f32 %v6587, %v6588
    %v6590 = vand.u32 %v6589, 4294901760
    %6591 = vmatpush.msra.mxu0 %v6590
    %v6592 = vand.u32 %v570, 4294901760
    %v6593 = vsub.f32 %v570, %v6592
    %v6594 = vand.u32 %v6593, 4294901760
    %v6595 = vsub.f32 %v6593, %v6594
    %v6596 = vand.u32 %v6595, 4294901760
    %6597 = vmatpush.msra.mxu0 %v6596
    %v6598 = vand.u32 %v568, 4294901760
    %v6599 = vsub.f32 %v568, %v6598
    %v6600 = vand.u32 %v6599, 4294901760
    %v6601 = vsub.f32 %v6599, %v6600
    %v6602 = vand.u32 %v6601, 4294901760
    %6603 = vmatpush.msra.mxu0 %v6602
    %v6604 = vand.u32 %v566, 4294901760
    %v6605 = vsub.f32 %v566, %v6604
    %v6606 = vand.u32 %v6605, 4294901760
    %v6607 = vsub.f32 %v6605, %v6606
    %v6608 = vand.u32 %v6607, 4294901760
    %6609 = vmatpush.msra.mxu0 %v6608
    %v6610 = vand.u32 %v564, 4294901760
    %v6611 = vsub.f32 %v564, %v6610
    %v6612 = vand.u32 %v6611, 4294901760
    %v6613 = vsub.f32 %v6611, %v6612
    %v6614 = vand.u32 %v6613, 4294901760
    %6615 = vmatpush.msra.mxu0 %v6614
    %v6616 = vand.u32 %v562, 4294901760
    %v6617 = vsub.f32 %v562, %v6616
    %v6618 = vand.u32 %v6617, 4294901760
    %v6619 = vsub.f32 %v6617, %v6618
    %v6620 = vand.u32 %v6619, 4294901760
    %6621 = vmatpush.msra.mxu0 %v6620
    %v6622 = vand.u32 %v560, 4294901760
    %v6623 = vsub.f32 %v560, %v6622
    %v6624 = vand.u32 %v6623, 4294901760
    %v6625 = vsub.f32 %v6623, %v6624
    %v6626 = vand.u32 %v6625, 4294901760
    %6627 = vmatpush.msra.mxu0 %v6626
    %v6628 = vand.u32 %v558, 4294901760
    %v6629 = vsub.f32 %v558, %v6628
    %v6630 = vand.u32 %v6629, 4294901760
    %v6631 = vsub.f32 %v6629, %v6630
    %v6632 = vand.u32 %v6631, 4294901760
    %6633 = vmatpush.msra.mxu0 %v6632
    %v6634 = vand.u32 %v687, 4294901760
    %6635 = vmatmul.f32.gmra.mxu0 %v6634
    %v6636 = vpop.f32.mrf.mxu0
    %v6637 = vadd.f32 %v6536, %v6636
    %6638 = vdwg.mxu0
    %v6639 = vand.u32 %v588, 4294901760
    %v6640 = vsub.f32 %v588, %v6639
    %6641 = vmatpush.msra.mxu0 %v6640
    %v6642 = vand.u32 %v586, 4294901760
    %v6643 = vsub.f32 %v586, %v6642
    %6644 = vmatpush.msra.mxu0 %v6643
    %v6645 = vand.u32 %v584, 4294901760
    %v6646 = vsub.f32 %v584, %v6645
    %6647 = vmatpush.msra.mxu0 %v6646
    %v6648 = vand.u32 %v582, 4294901760
    %v6649 = vsub.f32 %v582, %v6648
    %6650 = vmatpush.msra.mxu0 %v6649
    %v6651 = vand.u32 %v580, 4294901760
    %v6652 = vsub.f32 %v580, %v6651
    %6653 = vmatpush.msra.mxu0 %v6652
    %v6654 = vand.u32 %v578, 4294901760
    %v6655 = vsub.f32 %v578, %v6654
    %6656 = vmatpush.msra.mxu0 %v6655
    %v6657 = vand.u32 %v576, 4294901760
    %v6658 = vsub.f32 %v576, %v6657
    %6659 = vmatpush.msra.mxu0 %v6658
    %v6660 = vand.u32 %v574, 4294901760
    %v6661 = vsub.f32 %v574, %v6660
    %6662 = vmatpush.msra.mxu0 %v6661
    %v6663 = vand.u32 %v572, 4294901760
    %v6664 = vsub.f32 %v572, %v6663
    %6665 = vmatpush.msra.mxu0 %v6664
    %v6666 = vand.u32 %v570, 4294901760
    %v6667 = vsub.f32 %v570, %v6666
    %6668 = vmatpush.msra.mxu0 %v6667
    %v6669 = vand.u32 %v568, 4294901760
    %v6670 = vsub.f32 %v568, %v6669
    %6671 = vmatpush.msra.mxu0 %v6670
    %v6672 = vand.u32 %v566, 4294901760
    %v6673 = vsub.f32 %v566, %v6672
    %6674 = vmatpush.msra.mxu0 %v6673
    %v6675 = vand.u32 %v564, 4294901760
    %v6676 = vsub.f32 %v564, %v6675
    %6677 = vmatpush.msra.mxu0 %v6676
    %v6678 = vand.u32 %v562, 4294901760
    %v6679 = vsub.f32 %v562, %v6678
    %6680 = vmatpush.msra.mxu0 %v6679
    %v6681 = vand.u32 %v560, 4294901760
    %v6682 = vsub.f32 %v560, %v6681
    %6683 = vmatpush.msra.mxu0 %v6682
    %v6684 = vand.u32 %v558, 4294901760
    %v6685 = vsub.f32 %v558, %v6684
    %6686 = vmatpush.msra.mxu0 %v6685
    %v6687 = vand.u32 %v687, 4294901760
    %v6688 = vsub.f32 %v687, %v6687
    %6689 = vmatmul.f32.gmra.mxu0 %v6688
    %v6690 = vpop.f32.mrf.mxu0
    %v6691 = vadd.f32 %v6637, %v6690
    %6692 = vdwg.mxu0
    %v6693 = vand.u32 %v588, 4294901760
    %6694 = vmatpush.msra.mxu0 %v6693
    %v6695 = vand.u32 %v586, 4294901760
    %6696 = vmatpush.msra.mxu0 %v6695
    %v6697 = vand.u32 %v584, 4294901760
    %6698 = vmatpush.msra.mxu0 %v6697
    %v6699 = vand.u32 %v582, 4294901760
    %6700 = vmatpush.msra.mxu0 %v6699
    %v6701 = vand.u32 %v580, 4294901760
    %6702 = vmatpush.msra.mxu0 %v6701
    %v6703 = vand.u32 %v578, 4294901760
    %6704 = vmatpush.msra.mxu0 %v6703
    %v6705 = vand.u32 %v576, 4294901760
    %6706 = vmatpush.msra.mxu0 %v6705
    %v6707 = vand.u32 %v574, 4294901760
    %6708 = vmatpush.msra.mxu0 %v6707
    %v6709 = vand.u32 %v572, 4294901760
    %6710 = vmatpush.msra.mxu0 %v6709
    %v6711 = vand.u32 %v570, 4294901760
    %6712 = vmatpush.msra.mxu0 %v6711
    %v6713 = vand.u32 %v568, 4294901760
    %6714 = vmatpush.msra.mxu0 %v6713
    %v6715 = vand.u32 %v566, 4294901760
    %6716 = vmatpush.msra.mxu0 %v6715
    %v6717 = vand.u32 %v564, 4294901760
    %6718 = vmatpush.msra.mxu0 %v6717
    %v6719 = vand.u32 %v562, 4294901760
    %6720 = vmatpush.msra.mxu0 %v6719
    %v6721 = vand.u32 %v560, 4294901760
    %6722 = vmatpush.msra.mxu0 %v6721
    %v6723 = vand.u32 %v558, 4294901760
    %6724 = vmatpush.msra.mxu0 %v6723
    %v6725 = vand.u32 %v687, 4294901760
    %v6726 = vsub.f32 %v687, %v6725
    %v6727 = vand.u32 %v6726, 4294901760
    %6728 = vmatmul.f32.gmra.mxu0 %v6727
    %v6729 = vpop.f32.mrf.mxu0
    %v6730 = vadd.f32 %v6691, %v6729
    %6731 = vdwg.mxu0
    %v6732 = vand.u32 %v588, 4294901760
    %v6733 = vsub.f32 %v588, %v6732
    %v6734 = vand.u32 %v6733, 4294901760
    %6735 = vmatpush.msra.mxu0 %v6734
    %v6736 = vand.u32 %v586, 4294901760
    %v6737 = vsub.f32 %v586, %v6736
    %v6738 = vand.u32 %v6737, 4294901760
    %6739 = vmatpush.msra.mxu0 %v6738
    %v6740 = vand.u32 %v584, 4294901760
    %v6741 = vsub.f32 %v584, %v6740
    %v6742 = vand.u32 %v6741, 4294901760
    %6743 = vmatpush.msra.mxu0 %v6742
    %v6744 = vand.u32 %v582, 4294901760
    %v6745 = vsub.f32 %v582, %v6744
    %v6746 = vand.u32 %v6745, 4294901760
    %6747 = vmatpush.msra.mxu0 %v6746
    %v6748 = vand.u32 %v580, 4294901760
    %v6749 = vsub.f32 %v580, %v6748
    %v6750 = vand.u32 %v6749, 4294901760
    %6751 = vmatpush.msra.mxu0 %v6750
    %v6752 = vand.u32 %v578, 4294901760
    %v6753 = vsub.f32 %v578, %v6752
    %v6754 = vand.u32 %v6753, 4294901760
    %6755 = vmatpush.msra.mxu0 %v6754
    %v6756 = vand.u32 %v576, 4294901760
    %v6757 = vsub.f32 %v576, %v6756
    %v6758 = vand.u32 %v6757, 4294901760
    %6759 = vmatpush.msra.mxu0 %v6758
    %v6760 = vand.u32 %v574, 4294901760
    %v6761 = vsub.f32 %v574, %v6760
    %v6762 = vand.u32 %v6761, 4294901760
    %6763 = vmatpush.msra.mxu0 %v6762
    %v6764 = vand.u32 %v572, 4294901760
    %v6765 = vsub.f32 %v572, %v6764
    %v6766 = vand.u32 %v6765, 4294901760
    %6767 = vmatpush.msra.mxu0 %v6766
    %v6768 = vand.u32 %v570, 4294901760
    %v6769 = vsub.f32 %v570, %v6768
    %v6770 = vand.u32 %v6769, 4294901760
    %6771 = vmatpush.msra.mxu0 %v6770
    %v6772 = vand.u32 %v568, 4294901760
    %v6773 = vsub.f32 %v568, %v6772
    %v6774 = vand.u32 %v6773, 4294901760
    %6775 = vmatpush.msra.mxu0 %v6774
    %v6776 = vand.u32 %v566, 4294901760
    %v6777 = vsub.f32 %v566, %v6776
    %v6778 = vand.u32 %v6777, 4294901760
    %6779 = vmatpush.msra.mxu0 %v6778
    %v6780 = vand.u32 %v564, 4294901760
    %v6781 = vsub.f32 %v564, %v6780
    %v6782 = vand.u32 %v6781, 4294901760
    %6783 = vmatpush.msra.mxu0 %v6782
    %v6784 = vand.u32 %v562, 4294901760
    %v6785 = vsub.f32 %v562, %v6784
    %v6786 = vand.u32 %v6785, 4294901760
    %6787 = vmatpush.msra.mxu0 %v6786
    %v6788 = vand.u32 %v560, 4294901760
    %v6789 = vsub.f32 %v560, %v6788
    %v6790 = vand.u32 %v6789, 4294901760
    %6791 = vmatpush.msra.mxu0 %v6790
    %v6792 = vand.u32 %v558, 4294901760
    %v6793 = vsub.f32 %v558, %v6792
    %v6794 = vand.u32 %v6793, 4294901760
    %6795 = vmatpush.msra.mxu0 %v6794
    %v6796 = vand.u32 %v687, 4294901760
    %6797 = vmatmul.f32.gmra.mxu0 %v6796
    %v6798 = vpop.f32.mrf.mxu0
    %v6799 = vadd.f32 %v6730, %v6798
    %6800 = vdwg.mxu0
    %v6801 = vand.u32 %v588, 4294901760
    %6802 = vmatpush.msra.mxu0 %v6801
    %v6803 = vand.u32 %v586, 4294901760
    %6804 = vmatpush.msra.mxu0 %v6803
    %v6805 = vand.u32 %v584, 4294901760
    %6806 = vmatpush.msra.mxu0 %v6805
    %v6807 = vand.u32 %v582, 4294901760
    %6808 = vmatpush.msra.mxu0 %v6807
    %v6809 = vand.u32 %v580, 4294901760
    %6810 = vmatpush.msra.mxu0 %v6809
    %v6811 = vand.u32 %v578, 4294901760
    %6812 = vmatpush.msra.mxu0 %v6811
    %v6813 = vand.u32 %v576, 4294901760
    %6814 = vmatpush.msra.mxu0 %v6813
    %v6815 = vand.u32 %v574, 4294901760
    %6816 = vmatpush.msra.mxu0 %v6815
    %v6817 = vand.u32 %v572, 4294901760
    %6818 = vmatpush.msra.mxu0 %v6817
    %v6819 = vand.u32 %v570, 4294901760
    %6820 = vmatpush.msra.mxu0 %v6819
    %v6821 = vand.u32 %v568, 4294901760
    %6822 = vmatpush.msra.mxu0 %v6821
    %v6823 = vand.u32 %v566, 4294901760
    %6824 = vmatpush.msra.mxu0 %v6823
    %v6825 = vand.u32 %v564, 4294901760
    %6826 = vmatpush.msra.mxu0 %v6825
    %v6827 = vand.u32 %v562, 4294901760
    %6828 = vmatpush.msra.mxu0 %v6827
    %v6829 = vand.u32 %v560, 4294901760
    %6830 = vmatpush.msra.mxu0 %v6829
    %v6831 = vand.u32 %v558, 4294901760
    %6832 = vmatpush.msra.mxu0 %v6831
    %v6833 = vand.u32 %v687, 4294901760
    %6834 = vmatmul.f32.gmra.mxu0 %v6833
    %v6835 = vpop.f32.mrf.mxu0
    %v6836 = vadd.f32 %v6799, %v6835
    %6837 = vdwg.mxu0
    %v6838 = vand.u32 %v620, 4294901760
    %6839 = vmatpush.msra.mxu0 %v6838
    %v6840 = vand.u32 %v618, 4294901760
    %6841 = vmatpush.msra.mxu0 %v6840
    %v6842 = vand.u32 %v616, 4294901760
    %6843 = vmatpush.msra.mxu0 %v6842
    %v6844 = vand.u32 %v614, 4294901760
    %6845 = vmatpush.msra.mxu0 %v6844
    %v6846 = vand.u32 %v612, 4294901760
    %6847 = vmatpush.msra.mxu0 %v6846
    %v6848 = vand.u32 %v610, 4294901760
    %6849 = vmatpush.msra.mxu0 %v6848
    %v6850 = vand.u32 %v608, 4294901760
    %6851 = vmatpush.msra.mxu0 %v6850
    %v6852 = vand.u32 %v606, 4294901760
    %6853 = vmatpush.msra.mxu0 %v6852
    %v6854 = vand.u32 %v604, 4294901760
    %6855 = vmatpush.msra.mxu0 %v6854
    %v6856 = vand.u32 %v602, 4294901760
    %6857 = vmatpush.msra.mxu0 %v6856
    %v6858 = vand.u32 %v600, 4294901760
    %6859 = vmatpush.msra.mxu0 %v6858
    %v6860 = vand.u32 %v598, 4294901760
    %6861 = vmatpush.msra.mxu0 %v6860
    %v6862 = vand.u32 %v596, 4294901760
    %6863 = vmatpush.msra.mxu0 %v6862
    %v6864 = vand.u32 %v594, 4294901760
    %6865 = vmatpush.msra.mxu0 %v6864
    %v6866 = vand.u32 %v592, 4294901760
    %6867 = vmatpush.msra.mxu0 %v6866
    %v6868 = vand.u32 %v590, 4294901760
    %6869 = vmatpush.msra.mxu0 %v6868
    %v6870 = vand.u32 %v688, 4294901760
    %v6871 = vsub.f32 %v688, %v6870
    %v6872 = vand.u32 %v6871, 4294901760
    %v6873 = vsub.f32 %v6871, %v6872
    %v6874 = vand.u32 %v6873, 4294901760
    %6875 = vmatmul.f32.gmra.mxu0 %v6874
    %v6876 = vpop.f32.mrf.mxu0
    %v6877 = vadd.f32 %v6836, %v6876
    %6878 = vdwg.mxu0
    %v6879 = vand.u32 %v620, 4294901760
    %v6880 = vsub.f32 %v620, %v6879
    %v6881 = vand.u32 %v6880, 4294901760
    %v6882 = vsub.f32 %v6880, %v6881
    %v6883 = vand.u32 %v6882, 4294901760
    %6884 = vmatpush.msra.mxu0 %v6883
    %v6885 = vand.u32 %v618, 4294901760
    %v6886 = vsub.f32 %v618, %v6885
    %v6887 = vand.u32 %v6886, 4294901760
    %v6888 = vsub.f32 %v6886, %v6887
    %v6889 = vand.u32 %v6888, 4294901760
    %6890 = vmatpush.msra.mxu0 %v6889
    %v6891 = vand.u32 %v616, 4294901760
    %v6892 = vsub.f32 %v616, %v6891
    %v6893 = vand.u32 %v6892, 4294901760
    %v6894 = vsub.f32 %v6892, %v6893
    %v6895 = vand.u32 %v6894, 4294901760
    %6896 = vmatpush.msra.mxu0 %v6895
    %v6897 = vand.u32 %v614, 4294901760
    %v6898 = vsub.f32 %v614, %v6897
    %v6899 = vand.u32 %v6898, 4294901760
    %v6900 = vsub.f32 %v6898, %v6899
    %v6901 = vand.u32 %v6900, 4294901760
    %6902 = vmatpush.msra.mxu0 %v6901
    %v6903 = vand.u32 %v612, 4294901760
    %v6904 = vsub.f32 %v612, %v6903
    %v6905 = vand.u32 %v6904, 4294901760
    %v6906 = vsub.f32 %v6904, %v6905
    %v6907 = vand.u32 %v6906, 4294901760
    %6908 = vmatpush.msra.mxu0 %v6907
    %v6909 = vand.u32 %v610, 4294901760
    %v6910 = vsub.f32 %v610, %v6909
    %v6911 = vand.u32 %v6910, 4294901760
    %v6912 = vsub.f32 %v6910, %v6911
    %v6913 = vand.u32 %v6912, 4294901760
    %6914 = vmatpush.msra.mxu0 %v6913
    %v6915 = vand.u32 %v608, 4294901760
    %v6916 = vsub.f32 %v608, %v6915
    %v6917 = vand.u32 %v6916, 4294901760
    %v6918 = vsub.f32 %v6916, %v6917
    %v6919 = vand.u32 %v6918, 4294901760
    %6920 = vmatpush.msra.mxu0 %v6919
    %v6921 = vand.u32 %v606, 4294901760
    %v6922 = vsub.f32 %v606, %v6921
    %v6923 = vand.u32 %v6922, 4294901760
    %v6924 = vsub.f32 %v6922, %v6923
    %v6925 = vand.u32 %v6924, 4294901760
    %6926 = vmatpush.msra.mxu0 %v6925
    %v6927 = vand.u32 %v604, 4294901760
    %v6928 = vsub.f32 %v604, %v6927
    %v6929 = vand.u32 %v6928, 4294901760
    %v6930 = vsub.f32 %v6928, %v6929
    %v6931 = vand.u32 %v6930, 4294901760
    %6932 = vmatpush.msra.mxu0 %v6931
    %v6933 = vand.u32 %v602, 4294901760
    %v6934 = vsub.f32 %v602, %v6933
    %v6935 = vand.u32 %v6934, 4294901760
    %v6936 = vsub.f32 %v6934, %v6935
    %v6937 = vand.u32 %v6936, 4294901760
    %6938 = vmatpush.msra.mxu0 %v6937
    %v6939 = vand.u32 %v600, 4294901760
    %v6940 = vsub.f32 %v600, %v6939
    %v6941 = vand.u32 %v6940, 4294901760
    %v6942 = vsub.f32 %v6940, %v6941
    %v6943 = vand.u32 %v6942, 4294901760
    %6944 = vmatpush.msra.mxu0 %v6943
    %v6945 = vand.u32 %v598, 4294901760
    %v6946 = vsub.f32 %v598, %v6945
    %v6947 = vand.u32 %v6946, 4294901760
    %v6948 = vsub.f32 %v6946, %v6947
    %v6949 = vand.u32 %v6948, 4294901760
    %6950 = vmatpush.msra.mxu0 %v6949
    %v6951 = vand.u32 %v596, 4294901760
    %v6952 = vsub.f32 %v596, %v6951
    %v6953 = vand.u32 %v6952, 4294901760
    %v6954 = vsub.f32 %v6952, %v6953
    %v6955 = vand.u32 %v6954, 4294901760
    %6956 = vmatpush.msra.mxu0 %v6955
    %v6957 = vand.u32 %v594, 4294901760
    %v6958 = vsub.f32 %v594, %v6957
    %v6959 = vand.u32 %v6958, 4294901760
    %v6960 = vsub.f32 %v6958, %v6959
    %v6961 = vand.u32 %v6960, 4294901760
    %6962 = vmatpush.msra.mxu0 %v6961
    %v6963 = vand.u32 %v592, 4294901760
    %v6964 = vsub.f32 %v592, %v6963
    %v6965 = vand.u32 %v6964, 4294901760
    %v6966 = vsub.f32 %v6964, %v6965
    %v6967 = vand.u32 %v6966, 4294901760
    %6968 = vmatpush.msra.mxu0 %v6967
    %v6969 = vand.u32 %v590, 4294901760
    %v6970 = vsub.f32 %v590, %v6969
    %v6971 = vand.u32 %v6970, 4294901760
    %v6972 = vsub.f32 %v6970, %v6971
    %v6973 = vand.u32 %v6972, 4294901760
    %6974 = vmatpush.msra.mxu0 %v6973
    %v6975 = vand.u32 %v688, 4294901760
    %6976 = vmatmul.f32.gmra.mxu0 %v6975
    %v6977 = vpop.f32.mrf.mxu0
    %v6978 = vadd.f32 %v6877, %v6977
    %6979 = vdwg.mxu0
    %v6980 = vand.u32 %v620, 4294901760
    %v6981 = vsub.f32 %v620, %v6980
    %6982 = vmatpush.msra.mxu0 %v6981
    %v6983 = vand.u32 %v618, 4294901760
    %v6984 = vsub.f32 %v618, %v6983
    %6985 = vmatpush.msra.mxu0 %v6984
    %v6986 = vand.u32 %v616, 4294901760
    %v6987 = vsub.f32 %v616, %v6986
    %6988 = vmatpush.msra.mxu0 %v6987
    %v6989 = vand.u32 %v614, 4294901760
    %v6990 = vsub.f32 %v614, %v6989
    %6991 = vmatpush.msra.mxu0 %v6990
    %v6992 = vand.u32 %v612, 4294901760
    %v6993 = vsub.f32 %v612, %v6992
    %6994 = vmatpush.msra.mxu0 %v6993
    %v6995 = vand.u32 %v610, 4294901760
    %v6996 = vsub.f32 %v610, %v6995
    %6997 = vmatpush.msra.mxu0 %v6996
    %v6998 = vand.u32 %v608, 4294901760
    %v6999 = vsub.f32 %v608, %v6998
    %7000 = vmatpush.msra.mxu0 %v6999
    %v7001 = vand.u32 %v606, 4294901760
    %v7002 = vsub.f32 %v606, %v7001
    %7003 = vmatpush.msra.mxu0 %v7002
    %v7004 = vand.u32 %v604, 4294901760
    %v7005 = vsub.f32 %v604, %v7004
    %7006 = vmatpush.msra.mxu0 %v7005
    %v7007 = vand.u32 %v602, 4294901760
    %v7008 = vsub.f32 %v602, %v7007
    %7009 = vmatpush.msra.mxu0 %v7008
    %v7010 = vand.u32 %v600, 4294901760
    %v7011 = vsub.f32 %v600, %v7010
    %7012 = vmatpush.msra.mxu0 %v7011
    %v7013 = vand.u32 %v598, 4294901760
    %v7014 = vsub.f32 %v598, %v7013
    %7015 = vmatpush.msra.mxu0 %v7014
    %v7016 = vand.u32 %v596, 4294901760
    %v7017 = vsub.f32 %v596, %v7016
    %7018 = vmatpush.msra.mxu0 %v7017
    %v7019 = vand.u32 %v594, 4294901760
    %v7020 = vsub.f32 %v594, %v7019
    %7021 = vmatpush.msra.mxu0 %v7020
    %v7022 = vand.u32 %v592, 4294901760
    %v7023 = vsub.f32 %v592, %v7022
    %7024 = vmatpush.msra.mxu0 %v7023
    %v7025 = vand.u32 %v590, 4294901760
    %v7026 = vsub.f32 %v590, %v7025
    %7027 = vmatpush.msra.mxu0 %v7026
    %v7028 = vand.u32 %v688, 4294901760
    %v7029 = vsub.f32 %v688, %v7028
    %7030 = vmatmul.f32.gmra.mxu0 %v7029
    %v7031 = vpop.f32.mrf.mxu0
    %v7032 = vadd.f32 %v6978, %v7031
    %7033 = vdwg.mxu0
    %v7034 = vand.u32 %v620, 4294901760
    %7035 = vmatpush.msra.mxu0 %v7034
    %v7036 = vand.u32 %v618, 4294901760
    %7037 = vmatpush.msra.mxu0 %v7036
    %v7038 = vand.u32 %v616, 4294901760
    %7039 = vmatpush.msra.mxu0 %v7038
    %v7040 = vand.u32 %v614, 4294901760
    %7041 = vmatpush.msra.mxu0 %v7040
    %v7042 = vand.u32 %v612, 4294901760
    %7043 = vmatpush.msra.mxu0 %v7042
    %v7044 = vand.u32 %v610, 4294901760
    %7045 = vmatpush.msra.mxu0 %v7044
    %v7046 = vand.u32 %v608, 4294901760
    %7047 = vmatpush.msra.mxu0 %v7046
    %v7048 = vand.u32 %v606, 4294901760
    %7049 = vmatpush.msra.mxu0 %v7048
    %v7050 = vand.u32 %v604, 4294901760
    %7051 = vmatpush.msra.mxu0 %v7050
    %v7052 = vand.u32 %v602, 4294901760
    %7053 = vmatpush.msra.mxu0 %v7052
    %v7054 = vand.u32 %v600, 4294901760
    %7055 = vmatpush.msra.mxu0 %v7054
    %v7056 = vand.u32 %v598, 4294901760
    %7057 = vmatpush.msra.mxu0 %v7056
    %v7058 = vand.u32 %v596, 4294901760
    %7059 = vmatpush.msra.mxu0 %v7058
    %v7060 = vand.u32 %v594, 4294901760
    %7061 = vmatpush.msra.mxu0 %v7060
    %v7062 = vand.u32 %v592, 4294901760
    %7063 = vmatpush.msra.mxu0 %v7062
    %v7064 = vand.u32 %v590, 4294901760
    %7065 = vmatpush.msra.mxu0 %v7064
    %v7066 = vand.u32 %v688, 4294901760
    %v7067 = vsub.f32 %v688, %v7066
    %v7068 = vand.u32 %v7067, 4294901760
    %7069 = vmatmul.f32.gmra.mxu0 %v7068
    %v7070 = vpop.f32.mrf.mxu0
    %v7071 = vadd.f32 %v7032, %v7070
    %7072 = vdwg.mxu0
    %v7073 = vand.u32 %v620, 4294901760
    %v7074 = vsub.f32 %v620, %v7073
    %v7075 = vand.u32 %v7074, 4294901760
    %7076 = vmatpush.msra.mxu0 %v7075
    %v7077 = vand.u32 %v618, 4294901760
    %v7078 = vsub.f32 %v618, %v7077
    %v7079 = vand.u32 %v7078, 4294901760
    %7080 = vmatpush.msra.mxu0 %v7079
    %v7081 = vand.u32 %v616, 4294901760
    %v7082 = vsub.f32 %v616, %v7081
    %v7083 = vand.u32 %v7082, 4294901760
    %7084 = vmatpush.msra.mxu0 %v7083
    %v7085 = vand.u32 %v614, 4294901760
    %v7086 = vsub.f32 %v614, %v7085
    %v7087 = vand.u32 %v7086, 4294901760
    %7088 = vmatpush.msra.mxu0 %v7087
    %v7089 = vand.u32 %v612, 4294901760
    %v7090 = vsub.f32 %v612, %v7089
    %v7091 = vand.u32 %v7090, 4294901760
    %7092 = vmatpush.msra.mxu0 %v7091
    %v7093 = vand.u32 %v610, 4294901760
    %v7094 = vsub.f32 %v610, %v7093
    %v7095 = vand.u32 %v7094, 4294901760
    %7096 = vmatpush.msra.mxu0 %v7095
    %v7097 = vand.u32 %v608, 4294901760
    %v7098 = vsub.f32 %v608, %v7097
    %v7099 = vand.u32 %v7098, 4294901760
    %7100 = vmatpush.msra.mxu0 %v7099
    %v7101 = vand.u32 %v606, 4294901760
    %v7102 = vsub.f32 %v606, %v7101
    %v7103 = vand.u32 %v7102, 4294901760
    %7104 = vmatpush.msra.mxu0 %v7103
    %v7105 = vand.u32 %v604, 4294901760
    %v7106 = vsub.f32 %v604, %v7105
    %v7107 = vand.u32 %v7106, 4294901760
    %7108 = vmatpush.msra.mxu0 %v7107
    %v7109 = vand.u32 %v602, 4294901760
    %v7110 = vsub.f32 %v602, %v7109
    %v7111 = vand.u32 %v7110, 4294901760
    %7112 = vmatpush.msra.mxu0 %v7111
    %v7113 = vand.u32 %v600, 4294901760
    %v7114 = vsub.f32 %v600, %v7113
    %v7115 = vand.u32 %v7114, 4294901760
    %7116 = vmatpush.msra.mxu0 %v7115
    %v7117 = vand.u32 %v598, 4294901760
    %v7118 = vsub.f32 %v598, %v7117
    %v7119 = vand.u32 %v7118, 4294901760
    %7120 = vmatpush.msra.mxu0 %v7119
    %v7121 = vand.u32 %v596, 4294901760
    %v7122 = vsub.f32 %v596, %v7121
    %v7123 = vand.u32 %v7122, 4294901760
    %7124 = vmatpush.msra.mxu0 %v7123
    %v7125 = vand.u32 %v594, 4294901760
    %v7126 = vsub.f32 %v594, %v7125
    %v7127 = vand.u32 %v7126, 4294901760
    %7128 = vmatpush.msra.mxu0 %v7127
    %v7129 = vand.u32 %v592, 4294901760
    %v7130 = vsub.f32 %v592, %v7129
    %v7131 = vand.u32 %v7130, 4294901760
    %7132 = vmatpush.msra.mxu0 %v7131
    %v7133 = vand.u32 %v590, 4294901760
    %v7134 = vsub.f32 %v590, %v7133
    %v7135 = vand.u32 %v7134, 4294901760
    %7136 = vmatpush.msra.mxu0 %v7135
    %v7137 = vand.u32 %v688, 4294901760
    %7138 = vmatmul.f32.gmra.mxu0 %v7137
    %v7139 = vpop.f32.mrf.mxu0
    %v7140 = vadd.f32 %v7071, %v7139
    %7141 = vdwg.mxu0
    %v7142 = vand.u32 %v620, 4294901760
    %7143 = vmatpush.msra.mxu0 %v7142
    %v7144 = vand.u32 %v618, 4294901760
    %7145 = vmatpush.msra.mxu0 %v7144
    %v7146 = vand.u32 %v616, 4294901760
    %7147 = vmatpush.msra.mxu0 %v7146
    %v7148 = vand.u32 %v614, 4294901760
    %7149 = vmatpush.msra.mxu0 %v7148
    %v7150 = vand.u32 %v612, 4294901760
    %7151 = vmatpush.msra.mxu0 %v7150
    %v7152 = vand.u32 %v610, 4294901760
    %7153 = vmatpush.msra.mxu0 %v7152
    %v7154 = vand.u32 %v608, 4294901760
    %7155 = vmatpush.msra.mxu0 %v7154
    %v7156 = vand.u32 %v606, 4294901760
    %7157 = vmatpush.msra.mxu0 %v7156
    %v7158 = vand.u32 %v604, 4294901760
    %7159 = vmatpush.msra.mxu0 %v7158
    %v7160 = vand.u32 %v602, 4294901760
    %7161 = vmatpush.msra.mxu0 %v7160
    %v7162 = vand.u32 %v600, 4294901760
    %7163 = vmatpush.msra.mxu0 %v7162
    %v7164 = vand.u32 %v598, 4294901760
    %7165 = vmatpush.msra.mxu0 %v7164
    %v7166 = vand.u32 %v596, 4294901760
    %7167 = vmatpush.msra.mxu0 %v7166
    %v7168 = vand.u32 %v594, 4294901760
    %7169 = vmatpush.msra.mxu0 %v7168
    %v7170 = vand.u32 %v592, 4294901760
    %7171 = vmatpush.msra.mxu0 %v7170
    %v7172 = vand.u32 %v590, 4294901760
    %7173 = vmatpush.msra.mxu0 %v7172
    %v7174 = vand.u32 %v688, 4294901760
    %7175 = vmatmul.f32.gmra.mxu0 %v7174
    %v7176 = vpop.f32.mrf.mxu0
    %v7177 = vadd.f32 %v7140, %v7176
    %7178 = vdwg.mxu0
    %v7179 = vand.u32 %v652, 4294901760
    %7180 = vmatpush.msra.mxu0 %v7179
    %v7181 = vand.u32 %v650, 4294901760
    %7182 = vmatpush.msra.mxu0 %v7181
    %v7183 = vand.u32 %v648, 4294901760
    %7184 = vmatpush.msra.mxu0 %v7183
    %v7185 = vand.u32 %v646, 4294901760
    %7186 = vmatpush.msra.mxu0 %v7185
    %v7187 = vand.u32 %v644, 4294901760
    %7188 = vmatpush.msra.mxu0 %v7187
    %v7189 = vand.u32 %v642, 4294901760
    %7190 = vmatpush.msra.mxu0 %v7189
    %v7191 = vand.u32 %v640, 4294901760
    %7192 = vmatpush.msra.mxu0 %v7191
    %v7193 = vand.u32 %v638, 4294901760
    %7194 = vmatpush.msra.mxu0 %v7193
    %v7195 = vand.u32 %v636, 4294901760
    %7196 = vmatpush.msra.mxu0 %v7195
    %v7197 = vand.u32 %v634, 4294901760
    %7198 = vmatpush.msra.mxu0 %v7197
    %v7199 = vand.u32 %v632, 4294901760
    %7200 = vmatpush.msra.mxu0 %v7199
    %v7201 = vand.u32 %v630, 4294901760
    %7202 = vmatpush.msra.mxu0 %v7201
    %v7203 = vand.u32 %v628, 4294901760
    %7204 = vmatpush.msra.mxu0 %v7203
    %v7205 = vand.u32 %v626, 4294901760
    %7206 = vmatpush.msra.mxu0 %v7205
    %v7207 = vand.u32 %v624, 4294901760
    %7208 = vmatpush.msra.mxu0 %v7207
    %v7209 = vand.u32 %v622, 4294901760
    %7210 = vmatpush.msra.mxu0 %v7209
    %v7211 = vand.u32 %v689, 4294901760
    %v7212 = vsub.f32 %v689, %v7211
    %v7213 = vand.u32 %v7212, 4294901760
    %v7214 = vsub.f32 %v7212, %v7213
    %v7215 = vand.u32 %v7214, 4294901760
    %7216 = vmatmul.f32.gmra.mxu0 %v7215
    %v7217 = vpop.f32.mrf.mxu0
    %v7218 = vadd.f32 %v7177, %v7217
    %7219 = vdwg.mxu0
    %v7220 = vand.u32 %v652, 4294901760
    %v7221 = vsub.f32 %v652, %v7220
    %v7222 = vand.u32 %v7221, 4294901760
    %v7223 = vsub.f32 %v7221, %v7222
    %v7224 = vand.u32 %v7223, 4294901760
    %7225 = vmatpush.msra.mxu0 %v7224
    %v7226 = vand.u32 %v650, 4294901760
    %v7227 = vsub.f32 %v650, %v7226
    %v7228 = vand.u32 %v7227, 4294901760
    %v7229 = vsub.f32 %v7227, %v7228
    %v7230 = vand.u32 %v7229, 4294901760
    %7231 = vmatpush.msra.mxu0 %v7230
    %v7232 = vand.u32 %v648, 4294901760
    %v7233 = vsub.f32 %v648, %v7232
    %v7234 = vand.u32 %v7233, 4294901760
    %v7235 = vsub.f32 %v7233, %v7234
    %v7236 = vand.u32 %v7235, 4294901760
    %7237 = vmatpush.msra.mxu0 %v7236
    %v7238 = vand.u32 %v646, 4294901760
    %v7239 = vsub.f32 %v646, %v7238
    %v7240 = vand.u32 %v7239, 4294901760
    %v7241 = vsub.f32 %v7239, %v7240
    %v7242 = vand.u32 %v7241, 4294901760
    %7243 = vmatpush.msra.mxu0 %v7242
    %v7244 = vand.u32 %v644, 4294901760
    %v7245 = vsub.f32 %v644, %v7244
    %v7246 = vand.u32 %v7245, 4294901760
    %v7247 = vsub.f32 %v7245, %v7246
    %v7248 = vand.u32 %v7247, 4294901760
    %7249 = vmatpush.msra.mxu0 %v7248
    %v7250 = vand.u32 %v642, 4294901760
    %v7251 = vsub.f32 %v642, %v7250
    %v7252 = vand.u32 %v7251, 4294901760
    %v7253 = vsub.f32 %v7251, %v7252
    %v7254 = vand.u32 %v7253, 4294901760
    %7255 = vmatpush.msra.mxu0 %v7254
    %v7256 = vand.u32 %v640, 4294901760
    %v7257 = vsub.f32 %v640, %v7256
    %v7258 = vand.u32 %v7257, 4294901760
    %v7259 = vsub.f32 %v7257, %v7258
    %v7260 = vand.u32 %v7259, 4294901760
    %7261 = vmatpush.msra.mxu0 %v7260
    %v7262 = vand.u32 %v638, 4294901760
    %v7263 = vsub.f32 %v638, %v7262
    %v7264 = vand.u32 %v7263, 4294901760
    %v7265 = vsub.f32 %v7263, %v7264
    %v7266 = vand.u32 %v7265, 4294901760
    %7267 = vmatpush.msra.mxu0 %v7266
    %v7268 = vand.u32 %v636, 4294901760
    %v7269 = vsub.f32 %v636, %v7268
    %v7270 = vand.u32 %v7269, 4294901760
    %v7271 = vsub.f32 %v7269, %v7270
    %v7272 = vand.u32 %v7271, 4294901760
    %7273 = vmatpush.msra.mxu0 %v7272
    %v7274 = vand.u32 %v634, 4294901760
    %v7275 = vsub.f32 %v634, %v7274
    %v7276 = vand.u32 %v7275, 4294901760
    %v7277 = vsub.f32 %v7275, %v7276
    %v7278 = vand.u32 %v7277, 4294901760
    %7279 = vmatpush.msra.mxu0 %v7278
    %v7280 = vand.u32 %v632, 4294901760
    %v7281 = vsub.f32 %v632, %v7280
    %v7282 = vand.u32 %v7281, 4294901760
    %v7283 = vsub.f32 %v7281, %v7282
    %v7284 = vand.u32 %v7283, 4294901760
    %7285 = vmatpush.msra.mxu0 %v7284
    %v7286 = vand.u32 %v630, 4294901760
    %v7287 = vsub.f32 %v630, %v7286
    %v7288 = vand.u32 %v7287, 4294901760
    %v7289 = vsub.f32 %v7287, %v7288
    %v7290 = vand.u32 %v7289, 4294901760
    %7291 = vmatpush.msra.mxu0 %v7290
    %v7292 = vand.u32 %v628, 4294901760
    %v7293 = vsub.f32 %v628, %v7292
    %v7294 = vand.u32 %v7293, 4294901760
    %v7295 = vsub.f32 %v7293, %v7294
    %v7296 = vand.u32 %v7295, 4294901760
    %7297 = vmatpush.msra.mxu0 %v7296
    %v7298 = vand.u32 %v626, 4294901760
    %v7299 = vsub.f32 %v626, %v7298
    %v7300 = vand.u32 %v7299, 4294901760
    %v7301 = vsub.f32 %v7299, %v7300
    %v7302 = vand.u32 %v7301, 4294901760
    %7303 = vmatpush.msra.mxu0 %v7302
    %v7304 = vand.u32 %v624, 4294901760
    %v7305 = vsub.f32 %v624, %v7304
    %v7306 = vand.u32 %v7305, 4294901760
    %v7307 = vsub.f32 %v7305, %v7306
    %v7308 = vand.u32 %v7307, 4294901760
    %7309 = vmatpush.msra.mxu0 %v7308
    %v7310 = vand.u32 %v622, 4294901760
    %v7311 = vsub.f32 %v622, %v7310
    %v7312 = vand.u32 %v7311, 4294901760
    %v7313 = vsub.f32 %v7311, %v7312
    %v7314 = vand.u32 %v7313, 4294901760
    %7315 = vmatpush.msra.mxu0 %v7314
    %v7316 = vand.u32 %v689, 4294901760
    %7317 = vmatmul.f32.gmra.mxu0 %v7316
    %v7318 = vpop.f32.mrf.mxu0
    %v7319 = vadd.f32 %v7218, %v7318
    %7320 = vdwg.mxu0
    %v7321 = vand.u32 %v652, 4294901760
    %v7322 = vsub.f32 %v652, %v7321
    %7323 = vmatpush.msra.mxu0 %v7322
    %v7324 = vand.u32 %v650, 4294901760
    %v7325 = vsub.f32 %v650, %v7324
    %7326 = vmatpush.msra.mxu0 %v7325
    %v7327 = vand.u32 %v648, 4294901760
    %v7328 = vsub.f32 %v648, %v7327
    %7329 = vmatpush.msra.mxu0 %v7328
    %v7330 = vand.u32 %v646, 4294901760
    %v7331 = vsub.f32 %v646, %v7330
    %7332 = vmatpush.msra.mxu0 %v7331
    %v7333 = vand.u32 %v644, 4294901760
    %v7334 = vsub.f32 %v644, %v7333
    %7335 = vmatpush.msra.mxu0 %v7334
    %v7336 = vand.u32 %v642, 4294901760
    %v7337 = vsub.f32 %v642, %v7336
    %7338 = vmatpush.msra.mxu0 %v7337
    %v7339 = vand.u32 %v640, 4294901760
    %v7340 = vsub.f32 %v640, %v7339
    %7341 = vmatpush.msra.mxu0 %v7340
    %v7342 = vand.u32 %v638, 4294901760
    %v7343 = vsub.f32 %v638, %v7342
    %7344 = vmatpush.msra.mxu0 %v7343
    %v7345 = vand.u32 %v636, 4294901760
    %v7346 = vsub.f32 %v636, %v7345
    %7347 = vmatpush.msra.mxu0 %v7346
    %v7348 = vand.u32 %v634, 4294901760
    %v7349 = vsub.f32 %v634, %v7348
    %7350 = vmatpush.msra.mxu0 %v7349
    %v7351 = vand.u32 %v632, 4294901760
    %v7352 = vsub.f32 %v632, %v7351
    %7353 = vmatpush.msra.mxu0 %v7352
    %v7354 = vand.u32 %v630, 4294901760
    %v7355 = vsub.f32 %v630, %v7354
    %7356 = vmatpush.msra.mxu0 %v7355
    %v7357 = vand.u32 %v628, 4294901760
    %v7358 = vsub.f32 %v628, %v7357
    %7359 = vmatpush.msra.mxu0 %v7358
    %v7360 = vand.u32 %v626, 4294901760
    %v7361 = vsub.f32 %v626, %v7360
    %7362 = vmatpush.msra.mxu0 %v7361
    %v7363 = vand.u32 %v624, 4294901760
    %v7364 = vsub.f32 %v624, %v7363
    %7365 = vmatpush.msra.mxu0 %v7364
    %v7366 = vand.u32 %v622, 4294901760
    %v7367 = vsub.f32 %v622, %v7366
    %7368 = vmatpush.msra.mxu0 %v7367
    %v7369 = vand.u32 %v689, 4294901760
    %v7370 = vsub.f32 %v689, %v7369
    %7371 = vmatmul.f32.gmra.mxu0 %v7370
    %v7372 = vpop.f32.mrf.mxu0
    %v7373 = vadd.f32 %v7319, %v7372
    %7374 = vdwg.mxu0
    %v7375 = vand.u32 %v652, 4294901760
    %7376 = vmatpush.msra.mxu0 %v7375
    %v7377 = vand.u32 %v650, 4294901760
    %7378 = vmatpush.msra.mxu0 %v7377
    %v7379 = vand.u32 %v648, 4294901760
    %7380 = vmatpush.msra.mxu0 %v7379
    %v7381 = vand.u32 %v646, 4294901760
    %7382 = vmatpush.msra.mxu0 %v7381
    %v7383 = vand.u32 %v644, 4294901760
    %7384 = vmatpush.msra.mxu0 %v7383
    %v7385 = vand.u32 %v642, 4294901760
    %7386 = vmatpush.msra.mxu0 %v7385
    %v7387 = vand.u32 %v640, 4294901760
    %7388 = vmatpush.msra.mxu0 %v7387
    %v7389 = vand.u32 %v638, 4294901760
    %7390 = vmatpush.msra.mxu0 %v7389
    %v7391 = vand.u32 %v636, 4294901760
    %7392 = vmatpush.msra.mxu0 %v7391
    %v7393 = vand.u32 %v634, 4294901760
    %7394 = vmatpush.msra.mxu0 %v7393
    %v7395 = vand.u32 %v632, 4294901760
    %7396 = vmatpush.msra.mxu0 %v7395
    %v7397 = vand.u32 %v630, 4294901760
    %7398 = vmatpush.msra.mxu0 %v7397
    %v7399 = vand.u32 %v628, 4294901760
    %7400 = vmatpush.msra.mxu0 %v7399
    %v7401 = vand.u32 %v626, 4294901760
    %7402 = vmatpush.msra.mxu0 %v7401
    %v7403 = vand.u32 %v624, 4294901760
    %7404 = vmatpush.msra.mxu0 %v7403
    %v7405 = vand.u32 %v622, 4294901760
    %7406 = vmatpush.msra.mxu0 %v7405
    %v7407 = vand.u32 %v689, 4294901760
    %v7408 = vsub.f32 %v689, %v7407
    %v7409 = vand.u32 %v7408, 4294901760
    %7410 = vmatmul.f32.gmra.mxu0 %v7409
    %v7411 = vpop.f32.mrf.mxu0
    %v7412 = vadd.f32 %v7373, %v7411
    %7413 = vdwg.mxu0
    %v7414 = vand.u32 %v652, 4294901760
    %v7415 = vsub.f32 %v652, %v7414
    %v7416 = vand.u32 %v7415, 4294901760
    %7417 = vmatpush.msra.mxu0 %v7416
    %v7418 = vand.u32 %v650, 4294901760
    %v7419 = vsub.f32 %v650, %v7418
    %v7420 = vand.u32 %v7419, 4294901760
    %7421 = vmatpush.msra.mxu0 %v7420
    %v7422 = vand.u32 %v648, 4294901760
    %v7423 = vsub.f32 %v648, %v7422
    %v7424 = vand.u32 %v7423, 4294901760
    %7425 = vmatpush.msra.mxu0 %v7424
    %v7426 = vand.u32 %v646, 4294901760
    %v7427 = vsub.f32 %v646, %v7426
    %v7428 = vand.u32 %v7427, 4294901760
    %7429 = vmatpush.msra.mxu0 %v7428
    %v7430 = vand.u32 %v644, 4294901760
    %v7431 = vsub.f32 %v644, %v7430
    %v7432 = vand.u32 %v7431, 4294901760
    %7433 = vmatpush.msra.mxu0 %v7432
    %v7434 = vand.u32 %v642, 4294901760
    %v7435 = vsub.f32 %v642, %v7434
    %v7436 = vand.u32 %v7435, 4294901760
    %7437 = vmatpush.msra.mxu0 %v7436
    %v7438 = vand.u32 %v640, 4294901760
    %v7439 = vsub.f32 %v640, %v7438
    %v7440 = vand.u32 %v7439, 4294901760
    %7441 = vmatpush.msra.mxu0 %v7440
    %v7442 = vand.u32 %v638, 4294901760
    %v7443 = vsub.f32 %v638, %v7442
    %v7444 = vand.u32 %v7443, 4294901760
    %7445 = vmatpush.msra.mxu0 %v7444
    %v7446 = vand.u32 %v636, 4294901760
    %v7447 = vsub.f32 %v636, %v7446
    %v7448 = vand.u32 %v7447, 4294901760
    %7449 = vmatpush.msra.mxu0 %v7448
    %v7450 = vand.u32 %v634, 4294901760
    %v7451 = vsub.f32 %v634, %v7450
    %v7452 = vand.u32 %v7451, 4294901760
    %7453 = vmatpush.msra.mxu0 %v7452
    %v7454 = vand.u32 %v632, 4294901760
    %v7455 = vsub.f32 %v632, %v7454
    %v7456 = vand.u32 %v7455, 4294901760
    %7457 = vmatpush.msra.mxu0 %v7456
    %v7458 = vand.u32 %v630, 4294901760
    %v7459 = vsub.f32 %v630, %v7458
    %v7460 = vand.u32 %v7459, 4294901760
    %7461 = vmatpush.msra.mxu0 %v7460
    %v7462 = vand.u32 %v628, 4294901760
    %v7463 = vsub.f32 %v628, %v7462
    %v7464 = vand.u32 %v7463, 4294901760
    %7465 = vmatpush.msra.mxu0 %v7464
    %v7466 = vand.u32 %v626, 4294901760
    %v7467 = vsub.f32 %v626, %v7466
    %v7468 = vand.u32 %v7467, 4294901760
    %7469 = vmatpush.msra.mxu0 %v7468
    %v7470 = vand.u32 %v624, 4294901760
    %v7471 = vsub.f32 %v624, %v7470
    %v7472 = vand.u32 %v7471, 4294901760
    %7473 = vmatpush.msra.mxu0 %v7472
    %v7474 = vand.u32 %v622, 4294901760
    %v7475 = vsub.f32 %v622, %v7474
    %v7476 = vand.u32 %v7475, 4294901760
    %7477 = vmatpush.msra.mxu0 %v7476
    %v7478 = vand.u32 %v689, 4294901760
    %7479 = vmatmul.f32.gmra.mxu0 %v7478
    %v7480 = vpop.f32.mrf.mxu0
    %v7481 = vadd.f32 %v7412, %v7480
    %7482 = vdwg.mxu0
    %v7483 = vand.u32 %v652, 4294901760
    %7484 = vmatpush.msra.mxu0 %v7483
    %v7485 = vand.u32 %v650, 4294901760
    %7486 = vmatpush.msra.mxu0 %v7485
    %v7487 = vand.u32 %v648, 4294901760
    %7488 = vmatpush.msra.mxu0 %v7487
    %v7489 = vand.u32 %v646, 4294901760
    %7490 = vmatpush.msra.mxu0 %v7489
    %v7491 = vand.u32 %v644, 4294901760
    %7492 = vmatpush.msra.mxu0 %v7491
    %v7493 = vand.u32 %v642, 4294901760
    %7494 = vmatpush.msra.mxu0 %v7493
    %v7495 = vand.u32 %v640, 4294901760
    %7496 = vmatpush.msra.mxu0 %v7495
    %v7497 = vand.u32 %v638, 4294901760
    %7498 = vmatpush.msra.mxu0 %v7497
    %v7499 = vand.u32 %v636, 4294901760
    %7500 = vmatpush.msra.mxu0 %v7499
    %v7501 = vand.u32 %v634, 4294901760
    %7502 = vmatpush.msra.mxu0 %v7501
    %v7503 = vand.u32 %v632, 4294901760
    %7504 = vmatpush.msra.mxu0 %v7503
    %v7505 = vand.u32 %v630, 4294901760
    %7506 = vmatpush.msra.mxu0 %v7505
    %v7507 = vand.u32 %v628, 4294901760
    %7508 = vmatpush.msra.mxu0 %v7507
    %v7509 = vand.u32 %v626, 4294901760
    %7510 = vmatpush.msra.mxu0 %v7509
    %v7511 = vand.u32 %v624, 4294901760
    %7512 = vmatpush.msra.mxu0 %v7511
    %v7513 = vand.u32 %v622, 4294901760
    %7514 = vmatpush.msra.mxu0 %v7513
    %v7515 = vand.u32 %v689, 4294901760
    %7516 = vmatmul.f32.gmra.mxu0 %v7515
    %v7517 = vpop.f32.mrf.mxu0
    %v7518 = vadd.f32 %v7481, %v7517
    %7519 = vdwg.mxu0
    %v7520 = vmax.f32 %v4108, 0.0
    %v7521 = vmax.f32 %v7518, 0.0
    %v7522 = vld [vmem:[#allocation8] sm:$0x3]
    %v7524 = vperm.slane %v7522, 0
    %v7525 = vperm.slane %v7522, 1
    %v7528 = vmul.f32 %v7520, %v7524
    %v7529 = vmul.f32 %v7521, %v7525
    %vm7530 = vcmask 1041408
    %v7531 = vsel %vm7530, %v7528, 0.0
    %v7532 = vsel %vm7530, %v7529, 0.0
    %v7533 = vadd.f32 %v7531, %v7532
    %7534 = vadd.xlane.f32.xlu0 %v7533
    %v7535 = vpop.xlane.xlu0 %7534
    %v7536 = vld [vmem:[#allocation2] sm:$0x1]
    %v7538 = vperm.slane %v7536, 0
    %v7540 = vadd.f32 %v7535, %v7538
    %vm7541 = vcmask 1024
    %7542 = vst.msk [vmem:[%s5] sm:$0x3] %vm7541, %v7540
    // Predicated region
    $region45: #{tpu_custom_call.1} parent=1 // pred_check
      _
    $region46: #{tpu_custom_call.1} parent=1 // pred_check_branch
      %7544 = sbr.rel (0) target = $region48
    $region47: #{tpu_custom_call.1} parent=1 // pred_region
      _
    $region48: #{tpu_custom_call.1} parent=1 // pred_fallthru
      _
    // Predicated region
    $region49: #{tpu_custom_call.1} parent=1 // pred_check
      _
    $region50: #{tpu_custom_call.1} parent=1 // pred_check_branch
      %7546 = sbr.rel (0) target = $region52
    $region51: #{tpu_custom_call.1} parent=1 // pred_region
      _
    $region52: #{tpu_custom_call.1} parent=1 // pred_fallthru
      _
    %7547 = vsyncpa [#allocation4], 1
    %7548 = vsyncpa [#allocation6], 1
    %7549 = vsyncpa [#allocation9], 1

</llo_original>
